<compile_context>
chip_gen: v7x
topology: tpu7x:2x2x1
jax: 0.10.0
libtpu: 0.0.40
codegen_flags: <defaults>
</compile_context>

<pallas_src>
import jax
import jax.numpy as jnp
from jax.experimental import pallas as pl
from jax.experimental.pallas import tpu as pltpu

# ---------------------------------------------------------------------------
# Model configuration (small, consistent with the module's constructor)
# ---------------------------------------------------------------------------
IN_CHANNELS = 2
IMG_SIZE = (16, 16, 16)
PATCH_SIZE = (8, 8, 8)
HIDDEN = 64
MLP_DIM = 128
NUM_LAYERS = 2
NUM_HEADS = 4
DIM_HEAD = HIDDEN // NUM_HEADS
LN_EPS = 1e-5  # nn.LayerNorm default

N_PATCHES = 1
for _s, _p in zip(IMG_SIZE, PATCH_SIZE):
    N_PATCHES *= _s // _p                       # 8
PATCH_DIM = IN_CHANNELS
for _p in PATCH_SIZE:
    PATCH_DIM *= _p                             # 1024

OUT_WIDTH = (NUM_LAYERS + 1) * HIDDEN           # packed output slab width


# ---------------------------------------------------------------------------
# In-kernel helpers
# ---------------------------------------------------------------------------
def _layernorm(x, g, b):
    # PyTorch LayerNorm: biased variance, eps inside rsqrt.
    mu = jnp.mean(x, axis=-1, keepdims=True)
    xc = x - mu
    var = jnp.mean(xc * xc, axis=-1, keepdims=True)
    return xc * jax.lax.rsqrt(var + LN_EPS) * g + b


def _gelu_exact(y):
    # nn.GELU default (erf form) — kept exact for parity with the module.
    return 0.5 * y * (1.0 + jax.lax.erf(y * 0.7071067811865475))


# ---------------------------------------------------------------------------
# Fused ViT kernel factory. One grid step == `bblk` batch elements; all
# transformer layers unrolled; everything stays resident in VMEM/vregs.
# ---------------------------------------------------------------------------
def _make_vit_kernel(bblk: int):
    L = N_PATCHES

    def kernel(
        patches_ref, patch_w_ref, patch_b_ref, pos_ref,
        ln1_g_ref, ln1_b_ref,
        q_w_ref, k_w_ref, v_w_ref,          # (NUM_LAYERS*NUM_HEADS, HIDDEN, Dh)
        proj_w_ref, proj_b_ref,              # (NUM_LAYERS*NUM_HEADS, Dh, HIDDEN)
        ln2_g_ref, ln2_b_ref,
        fc1_w_ref, fc1_b_ref, fc2_w_ref, fc2_b_ref,
        lnf_g_ref, lnf_b_ref,
        out_ref,
    ):
        # --- patch embedding (Conv3d k=stride=patch == matmul, bf16 inputs,
        #     f32 accumulation) + bias + positional embedding ---------------
        h = (
            jnp.dot(patches_ref[...], patch_w_ref[...],
                    preferred_element_type=jnp.float32)
            + patch_b_ref[...]
            + pos_ref[...]
        )  # (bblk*L, HIDDEN), f32

        hs_slabs = []
        for l in range(NUM_LAYERS):
            # ---------------- self-attention branch ----------------
            xn = _layernorm(h, ln1_g_ref[l], ln1_b_ref[l])     # (bblk*L, HIDDEN)

            att_rows = []
            for b in range(bblk):
                # sublane slice at a multiple of 8 rows — no relayout.
                xb = xn[b * L:(b + 1) * L, :]                  # (L, HIDDEN)
                acc = None
                for hh in range(NUM_HEADS):
                    lh = l * NUM_HEADS + hh
                    # per-head weights are pre-split (lane aligned) — scale is
                    # already folded into q_w wrapper-side.
                    q = jnp.dot(xb, q_w_ref[lh],
                                preferred_element_type=jnp.float32)   # (L, Dh)
                    k = jnp.dot(xb, k_w_ref[lh],
                                preferred_element_type=jnp.float32)   # (L, Dh)
                    v = jnp.dot(xb, v_w_ref[lh],
                                preferred_element_type=jnp.float32)   # (L, Dh)
                    # q @ k^T without materializing a transpose.
                    s = jax.lax.dot_general(
                        q, k, (((1,), (1,)), ((), ())),
                        preferred_element_type=jnp.float32)           # (L, L)
                    s = s - jnp.max(s, axis=-1, keepdims=True)
                    p = jnp.exp(s)
                    p = p * pl.reciprocal(
                        jnp.sum(p, axis=-1, keepdims=True), approx=True)
                    o = jnp.dot(p, v,
                                preferred_element_type=jnp.float32)   # (L, Dh)
                    # fold the head-concat into the output projection:
                    # att = sum_h o_h @ W_proj[h]  (no lane concat).
                    contrib = jnp.dot(o, proj_w_ref[lh],
                                      preferred_element_type=jnp.float32)
                    acc = contrib if acc is None else acc + contrib
                att_rows.append(acc)                            # (L, HIDDEN)

            att = att_rows[0] if bblk == 1 else jnp.concatenate(att_rows, axis=0)
            h = h + att + proj_b_ref[l]

            # ---------------- MLP branch ----------------
            xn2 = _layernorm(h, ln2_g_ref[l], ln2_b_ref[l])
            y = (jnp.dot(xn2, fc1_w_ref[l],
                         preferred_element_type=jnp.float32)
                 + fc1_b_ref[l])                                # (bblk*L, MLP_DIM)
            y = _gelu_exact(y)
            y = (jnp.dot(y, fc2_w_ref[l],
                         preferred_element_type=jnp.float32)
                 + fc2_b_ref[l])                                # (bblk*L, HIDDEN)
            h = h + y

            hs_slabs.append(h)                                  # per-block output

        # --- final LayerNorm + single lane-dense packed store ---------------
        final = _layernorm(h, lnf_g_ref[...], lnf_b_ref[...])
        out_ref[...] = jnp.concatenate(hs_slabs + [final], axis=-1)

    return kernel


# ---------------------------------------------------------------------------
# Parameter initialization (deterministic, synthetic; per-layer / per-head
# tensors stacked along leading axes)
# ---------------------------------------------------------------------------
def init_params(key):
    keys = jax.random.split(key, 7)

    def nrm(k, shape, scale=0.02):
        return scale * jax.random.normal(k, shape, dtype=jnp.float32)

    return {
        "patch_w": nrm(keys[0], (PATCH_DIM, HIDDEN)),
        "patch_b": jnp.zeros((1, HIDDEN), jnp.float32),
        "pos_emb": nrm(keys[1], (1, N_PATCHES, HIDDEN)),
        "ln1_g": jnp.ones((NUM_LAYERS, 1, HIDDEN), jnp.float32),
        "ln1_b": jnp.zeros((NUM_LAYERS, 1, HIDDEN), jnp.float32),
        # qkv_bias=False -> no qkv bias. Weights stored per layer / per head
        # (equivalent reshaping of the nn.Linear(hidden, 3*inner) weight).
        "q_w": nrm(keys[2], (NUM_LAYERS, NUM_HEADS, HIDDEN, DIM_HEAD)),
        "k_w": nrm(keys[3], (NUM_LAYERS, NUM_HEADS, HIDDEN, DIM_HEAD)),
        "v_w": nrm(keys[4], (NUM_LAYERS, NUM_HEADS, HIDDEN, DIM_HEAD)),
        "proj_w": nrm(keys[5], (NUM_LAYERS, NUM_HEADS, DIM_HEAD, HIDDEN)),
        "proj_b": jnp.zeros((NUM_LAYERS, 1, HIDDEN), jnp.float32),
        "ln2_g": jnp.ones((NUM_LAYERS, 1, HIDDEN), jnp.float32),
        "ln2_b": jnp.zeros((NUM_LAYERS, 1, HIDDEN), jnp.float32),
        "fc1_w": nrm(keys[6], (NUM_LAYERS, HIDDEN, MLP_DIM)),
        "fc1_b": jnp.zeros((NUM_LAYERS, 1, MLP_DIM), jnp.float32),
        "fc2_w": nrm(jax.random.fold_in(keys[6], 1), (NUM_LAYERS, MLP_DIM, HIDDEN)),
        "fc2_b": jnp.zeros((NUM_LAYERS, 1, HIDDEN), jnp.float32),
        "lnf_g": jnp.ones((1, HIDDEN), jnp.float32),
        "lnf_b": jnp.zeros((1, HIDDEN), jnp.float32),
    }


# ---------------------------------------------------------------------------
# Forward pass. XLA does only the patch-extraction relayout and the tiny,
# one-time weight reshapes/casts; everything else runs in one fused kernel.
# ---------------------------------------------------------------------------
def vit_forward(params, x, *, batch_block=None):
    B, C, D, H, W = x.shape
    pd, ph, pw = PATCH_SIZE
    nd, nh, nw = D // pd, H // ph, W // pw
    L = nd * nh * nw  # == N_PATCHES

    # Whole batch per grid step by default (grid=(1,)); set batch_block=B//2
    # on v7x to give each TensorCore half of the batch.
    bblk = B if batch_block is None else batch_block
    assert B % bblk == 0
    nsteps = B // bblk
    rows = bblk * L

    # Patch extraction: lane-dense (B*L, PATCH_DIM) view, channel-major patch
    # flattening (matches Conv3d weight flattening order). bf16 for the MXU;
    # accumulation stays f32 inside the kernel.
    patches = x.reshape(B, C, nd, pd, nh, ph, nw, pw)
    patches = patches.transpose(0, 2, 4, 6, 1, 3, 5, 7)
    patches = patches.reshape(B * L, C * pd * ph * pw).astype(jnp.bfloat16)
    patch_w = params["patch_w"].astype(jnp.bfloat16)

    pos = jnp.tile(params["pos_emb"].reshape(L, HIDDEN), (B, 1))     # (B*L, HIDDEN)

    scale = float(DIM_HEAD) ** -0.5
    q_w = (params["q_w"] * scale).reshape(NUM_LAYERS * NUM_HEADS, HIDDEN, DIM_HEAD)
    k_w = params["k_w"].reshape(NUM_LAYERS * NUM_HEADS, HIDDEN, DIM_HEAD)
    v_w = params["v_w"].reshape(NUM_LAYERS * NUM_HEADS, HIDDEN, DIM_HEAD)
    proj_w = params["proj_w"].reshape(NUM_LAYERS * NUM_HEADS, DIM_HEAD, HIDDEN)

    blk = lambda i: (i, 0)
    rep2 = lambda i: (0, 0)
    rep3 = lambda i: (0, 0, 0)

    in_specs = [
        pl.BlockSpec((rows, PATCH_DIM), blk),                          # patches
        pl.BlockSpec((PATCH_DIM, HIDDEN), rep2),                       # patch_w
        pl.BlockSpec((1, HIDDEN), rep2),                               # patch_b
        pl.BlockSpec((rows, HIDDEN), blk),                             # pos
        pl.BlockSpec((NUM_LAYERS, 1, HIDDEN), rep3),                   # ln1_g
        pl.BlockSpec((NUM_LAYERS, 1, HIDDEN), rep3),                   # ln1_b
        pl.BlockSpec((NUM_LAYERS * NUM_HEADS, HIDDEN, DIM_HEAD), rep3),  # q_w
        pl.BlockSpec((NUM_LAYERS * NUM_HEADS, HIDDEN, DIM_HEAD), rep3),  # k_w
        pl.BlockSpec((NUM_LAYERS * NUM_HEADS, HIDDEN, DIM_HEAD), rep3),  # v_w
        pl.BlockSpec((NUM_LAYERS * NUM_HEADS, DIM_HEAD, HIDDEN), rep3),  # proj_w
        pl.BlockSpec((NUM_LAYERS, 1, HIDDEN), rep3),                   # proj_b
        pl.BlockSpec((NUM_LAYERS, 1, HIDDEN), rep3),                   # ln2_g
        pl.BlockSpec((NUM_LAYERS, 1, HIDDEN), rep3),                   # ln2_b
        pl.BlockSpec((NUM_LAYERS, HIDDEN, MLP_DIM), rep3),             # fc1_w
        pl.BlockSpec((NUM_LAYERS, 1, MLP_DIM), rep3),                  # fc1_b
        pl.BlockSpec((NUM_LAYERS, MLP_DIM, HIDDEN), rep3),             # fc2_w
        pl.BlockSpec((NUM_LAYERS, 1, HIDDEN), rep3),                   # fc2_b
        pl.BlockSpec((1, HIDDEN), rep2),                               # lnf_g
        pl.BlockSpec((1, HIDDEN), rep2),                               # lnf_b
    ]
    out_specs = pl.BlockSpec((rows, OUT_WIDTH), blk)                   # packed slab

    slab = pl.pallas_call(
        _make_vit_kernel(bblk),
        out_shape=jax.ShapeDtypeStruct((B * L, OUT_WIDTH), jnp.float32),
        grid=(nsteps,),
        in_specs=in_specs,
        out_specs=out_specs,
        compiler_params=pltpu.CompilerParams(
            dimension_semantics=("parallel",)),
    )(
        patches, patch_w, params["patch_b"], pos,
        params["ln1_g"], params["ln1_b"],
        q_w, k_w, v_w,
        proj_w, params["proj_b"],
        params["ln2_g"], params["ln2_b"],
        params["fc1_w"], params["fc1_b"], params["fc2_w"], params["fc2_b"],
        params["lnf_g"], params["lnf_b"],
    )

    # Unpack the lane-dense slab in the wrapper (free relative to kernel).
    hidden_states_out = [
        slab[:, l * HIDDEN:(l + 1) * HIDDEN].reshape(B, L, HIDDEN)
        for l in range(NUM_LAYERS)
    ]
    out = slab[:, NUM_LAYERS * HIDDEN:].reshape(B, L, HIDDEN)
    return out, hidden_states_out


# ---------------------------------------------------------------------------
if __name__ == "__main__":
    key = jax.random.PRNGKey(0)
    kx, kp = jax.random.split(key)
    B = 2
    x = jax.random.normal(
        kx, (B, IN_CHANNELS) + IMG_SIZE, dtype=jnp.float32
    )  # (2, 2, 16, 16, 16), NCDHW like PyTorch

    params = init_params(kp)

    out, hidden_states = jax.jit(vit_forward)(params, x)
    out = jax.block_until_ready(out)
    hidden_states = [jax.block_until_ready(hs) for hs in hidden_states]

    assert out.shape == (B, N_PATCHES, HIDDEN)
    assert len(hidden_states) == NUM_LAYERS
    assert all(hs.shape == (B, N_PATCHES, HIDDEN) for hs in hidden_states)
    assert bool(jnp.all(jnp.isfinite(out)))
    assert all(bool(jnp.all(jnp.isfinite(hs))) for hs in hidden_states)

    print("KERNEL_OK")
</pallas_src>

<mosaic_0001>
module attributes {stable_mosaic.version = 11 : i64} {
  func.func @kernel(%arg0: i32, %arg1: memref<16x1024xbf16, #tpu.memory_space<vmem>>, %arg2: memref<1024x64xbf16, #tpu.memory_space<vmem>>, %arg3: memref<1x64xf32, #tpu.memory_space<vmem>>, %arg4: memref<16x64xf32, #tpu.memory_space<vmem>>, %arg5: memref<2x1x64xf32, #tpu.memory_space<vmem>>, %arg6: memref<2x1x64xf32, #tpu.memory_space<vmem>>, %arg7: memref<8x64x16xf32, #tpu.memory_space<vmem>>, %arg8: memref<8x64x16xf32, #tpu.memory_space<vmem>>, %arg9: memref<8x64x16xf32, #tpu.memory_space<vmem>>, %arg10: memref<8x16x64xf32, #tpu.memory_space<vmem>>, %arg11: memref<2x1x64xf32, #tpu.memory_space<vmem>>, %arg12: memref<2x1x64xf32, #tpu.memory_space<vmem>>, %arg13: memref<2x1x64xf32, #tpu.memory_space<vmem>>, %arg14: memref<2x64x128xf32, #tpu.memory_space<vmem>>, %arg15: memref<2x1x128xf32, #tpu.memory_space<vmem>>, %arg16: memref<2x128x64xf32, #tpu.memory_space<vmem>>, %arg17: memref<2x1x64xf32, #tpu.memory_space<vmem>>, %arg18: memref<1x64xf32, #tpu.memory_space<vmem>>, %arg19: memref<1x64xf32, #tpu.memory_space<vmem>>, %arg20: memref<16x192xf32, #tpu.memory_space<vmem>>) attributes {dimension_semantics = [#tpu.dimension_semantics<parallel>], iteration_bounds = array<i64: 1>, scalar_prefetch = 0 : i64, scratch_operands = 0 : i64, tpu.core_type = #tpu.core_type<tc>, window_params = [{transform_indices = @transform_0, window_bounds = array<i64: 16, 1024>}, {pipeline_mode = #tpu.pipeline_mode<synchronous>, transform_indices = @transform_1, window_bounds = array<i64: 1024, 64>}, {pipeline_mode = #tpu.pipeline_mode<synchronous>, transform_indices = @transform_2, window_bounds = array<i64: 1, 64>}, {transform_indices = @transform_3, window_bounds = array<i64: 16, 64>}, {pipeline_mode = #tpu.pipeline_mode<synchronous>, transform_indices = @transform_4, window_bounds = array<i64: 2, 1, 64>}, {pipeline_mode = #tpu.pipeline_mode<synchronous>, transform_indices = @transform_5, window_bounds = array<i64: 2, 1, 64>}, {pipeline_mode = #tpu.pipeline_mode<synchronous>, transform_indices = @transform_6, window_bounds = array<i64: 8, 64, 16>}, {pipeline_mode = #tpu.pipeline_mode<synchronous>, transform_indices = @transform_7, window_bounds = array<i64: 8, 64, 16>}, {pipeline_mode = #tpu.pipeline_mode<synchronous>, transform_indices = @transform_8, window_bounds = array<i64: 8, 64, 16>}, {pipeline_mode = #tpu.pipeline_mode<synchronous>, transform_indices = @transform_9, window_bounds = array<i64: 8, 16, 64>}, {pipeline_mode = #tpu.pipeline_mode<synchronous>, transform_indices = @transform_10, window_bounds = array<i64: 2, 1, 64>}, {pipeline_mode = #tpu.pipeline_mode<synchronous>, transform_indices = @transform_11, window_bounds = array<i64: 2, 1, 64>}, {pipeline_mode = #tpu.pipeline_mode<synchronous>, transform_indices = @transform_12, window_bounds = array<i64: 2, 1, 64>}, {pipeline_mode = #tpu.pipeline_mode<synchronous>, transform_indices = @transform_13, window_bounds = array<i64: 2, 64, 128>}, {pipeline_mode = #tpu.pipeline_mode<synchronous>, transform_indices = @transform_14, window_bounds = array<i64: 2, 1, 128>}, {pipeline_mode = #tpu.pipeline_mode<synchronous>, transform_indices = @transform_15, window_bounds = array<i64: 2, 128, 64>}, {pipeline_mode = #tpu.pipeline_mode<synchronous>, transform_indices = @transform_16, window_bounds = array<i64: 2, 1, 64>}, {pipeline_mode = #tpu.pipeline_mode<synchronous>, transform_indices = @transform_17, window_bounds = array<i64: 1, 64>}, {pipeline_mode = #tpu.pipeline_mode<synchronous>, transform_indices = @transform_18, window_bounds = array<i64: 1, 64>}, {transform_indices = @transform_19, window_bounds = array<i64: 16, 192>}]} {
    %c0 = arith.constant 0 : index
    %c0_0 = arith.constant 0 : index
    %0 = vector.load %arg1[%c0, %c0_0] : memref<16x1024xbf16, #tpu.memory_space<vmem>>, vector<16x1024xbf16>
    %c0_1 = arith.constant 0 : index
    %c0_2 = arith.constant 0 : index
    %1 = vector.load %arg2[%c0_1, %c0_2] : memref<1024x64xbf16, #tpu.memory_space<vmem>>, vector<1024x64xbf16>
    %cst = arith.constant dense<0.000000e+00> : vector<16x64xf32>
    %2 = tpu.matmul %0, %1, %cst {dimension_numbers = #tpu.dot_dimension_numbers<[1], [0], [0], [1], [0, 0, 1, 1], [], []>} : vector<16x1024xbf16>, vector<1024x64xbf16>, vector<16x64xf32> -> vector<16x64xf32>
    %c0_3 = arith.constant 0 : index
    %c0_4 = arith.constant 0 : index
    %3 = vector.load %arg3[%c0_3, %c0_4] : memref<1x64xf32, #tpu.memory_space<vmem>>, vector<1x64xf32>
    %4 = vector.broadcast %3 : vector<1x64xf32> to vector<16x64xf32>
    %5 = arith.addf %2, %4 : vector<16x64xf32>
    %c0_5 = arith.constant 0 : index
    %c0_6 = arith.constant 0 : index
    %6 = vector.load %arg4[%c0_5, %c0_6] : memref<16x64xf32, #tpu.memory_space<vmem>>, vector<16x64xf32>
    %7 = arith.addf %5, %6 : vector<16x64xf32>
    %c0_7 = arith.constant 0 : index
    %c0_8 = arith.constant 0 : index
    %c0_9 = arith.constant 0 : index
    %8 = vector.load %arg5[%c0_7, %c0_8, %c0_9] : memref<2x1x64xf32, #tpu.memory_space<vmem>>, vector<1x1x64xf32>
    %9 = vector.shape_cast %8 : vector<1x1x64xf32> to vector<1x64xf32>
    %c0_10 = arith.constant 0 : index
    %c0_11 = arith.constant 0 : index
    %c0_12 = arith.constant 0 : index
    %10 = vector.load %arg6[%c0_10, %c0_11, %c0_12] : memref<2x1x64xf32, #tpu.memory_space<vmem>>, vector<1x1x64xf32>
    %11 = vector.shape_cast %10 : vector<1x1x64xf32> to vector<1x64xf32>
    %cst_13 = arith.constant dense<0.000000e+00> : vector<16xf32>
    %12 = vector.multi_reduction <add>, %7, %cst_13 [1] : vector<16x64xf32> to vector<16xf32>
    %13 = vector.shape_cast %12 : vector<16xf32> to vector<16x1xf32>
    %cst_14 = arith.constant 6.400000e+01 : f32
    %14 = vector.broadcast %cst_14 : f32 to vector<16x1xf32>
    %15 = arith.divf %13, %14 : vector<16x1xf32>
    %16 = vector.broadcast %15 : vector<16x1xf32> to vector<16x64xf32>
    %17 = arith.subf %7, %16 : vector<16x64xf32>
    %18 = arith.mulf %17, %17 : vector<16x64xf32>
    %cst_15 = arith.constant dense<0.000000e+00> : vector<16xf32>
    %19 = vector.multi_reduction <add>, %18, %cst_15 [1] : vector<16x64xf32> to vector<16xf32>
    %20 = vector.shape_cast %19 : vector<16xf32> to vector<16x1xf32>
    %cst_16 = arith.constant 6.400000e+01 : f32
    %21 = vector.broadcast %cst_16 : f32 to vector<16x1xf32>
    %22 = arith.divf %20, %21 : vector<16x1xf32>
    %cst_17 = arith.constant 9.99999974E-6 : f32
    %23 = vector.broadcast %cst_17 : f32 to vector<16x1xf32>
    %24 = arith.addf %22, %23 : vector<16x1xf32>
    %25 = math.rsqrt %24 : vector<16x1xf32>
    %26 = vector.broadcast %25 : vector<16x1xf32> to vector<16x64xf32>
    %27 = arith.mulf %17, %26 : vector<16x64xf32>
    %28 = vector.broadcast %9 : vector<1x64xf32> to vector<16x64xf32>
    %29 = arith.mulf %27, %28 : vector<16x64xf32>
    %30 = vector.broadcast %11 : vector<1x64xf32> to vector<16x64xf32>
    %31 = arith.addf %29, %30 : vector<16x64xf32>
    %32 = vector.extract_strided_slice %31 {offsets = [0, 0], sizes = [8, 64], strides = [1, 1]} : vector<16x64xf32> to vector<8x64xf32>
    %c0_18 = arith.constant 0 : index
    %c0_19 = arith.constant 0 : index
    %c0_20 = arith.constant 0 : index
    %33 = vector.load %arg7[%c0_18, %c0_19, %c0_20] : memref<8x64x16xf32, #tpu.memory_space<vmem>>, vector<1x64x16xf32>
    %34 = vector.shape_cast %33 : vector<1x64x16xf32> to vector<64x16xf32>
    %cst_21 = arith.constant dense<0.000000e+00> : vector<8x16xf32>
    %35 = tpu.matmul %32, %34, %cst_21 {dimension_numbers = #tpu.dot_dimension_numbers<[1], [0], [0], [1], [0, 0, 1, 1], [], []>} : vector<8x64xf32>, vector<64x16xf32>, vector<8x16xf32> -> vector<8x16xf32>
    %c0_22 = arith.constant 0 : index
    %c0_23 = arith.constant 0 : index
    %c0_24 = arith.constant 0 : index
    %36 = vector.load %arg8[%c0_22, %c0_23, %c0_24] : memref<8x64x16xf32, #tpu.memory_space<vmem>>, vector<1x64x16xf32>
    %37 = vector.shape_cast %36 : vector<1x64x16xf32> to vector<64x16xf32>
    %cst_25 = arith.constant dense<0.000000e+00> : vector<8x16xf32>
    %38 = tpu.matmul %32, %37, %cst_25 {dimension_numbers = #tpu.dot_dimension_numbers<[1], [0], [0], [1], [0, 0, 1, 1], [], []>} : vector<8x64xf32>, vector<64x16xf32>, vector<8x16xf32> -> vector<8x16xf32>
    %c0_26 = arith.constant 0 : index
    %c0_27 = arith.constant 0 : index
    %c0_28 = arith.constant 0 : index
    %39 = vector.load %arg9[%c0_26, %c0_27, %c0_28] : memref<8x64x16xf32, #tpu.memory_space<vmem>>, vector<1x64x16xf32>
    %40 = vector.shape_cast %39 : vector<1x64x16xf32> to vector<64x16xf32>
    %cst_29 = arith.constant dense<0.000000e+00> : vector<8x16xf32>
    %41 = tpu.matmul %32, %40, %cst_29 {dimension_numbers = #tpu.dot_dimension_numbers<[1], [0], [0], [1], [0, 0, 1, 1], [], []>} : vector<8x64xf32>, vector<64x16xf32>, vector<8x16xf32> -> vector<8x16xf32>
    %cst_30 = arith.constant dense<0.000000e+00> : vector<8x8xf32>
    %42 = tpu.matmul %35, %38, %cst_30 {dimension_numbers = #tpu.dot_dimension_numbers<[1], [1], [0], [0], [0, 0, 1, 0], [], []>} : vector<8x16xf32>, vector<8x16xf32>, vector<8x8xf32> -> vector<8x8xf32>
    %cst_31 = arith.constant dense<0xFF800000> : vector<8xf32>
    %43 = vector.multi_reduction <maximumf>, %42, %cst_31 [1] : vector<8x8xf32> to vector<8xf32>
    %44 = vector.shape_cast %43 : vector<8xf32> to vector<8x1xf32>
    %45 = vector.broadcast %44 : vector<8x1xf32> to vector<8x8xf32>
    %46 = arith.subf %42, %45 : vector<8x8xf32>
    %47 = math.exp %46 : vector<8x8xf32>
    %cst_32 = arith.constant dense<0.000000e+00> : vector<8xf32>
    %48 = vector.multi_reduction <add>, %47, %cst_32 [1] : vector<8x8xf32> to vector<8xf32>
    %49 = vector.shape_cast %48 : vector<8xf32> to vector<8x1xf32>
    %50 = tpu.reciprocal %49 {approx = true} : vector<8x1xf32> -> vector<8x1xf32>
    %51 = vector.broadcast %50 : vector<8x1xf32> to vector<8x8xf32>
    %52 = arith.mulf %47, %51 : vector<8x8xf32>
    %cst_33 = arith.constant dense<0.000000e+00> : vector<8x16xf32>
    %53 = tpu.matmul %52, %41, %cst_33 {dimension_numbers = #tpu.dot_dimension_numbers<[1], [0], [0], [1], [0, 0, 1, 1], [], []>} : vector<8x8xf32>, vector<8x16xf32>, vector<8x16xf32> -> vector<8x16xf32>
    %c0_34 = arith.constant 0 : index
    %c0_35 = arith.constant 0 : index
    %c0_36 = arith.constant 0 : index
    %54 = vector.load %arg10[%c0_34, %c0_35, %c0_36] : memref<8x16x64xf32, #tpu.memory_space<vmem>>, vector<1x16x64xf32>
    %55 = vector.shape_cast %54 : vector<1x16x64xf32> to vector<16x64xf32>
    %cst_37 = arith.constant dense<0.000000e+00> : vector<8x64xf32>
    %56 = tpu.matmul %53, %55, %cst_37 {dimension_numbers = #tpu.dot_dimension_numbers<[1], [0], [0], [1], [0, 0, 1, 1], [], []>} : vector<8x16xf32>, vector<16x64xf32>, vector<8x64xf32> -> vector<8x64xf32>
    %c1 = arith.constant 1 : index
    %c0_38 = arith.constant 0 : index
    %c0_39 = arith.constant 0 : index
    %57 = vector.load %arg7[%c1, %c0_38, %c0_39] : memref<8x64x16xf32, #tpu.memory_space<vmem>>, vector<1x64x16xf32>
    %58 = vector.shape_cast %57 : vector<1x64x16xf32> to vector<64x16xf32>
    %cst_40 = arith.constant dense<0.000000e+00> : vector<8x16xf32>
    %59 = tpu.matmul %32, %58, %cst_40 {dimension_numbers = #tpu.dot_dimension_numbers<[1], [0], [0], [1], [0, 0, 1, 1], [], []>} : vector<8x64xf32>, vector<64x16xf32>, vector<8x16xf32> -> vector<8x16xf32>
    %c1_41 = arith.constant 1 : index
    %c0_42 = arith.constant 0 : index
    %c0_43 = arith.constant 0 : index
    %60 = vector.load %arg8[%c1_41, %c0_42, %c0_43] : memref<8x64x16xf32, #tpu.memory_space<vmem>>, vector<1x64x16xf32>
    %61 = vector.shape_cast %60 : vector<1x64x16xf32> to vector<64x16xf32>
    %cst_44 = arith.constant dense<0.000000e+00> : vector<8x16xf32>
    %62 = tpu.matmul %32, %61, %cst_44 {dimension_numbers = #tpu.dot_dimension_numbers<[1], [0], [0], [1], [0, 0, 1, 1], [], []>} : vector<8x64xf32>, vector<64x16xf32>, vector<8x16xf32> -> vector<8x16xf32>
    %c1_45 = arith.constant 1 : index
    %c0_46 = arith.constant 0 : index
    %c0_47 = arith.constant 0 : index
    %63 = vector.load %arg9[%c1_45, %c0_46, %c0_47] : memref<8x64x16xf32, #tpu.memory_space<vmem>>, vector<1x64x16xf32>
    %64 = vector.shape_cast %63 : vector<1x64x16xf32> to vector<64x16xf32>
    %cst_48 = arith.constant dense<0.000000e+00> : vector<8x16xf32>
    %65 = tpu.matmul %32, %64, %cst_48 {dimension_numbers = #tpu.dot_dimension_numbers<[1], [0], [0], [1], [0, 0, 1, 1], [], []>} : vector<8x64xf32>, vector<64x16xf32>, vector<8x16xf32> -> vector<8x16xf32>
    %cst_49 = arith.constant dense<0.000000e+00> : vector<8x8xf32>
    %66 = tpu.matmul %59, %62, %cst_49 {dimension_numbers = #tpu.dot_dimension_numbers<[1], [1], [0], [0], [0, 0, 1, 0], [], []>} : vector<8x16xf32>, vector<8x16xf32>, vector<8x8xf32> -> vector<8x8xf32>
    %cst_50 = arith.constant dense<0xFF800000> : vector<8xf32>
    %67 = vector.multi_reduction <maximumf>, %66, %cst_50 [1] : vector<8x8xf32> to vector<8xf32>
    %68 = vector.shape_cast %67 : vector<8xf32> to vector<8x1xf32>
    %69 = vector.broadcast %68 : vector<8x1xf32> to vector<8x8xf32>
    %70 = arith.subf %66, %69 : vector<8x8xf32>
    %71 = math.exp %70 : vector<8x8xf32>
    %cst_51 = arith.constant dense<0.000000e+00> : vector<8xf32>
    %72 = vector.multi_reduction <add>, %71, %cst_51 [1] : vector<8x8xf32> to vector<8xf32>
    %73 = vector.shape_cast %72 : vector<8xf32> to vector<8x1xf32>
    %74 = tpu.reciprocal %73 {approx = true} : vector<8x1xf32> -> vector<8x1xf32>
    %75 = vector.broadcast %74 : vector<8x1xf32> to vector<8x8xf32>
    %76 = arith.mulf %71, %75 : vector<8x8xf32>
    %cst_52 = arith.constant dense<0.000000e+00> : vector<8x16xf32>
    %77 = tpu.matmul %76, %65, %cst_52 {dimension_numbers = #tpu.dot_dimension_numbers<[1], [0], [0], [1], [0, 0, 1, 1], [], []>} : vector<8x8xf32>, vector<8x16xf32>, vector<8x16xf32> -> vector<8x16xf32>
    %c1_53 = arith.constant 1 : index
    %c0_54 = arith.constant 0 : index
    %c0_55 = arith.constant 0 : index
    %78 = vector.load %arg10[%c1_53, %c0_54, %c0_55] : memref<8x16x64xf32, #tpu.memory_space<vmem>>, vector<1x16x64xf32>
    %79 = vector.shape_cast %78 : vector<1x16x64xf32> to vector<16x64xf32>
    %cst_56 = arith.constant dense<0.000000e+00> : vector<8x64xf32>
    %80 = tpu.matmul %77, %79, %cst_56 {dimension_numbers = #tpu.dot_dimension_numbers<[1], [0], [0], [1], [0, 0, 1, 1], [], []>} : vector<8x16xf32>, vector<16x64xf32>, vector<8x64xf32> -> vector<8x64xf32>
    %81 = arith.addf %56, %80 : vector<8x64xf32>
    %c2 = arith.constant 2 : index
    %c0_57 = arith.constant 0 : index
    %c0_58 = arith.constant 0 : index
    %82 = vector.load %arg7[%c2, %c0_57, %c0_58] : memref<8x64x16xf32, #tpu.memory_space<vmem>>, vector<1x64x16xf32>
    %83 = vector.shape_cast %82 : vector<1x64x16xf32> to vector<64x16xf32>
    %cst_59 = arith.constant dense<0.000000e+00> : vector<8x16xf32>
    %84 = tpu.matmul %32, %83, %cst_59 {dimension_numbers = #tpu.dot_dimension_numbers<[1], [0], [0], [1], [0, 0, 1, 1], [], []>} : vector<8x64xf32>, vector<64x16xf32>, vector<8x16xf32> -> vector<8x16xf32>
    %c2_60 = arith.constant 2 : index
    %c0_61 = arith.constant 0 : index
    %c0_62 = arith.constant 0 : index
    %85 = vector.load %arg8[%c2_60, %c0_61, %c0_62] : memref<8x64x16xf32, #tpu.memory_space<vmem>>, vector<1x64x16xf32>
    %86 = vector.shape_cast %85 : vector<1x64x16xf32> to vector<64x16xf32>
    %cst_63 = arith.constant dense<0.000000e+00> : vector<8x16xf32>
    %87 = tpu.matmul %32, %86, %cst_63 {dimension_numbers = #tpu.dot_dimension_numbers<[1], [0], [0], [1], [0, 0, 1, 1], [], []>} : vector<8x64xf32>, vector<64x16xf32>, vector<8x16xf32> -> vector<8x16xf32>
    %c2_64 = arith.constant 2 : index
    %c0_65 = arith.constant 0 : index
    %c0_66 = arith.constant 0 : index
    %88 = vector.load %arg9[%c2_64, %c0_65, %c0_66] : memref<8x64x16xf32, #tpu.memory_space<vmem>>, vector<1x64x16xf32>
    %89 = vector.shape_cast %88 : vector<1x64x16xf32> to vector<64x16xf32>
    %cst_67 = arith.constant dense<0.000000e+00> : vector<8x16xf32>
    %90 = tpu.matmul %32, %89, %cst_67 {dimension_numbers = #tpu.dot_dimension_numbers<[1], [0], [0], [1], [0, 0, 1, 1], [], []>} : vector<8x64xf32>, vector<64x16xf32>, vector<8x16xf32> -> vector<8x16xf32>
    %cst_68 = arith.constant dense<0.000000e+00> : vector<8x8xf32>
    %91 = tpu.matmul %84, %87, %cst_68 {dimension_numbers = #tpu.dot_dimension_numbers<[1], [1], [0], [0], [0, 0, 1, 0], [], []>} : vector<8x16xf32>, vector<8x16xf32>, vector<8x8xf32> -> vector<8x8xf32>
    %cst_69 = arith.constant dense<0xFF800000> : vector<8xf32>
    %92 = vector.multi_reduction <maximumf>, %91, %cst_69 [1] : vector<8x8xf32> to vector<8xf32>
    %93 = vector.shape_cast %92 : vector<8xf32> to vector<8x1xf32>
    %94 = vector.broadcast %93 : vector<8x1xf32> to vector<8x8xf32>
    %95 = arith.subf %91, %94 : vector<8x8xf32>
    %96 = math.exp %95 : vector<8x8xf32>
    %cst_70 = arith.constant dense<0.000000e+00> : vector<8xf32>
    %97 = vector.multi_reduction <add>, %96, %cst_70 [1] : vector<8x8xf32> to vector<8xf32>
    %98 = vector.shape_cast %97 : vector<8xf32> to vector<8x1xf32>
    %99 = tpu.reciprocal %98 {approx = true} : vector<8x1xf32> -> vector<8x1xf32>
    %100 = vector.broadcast %99 : vector<8x1xf32> to vector<8x8xf32>
    %101 = arith.mulf %96, %100 : vector<8x8xf32>
    %cst_71 = arith.constant dense<0.000000e+00> : vector<8x16xf32>
    %102 = tpu.matmul %101, %90, %cst_71 {dimension_numbers = #tpu.dot_dimension_numbers<[1], [0], [0], [1], [0, 0, 1, 1], [], []>} : vector<8x8xf32>, vector<8x16xf32>, vector<8x16xf32> -> vector<8x16xf32>
    %c2_72 = arith.constant 2 : index
    %c0_73 = arith.constant 0 : index
    %c0_74 = arith.constant 0 : index
    %103 = vector.load %arg10[%c2_72, %c0_73, %c0_74] : memref<8x16x64xf32, #tpu.memory_space<vmem>>, vector<1x16x64xf32>
    %104 = vector.shape_cast %103 : vector<1x16x64xf32> to vector<16x64xf32>
    %cst_75 = arith.constant dense<0.000000e+00> : vector<8x64xf32>
    %105 = tpu.matmul %102, %104, %cst_75 {dimension_numbers = #tpu.dot_dimension_numbers<[1], [0], [0], [1], [0, 0, 1, 1], [], []>} : vector<8x16xf32>, vector<16x64xf32>, vector<8x64xf32> -> vector<8x64xf32>
    %106 = arith.addf %81, %105 : vector<8x64xf32>
    %c3 = arith.constant 3 : index
    %c0_76 = arith.constant 0 : index
    %c0_77 = arith.constant 0 : index
    %107 = vector.load %arg7[%c3, %c0_76, %c0_77] : memref<8x64x16xf32, #tpu.memory_space<vmem>>, vector<1x64x16xf32>
    %108 = vector.shape_cast %107 : vector<1x64x16xf32> to vector<64x16xf32>
    %cst_78 = arith.constant dense<0.000000e+00> : vector<8x16xf32>
    %109 = tpu.matmul %32, %108, %cst_78 {dimension_numbers = #tpu.dot_dimension_numbers<[1], [0], [0], [1], [0, 0, 1, 1], [], []>} : vector<8x64xf32>, vector<64x16xf32>, vector<8x16xf32> -> vector<8x16xf32>
    %c3_79 = arith.constant 3 : index
    %c0_80 = arith.constant 0 : index
    %c0_81 = arith.constant 0 : index
    %110 = vector.load %arg8[%c3_79, %c0_80, %c0_81] : memref<8x64x16xf32, #tpu.memory_space<vmem>>, vector<1x64x16xf32>
    %111 = vector.shape_cast %110 : vector<1x64x16xf32> to vector<64x16xf32>
    %cst_82 = arith.constant dense<0.000000e+00> : vector<8x16xf32>
    %112 = tpu.matmul %32, %111, %cst_82 {dimension_numbers = #tpu.dot_dimension_numbers<[1], [0], [0], [1], [0, 0, 1, 1], [], []>} : vector<8x64xf32>, vector<64x16xf32>, vector<8x16xf32> -> vector<8x16xf32>
    %c3_83 = arith.constant 3 : index
    %c0_84 = arith.constant 0 : index
    %c0_85 = arith.constant 0 : index
    %113 = vector.load %arg9[%c3_83, %c0_84, %c0_85] : memref<8x64x16xf32, #tpu.memory_space<vmem>>, vector<1x64x16xf32>
    %114 = vector.shape_cast %113 : vector<1x64x16xf32> to vector<64x16xf32>
    %cst_86 = arith.constant dense<0.000000e+00> : vector<8x16xf32>
    %115 = tpu.matmul %32, %114, %cst_86 {dimension_numbers = #tpu.dot_dimension_numbers<[1], [0], [0], [1], [0, 0, 1, 1], [], []>} : vector<8x64xf32>, vector<64x16xf32>, vector<8x16xf32> -> vector<8x16xf32>
    %cst_87 = arith.constant dense<0.000000e+00> : vector<8x8xf32>
    %116 = tpu.matmul %109, %112, %cst_87 {dimension_numbers = #tpu.dot_dimension_numbers<[1], [1], [0], [0], [0, 0, 1, 0], [], []>} : vector<8x16xf32>, vector<8x16xf32>, vector<8x8xf32> -> vector<8x8xf32>
    %cst_88 = arith.constant dense<0xFF800000> : vector<8xf32>
    %117 = vector.multi_reduction <maximumf>, %116, %cst_88 [1] : vector<8x8xf32> to vector<8xf32>
    %118 = vector.shape_cast %117 : vector<8xf32> to vector<8x1xf32>
    %119 = vector.broadcast %118 : vector<8x1xf32> to vector<8x8xf32>
    %120 = arith.subf %116, %119 : vector<8x8xf32>
    %121 = math.exp %120 : vector<8x8xf32>
    %cst_89 = arith.constant dense<0.000000e+00> : vector<8xf32>
    %122 = vector.multi_reduction <add>, %121, %cst_89 [1] : vector<8x8xf32> to vector<8xf32>
    %123 = vector.shape_cast %122 : vector<8xf32> to vector<8x1xf32>
    %124 = tpu.reciprocal %123 {approx = true} : vector<8x1xf32> -> vector<8x1xf32>
    %125 = vector.broadcast %124 : vector<8x1xf32> to vector<8x8xf32>
    %126 = arith.mulf %121, %125 : vector<8x8xf32>
    %cst_90 = arith.constant dense<0.000000e+00> : vector<8x16xf32>
    %127 = tpu.matmul %126, %115, %cst_90 {dimension_numbers = #tpu.dot_dimension_numbers<[1], [0], [0], [1], [0, 0, 1, 1], [], []>} : vector<8x8xf32>, vector<8x16xf32>, vector<8x16xf32> -> vector<8x16xf32>
    %c3_91 = arith.constant 3 : index
    %c0_92 = arith.constant 0 : index
    %c0_93 = arith.constant 0 : index
    %128 = vector.load %arg10[%c3_91, %c0_92, %c0_93] : memref<8x16x64xf32, #tpu.memory_space<vmem>>, vector<1x16x64xf32>
    %129 = vector.shape_cast %128 : vector<1x16x64xf32> to vector<16x64xf32>
    %cst_94 = arith.constant dense<0.000000e+00> : vector<8x64xf32>
    %130 = tpu.matmul %127, %129, %cst_94 {dimension_numbers = #tpu.dot_dimension_numbers<[1], [0], [0], [1], [0, 0, 1, 1], [], []>} : vector<8x16xf32>, vector<16x64xf32>, vector<8x64xf32> -> vector<8x64xf32>
    %131 = arith.addf %106, %130 : vector<8x64xf32>
    %132 = vector.extract_strided_slice %31 {offsets = [8, 0], sizes = [8, 64], strides = [1, 1]} : vector<16x64xf32> to vector<8x64xf32>
    %c0_95 = arith.constant 0 : index
    %c0_96 = arith.constant 0 : index
    %c0_97 = arith.constant 0 : index
    %133 = vector.load %arg7[%c0_95, %c0_96, %c0_97] : memref<8x64x16xf32, #tpu.memory_space<vmem>>, vector<1x64x16xf32>
    %134 = vector.shape_cast %133 : vector<1x64x16xf32> to vector<64x16xf32>
    %cst_98 = arith.constant dense<0.000000e+00> : vector<8x16xf32>
    %135 = tpu.matmul %132, %134, %cst_98 {dimension_numbers = #tpu.dot_dimension_numbers<[1], [0], [0], [1], [0, 0, 1, 1], [], []>} : vector<8x64xf32>, vector<64x16xf32>, vector<8x16xf32> -> vector<8x16xf32>
    %c0_99 = arith.constant 0 : index
    %c0_100 = arith.constant 0 : index
    %c0_101 = arith.constant 0 : index
    %136 = vector.load %arg8[%c0_99, %c0_100, %c0_101] : memref<8x64x16xf32, #tpu.memory_space<vmem>>, vector<1x64x16xf32>
    %137 = vector.shape_cast %136 : vector<1x64x16xf32> to vector<64x16xf32>
    %cst_102 = arith.constant dense<0.000000e+00> : vector<8x16xf32>
    %138 = tpu.matmul %132, %137, %cst_102 {dimension_numbers = #tpu.dot_dimension_numbers<[1], [0], [0], [1], [0, 0, 1, 1], [], []>} : vector<8x64xf32>, vector<64x16xf32>, vector<8x16xf32> -> vector<8x16xf32>
    %c0_103 = arith.constant 0 : index
    %c0_104 = arith.constant 0 : index
    %c0_105 = arith.constant 0 : index
    %139 = vector.load %arg9[%c0_103, %c0_104, %c0_105] : memref<8x64x16xf32, #tpu.memory_space<vmem>>, vector<1x64x16xf32>
    %140 = vector.shape_cast %139 : vector<1x64x16xf32> to vector<64x16xf32>
    %cst_106 = arith.constant dense<0.000000e+00> : vector<8x16xf32>
    %141 = tpu.matmul %132, %140, %cst_106 {dimension_numbers = #tpu.dot_dimension_numbers<[1], [0], [0], [1], [0, 0, 1, 1], [], []>} : vector<8x64xf32>, vector<64x16xf32>, vector<8x16xf32> -> vector<8x16xf32>
    %cst_107 = arith.constant dense<0.000000e+00> : vector<8x8xf32>
    %142 = tpu.matmul %135, %138, %cst_107 {dimension_numbers = #tpu.dot_dimension_numbers<[1], [1], [0], [0], [0, 0, 1, 0], [], []>} : vector<8x16xf32>, vector<8x16xf32>, vector<8x8xf32> -> vector<8x8xf32>
    %cst_108 = arith.constant dense<0xFF800000> : vector<8xf32>
    %143 = vector.multi_reduction <maximumf>, %142, %cst_108 [1] : vector<8x8xf32> to vector<8xf32>
    %144 = vector.shape_cast %143 : vector<8xf32> to vector<8x1xf32>
    %145 = vector.broadcast %144 : vector<8x1xf32> to vector<8x8xf32>
    %146 = arith.subf %142, %145 : vector<8x8xf32>
    %147 = math.exp %146 : vector<8x8xf32>
    %cst_109 = arith.constant dense<0.000000e+00> : vector<8xf32>
    %148 = vector.multi_reduction <add>, %147, %cst_109 [1] : vector<8x8xf32> to vector<8xf32>
    %149 = vector.shape_cast %148 : vector<8xf32> to vector<8x1xf32>
    %150 = tpu.reciprocal %149 {approx = true} : vector<8x1xf32> -> vector<8x1xf32>
    %151 = vector.broadcast %150 : vector<8x1xf32> to vector<8x8xf32>
    %152 = arith.mulf %147, %151 : vector<8x8xf32>
    %cst_110 = arith.constant dense<0.000000e+00> : vector<8x16xf32>
    %153 = tpu.matmul %152, %141, %cst_110 {dimension_numbers = #tpu.dot_dimension_numbers<[1], [0], [0], [1], [0, 0, 1, 1], [], []>} : vector<8x8xf32>, vector<8x16xf32>, vector<8x16xf32> -> vector<8x16xf32>
    %c0_111 = arith.constant 0 : index
    %c0_112 = arith.constant 0 : index
    %c0_113 = arith.constant 0 : index
    %154 = vector.load %arg10[%c0_111, %c0_112, %c0_113] : memref<8x16x64xf32, #tpu.memory_space<vmem>>, vector<1x16x64xf32>
    %155 = vector.shape_cast %154 : vector<1x16x64xf32> to vector<16x64xf32>
    %cst_114 = arith.constant dense<0.000000e+00> : vector<8x64xf32>
    %156 = tpu.matmul %153, %155, %cst_114 {dimension_numbers = #tpu.dot_dimension_numbers<[1], [0], [0], [1], [0, 0, 1, 1], [], []>} : vector<8x16xf32>, vector<16x64xf32>, vector<8x64xf32> -> vector<8x64xf32>
    %c1_115 = arith.constant 1 : index
    %c0_116 = arith.constant 0 : index
    %c0_117 = arith.constant 0 : index
    %157 = vector.load %arg7[%c1_115, %c0_116, %c0_117] : memref<8x64x16xf32, #tpu.memory_space<vmem>>, vector<1x64x16xf32>
    %158 = vector.shape_cast %157 : vector<1x64x16xf32> to vector<64x16xf32>
    %cst_118 = arith.constant dense<0.000000e+00> : vector<8x16xf32>
    %159 = tpu.matmul %132, %158, %cst_118 {dimension_numbers = #tpu.dot_dimension_numbers<[1], [0], [0], [1], [0, 0, 1, 1], [], []>} : vector<8x64xf32>, vector<64x16xf32>, vector<8x16xf32> -> vector<8x16xf32>
    %c1_119 = arith.constant 1 : index
    %c0_120 = arith.constant 0 : index
    %c0_121 = arith.constant 0 : index
    %160 = vector.load %arg8[%c1_119, %c0_120, %c0_121] : memref<8x64x16xf32, #tpu.memory_space<vmem>>, vector<1x64x16xf32>
    %161 = vector.shape_cast %160 : vector<1x64x16xf32> to vector<64x16xf32>
    %cst_122 = arith.constant dense<0.000000e+00> : vector<8x16xf32>
    %162 = tpu.matmul %132, %161, %cst_122 {dimension_numbers = #tpu.dot_dimension_numbers<[1], [0], [0], [1], [0, 0, 1, 1], [], []>} : vector<8x64xf32>, vector<64x16xf32>, vector<8x16xf32> -> vector<8x16xf32>
    %c1_123 = arith.constant 1 : index
    %c0_124 = arith.constant 0 : index
    %c0_125 = arith.constant 0 : index
    %163 = vector.load %arg9[%c1_123, %c0_124, %c0_125] : memref<8x64x16xf32, #tpu.memory_space<vmem>>, vector<1x64x16xf32>
    %164 = vector.shape_cast %163 : vector<1x64x16xf32> to vector<64x16xf32>
    %cst_126 = arith.constant dense<0.000000e+00> : vector<8x16xf32>
    %165 = tpu.matmul %132, %164, %cst_126 {dimension_numbers = #tpu.dot_dimension_numbers<[1], [0], [0], [1], [0, 0, 1, 1], [], []>} : vector<8x64xf32>, vector<64x16xf32>, vector<8x16xf32> -> vector<8x16xf32>
    %cst_127 = arith.constant dense<0.000000e+00> : vector<8x8xf32>
    %166 = tpu.matmul %159, %162, %cst_127 {dimension_numbers = #tpu.dot_dimension_numbers<[1], [1], [0], [0], [0, 0, 1, 0], [], []>} : vector<8x16xf32>, vector<8x16xf32>, vector<8x8xf32> -> vector<8x8xf32>
    %cst_128 = arith.constant dense<0xFF800000> : vector<8xf32>
    %167 = vector.multi_reduction <maximumf>, %166, %cst_128 [1] : vector<8x8xf32> to vector<8xf32>
    %168 = vector.shape_cast %167 : vector<8xf32> to vector<8x1xf32>
    %169 = vector.broadcast %168 : vector<8x1xf32> to vector<8x8xf32>
    %170 = arith.subf %166, %169 : vector<8x8xf32>
    %171 = math.exp %170 : vector<8x8xf32>
    %cst_129 = arith.constant dense<0.000000e+00> : vector<8xf32>
    %172 = vector.multi_reduction <add>, %171, %cst_129 [1] : vector<8x8xf32> to vector<8xf32>
    %173 = vector.shape_cast %172 : vector<8xf32> to vector<8x1xf32>
    %174 = tpu.reciprocal %173 {approx = true} : vector<8x1xf32> -> vector<8x1xf32>
    %175 = vector.broadcast %174 : vector<8x1xf32> to vector<8x8xf32>
    %176 = arith.mulf %171, %175 : vector<8x8xf32>
    %cst_130 = arith.constant dense<0.000000e+00> : vector<8x16xf32>
    %177 = tpu.matmul %176, %165, %cst_130 {dimension_numbers = #tpu.dot_dimension_numbers<[1], [0], [0], [1], [0, 0, 1, 1], [], []>} : vector<8x8xf32>, vector<8x16xf32>, vector<8x16xf32> -> vector<8x16xf32>
    %c1_131 = arith.constant 1 : index
    %c0_132 = arith.constant 0 : index
    %c0_133 = arith.constant 0 : index
    %178 = vector.load %arg10[%c1_131, %c0_132, %c0_133] : memref<8x16x64xf32, #tpu.memory_space<vmem>>, vector<1x16x64xf32>
    %179 = vector.shape_cast %178 : vector<1x16x64xf32> to vector<16x64xf32>
    %cst_134 = arith.constant dense<0.000000e+00> : vector<8x64xf32>
    %180 = tpu.matmul %177, %179, %cst_134 {dimension_numbers = #tpu.dot_dimension_numbers<[1], [0], [0], [1], [0, 0, 1, 1], [], []>} : vector<8x16xf32>, vector<16x64xf32>, vector<8x64xf32> -> vector<8x64xf32>
    %181 = arith.addf %156, %180 : vector<8x64xf32>
    %c2_135 = arith.constant 2 : index
    %c0_136 = arith.constant 0 : index
    %c0_137 = arith.constant 0 : index
    %182 = vector.load %arg7[%c2_135, %c0_136, %c0_137] : memref<8x64x16xf32, #tpu.memory_space<vmem>>, vector<1x64x16xf32>
    %183 = vector.shape_cast %182 : vector<1x64x16xf32> to vector<64x16xf32>
    %cst_138 = arith.constant dense<0.000000e+00> : vector<8x16xf32>
    %184 = tpu.matmul %132, %183, %cst_138 {dimension_numbers = #tpu.dot_dimension_numbers<[1], [0], [0], [1], [0, 0, 1, 1], [], []>} : vector<8x64xf32>, vector<64x16xf32>, vector<8x16xf32> -> vector<8x16xf32>
    %c2_139 = arith.constant 2 : index
    %c0_140 = arith.constant 0 : index
    %c0_141 = arith.constant 0 : index
    %185 = vector.load %arg8[%c2_139, %c0_140, %c0_141] : memref<8x64x16xf32, #tpu.memory_space<vmem>>, vector<1x64x16xf32>
    %186 = vector.shape_cast %185 : vector<1x64x16xf32> to vector<64x16xf32>
    %cst_142 = arith.constant dense<0.000000e+00> : vector<8x16xf32>
    %187 = tpu.matmul %132, %186, %cst_142 {dimension_numbers = #tpu.dot_dimension_numbers<[1], [0], [0], [1], [0, 0, 1, 1], [], []>} : vector<8x64xf32>, vector<64x16xf32>, vector<8x16xf32> -> vector<8x16xf32>
    %c2_143 = arith.constant 2 : index
    %c0_144 = arith.constant 0 : index
    %c0_145 = arith.constant 0 : index
    %188 = vector.load %arg9[%c2_143, %c0_144, %c0_145] : memref<8x64x16xf32, #tpu.memory_space<vmem>>, vector<1x64x16xf32>
    %189 = vector.shape_cast %188 : vector<1x64x16xf32> to vector<64x16xf32>
    %cst_146 = arith.constant dense<0.000000e+00> : vector<8x16xf32>
    %190 = tpu.matmul %132, %189, %cst_146 {dimension_numbers = #tpu.dot_dimension_numbers<[1], [0], [0], [1], [0, 0, 1, 1], [], []>} : vector<8x64xf32>, vector<64x16xf32>, vector<8x16xf32> -> vector<8x16xf32>
    %cst_147 = arith.constant dense<0.000000e+00> : vector<8x8xf32>
    %191 = tpu.matmul %184, %187, %cst_147 {dimension_numbers = #tpu.dot_dimension_numbers<[1], [1], [0], [0], [0, 0, 1, 0], [], []>} : vector<8x16xf32>, vector<8x16xf32>, vector<8x8xf32> -> vector<8x8xf32>
    %cst_148 = arith.constant dense<0xFF800000> : vector<8xf32>
    %192 = vector.multi_reduction <maximumf>, %191, %cst_148 [1] : vector<8x8xf32> to vector<8xf32>
    %193 = vector.shape_cast %192 : vector<8xf32> to vector<8x1xf32>
    %194 = vector.broadcast %193 : vector<8x1xf32> to vector<8x8xf32>
    %195 = arith.subf %191, %194 : vector<8x8xf32>
    %196 = math.exp %195 : vector<8x8xf32>
    %cst_149 = arith.constant dense<0.000000e+00> : vector<8xf32>
    %197 = vector.multi_reduction <add>, %196, %cst_149 [1] : vector<8x8xf32> to vector<8xf32>
    %198 = vector.shape_cast %197 : vector<8xf32> to vector<8x1xf32>
    %199 = tpu.reciprocal %198 {approx = true} : vector<8x1xf32> -> vector<8x1xf32>
    %200 = vector.broadcast %199 : vector<8x1xf32> to vector<8x8xf32>
    %201 = arith.mulf %196, %200 : vector<8x8xf32>
    %cst_150 = arith.constant dense<0.000000e+00> : vector<8x16xf32>
    %202 = tpu.matmul %201, %190, %cst_150 {dimension_numbers = #tpu.dot_dimension_numbers<[1], [0], [0], [1], [0, 0, 1, 1], [], []>} : vector<8x8xf32>, vector<8x16xf32>, vector<8x16xf32> -> vector<8x16xf32>
    %c2_151 = arith.constant 2 : index
    %c0_152 = arith.constant 0 : index
    %c0_153 = arith.constant 0 : index
    %203 = vector.load %arg10[%c2_151, %c0_152, %c0_153] : memref<8x16x64xf32, #tpu.memory_space<vmem>>, vector<1x16x64xf32>
    %204 = vector.shape_cast %203 : vector<1x16x64xf32> to vector<16x64xf32>
    %cst_154 = arith.constant dense<0.000000e+00> : vector<8x64xf32>
    %205 = tpu.matmul %202, %204, %cst_154 {dimension_numbers = #tpu.dot_dimension_numbers<[1], [0], [0], [1], [0, 0, 1, 1], [], []>} : vector<8x16xf32>, vector<16x64xf32>, vector<8x64xf32> -> vector<8x64xf32>
    %206 = arith.addf %181, %205 : vector<8x64xf32>
    %c3_155 = arith.constant 3 : index
    %c0_156 = arith.constant 0 : index
    %c0_157 = arith.constant 0 : index
    %207 = vector.load %arg7[%c3_155, %c0_156, %c0_157] : memref<8x64x16xf32, #tpu.memory_space<vmem>>, vector<1x64x16xf32>
    %208 = vector.shape_cast %207 : vector<1x64x16xf32> to vector<64x16xf32>
    %cst_158 = arith.constant dense<0.000000e+00> : vector<8x16xf32>
    %209 = tpu.matmul %132, %208, %cst_158 {dimension_numbers = #tpu.dot_dimension_numbers<[1], [0], [0], [1], [0, 0, 1, 1], [], []>} : vector<8x64xf32>, vector<64x16xf32>, vector<8x16xf32> -> vector<8x16xf32>
    %c3_159 = arith.constant 3 : index
    %c0_160 = arith.constant 0 : index
    %c0_161 = arith.constant 0 : index
    %210 = vector.load %arg8[%c3_159, %c0_160, %c0_161] : memref<8x64x16xf32, #tpu.memory_space<vmem>>, vector<1x64x16xf32>
    %211 = vector.shape_cast %210 : vector<1x64x16xf32> to vector<64x16xf32>
    %cst_162 = arith.constant dense<0.000000e+00> : vector<8x16xf32>
    %212 = tpu.matmul %132, %211, %cst_162 {dimension_numbers = #tpu.dot_dimension_numbers<[1], [0], [0], [1], [0, 0, 1, 1], [], []>} : vector<8x64xf32>, vector<64x16xf32>, vector<8x16xf32> -> vector<8x16xf32>
    %c3_163 = arith.constant 3 : index
    %c0_164 = arith.constant 0 : index
    %c0_165 = arith.constant 0 : index
    %213 = vector.load %arg9[%c3_163, %c0_164, %c0_165] : memref<8x64x16xf32, #tpu.memory_space<vmem>>, vector<1x64x16xf32>
    %214 = vector.shape_cast %213 : vector<1x64x16xf32> to vector<64x16xf32>
    %cst_166 = arith.constant dense<0.000000e+00> : vector<8x16xf32>
    %215 = tpu.matmul %132, %214, %cst_166 {dimension_numbers = #tpu.dot_dimension_numbers<[1], [0], [0], [1], [0, 0, 1, 1], [], []>} : vector<8x64xf32>, vector<64x16xf32>, vector<8x16xf32> -> vector<8x16xf32>
    %cst_167 = arith.constant dense<0.000000e+00> : vector<8x8xf32>
    %216 = tpu.matmul %209, %212, %cst_167 {dimension_numbers = #tpu.dot_dimension_numbers<[1], [1], [0], [0], [0, 0, 1, 0], [], []>} : vector<8x16xf32>, vector<8x16xf32>, vector<8x8xf32> -> vector<8x8xf32>
    %cst_168 = arith.constant dense<0xFF800000> : vector<8xf32>
    %217 = vector.multi_reduction <maximumf>, %216, %cst_168 [1] : vector<8x8xf32> to vector<8xf32>
    %218 = vector.shape_cast %217 : vector<8xf32> to vector<8x1xf32>
    %219 = vector.broadcast %218 : vector<8x1xf32> to vector<8x8xf32>
    %220 = arith.subf %216, %219 : vector<8x8xf32>
    %221 = math.exp %220 : vector<8x8xf32>
    %cst_169 = arith.constant dense<0.000000e+00> : vector<8xf32>
    %222 = vector.multi_reduction <add>, %221, %cst_169 [1] : vector<8x8xf32> to vector<8xf32>
    %223 = vector.shape_cast %222 : vector<8xf32> to vector<8x1xf32>
    %224 = tpu.reciprocal %223 {approx = true} : vector<8x1xf32> -> vector<8x1xf32>
    %225 = vector.broadcast %224 : vector<8x1xf32> to vector<8x8xf32>
    %226 = arith.mulf %221, %225 : vector<8x8xf32>
    %cst_170 = arith.constant dense<0.000000e+00> : vector<8x16xf32>
    %227 = tpu.matmul %226, %215, %cst_170 {dimension_numbers = #tpu.dot_dimension_numbers<[1], [0], [0], [1], [0, 0, 1, 1], [], []>} : vector<8x8xf32>, vector<8x16xf32>, vector<8x16xf32> -> vector<8x16xf32>
    %c3_171 = arith.constant 3 : index
    %c0_172 = arith.constant 0 : index
    %c0_173 = arith.constant 0 : index
    %228 = vector.load %arg10[%c3_171, %c0_172, %c0_173] : memref<8x16x64xf32, #tpu.memory_space<vmem>>, vector<1x16x64xf32>
    %229 = vector.shape_cast %228 : vector<1x16x64xf32> to vector<16x64xf32>
    %cst_174 = arith.constant dense<0.000000e+00> : vector<8x64xf32>
    %230 = tpu.matmul %227, %229, %cst_174 {dimension_numbers = #tpu.dot_dimension_numbers<[1], [0], [0], [1], [0, 0, 1, 1], [], []>} : vector<8x16xf32>, vector<16x64xf32>, vector<8x64xf32> -> vector<8x64xf32>
    %231 = arith.addf %206, %230 : vector<8x64xf32>
    %232 = tpu.concatenate %131, %231 in 0 : vector<8x64xf32>, vector<8x64xf32> -> vector<16x64xf32>
    %233 = arith.addf %7, %232 : vector<16x64xf32>
    %c0_175 = arith.constant 0 : index
    %c0_176 = arith.constant 0 : index
    %c0_177 = arith.constant 0 : index
    %234 = vector.load %arg11[%c0_175, %c0_176, %c0_177] : memref<2x1x64xf32, #tpu.memory_space<vmem>>, vector<1x1x64xf32>
    %235 = vector.shape_cast %234 : vector<1x1x64xf32> to vector<1x64xf32>
    %236 = vector.broadcast %235 : vector<1x64xf32> to vector<16x64xf32>
    %237 = arith.addf %233, %236 : vector<16x64xf32>
    %c0_178 = arith.constant 0 : index
    %c0_179 = arith.constant 0 : index
    %c0_180 = arith.constant 0 : index
    %238 = vector.load %arg12[%c0_178, %c0_179, %c0_180] : memref<2x1x64xf32, #tpu.memory_space<vmem>>, vector<1x1x64xf32>
    %239 = vector.shape_cast %238 : vector<1x1x64xf32> to vector<1x64xf32>
    %c0_181 = arith.constant 0 : index
    %c0_182 = arith.constant 0 : index
    %c0_183 = arith.constant 0 : index
    %240 = vector.load %arg13[%c0_181, %c0_182, %c0_183] : memref<2x1x64xf32, #tpu.memory_space<vmem>>, vector<1x1x64xf32>
    %241 = vector.shape_cast %240 : vector<1x1x64xf32> to vector<1x64xf32>
    %cst_184 = arith.constant dense<0.000000e+00> : vector<16xf32>
    %242 = vector.multi_reduction <add>, %237, %cst_184 [1] : vector<16x64xf32> to vector<16xf32>
    %243 = vector.shape_cast %242 : vector<16xf32> to vector<16x1xf32>
    %cst_185 = arith.constant 6.400000e+01 : f32
    %244 = vector.broadcast %cst_185 : f32 to vector<16x1xf32>
    %245 = arith.divf %243, %244 : vector<16x1xf32>
    %246 = vector.broadcast %245 : vector<16x1xf32> to vector<16x64xf32>
    %247 = arith.subf %237, %246 : vector<16x64xf32>
    %248 = arith.mulf %247, %247 : vector<16x64xf32>
    %cst_186 = arith.constant dense<0.000000e+00> : vector<16xf32>
    %249 = vector.multi_reduction <add>, %248, %cst_186 [1] : vector<16x64xf32> to vector<16xf32>
    %250 = vector.shape_cast %249 : vector<16xf32> to vector<16x1xf32>
    %cst_187 = arith.constant 6.400000e+01 : f32
    %251 = vector.broadcast %cst_187 : f32 to vector<16x1xf32>
    %252 = arith.divf %250, %251 : vector<16x1xf32>
    %cst_188 = arith.constant 9.99999974E-6 : f32
    %253 = vector.broadcast %cst_188 : f32 to vector<16x1xf32>
    %254 = arith.addf %252, %253 : vector<16x1xf32>
    %255 = math.rsqrt %254 : vector<16x1xf32>
    %256 = vector.broadcast %255 : vector<16x1xf32> to vector<16x64xf32>
    %257 = arith.mulf %247, %256 : vector<16x64xf32>
    %258 = vector.broadcast %239 : vector<1x64xf32> to vector<16x64xf32>
    %259 = arith.mulf %257, %258 : vector<16x64xf32>
    %260 = vector.broadcast %241 : vector<1x64xf32> to vector<16x64xf32>
    %261 = arith.addf %259, %260 : vector<16x64xf32>
    %c0_189 = arith.constant 0 : index
    %c0_190 = arith.constant 0 : index
    %c0_191 = arith.constant 0 : index
    %262 = vector.load %arg14[%c0_189, %c0_190, %c0_191] : memref<2x64x128xf32, #tpu.memory_space<vmem>>, vector<1x64x128xf32>
    %263 = vector.shape_cast %262 : vector<1x64x128xf32> to vector<64x128xf32>
    %cst_192 = arith.constant dense<0.000000e+00> : vector<16x128xf32>
    %264 = tpu.matmul %261, %263, %cst_192 {dimension_numbers = #tpu.dot_dimension_numbers<[1], [0], [0], [1], [0, 0, 1, 1], [], []>} : vector<16x64xf32>, vector<64x128xf32>, vector<16x128xf32> -> vector<16x128xf32>
    %c0_193 = arith.constant 0 : index
    %c0_194 = arith.constant 0 : index
    %c0_195 = arith.constant 0 : index
    %265 = vector.load %arg15[%c0_193, %c0_194, %c0_195] : memref<2x1x128xf32, #tpu.memory_space<vmem>>, vector<1x1x128xf32>
    %266 = vector.shape_cast %265 : vector<1x1x128xf32> to vector<1x128xf32>
    %267 = vector.broadcast %266 : vector<1x128xf32> to vector<16x128xf32>
    %268 = arith.addf %264, %267 : vector<16x128xf32>
    %cst_196 = arith.constant 5.000000e-01 : f32
    %269 = vector.broadcast %cst_196 : f32 to vector<16x128xf32>
    %270 = arith.mulf %269, %268 : vector<16x128xf32>
    %cst_197 = arith.constant 0.707106769 : f32
    %271 = vector.broadcast %cst_197 : f32 to vector<16x128xf32>
    %272 = arith.mulf %268, %271 : vector<16x128xf32>
    %273 = math.erf %272 : vector<16x128xf32>
    %cst_198 = arith.constant 1.000000e+00 : f32
    %274 = vector.broadcast %cst_198 : f32 to vector<16x128xf32>
    %275 = arith.addf %274, %273 : vector<16x128xf32>
    %276 = arith.mulf %270, %275 : vector<16x128xf32>
    %c0_199 = arith.constant 0 : index
    %c0_200 = arith.constant 0 : index
    %c0_201 = arith.constant 0 : index
    %277 = vector.load %arg16[%c0_199, %c0_200, %c0_201] : memref<2x128x64xf32, #tpu.memory_space<vmem>>, vector<1x128x64xf32>
    %278 = vector.shape_cast %277 : vector<1x128x64xf32> to vector<128x64xf32>
    %cst_202 = arith.constant dense<0.000000e+00> : vector<16x64xf32>
    %279 = tpu.matmul %276, %278, %cst_202 {dimension_numbers = #tpu.dot_dimension_numbers<[1], [0], [0], [1], [0, 0, 1, 1], [], []>} : vector<16x128xf32>, vector<128x64xf32>, vector<16x64xf32> -> vector<16x64xf32>
    %c0_203 = arith.constant 0 : index
    %c0_204 = arith.constant 0 : index
    %c0_205 = arith.constant 0 : index
    %280 = vector.load %arg17[%c0_203, %c0_204, %c0_205] : memref<2x1x64xf32, #tpu.memory_space<vmem>>, vector<1x1x64xf32>
    %281 = vector.shape_cast %280 : vector<1x1x64xf32> to vector<1x64xf32>
    %282 = vector.broadcast %281 : vector<1x64xf32> to vector<16x64xf32>
    %283 = arith.addf %279, %282 : vector<16x64xf32>
    %284 = arith.addf %237, %283 : vector<16x64xf32>
    %c1_206 = arith.constant 1 : index
    %c0_207 = arith.constant 0 : index
    %c0_208 = arith.constant 0 : index
    %285 = vector.load %arg5[%c1_206, %c0_207, %c0_208] : memref<2x1x64xf32, #tpu.memory_space<vmem>>, vector<1x1x64xf32>
    %286 = vector.shape_cast %285 : vector<1x1x64xf32> to vector<1x64xf32>
    %c1_209 = arith.constant 1 : index
    %c0_210 = arith.constant 0 : index
    %c0_211 = arith.constant 0 : index
    %287 = vector.load %arg6[%c1_209, %c0_210, %c0_211] : memref<2x1x64xf32, #tpu.memory_space<vmem>>, vector<1x1x64xf32>
    %288 = vector.shape_cast %287 : vector<1x1x64xf32> to vector<1x64xf32>
    %cst_212 = arith.constant dense<0.000000e+00> : vector<16xf32>
    %289 = vector.multi_reduction <add>, %284, %cst_212 [1] : vector<16x64xf32> to vector<16xf32>
    %290 = vector.shape_cast %289 : vector<16xf32> to vector<16x1xf32>
    %cst_213 = arith.constant 6.400000e+01 : f32
    %291 = vector.broadcast %cst_213 : f32 to vector<16x1xf32>
    %292 = arith.divf %290, %291 : vector<16x1xf32>
    %293 = vector.broadcast %292 : vector<16x1xf32> to vector<16x64xf32>
    %294 = arith.subf %284, %293 : vector<16x64xf32>
    %295 = arith.mulf %294, %294 : vector<16x64xf32>
    %cst_214 = arith.constant dense<0.000000e+00> : vector<16xf32>
    %296 = vector.multi_reduction <add>, %295, %cst_214 [1] : vector<16x64xf32> to vector<16xf32>
    %297 = vector.shape_cast %296 : vector<16xf32> to vector<16x1xf32>
    %cst_215 = arith.constant 6.400000e+01 : f32
    %298 = vector.broadcast %cst_215 : f32 to vector<16x1xf32>
    %299 = arith.divf %297, %298 : vector<16x1xf32>
    %cst_216 = arith.constant 9.99999974E-6 : f32
    %300 = vector.broadcast %cst_216 : f32 to vector<16x1xf32>
    %301 = arith.addf %299, %300 : vector<16x1xf32>
    %302 = math.rsqrt %301 : vector<16x1xf32>
    %303 = vector.broadcast %302 : vector<16x1xf32> to vector<16x64xf32>
    %304 = arith.mulf %294, %303 : vector<16x64xf32>
    %305 = vector.broadcast %286 : vector<1x64xf32> to vector<16x64xf32>
    %306 = arith.mulf %304, %305 : vector<16x64xf32>
    %307 = vector.broadcast %288 : vector<1x64xf32> to vector<16x64xf32>
    %308 = arith.addf %306, %307 : vector<16x64xf32>
    %309 = vector.extract_strided_slice %308 {offsets = [0, 0], sizes = [8, 64], strides = [1, 1]} : vector<16x64xf32> to vector<8x64xf32>
    %c4 = arith.constant 4 : index
    %c0_217 = arith.constant 0 : index
    %c0_218 = arith.constant 0 : index
    %310 = vector.load %arg7[%c4, %c0_217, %c0_218] : memref<8x64x16xf32, #tpu.memory_space<vmem>>, vector<1x64x16xf32>
    %311 = vector.shape_cast %310 : vector<1x64x16xf32> to vector<64x16xf32>
    %cst_219 = arith.constant dense<0.000000e+00> : vector<8x16xf32>
    %312 = tpu.matmul %309, %311, %cst_219 {dimension_numbers = #tpu.dot_dimension_numbers<[1], [0], [0], [1], [0, 0, 1, 1], [], []>} : vector<8x64xf32>, vector<64x16xf32>, vector<8x16xf32> -> vector<8x16xf32>
    %c4_220 = arith.constant 4 : index
    %c0_221 = arith.constant 0 : index
    %c0_222 = arith.constant 0 : index
    %313 = vector.load %arg8[%c4_220, %c0_221, %c0_222] : memref<8x64x16xf32, #tpu.memory_space<vmem>>, vector<1x64x16xf32>
    %314 = vector.shape_cast %313 : vector<1x64x16xf32> to vector<64x16xf32>
    %cst_223 = arith.constant dense<0.000000e+00> : vector<8x16xf32>
    %315 = tpu.matmul %309, %314, %cst_223 {dimension_numbers = #tpu.dot_dimension_numbers<[1], [0], [0], [1], [0, 0, 1, 1], [], []>} : vector<8x64xf32>, vector<64x16xf32>, vector<8x16xf32> -> vector<8x16xf32>
    %c4_224 = arith.constant 4 : index
    %c0_225 = arith.constant 0 : index
    %c0_226 = arith.constant 0 : index
    %316 = vector.load %arg9[%c4_224, %c0_225, %c0_226] : memref<8x64x16xf32, #tpu.memory_space<vmem>>, vector<1x64x16xf32>
    %317 = vector.shape_cast %316 : vector<1x64x16xf32> to vector<64x16xf32>
    %cst_227 = arith.constant dense<0.000000e+00> : vector<8x16xf32>
    %318 = tpu.matmul %309, %317, %cst_227 {dimension_numbers = #tpu.dot_dimension_numbers<[1], [0], [0], [1], [0, 0, 1, 1], [], []>} : vector<8x64xf32>, vector<64x16xf32>, vector<8x16xf32> -> vector<8x16xf32>
    %cst_228 = arith.constant dense<0.000000e+00> : vector<8x8xf32>
    %319 = tpu.matmul %312, %315, %cst_228 {dimension_numbers = #tpu.dot_dimension_numbers<[1], [1], [0], [0], [0, 0, 1, 0], [], []>} : vector<8x16xf32>, vector<8x16xf32>, vector<8x8xf32> -> vector<8x8xf32>
    %cst_229 = arith.constant dense<0xFF800000> : vector<8xf32>
    %320 = vector.multi_reduction <maximumf>, %319, %cst_229 [1] : vector<8x8xf32> to vector<8xf32>
    %321 = vector.shape_cast %320 : vector<8xf32> to vector<8x1xf32>
    %322 = vector.broadcast %321 : vector<8x1xf32> to vector<8x8xf32>
    %323 = arith.subf %319, %322 : vector<8x8xf32>
    %324 = math.exp %323 : vector<8x8xf32>
    %cst_230 = arith.constant dense<0.000000e+00> : vector<8xf32>
    %325 = vector.multi_reduction <add>, %324, %cst_230 [1] : vector<8x8xf32> to vector<8xf32>
    %326 = vector.shape_cast %325 : vector<8xf32> to vector<8x1xf32>
    %327 = tpu.reciprocal %326 {approx = true} : vector<8x1xf32> -> vector<8x1xf32>
    %328 = vector.broadcast %327 : vector<8x1xf32> to vector<8x8xf32>
    %329 = arith.mulf %324, %328 : vector<8x8xf32>
    %cst_231 = arith.constant dense<0.000000e+00> : vector<8x16xf32>
    %330 = tpu.matmul %329, %318, %cst_231 {dimension_numbers = #tpu.dot_dimension_numbers<[1], [0], [0], [1], [0, 0, 1, 1], [], []>} : vector<8x8xf32>, vector<8x16xf32>, vector<8x16xf32> -> vector<8x16xf32>
    %c4_232 = arith.constant 4 : index
    %c0_233 = arith.constant 0 : index
    %c0_234 = arith.constant 0 : index
    %331 = vector.load %arg10[%c4_232, %c0_233, %c0_234] : memref<8x16x64xf32, #tpu.memory_space<vmem>>, vector<1x16x64xf32>
    %332 = vector.shape_cast %331 : vector<1x16x64xf32> to vector<16x64xf32>
    %cst_235 = arith.constant dense<0.000000e+00> : vector<8x64xf32>
    %333 = tpu.matmul %330, %332, %cst_235 {dimension_numbers = #tpu.dot_dimension_numbers<[1], [0], [0], [1], [0, 0, 1, 1], [], []>} : vector<8x16xf32>, vector<16x64xf32>, vector<8x64xf32> -> vector<8x64xf32>
    %c5 = arith.constant 5 : index
    %c0_236 = arith.constant 0 : index
    %c0_237 = arith.constant 0 : index
    %334 = vector.load %arg7[%c5, %c0_236, %c0_237] : memref<8x64x16xf32, #tpu.memory_space<vmem>>, vector<1x64x16xf32>
    %335 = vector.shape_cast %334 : vector<1x64x16xf32> to vector<64x16xf32>
    %cst_238 = arith.constant dense<0.000000e+00> : vector<8x16xf32>
    %336 = tpu.matmul %309, %335, %cst_238 {dimension_numbers = #tpu.dot_dimension_numbers<[1], [0], [0], [1], [0, 0, 1, 1], [], []>} : vector<8x64xf32>, vector<64x16xf32>, vector<8x16xf32> -> vector<8x16xf32>
    %c5_239 = arith.constant 5 : index
    %c0_240 = arith.constant 0 : index
    %c0_241 = arith.constant 0 : index
    %337 = vector.load %arg8[%c5_239, %c0_240, %c0_241] : memref<8x64x16xf32, #tpu.memory_space<vmem>>, vector<1x64x16xf32>
    %338 = vector.shape_cast %337 : vector<1x64x16xf32> to vector<64x16xf32>
    %cst_242 = arith.constant dense<0.000000e+00> : vector<8x16xf32>
    %339 = tpu.matmul %309, %338, %cst_242 {dimension_numbers = #tpu.dot_dimension_numbers<[1], [0], [0], [1], [0, 0, 1, 1], [], []>} : vector<8x64xf32>, vector<64x16xf32>, vector<8x16xf32> -> vector<8x16xf32>
    %c5_243 = arith.constant 5 : index
    %c0_244 = arith.constant 0 : index
    %c0_245 = arith.constant 0 : index
    %340 = vector.load %arg9[%c5_243, %c0_244, %c0_245] : memref<8x64x16xf32, #tpu.memory_space<vmem>>, vector<1x64x16xf32>
    %341 = vector.shape_cast %340 : vector<1x64x16xf32> to vector<64x16xf32>
    %cst_246 = arith.constant dense<0.000000e+00> : vector<8x16xf32>
    %342 = tpu.matmul %309, %341, %cst_246 {dimension_numbers = #tpu.dot_dimension_numbers<[1], [0], [0], [1], [0, 0, 1, 1], [], []>} : vector<8x64xf32>, vector<64x16xf32>, vector<8x16xf32> -> vector<8x16xf32>
    %cst_247 = arith.constant dense<0.000000e+00> : vector<8x8xf32>
    %343 = tpu.matmul %336, %339, %cst_247 {dimension_numbers = #tpu.dot_dimension_numbers<[1], [1], [0], [0], [0, 0, 1, 0], [], []>} : vector<8x16xf32>, vector<8x16xf32>, vector<8x8xf32> -> vector<8x8xf32>
    %cst_248 = arith.constant dense<0xFF800000> : vector<8xf32>
    %344 = vector.multi_reduction <maximumf>, %343, %cst_248 [1] : vector<8x8xf32> to vector<8xf32>
    %345 = vector.shape_cast %344 : vector<8xf32> to vector<8x1xf32>
    %346 = vector.broadcast %345 : vector<8x1xf32> to vector<8x8xf32>
    %347 = arith.subf %343, %346 : vector<8x8xf32>
    %348 = math.exp %347 : vector<8x8xf32>
    %cst_249 = arith.constant dense<0.000000e+00> : vector<8xf32>
    %349 = vector.multi_reduction <add>, %348, %cst_249 [1] : vector<8x8xf32> to vector<8xf32>
    %350 = vector.shape_cast %349 : vector<8xf32> to vector<8x1xf32>
    %351 = tpu.reciprocal %350 {approx = true} : vector<8x1xf32> -> vector<8x1xf32>
    %352 = vector.broadcast %351 : vector<8x1xf32> to vector<8x8xf32>
    %353 = arith.mulf %348, %352 : vector<8x8xf32>
    %cst_250 = arith.constant dense<0.000000e+00> : vector<8x16xf32>
    %354 = tpu.matmul %353, %342, %cst_250 {dimension_numbers = #tpu.dot_dimension_numbers<[1], [0], [0], [1], [0, 0, 1, 1], [], []>} : vector<8x8xf32>, vector<8x16xf32>, vector<8x16xf32> -> vector<8x16xf32>
    %c5_251 = arith.constant 5 : index
    %c0_252 = arith.constant 0 : index
    %c0_253 = arith.constant 0 : index
    %355 = vector.load %arg10[%c5_251, %c0_252, %c0_253] : memref<8x16x64xf32, #tpu.memory_space<vmem>>, vector<1x16x64xf32>
    %356 = vector.shape_cast %355 : vector<1x16x64xf32> to vector<16x64xf32>
    %cst_254 = arith.constant dense<0.000000e+00> : vector<8x64xf32>
    %357 = tpu.matmul %354, %356, %cst_254 {dimension_numbers = #tpu.dot_dimension_numbers<[1], [0], [0], [1], [0, 0, 1, 1], [], []>} : vector<8x16xf32>, vector<16x64xf32>, vector<8x64xf32> -> vector<8x64xf32>
    %358 = arith.addf %333, %357 : vector<8x64xf32>
    %c6 = arith.constant 6 : index
    %c0_255 = arith.constant 0 : index
    %c0_256 = arith.constant 0 : index
    %359 = vector.load %arg7[%c6, %c0_255, %c0_256] : memref<8x64x16xf32, #tpu.memory_space<vmem>>, vector<1x64x16xf32>
    %360 = vector.shape_cast %359 : vector<1x64x16xf32> to vector<64x16xf32>
    %cst_257 = arith.constant dense<0.000000e+00> : vector<8x16xf32>
    %361 = tpu.matmul %309, %360, %cst_257 {dimension_numbers = #tpu.dot_dimension_numbers<[1], [0], [0], [1], [0, 0, 1, 1], [], []>} : vector<8x64xf32>, vector<64x16xf32>, vector<8x16xf32> -> vector<8x16xf32>
    %c6_258 = arith.constant 6 : index
    %c0_259 = arith.constant 0 : index
    %c0_260 = arith.constant 0 : index
    %362 = vector.load %arg8[%c6_258, %c0_259, %c0_260] : memref<8x64x16xf32, #tpu.memory_space<vmem>>, vector<1x64x16xf32>
    %363 = vector.shape_cast %362 : vector<1x64x16xf32> to vector<64x16xf32>
    %cst_261 = arith.constant dense<0.000000e+00> : vector<8x16xf32>
    %364 = tpu.matmul %309, %363, %cst_261 {dimension_numbers = #tpu.dot_dimension_numbers<[1], [0], [0], [1], [0, 0, 1, 1], [], []>} : vector<8x64xf32>, vector<64x16xf32>, vector<8x16xf32> -> vector<8x16xf32>
    %c6_262 = arith.constant 6 : index
    %c0_263 = arith.constant 0 : index
    %c0_264 = arith.constant 0 : index
    %365 = vector.load %arg9[%c6_262, %c0_263, %c0_264] : memref<8x64x16xf32, #tpu.memory_space<vmem>>, vector<1x64x16xf32>
    %366 = vector.shape_cast %365 : vector<1x64x16xf32> to vector<64x16xf32>
    %cst_265 = arith.constant dense<0.000000e+00> : vector<8x16xf32>
    %367 = tpu.matmul %309, %366, %cst_265 {dimension_numbers = #tpu.dot_dimension_numbers<[1], [0], [0], [1], [0, 0, 1, 1], [], []>} : vector<8x64xf32>, vector<64x16xf32>, vector<8x16xf32> -> vector<8x16xf32>
    %cst_266 = arith.constant dense<0.000000e+00> : vector<8x8xf32>
    %368 = tpu.matmul %361, %364, %cst_266 {dimension_numbers = #tpu.dot_dimension_numbers<[1], [1], [0], [0], [0, 0, 1, 0], [], []>} : vector<8x16xf32>, vector<8x16xf32>, vector<8x8xf32> -> vector<8x8xf32>
    %cst_267 = arith.constant dense<0xFF800000> : vector<8xf32>
    %369 = vector.multi_reduction <maximumf>, %368, %cst_267 [1] : vector<8x8xf32> to vector<8xf32>
    %370 = vector.shape_cast %369 : vector<8xf32> to vector<8x1xf32>
    %371 = vector.broadcast %370 : vector<8x1xf32> to vector<8x8xf32>
    %372 = arith.subf %368, %371 : vector<8x8xf32>
    %373 = math.exp %372 : vector<8x8xf32>
    %cst_268 = arith.constant dense<0.000000e+00> : vector<8xf32>
    %374 = vector.multi_reduction <add>, %373, %cst_268 [1] : vector<8x8xf32> to vector<8xf32>
    %375 = vector.shape_cast %374 : vector<8xf32> to vector<8x1xf32>
    %376 = tpu.reciprocal %375 {approx = true} : vector<8x1xf32> -> vector<8x1xf32>
    %377 = vector.broadcast %376 : vector<8x1xf32> to vector<8x8xf32>
    %378 = arith.mulf %373, %377 : vector<8x8xf32>
    %cst_269 = arith.constant dense<0.000000e+00> : vector<8x16xf32>
    %379 = tpu.matmul %378, %367, %cst_269 {dimension_numbers = #tpu.dot_dimension_numbers<[1], [0], [0], [1], [0, 0, 1, 1], [], []>} : vector<8x8xf32>, vector<8x16xf32>, vector<8x16xf32> -> vector<8x16xf32>
    %c6_270 = arith.constant 6 : index
    %c0_271 = arith.constant 0 : index
    %c0_272 = arith.constant 0 : index
    %380 = vector.load %arg10[%c6_270, %c0_271, %c0_272] : memref<8x16x64xf32, #tpu.memory_space<vmem>>, vector<1x16x64xf32>
    %381 = vector.shape_cast %380 : vector<1x16x64xf32> to vector<16x64xf32>
    %cst_273 = arith.constant dense<0.000000e+00> : vector<8x64xf32>
    %382 = tpu.matmul %379, %381, %cst_273 {dimension_numbers = #tpu.dot_dimension_numbers<[1], [0], [0], [1], [0, 0, 1, 1], [], []>} : vector<8x16xf32>, vector<16x64xf32>, vector<8x64xf32> -> vector<8x64xf32>
    %383 = arith.addf %358, %382 : vector<8x64xf32>
    %c7 = arith.constant 7 : index
    %c0_274 = arith.constant 0 : index
    %c0_275 = arith.constant 0 : index
    %384 = vector.load %arg7[%c7, %c0_274, %c0_275] : memref<8x64x16xf32, #tpu.memory_space<vmem>>, vector<1x64x16xf32>
    %385 = vector.shape_cast %384 : vector<1x64x16xf32> to vector<64x16xf32>
    %cst_276 = arith.constant dense<0.000000e+00> : vector<8x16xf32>
    %386 = tpu.matmul %309, %385, %cst_276 {dimension_numbers = #tpu.dot_dimension_numbers<[1], [0], [0], [1], [0, 0, 1, 1], [], []>} : vector<8x64xf32>, vector<64x16xf32>, vector<8x16xf32> -> vector<8x16xf32>
    %c7_277 = arith.constant 7 : index
    %c0_278 = arith.constant 0 : index
    %c0_279 = arith.constant 0 : index
    %387 = vector.load %arg8[%c7_277, %c0_278, %c0_279] : memref<8x64x16xf32, #tpu.memory_space<vmem>>, vector<1x64x16xf32>
    %388 = vector.shape_cast %387 : vector<1x64x16xf32> to vector<64x16xf32>
    %cst_280 = arith.constant dense<0.000000e+00> : vector<8x16xf32>
    %389 = tpu.matmul %309, %388, %cst_280 {dimension_numbers = #tpu.dot_dimension_numbers<[1], [0], [0], [1], [0, 0, 1, 1], [], []>} : vector<8x64xf32>, vector<64x16xf32>, vector<8x16xf32> -> vector<8x16xf32>
    %c7_281 = arith.constant 7 : index
    %c0_282 = arith.constant 0 : index
    %c0_283 = arith.constant 0 : index
    %390 = vector.load %arg9[%c7_281, %c0_282, %c0_283] : memref<8x64x16xf32, #tpu.memory_space<vmem>>, vector<1x64x16xf32>
    %391 = vector.shape_cast %390 : vector<1x64x16xf32> to vector<64x16xf32>
    %cst_284 = arith.constant dense<0.000000e+00> : vector<8x16xf32>
    %392 = tpu.matmul %309, %391, %cst_284 {dimension_numbers = #tpu.dot_dimension_numbers<[1], [0], [0], [1], [0, 0, 1, 1], [], []>} : vector<8x64xf32>, vector<64x16xf32>, vector<8x16xf32> -> vector<8x16xf32>
    %cst_285 = arith.constant dense<0.000000e+00> : vector<8x8xf32>
    %393 = tpu.matmul %386, %389, %cst_285 {dimension_numbers = #tpu.dot_dimension_numbers<[1], [1], [0], [0], [0, 0, 1, 0], [], []>} : vector<8x16xf32>, vector<8x16xf32>, vector<8x8xf32> -> vector<8x8xf32>
    %cst_286 = arith.constant dense<0xFF800000> : vector<8xf32>
    %394 = vector.multi_reduction <maximumf>, %393, %cst_286 [1] : vector<8x8xf32> to vector<8xf32>
    %395 = vector.shape_cast %394 : vector<8xf32> to vector<8x1xf32>
    %396 = vector.broadcast %395 : vector<8x1xf32> to vector<8x8xf32>
    %397 = arith.subf %393, %396 : vector<8x8xf32>
    %398 = math.exp %397 : vector<8x8xf32>
    %cst_287 = arith.constant dense<0.000000e+00> : vector<8xf32>
    %399 = vector.multi_reduction <add>, %398, %cst_287 [1] : vector<8x8xf32> to vector<8xf32>
    %400 = vector.shape_cast %399 : vector<8xf32> to vector<8x1xf32>
    %401 = tpu.reciprocal %400 {approx = true} : vector<8x1xf32> -> vector<8x1xf32>
    %402 = vector.broadcast %401 : vector<8x1xf32> to vector<8x8xf32>
    %403 = arith.mulf %398, %402 : vector<8x8xf32>
    %cst_288 = arith.constant dense<0.000000e+00> : vector<8x16xf32>
    %404 = tpu.matmul %403, %392, %cst_288 {dimension_numbers = #tpu.dot_dimension_numbers<[1], [0], [0], [1], [0, 0, 1, 1], [], []>} : vector<8x8xf32>, vector<8x16xf32>, vector<8x16xf32> -> vector<8x16xf32>
    %c7_289 = arith.constant 7 : index
    %c0_290 = arith.constant 0 : index
    %c0_291 = arith.constant 0 : index
    %405 = vector.load %arg10[%c7_289, %c0_290, %c0_291] : memref<8x16x64xf32, #tpu.memory_space<vmem>>, vector<1x16x64xf32>
    %406 = vector.shape_cast %405 : vector<1x16x64xf32> to vector<16x64xf32>
    %cst_292 = arith.constant dense<0.000000e+00> : vector<8x64xf32>
    %407 = tpu.matmul %404, %406, %cst_292 {dimension_numbers = #tpu.dot_dimension_numbers<[1], [0], [0], [1], [0, 0, 1, 1], [], []>} : vector<8x16xf32>, vector<16x64xf32>, vector<8x64xf32> -> vector<8x64xf32>
    %408 = arith.addf %383, %407 : vector<8x64xf32>
    %409 = vector.extract_strided_slice %308 {offsets = [8, 0], sizes = [8, 64], strides = [1, 1]} : vector<16x64xf32> to vector<8x64xf32>
    %c4_293 = arith.constant 4 : index
    %c0_294 = arith.constant 0 : index
    %c0_295 = arith.constant 0 : index
    %410 = vector.load %arg7[%c4_293, %c0_294, %c0_295] : memref<8x64x16xf32, #tpu.memory_space<vmem>>, vector<1x64x16xf32>
    %411 = vector.shape_cast %410 : vector<1x64x16xf32> to vector<64x16xf32>
    %cst_296 = arith.constant dense<0.000000e+00> : vector<8x16xf32>
    %412 = tpu.matmul %409, %411, %cst_296 {dimension_numbers = #tpu.dot_dimension_numbers<[1], [0], [0], [1], [0, 0, 1, 1], [], []>} : vector<8x64xf32>, vector<64x16xf32>, vector<8x16xf32> -> vector<8x16xf32>
    %c4_297 = arith.constant 4 : index
    %c0_298 = arith.constant 0 : index
    %c0_299 = arith.constant 0 : index
    %413 = vector.load %arg8[%c4_297, %c0_298, %c0_299] : memref<8x64x16xf32, #tpu.memory_space<vmem>>, vector<1x64x16xf32>
    %414 = vector.shape_cast %413 : vector<1x64x16xf32> to vector<64x16xf32>
    %cst_300 = arith.constant dense<0.000000e+00> : vector<8x16xf32>
    %415 = tpu.matmul %409, %414, %cst_300 {dimension_numbers = #tpu.dot_dimension_numbers<[1], [0], [0], [1], [0, 0, 1, 1], [], []>} : vector<8x64xf32>, vector<64x16xf32>, vector<8x16xf32> -> vector<8x16xf32>
    %c4_301 = arith.constant 4 : index
    %c0_302 = arith.constant 0 : index
    %c0_303 = arith.constant 0 : index
    %416 = vector.load %arg9[%c4_301, %c0_302, %c0_303] : memref<8x64x16xf32, #tpu.memory_space<vmem>>, vector<1x64x16xf32>
    %417 = vector.shape_cast %416 : vector<1x64x16xf32> to vector<64x16xf32>
    %cst_304 = arith.constant dense<0.000000e+00> : vector<8x16xf32>
    %418 = tpu.matmul %409, %417, %cst_304 {dimension_numbers = #tpu.dot_dimension_numbers<[1], [0], [0], [1], [0, 0, 1, 1], [], []>} : vector<8x64xf32>, vector<64x16xf32>, vector<8x16xf32> -> vector<8x16xf32>
    %cst_305 = arith.constant dense<0.000000e+00> : vector<8x8xf32>
    %419 = tpu.matmul %412, %415, %cst_305 {dimension_numbers = #tpu.dot_dimension_numbers<[1], [1], [0], [0], [0, 0, 1, 0], [], []>} : vector<8x16xf32>, vector<8x16xf32>, vector<8x8xf32> -> vector<8x8xf32>
    %cst_306 = arith.constant dense<0xFF800000> : vector<8xf32>
    %420 = vector.multi_reduction <maximumf>, %419, %cst_306 [1] : vector<8x8xf32> to vector<8xf32>
    %421 = vector.shape_cast %420 : vector<8xf32> to vector<8x1xf32>
    %422 = vector.broadcast %421 : vector<8x1xf32> to vector<8x8xf32>
    %423 = arith.subf %419, %422 : vector<8x8xf32>
    %424 = math.exp %423 : vector<8x8xf32>
    %cst_307 = arith.constant dense<0.000000e+00> : vector<8xf32>
    %425 = vector.multi_reduction <add>, %424, %cst_307 [1] : vector<8x8xf32> to vector<8xf32>
    %426 = vector.shape_cast %425 : vector<8xf32> to vector<8x1xf32>
    %427 = tpu.reciprocal %426 {approx = true} : vector<8x1xf32> -> vector<8x1xf32>
    %428 = vector.broadcast %427 : vector<8x1xf32> to vector<8x8xf32>
    %429 = arith.mulf %424, %428 : vector<8x8xf32>
    %cst_308 = arith.constant dense<0.000000e+00> : vector<8x16xf32>
    %430 = tpu.matmul %429, %418, %cst_308 {dimension_numbers = #tpu.dot_dimension_numbers<[1], [0], [0], [1], [0, 0, 1, 1], [], []>} : vector<8x8xf32>, vector<8x16xf32>, vector<8x16xf32> -> vector<8x16xf32>
    %c4_309 = arith.constant 4 : index
    %c0_310 = arith.constant 0 : index
    %c0_311 = arith.constant 0 : index
    %431 = vector.load %arg10[%c4_309, %c0_310, %c0_311] : memref<8x16x64xf32, #tpu.memory_space<vmem>>, vector<1x16x64xf32>
    %432 = vector.shape_cast %431 : vector<1x16x64xf32> to vector<16x64xf32>
    %cst_312 = arith.constant dense<0.000000e+00> : vector<8x64xf32>
    %433 = tpu.matmul %430, %432, %cst_312 {dimension_numbers = #tpu.dot_dimension_numbers<[1], [0], [0], [1], [0, 0, 1, 1], [], []>} : vector<8x16xf32>, vector<16x64xf32>, vector<8x64xf32> -> vector<8x64xf32>
    %c5_313 = arith.constant 5 : index
    %c0_314 = arith.constant 0 : index
    %c0_315 = arith.constant 0 : index
    %434 = vector.load %arg7[%c5_313, %c0_314, %c0_315] : memref<8x64x16xf32, #tpu.memory_space<vmem>>, vector<1x64x16xf32>
    %435 = vector.shape_cast %434 : vector<1x64x16xf32> to vector<64x16xf32>
    %cst_316 = arith.constant dense<0.000000e+00> : vector<8x16xf32>
    %436 = tpu.matmul %409, %435, %cst_316 {dimension_numbers = #tpu.dot_dimension_numbers<[1], [0], [0], [1], [0, 0, 1, 1], [], []>} : vector<8x64xf32>, vector<64x16xf32>, vector<8x16xf32> -> vector<8x16xf32>
    %c5_317 = arith.constant 5 : index
    %c0_318 = arith.constant 0 : index
    %c0_319 = arith.constant 0 : index
    %437 = vector.load %arg8[%c5_317, %c0_318, %c0_319] : memref<8x64x16xf32, #tpu.memory_space<vmem>>, vector<1x64x16xf32>
    %438 = vector.shape_cast %437 : vector<1x64x16xf32> to vector<64x16xf32>
    %cst_320 = arith.constant dense<0.000000e+00> : vector<8x16xf32>
    %439 = tpu.matmul %409, %438, %cst_320 {dimension_numbers = #tpu.dot_dimension_numbers<[1], [0], [0], [1], [0, 0, 1, 1], [], []>} : vector<8x64xf32>, vector<64x16xf32>, vector<8x16xf32> -> vector<8x16xf32>
    %c5_321 = arith.constant 5 : index
    %c0_322 = arith.constant 0 : index
    %c0_323 = arith.constant 0 : index
    %440 = vector.load %arg9[%c5_321, %c0_322, %c0_323] : memref<8x64x16xf32, #tpu.memory_space<vmem>>, vector<1x64x16xf32>
    %441 = vector.shape_cast %440 : vector<1x64x16xf32> to vector<64x16xf32>
    %cst_324 = arith.constant dense<0.000000e+00> : vector<8x16xf32>
    %442 = tpu.matmul %409, %441, %cst_324 {dimension_numbers = #tpu.dot_dimension_numbers<[1], [0], [0], [1], [0, 0, 1, 1], [], []>} : vector<8x64xf32>, vector<64x16xf32>, vector<8x16xf32> -> vector<8x16xf32>
    %cst_325 = arith.constant dense<0.000000e+00> : vector<8x8xf32>
    %443 = tpu.matmul %436, %439, %cst_325 {dimension_numbers = #tpu.dot_dimension_numbers<[1], [1], [0], [0], [0, 0, 1, 0], [], []>} : vector<8x16xf32>, vector<8x16xf32>, vector<8x8xf32> -> vector<8x8xf32>
    %cst_326 = arith.constant dense<0xFF800000> : vector<8xf32>
    %444 = vector.multi_reduction <maximumf>, %443, %cst_326 [1] : vector<8x8xf32> to vector<8xf32>
    %445 = vector.shape_cast %444 : vector<8xf32> to vector<8x1xf32>
    %446 = vector.broadcast %445 : vector<8x1xf32> to vector<8x8xf32>
    %447 = arith.subf %443, %446 : vector<8x8xf32>
    %448 = math.exp %447 : vector<8x8xf32>
    %cst_327 = arith.constant dense<0.000000e+00> : vector<8xf32>
    %449 = vector.multi_reduction <add>, %448, %cst_327 [1] : vector<8x8xf32> to vector<8xf32>
    %450 = vector.shape_cast %449 : vector<8xf32> to vector<8x1xf32>
    %451 = tpu.reciprocal %450 {approx = true} : vector<8x1xf32> -> vector<8x1xf32>
    %452 = vector.broadcast %451 : vector<8x1xf32> to vector<8x8xf32>
    %453 = arith.mulf %448, %452 : vector<8x8xf32>
    %cst_328 = arith.constant dense<0.000000e+00> : vector<8x16xf32>
    %454 = tpu.matmul %453, %442, %cst_328 {dimension_numbers = #tpu.dot_dimension_numbers<[1], [0], [0], [1], [0, 0, 1, 1], [], []>} : vector<8x8xf32>, vector<8x16xf32>, vector<8x16xf32> -> vector<8x16xf32>
    %c5_329 = arith.constant 5 : index
    %c0_330 = arith.constant 0 : index
    %c0_331 = arith.constant 0 : index
    %455 = vector.load %arg10[%c5_329, %c0_330, %c0_331] : memref<8x16x64xf32, #tpu.memory_space<vmem>>, vector<1x16x64xf32>
    %456 = vector.shape_cast %455 : vector<1x16x64xf32> to vector<16x64xf32>
    %cst_332 = arith.constant dense<0.000000e+00> : vector<8x64xf32>
    %457 = tpu.matmul %454, %456, %cst_332 {dimension_numbers = #tpu.dot_dimension_numbers<[1], [0], [0], [1], [0, 0, 1, 1], [], []>} : vector<8x16xf32>, vector<16x64xf32>, vector<8x64xf32> -> vector<8x64xf32>
    %458 = arith.addf %433, %457 : vector<8x64xf32>
    %c6_333 = arith.constant 6 : index
    %c0_334 = arith.constant 0 : index
    %c0_335 = arith.constant 0 : index
    %459 = vector.load %arg7[%c6_333, %c0_334, %c0_335] : memref<8x64x16xf32, #tpu.memory_space<vmem>>, vector<1x64x16xf32>
    %460 = vector.shape_cast %459 : vector<1x64x16xf32> to vector<64x16xf32>
    %cst_336 = arith.constant dense<0.000000e+00> : vector<8x16xf32>
    %461 = tpu.matmul %409, %460, %cst_336 {dimension_numbers = #tpu.dot_dimension_numbers<[1], [0], [0], [1], [0, 0, 1, 1], [], []>} : vector<8x64xf32>, vector<64x16xf32>, vector<8x16xf32> -> vector<8x16xf32>
    %c6_337 = arith.constant 6 : index
    %c0_338 = arith.constant 0 : index
    %c0_339 = arith.constant 0 : index
    %462 = vector.load %arg8[%c6_337, %c0_338, %c0_339] : memref<8x64x16xf32, #tpu.memory_space<vmem>>, vector<1x64x16xf32>
    %463 = vector.shape_cast %462 : vector<1x64x16xf32> to vector<64x16xf32>
    %cst_340 = arith.constant dense<0.000000e+00> : vector<8x16xf32>
    %464 = tpu.matmul %409, %463, %cst_340 {dimension_numbers = #tpu.dot_dimension_numbers<[1], [0], [0], [1], [0, 0, 1, 1], [], []>} : vector<8x64xf32>, vector<64x16xf32>, vector<8x16xf32> -> vector<8x16xf32>
    %c6_341 = arith.constant 6 : index
    %c0_342 = arith.constant 0 : index
    %c0_343 = arith.constant 0 : index
    %465 = vector.load %arg9[%c6_341, %c0_342, %c0_343] : memref<8x64x16xf32, #tpu.memory_space<vmem>>, vector<1x64x16xf32>
    %466 = vector.shape_cast %465 : vector<1x64x16xf32> to vector<64x16xf32>
    %cst_344 = arith.constant dense<0.000000e+00> : vector<8x16xf32>
    %467 = tpu.matmul %409, %466, %cst_344 {dimension_numbers = #tpu.dot_dimension_numbers<[1], [0], [0], [1], [0, 0, 1, 1], [], []>} : vector<8x64xf32>, vector<64x16xf32>, vector<8x16xf32> -> vector<8x16xf32>
    %cst_345 = arith.constant dense<0.000000e+00> : vector<8x8xf32>
    %468 = tpu.matmul %461, %464, %cst_345 {dimension_numbers = #tpu.dot_dimension_numbers<[1], [1], [0], [0], [0, 0, 1, 0], [], []>} : vector<8x16xf32>, vector<8x16xf32>, vector<8x8xf32> -> vector<8x8xf32>
    %cst_346 = arith.constant dense<0xFF800000> : vector<8xf32>
    %469 = vector.multi_reduction <maximumf>, %468, %cst_346 [1] : vector<8x8xf32> to vector<8xf32>
    %470 = vector.shape_cast %469 : vector<8xf32> to vector<8x1xf32>
    %471 = vector.broadcast %470 : vector<8x1xf32> to vector<8x8xf32>
    %472 = arith.subf %468, %471 : vector<8x8xf32>
    %473 = math.exp %472 : vector<8x8xf32>
    %cst_347 = arith.constant dense<0.000000e+00> : vector<8xf32>
    %474 = vector.multi_reduction <add>, %473, %cst_347 [1] : vector<8x8xf32> to vector<8xf32>
    %475 = vector.shape_cast %474 : vector<8xf32> to vector<8x1xf32>
    %476 = tpu.reciprocal %475 {approx = true} : vector<8x1xf32> -> vector<8x1xf32>
    %477 = vector.broadcast %476 : vector<8x1xf32> to vector<8x8xf32>
    %478 = arith.mulf %473, %477 : vector<8x8xf32>
    %cst_348 = arith.constant dense<0.000000e+00> : vector<8x16xf32>
    %479 = tpu.matmul %478, %467, %cst_348 {dimension_numbers = #tpu.dot_dimension_numbers<[1], [0], [0], [1], [0, 0, 1, 1], [], []>} : vector<8x8xf32>, vector<8x16xf32>, vector<8x16xf32> -> vector<8x16xf32>
    %c6_349 = arith.constant 6 : index
    %c0_350 = arith.constant 0 : index
    %c0_351 = arith.constant 0 : index
    %480 = vector.load %arg10[%c6_349, %c0_350, %c0_351] : memref<8x16x64xf32, #tpu.memory_space<vmem>>, vector<1x16x64xf32>
    %481 = vector.shape_cast %480 : vector<1x16x64xf32> to vector<16x64xf32>
    %cst_352 = arith.constant dense<0.000000e+00> : vector<8x64xf32>
    %482 = tpu.matmul %479, %481, %cst_352 {dimension_numbers = #tpu.dot_dimension_numbers<[1], [0], [0], [1], [0, 0, 1, 1], [], []>} : vector<8x16xf32>, vector<16x64xf32>, vector<8x64xf32> -> vector<8x64xf32>
    %483 = arith.addf %458, %482 : vector<8x64xf32>
    %c7_353 = arith.constant 7 : index
    %c0_354 = arith.constant 0 : index
    %c0_355 = arith.constant 0 : index
    %484 = vector.load %arg7[%c7_353, %c0_354, %c0_355] : memref<8x64x16xf32, #tpu.memory_space<vmem>>, vector<1x64x16xf32>
    %485 = vector.shape_cast %484 : vector<1x64x16xf32> to vector<64x16xf32>
    %cst_356 = arith.constant dense<0.000000e+00> : vector<8x16xf32>
    %486 = tpu.matmul %409, %485, %cst_356 {dimension_numbers = #tpu.dot_dimension_numbers<[1], [0], [0], [1], [0, 0, 1, 1], [], []>} : vector<8x64xf32>, vector<64x16xf32>, vector<8x16xf32> -> vector<8x16xf32>
    %c7_357 = arith.constant 7 : index
    %c0_358 = arith.constant 0 : index
    %c0_359 = arith.constant 0 : index
    %487 = vector.load %arg8[%c7_357, %c0_358, %c0_359] : memref<8x64x16xf32, #tpu.memory_space<vmem>>, vector<1x64x16xf32>
    %488 = vector.shape_cast %487 : vector<1x64x16xf32> to vector<64x16xf32>
    %cst_360 = arith.constant dense<0.000000e+00> : vector<8x16xf32>
    %489 = tpu.matmul %409, %488, %cst_360 {dimension_numbers = #tpu.dot_dimension_numbers<[1], [0], [0], [1], [0, 0, 1, 1], [], []>} : vector<8x64xf32>, vector<64x16xf32>, vector<8x16xf32> -> vector<8x16xf32>
    %c7_361 = arith.constant 7 : index
    %c0_362 = arith.constant 0 : index
    %c0_363 = arith.constant 0 : index
    %490 = vector.load %arg9[%c7_361, %c0_362, %c0_363] : memref<8x64x16xf32, #tpu.memory_space<vmem>>, vector<1x64x16xf32>
    %491 = vector.shape_cast %490 : vector<1x64x16xf32> to vector<64x16xf32>
    %cst_364 = arith.constant dense<0.000000e+00> : vector<8x16xf32>
    %492 = tpu.matmul %409, %491, %cst_364 {dimension_numbers = #tpu.dot_dimension_numbers<[1], [0], [0], [1], [0, 0, 1, 1], [], []>} : vector<8x64xf32>, vector<64x16xf32>, vector<8x16xf32> -> vector<8x16xf32>
    %cst_365 = arith.constant dense<0.000000e+00> : vector<8x8xf32>
    %493 = tpu.matmul %486, %489, %cst_365 {dimension_numbers = #tpu.dot_dimension_numbers<[1], [1], [0], [0], [0, 0, 1, 0], [], []>} : vector<8x16xf32>, vector<8x16xf32>, vector<8x8xf32> -> vector<8x8xf32>
    %cst_366 = arith.constant dense<0xFF800000> : vector<8xf32>
    %494 = vector.multi_reduction <maximumf>, %493, %cst_366 [1] : vector<8x8xf32> to vector<8xf32>
    %495 = vector.shape_cast %494 : vector<8xf32> to vector<8x1xf32>
    %496 = vector.broadcast %495 : vector<8x1xf32> to vector<8x8xf32>
    %497 = arith.subf %493, %496 : vector<8x8xf32>
    %498 = math.exp %497 : vector<8x8xf32>
    %cst_367 = arith.constant dense<0.000000e+00> : vector<8xf32>
    %499 = vector.multi_reduction <add>, %498, %cst_367 [1] : vector<8x8xf32> to vector<8xf32>
    %500 = vector.shape_cast %499 : vector<8xf32> to vector<8x1xf32>
    %501 = tpu.reciprocal %500 {approx = true} : vector<8x1xf32> -> vector<8x1xf32>
    %502 = vector.broadcast %501 : vector<8x1xf32> to vector<8x8xf32>
    %503 = arith.mulf %498, %502 : vector<8x8xf32>
    %cst_368 = arith.constant dense<0.000000e+00> : vector<8x16xf32>
    %504 = tpu.matmul %503, %492, %cst_368 {dimension_numbers = #tpu.dot_dimension_numbers<[1], [0], [0], [1], [0, 0, 1, 1], [], []>} : vector<8x8xf32>, vector<8x16xf32>, vector<8x16xf32> -> vector<8x16xf32>
    %c7_369 = arith.constant 7 : index
    %c0_370 = arith.constant 0 : index
    %c0_371 = arith.constant 0 : index
    %505 = vector.load %arg10[%c7_369, %c0_370, %c0_371] : memref<8x16x64xf32, #tpu.memory_space<vmem>>, vector<1x16x64xf32>
    %506 = vector.shape_cast %505 : vector<1x16x64xf32> to vector<16x64xf32>
    %cst_372 = arith.constant dense<0.000000e+00> : vector<8x64xf32>
    %507 = tpu.matmul %504, %506, %cst_372 {dimension_numbers = #tpu.dot_dimension_numbers<[1], [0], [0], [1], [0, 0, 1, 1], [], []>} : vector<8x16xf32>, vector<16x64xf32>, vector<8x64xf32> -> vector<8x64xf32>
    %508 = arith.addf %483, %507 : vector<8x64xf32>
    %509 = tpu.concatenate %408, %508 in 0 : vector<8x64xf32>, vector<8x64xf32> -> vector<16x64xf32>
    %510 = arith.addf %284, %509 : vector<16x64xf32>
    %c1_373 = arith.constant 1 : index
    %c0_374 = arith.constant 0 : index
    %c0_375 = arith.constant 0 : index
    %511 = vector.load %arg11[%c1_373, %c0_374, %c0_375] : memref<2x1x64xf32, #tpu.memory_space<vmem>>, vector<1x1x64xf32>
    %512 = vector.shape_cast %511 : vector<1x1x64xf32> to vector<1x64xf32>
    %513 = vector.broadcast %512 : vector<1x64xf32> to vector<16x64xf32>
    %514 = arith.addf %510, %513 : vector<16x64xf32>
    %c1_376 = arith.constant 1 : index
    %c0_377 = arith.constant 0 : index
    %c0_378 = arith.constant 0 : index
    %515 = vector.load %arg12[%c1_376, %c0_377, %c0_378] : memref<2x1x64xf32, #tpu.memory_space<vmem>>, vector<1x1x64xf32>
    %516 = vector.shape_cast %515 : vector<1x1x64xf32> to vector<1x64xf32>
    %c1_379 = arith.constant 1 : index
    %c0_380 = arith.constant 0 : index
    %c0_381 = arith.constant 0 : index
    %517 = vector.load %arg13[%c1_379, %c0_380, %c0_381] : memref<2x1x64xf32, #tpu.memory_space<vmem>>, vector<1x1x64xf32>
    %518 = vector.shape_cast %517 : vector<1x1x64xf32> to vector<1x64xf32>
    %cst_382 = arith.constant dense<0.000000e+00> : vector<16xf32>
    %519 = vector.multi_reduction <add>, %514, %cst_382 [1] : vector<16x64xf32> to vector<16xf32>
    %520 = vector.shape_cast %519 : vector<16xf32> to vector<16x1xf32>
    %cst_383 = arith.constant 6.400000e+01 : f32
    %521 = vector.broadcast %cst_383 : f32 to vector<16x1xf32>
    %522 = arith.divf %520, %521 : vector<16x1xf32>
    %523 = vector.broadcast %522 : vector<16x1xf32> to vector<16x64xf32>
    %524 = arith.subf %514, %523 : vector<16x64xf32>
    %525 = arith.mulf %524, %524 : vector<16x64xf32>
    %cst_384 = arith.constant dense<0.000000e+00> : vector<16xf32>
    %526 = vector.multi_reduction <add>, %525, %cst_384 [1] : vector<16x64xf32> to vector<16xf32>
    %527 = vector.shape_cast %526 : vector<16xf32> to vector<16x1xf32>
    %cst_385 = arith.constant 6.400000e+01 : f32
    %528 = vector.broadcast %cst_385 : f32 to vector<16x1xf32>
    %529 = arith.divf %527, %528 : vector<16x1xf32>
    %cst_386 = arith.constant 9.99999974E-6 : f32
    %530 = vector.broadcast %cst_386 : f32 to vector<16x1xf32>
    %531 = arith.addf %529, %530 : vector<16x1xf32>
    %532 = math.rsqrt %531 : vector<16x1xf32>
    %533 = vector.broadcast %532 : vector<16x1xf32> to vector<16x64xf32>
    %534 = arith.mulf %524, %533 : vector<16x64xf32>
    %535 = vector.broadcast %516 : vector<1x64xf32> to vector<16x64xf32>
    %536 = arith.mulf %534, %535 : vector<16x64xf32>
    %537 = vector.broadcast %518 : vector<1x64xf32> to vector<16x64xf32>
    %538 = arith.addf %536, %537 : vector<16x64xf32>
    %c1_387 = arith.constant 1 : index
    %c0_388 = arith.constant 0 : index
    %c0_389 = arith.constant 0 : index
    %539 = vector.load %arg14[%c1_387, %c0_388, %c0_389] : memref<2x64x128xf32, #tpu.memory_space<vmem>>, vector<1x64x128xf32>
    %540 = vector.shape_cast %539 : vector<1x64x128xf32> to vector<64x128xf32>
    %cst_390 = arith.constant dense<0.000000e+00> : vector<16x128xf32>
    %541 = tpu.matmul %538, %540, %cst_390 {dimension_numbers = #tpu.dot_dimension_numbers<[1], [0], [0], [1], [0, 0, 1, 1], [], []>} : vector<16x64xf32>, vector<64x128xf32>, vector<16x128xf32> -> vector<16x128xf32>
    %c1_391 = arith.constant 1 : index
    %c0_392 = arith.constant 0 : index
    %c0_393 = arith.constant 0 : index
    %542 = vector.load %arg15[%c1_391, %c0_392, %c0_393] : memref<2x1x128xf32, #tpu.memory_space<vmem>>, vector<1x1x128xf32>
    %543 = vector.shape_cast %542 : vector<1x1x128xf32> to vector<1x128xf32>
    %544 = vector.broadcast %543 : vector<1x128xf32> to vector<16x128xf32>
    %545 = arith.addf %541, %544 : vector<16x128xf32>
    %cst_394 = arith.constant 5.000000e-01 : f32
    %546 = vector.broadcast %cst_394 : f32 to vector<16x128xf32>
    %547 = arith.mulf %546, %545 : vector<16x128xf32>
    %cst_395 = arith.constant 0.707106769 : f32
    %548 = vector.broadcast %cst_395 : f32 to vector<16x128xf32>
    %549 = arith.mulf %545, %548 : vector<16x128xf32>
    %550 = math.erf %549 : vector<16x128xf32>
    %cst_396 = arith.constant 1.000000e+00 : f32
    %551 = vector.broadcast %cst_396 : f32 to vector<16x128xf32>
    %552 = arith.addf %551, %550 : vector<16x128xf32>
    %553 = arith.mulf %547, %552 : vector<16x128xf32>
    %c1_397 = arith.constant 1 : index
    %c0_398 = arith.constant 0 : index
    %c0_399 = arith.constant 0 : index
    %554 = vector.load %arg16[%c1_397, %c0_398, %c0_399] : memref<2x128x64xf32, #tpu.memory_space<vmem>>, vector<1x128x64xf32>
    %555 = vector.shape_cast %554 : vector<1x128x64xf32> to vector<128x64xf32>
    %cst_400 = arith.constant dense<0.000000e+00> : vector<16x64xf32>
    %556 = tpu.matmul %553, %555, %cst_400 {dimension_numbers = #tpu.dot_dimension_numbers<[1], [0], [0], [1], [0, 0, 1, 1], [], []>} : vector<16x128xf32>, vector<128x64xf32>, vector<16x64xf32> -> vector<16x64xf32>
    %c1_401 = arith.constant 1 : index
    %c0_402 = arith.constant 0 : index
    %c0_403 = arith.constant 0 : index
    %557 = vector.load %arg17[%c1_401, %c0_402, %c0_403] : memref<2x1x64xf32, #tpu.memory_space<vmem>>, vector<1x1x64xf32>
    %558 = vector.shape_cast %557 : vector<1x1x64xf32> to vector<1x64xf32>
    %559 = vector.broadcast %558 : vector<1x64xf32> to vector<16x64xf32>
    %560 = arith.addf %556, %559 : vector<16x64xf32>
    %561 = arith.addf %514, %560 : vector<16x64xf32>
    %c0_404 = arith.constant 0 : index
    %c0_405 = arith.constant 0 : index
    %562 = vector.load %arg18[%c0_404, %c0_405] : memref<1x64xf32, #tpu.memory_space<vmem>>, vector<1x64xf32>
    %c0_406 = arith.constant 0 : index
    %c0_407 = arith.constant 0 : index
    %563 = vector.load %arg19[%c0_406, %c0_407] : memref<1x64xf32, #tpu.memory_space<vmem>>, vector<1x64xf32>
    %cst_408 = arith.constant dense<0.000000e+00> : vector<16xf32>
    %564 = vector.multi_reduction <add>, %561, %cst_408 [1] : vector<16x64xf32> to vector<16xf32>
    %565 = vector.shape_cast %564 : vector<16xf32> to vector<16x1xf32>
    %cst_409 = arith.constant 6.400000e+01 : f32
    %566 = vector.broadcast %cst_409 : f32 to vector<16x1xf32>
    %567 = arith.divf %565, %566 : vector<16x1xf32>
    %568 = vector.broadcast %567 : vector<16x1xf32> to vector<16x64xf32>
    %569 = arith.subf %561, %568 : vector<16x64xf32>
    %570 = arith.mulf %569, %569 : vector<16x64xf32>
    %cst_410 = arith.constant dense<0.000000e+00> : vector<16xf32>
    %571 = vector.multi_reduction <add>, %570, %cst_410 [1] : vector<16x64xf32> to vector<16xf32>
    %572 = vector.shape_cast %571 : vector<16xf32> to vector<16x1xf32>
    %cst_411 = arith.constant 6.400000e+01 : f32
    %573 = vector.broadcast %cst_411 : f32 to vector<16x1xf32>
    %574 = arith.divf %572, %573 : vector<16x1xf32>
    %cst_412 = arith.constant 9.99999974E-6 : f32
    %575 = vector.broadcast %cst_412 : f32 to vector<16x1xf32>
    %576 = arith.addf %574, %575 : vector<16x1xf32>
    %577 = math.rsqrt %576 : vector<16x1xf32>
    %578 = vector.broadcast %577 : vector<16x1xf32> to vector<16x64xf32>
    %579 = arith.mulf %569, %578 : vector<16x64xf32>
    %580 = vector.broadcast %562 : vector<1x64xf32> to vector<16x64xf32>
    %581 = arith.mulf %579, %580 : vector<16x64xf32>
    %582 = vector.broadcast %563 : vector<1x64xf32> to vector<16x64xf32>
    %583 = arith.addf %581, %582 : vector<16x64xf32>
    %584 = tpu.concatenate %284, %561, %583 in 1 : vector<16x64xf32>, vector<16x64xf32>, vector<16x64xf32> -> vector<16x192xf32>
    %c0_413 = arith.constant 0 : index
    %c0_414 = arith.constant 0 : index
    %585 = vector.load %arg20[%c0_413, %c0_414] : memref<16x192xf32, #tpu.memory_space<vmem>>, vector<16x192xf32>
    tpu.vector_store %arg20[%c0_413, %c0_414], %584 {strides = array<i32>} : memref<16x192xf32, #tpu.memory_space<vmem>>, vector<16x192xf32>,
    return
  }
  func.func @transform_0(%arg0: i32) -> (i32, i32) {
    %c0_i32 = arith.constant 0 : i32
    %c0_i32_0 = arith.constant 0 : i32
    return %arg0, %c0_i32 : i32, i32
  }
  func.func @transform_1(%arg0: i32) -> (i32, i32) {
    %c0_i32 = arith.constant 0 : i32
    %c0_i32_0 = arith.constant 0 : i32
    %c0_i32_1 = arith.constant 0 : i32
    return %c0_i32, %c0_i32_0 : i32, i32
  }
  func.func @transform_2(%arg0: i32) -> (i32, i32) {
    %c0_i32 = arith.constant 0 : i32
    %c0_i32_0 = arith.constant 0 : i32
    %c0_i32_1 = arith.constant 0 : i32
    return %c0_i32, %c0_i32_0 : i32, i32
  }
  func.func @transform_3(%arg0: i32) -> (i32, i32) {
    %c0_i32 = arith.constant 0 : i32
    %c0_i32_0 = arith.constant 0 : i32
    return %arg0, %c0_i32 : i32, i32
  }
  func.func @transform_4(%arg0: i32) -> (i32, i32, i32) {
    %c0_i32 = arith.constant 0 : i32
    %c0_i32_0 = arith.constant 0 : i32
    %c0_i32_1 = arith.constant 0 : i32
    %c0_i32_2 = arith.constant 0 : i32
    return %c0_i32, %c0_i32_0, %c0_i32_1 : i32, i32, i32
  }
  func.func @transform_5(%arg0: i32) -> (i32, i32, i32) {
    %c0_i32 = arith.constant 0 : i32
    %c0_i32_0 = arith.constant 0 : i32
    %c0_i32_1 = arith.constant 0 : i32
    %c0_i32_2 = arith.constant 0 : i32
    return %c0_i32, %c0_i32_0, %c0_i32_1 : i32, i32, i32
  }
  func.func @transform_6(%arg0: i32) -> (i32, i32, i32) {
    %c0_i32 = arith.constant 0 : i32
    %c0_i32_0 = arith.constant 0 : i32
    %c0_i32_1 = arith.constant 0 : i32
    %c0_i32_2 = arith.constant 0 : i32
    return %c0_i32, %c0_i32_0, %c0_i32_1 : i32, i32, i32
  }
  func.func @transform_7(%arg0: i32) -> (i32, i32, i32) {
    %c0_i32 = arith.constant 0 : i32
    %c0_i32_0 = arith.constant 0 : i32
    %c0_i32_1 = arith.constant 0 : i32
    %c0_i32_2 = arith.constant 0 : i32
    return %c0_i32, %c0_i32_0, %c0_i32_1 : i32, i32, i32
  }
  func.func @transform_8(%arg0: i32) -> (i32, i32, i32) {
    %c0_i32 = arith.constant 0 : i32
    %c0_i32_0 = arith.constant 0 : i32
    %c0_i32_1 = arith.constant 0 : i32
    %c0_i32_2 = arith.constant 0 : i32
    return %c0_i32, %c0_i32_0, %c0_i32_1 : i32, i32, i32
  }
  func.func @transform_9(%arg0: i32) -> (i32, i32, i32) {
    %c0_i32 = arith.constant 0 : i32
    %c0_i32_0 = arith.constant 0 : i32
    %c0_i32_1 = arith.constant 0 : i32
    %c0_i32_2 = arith.constant 0 : i32
    return %c0_i32, %c0_i32_0, %c0_i32_1 : i32, i32, i32
  }
  func.func @transform_10(%arg0: i32) -> (i32, i32, i32) {
    %c0_i32 = arith.constant 0 : i32
    %c0_i32_0 = arith.constant 0 : i32
    %c0_i32_1 = arith.constant 0 : i32
    %c0_i32_2 = arith.constant 0 : i32
    return %c0_i32, %c0_i32_0, %c0_i32_1 : i32, i32, i32
  }
  func.func @transform_11(%arg0: i32) -> (i32, i32, i32) {
    %c0_i32 = arith.constant 0 : i32
    %c0_i32_0 = arith.constant 0 : i32
    %c0_i32_1 = arith.constant 0 : i32
    %c0_i32_2 = arith.constant 0 : i32
    return %c0_i32, %c0_i32_0, %c0_i32_1 : i32, i32, i32
  }
  func.func @transform_12(%arg0: i32) -> (i32, i32, i32) {
    %c0_i32 = arith.constant 0 : i32
    %c0_i32_0 = arith.constant 0 : i32
    %c0_i32_1 = arith.constant 0 : i32
    %c0_i32_2 = arith.constant 0 : i32
    return %c0_i32, %c0_i32_0, %c0_i32_1 : i32, i32, i32
  }
  func.func @transform_13(%arg0: i32) -> (i32, i32, i32) {
    %c0_i32 = arith.constant 0 : i32
    %c0_i32_0 = arith.constant 0 : i32
    %c0_i32_1 = arith.constant 0 : i32
    %c0_i32_2 = arith.constant 0 : i32
    return %c0_i32, %c0_i32_0, %c0_i32_1 : i32, i32, i32
  }
  func.func @transform_14(%arg0: i32) -> (i32, i32, i32) {
    %c0_i32 = arith.constant 0 : i32
    %c0_i32_0 = arith.constant 0 : i32
    %c0_i32_1 = arith.constant 0 : i32
    %c0_i32_2 = arith.constant 0 : i32
    return %c0_i32, %c0_i32_0, %c0_i32_1 : i32, i32, i32
  }
  func.func @transform_15(%arg0: i32) -> (i32, i32, i32) {
    %c0_i32 = arith.constant 0 : i32
    %c0_i32_0 = arith.constant 0 : i32
    %c0_i32_1 = arith.constant 0 : i32
    %c0_i32_2 = arith.constant 0 : i32
    return %c0_i32, %c0_i32_0, %c0_i32_1 : i32, i32, i32
  }
  func.func @transform_16(%arg0: i32) -> (i32, i32, i32) {
    %c0_i32 = arith.constant 0 : i32
    %c0_i32_0 = arith.constant 0 : i32
    %c0_i32_1 = arith.constant 0 : i32
    %c0_i32_2 = arith.constant 0 : i32
    return %c0_i32, %c0_i32_0, %c0_i32_1 : i32, i32, i32
  }
  func.func @transform_17(%arg0: i32) -> (i32, i32) {
    %c0_i32 = arith.constant 0 : i32
    %c0_i32_0 = arith.constant 0 : i32
    %c0_i32_1 = arith.constant 0 : i32
    return %c0_i32, %c0_i32_0 : i32, i32
  }
  func.func @transform_18(%arg0: i32) -> (i32, i32) {
    %c0_i32 = arith.constant 0 : i32
    %c0_i32_0 = arith.constant 0 : i32
    %c0_i32_1 = arith.constant 0 : i32
    return %c0_i32, %c0_i32_0 : i32, i32
  }
  func.func @transform_19(%arg0: i32) -> (i32, i32) {
    %c0_i32 = arith.constant 0 : i32
    %c0_i32_0 = arith.constant 0 : i32
    return %arg0, %c0_i32 : i32, i32
  }
}

</mosaic_0001>

<llo_original>
// kernel: vit_forward.1
$region0: #{vit_forward.1}
  #allocation0 [shape = 'u32[]', space=smem, size = 0x4, offset = 0x4, fixed_abs, tag = 'smem constant byte address 0x4 - core index']
  #allocation1 [shape = 'u32[144,128]{1,0:T(1,128)}', space=vmem, size = 0x12000, scoped, tag = 'internal scratch']
  %s0 = inlined_call_operand.vmem [shape: bf16[16,1024], index: 0, kind: input, shape index: {}]
  %s1 = inlined_call_operand.vmem [shape: bf16[1024,64], index: 1, kind: input, shape index: {}]
  %s2 = inlined_call_operand.vmem [shape: f32[1,64], index: 2, kind: input, shape index: {}]
  %s3 = inlined_call_operand.vmem [shape: f32[16,64], index: 3, kind: input, shape index: {}]
  %s4 = inlined_call_operand.vmem [shape: f32[2,1,64], index: 4, kind: input, shape index: {}]
  %s5 = inlined_call_operand.vmem [shape: f32[2,1,64], index: 5, kind: input, shape index: {}]
  %s6 = inlined_call_operand.vmem [shape: f32[8,64,16], index: 6, kind: input, shape index: {}]
  %s7 = inlined_call_operand.vmem [shape: f32[8,64,16], index: 7, kind: input, shape index: {}]
  %s8 = inlined_call_operand.vmem [shape: f32[8,64,16], index: 8, kind: input, shape index: {}]
  %s9 = inlined_call_operand.vmem [shape: f32[8,16,64], index: 9, kind: input, shape index: {}]
  %s10 = inlined_call_operand.vmem [shape: f32[2,1,64], index: 10, kind: input, shape index: {}]
  %s11 = inlined_call_operand.vmem [shape: f32[2,1,64], index: 11, kind: input, shape index: {}]
  %s12 = inlined_call_operand.vmem [shape: f32[2,1,64], index: 12, kind: input, shape index: {}]
  %s13 = inlined_call_operand.vmem [shape: f32[2,64,128], index: 13, kind: input, shape index: {}]
  %s14 = inlined_call_operand.vmem [shape: f32[2,1,128], index: 14, kind: input, shape index: {}]
  %s15 = inlined_call_operand.vmem [shape: f32[2,128,64], index: 15, kind: input, shape index: {}]
  %s16 = inlined_call_operand.vmem [shape: f32[2,1,64], index: 16, kind: input, shape index: {}]
  %s17 = inlined_call_operand.vmem [shape: f32[1,64], index: 17, kind: input, shape index: {}]
  %s18 = inlined_call_operand.vmem [shape: f32[1,64], index: 18, kind: input, shape index: {}]
  %s19 = inlined_call_operand.vmem [shape: f32[16,192], index: 19, kind: output, shape index: {}]
  %s20 = sld [smem:[#allocation0]]
  $region86: #{vit_forward.1} parent=0
    _
  %s22 = ssub.s32 1, %s20
  %s23 = scalar_select 0, %s22, %s20
  // Predicated region
  $region2: #{vit_forward.1} parent=0 // pred_check
    _
  $region3: #{vit_forward.1} parent=0 // pred_check_branch
    %25 = sbr.rel (0) target = $region5
  $region4: #{vit_forward.1} parent=0 // pred_region
    _
  $region5: #{vit_forward.1} parent=0 // pred_fallthru
    _
  // Predicated region
  $region6: #{vit_forward.1} parent=0 // pred_check
    _
  $region7: #{vit_forward.1} parent=0 // pred_check_branch
    %27 = sbr.rel (0) target = $region9
  $region8: #{vit_forward.1} parent=0 // pred_region
    _
  $region9: #{vit_forward.1} parent=0 // pred_fallthru
    _
  // Predicated region
  $region10: #{vit_forward.1} parent=0 // pred_check
    _
  $region11: #{vit_forward.1} parent=0 // pred_check_branch
    %29 = sbr.rel (0) target = $region13
  $region12: #{vit_forward.1} parent=0 // pred_region
    _
  $region13: #{vit_forward.1} parent=0 // pred_fallthru
    _
  // Predicated region
  $region14: #{vit_forward.1} parent=0 // pred_check
    _
  $region15: #{vit_forward.1} parent=0 // pred_check_branch
    %31 = sbr.rel (0) target = $region17
  $region16: #{vit_forward.1} parent=0 // pred_region
    _
  $region17: #{vit_forward.1} parent=0 // pred_fallthru
    _
  // Predicated region
  $region18: #{vit_forward.1} parent=0 // pred_check
    _
  $region19: #{vit_forward.1} parent=0 // pred_check_branch
    %33 = sbr.rel (0) target = $region21
  $region20: #{vit_forward.1} parent=0 // pred_region
    _
  $region21: #{vit_forward.1} parent=0 // pred_fallthru
    _
  // Predicated region
  $region22: #{vit_forward.1} parent=0 // pred_check
    _
  $region23: #{vit_forward.1} parent=0 // pred_check_branch
    %35 = sbr.rel (0) target = $region25
  $region24: #{vit_forward.1} parent=0 // pred_region
    _
  $region25: #{vit_forward.1} parent=0 // pred_fallthru
    _
  // Predicated region
  $region26: #{vit_forward.1} parent=0 // pred_check
    _
  $region27: #{vit_forward.1} parent=0 // pred_check_branch
    %37 = sbr.rel (0) target = $region29
  $region28: #{vit_forward.1} parent=0 // pred_region
    _
  $region29: #{vit_forward.1} parent=0 // pred_fallthru
    _
  // Predicated region
  $region30: #{vit_forward.1} parent=0 // pred_check
    _
  $region31: #{vit_forward.1} parent=0 // pred_check_branch
    %39 = sbr.rel (0) target = $region33
  $region32: #{vit_forward.1} parent=0 // pred_region
    _
  $region33: #{vit_forward.1} parent=0 // pred_fallthru
    _
  // Predicated region
  $region34: #{vit_forward.1} parent=0 // pred_check
    _
  $region35: #{vit_forward.1} parent=0 // pred_check_branch
    %41 = sbr.rel (0) target = $region37
  $region36: #{vit_forward.1} parent=0 // pred_region
    _
  $region37: #{vit_forward.1} parent=0 // pred_fallthru
    _
  // Predicated region
  $region38: #{vit_forward.1} parent=0 // pred_check
    _
  $region39: #{vit_forward.1} parent=0 // pred_check_branch
    %43 = sbr.rel (0) target = $region41
  $region40: #{vit_forward.1} parent=0 // pred_region
    _
  $region41: #{vit_forward.1} parent=0 // pred_fallthru
    _
  // Predicated region
  $region42: #{vit_forward.1} parent=0 // pred_check
    _
  $region43: #{vit_forward.1} parent=0 // pred_check_branch
    %45 = sbr.rel (0) target = $region45
  $region44: #{vit_forward.1} parent=0 // pred_region
    _
  $region45: #{vit_forward.1} parent=0 // pred_fallthru
    _
  // Predicated region
  $region46: #{vit_forward.1} parent=0 // pred_check
    _
  $region47: #{vit_forward.1} parent=0 // pred_check_branch
    %47 = sbr.rel (0) target = $region49
  $region48: #{vit_forward.1} parent=0 // pred_region
    _
  $region49: #{vit_forward.1} parent=0 // pred_fallthru
    _
  // Predicated region
  $region50: #{vit_forward.1} parent=0 // pred_check
    _
  $region51: #{vit_forward.1} parent=0 // pred_check_branch
    %49 = sbr.rel (0) target = $region53
  $region52: #{vit_forward.1} parent=0 // pred_region
    _
  $region53: #{vit_forward.1} parent=0 // pred_fallthru
    _
  // Predicated region
  $region54: #{vit_forward.1} parent=0 // pred_check
    _
  $region55: #{vit_forward.1} parent=0 // pred_check_branch
    %51 = sbr.rel (0) target = $region57
  $region56: #{vit_forward.1} parent=0 // pred_region
    _
  $region57: #{vit_forward.1} parent=0 // pred_fallthru
    _
  // Predicated region
  $region58: #{vit_forward.1} parent=0 // pred_check
    _
  $region59: #{vit_forward.1} parent=0 // pred_check_branch
    %53 = sbr.rel (0) target = $region61
  $region60: #{vit_forward.1} parent=0 // pred_region
    _
  $region61: #{vit_forward.1} parent=0 // pred_fallthru
    _
  // Predicated region
  $region62: #{vit_forward.1} parent=0 // pred_check
    _
  $region63: #{vit_forward.1} parent=0 // pred_check_branch
    %55 = sbr.rel (0) target = $region65
  $region64: #{vit_forward.1} parent=0 // pred_region
    _
  $region65: #{vit_forward.1} parent=0 // pred_fallthru
    _
  // Predicated region
  $region66: #{vit_forward.1} parent=0 // pred_check
    _
  $region67: #{vit_forward.1} parent=0 // pred_check_branch
    %57 = sbr.rel (0) target = $region69
  $region68: #{vit_forward.1} parent=0 // pred_region
    _
  $region69: #{vit_forward.1} parent=0 // pred_fallthru
    _
  // Predicated region
  $region70: #{vit_forward.1} parent=0 // pred_check
    _
  $region71: #{vit_forward.1} parent=0 // pred_check_branch
    %59 = sbr.rel (0) target = $region73
  $region72: #{vit_forward.1} parent=0 // pred_region
    _
  $region73: #{vit_forward.1} parent=0 // pred_fallthru
    _
  // Predicated region
  $region74: #{vit_forward.1} parent=0 // pred_check
    _
  $region75: #{vit_forward.1} parent=0 // pred_check_branch
    %61 = sbr.rel (0) target = $region77
  $region76: #{vit_forward.1} parent=0 // pred_region
    _
  $region77: #{vit_forward.1} parent=0 // pred_fallthru
    _
  %v63 = vld [vmem:[%s0] sm:$0xff]
  %v64 = vld [vmem:[%s0 + $0x8] sm:$0xff]
  %v65 = vld [vmem:[%s0 + $0x10] sm:$0xff]
  %v66 = vld [vmem:[%s0 + $0x18] sm:$0xff]
  %v67 = vld [vmem:[%s0 + $0x20] sm:$0xff]
  %v68 = vld [vmem:[%s0 + $0x28] sm:$0xff]
  %v69 = vld [vmem:[%s0 + $0x30] sm:$0xff]
  %v70 = vld [vmem:[%s0 + $0x38] sm:$0xff]
  %v71 = vld [vmem:[%s1] sm:$0xf]
  %v72 = vld [vmem:[%s1 + $0x4] sm:$0xf]
  %v73 = vld [vmem:[%s1 + $0x8] sm:$0xf]
  %v74 = vld [vmem:[%s1 + $0xc] sm:$0xf]
  %v75 = vld [vmem:[%s1 + $0x10] sm:$0xf]
  %v76 = vld [vmem:[%s1 + $0x14] sm:$0xf]
  %v77 = vld [vmem:[%s1 + $0x18] sm:$0xf]
  %v78 = vld [vmem:[%s1 + $0x1c] sm:$0xf]
  %v79 = vld [vmem:[%s1 + $0x20] sm:$0xf]
  %v80 = vld [vmem:[%s1 + $0x24] sm:$0xf]
  %v81 = vld [vmem:[%s1 + $0x28] sm:$0xf]
  %v82 = vld [vmem:[%s1 + $0x2c] sm:$0xf]
  %v83 = vld [vmem:[%s1 + $0x30] sm:$0xf]
  %v84 = vld [vmem:[%s1 + $0x34] sm:$0xf]
  %v85 = vld [vmem:[%s1 + $0x38] sm:$0xf]
  %v86 = vld [vmem:[%s1 + $0x3c] sm:$0xf]
  %v87 = vld [vmem:[%s1 + $0x40] sm:$0xf]
  %v88 = vld [vmem:[%s1 + $0x44] sm:$0xf]
  %v89 = vld [vmem:[%s1 + $0x48] sm:$0xf]
  %v90 = vld [vmem:[%s1 + $0x4c] sm:$0xf]
  %v91 = vld [vmem:[%s1 + $0x50] sm:$0xf]
  %v92 = vld [vmem:[%s1 + $0x54] sm:$0xf]
  %v93 = vld [vmem:[%s1 + $0x58] sm:$0xf]
  %v94 = vld [vmem:[%s1 + $0x5c] sm:$0xf]
  %v95 = vld [vmem:[%s1 + $0x60] sm:$0xf]
  %v96 = vld [vmem:[%s1 + $0x64] sm:$0xf]
  %v97 = vld [vmem:[%s1 + $0x68] sm:$0xf]
  %v98 = vld [vmem:[%s1 + $0x6c] sm:$0xf]
  %v99 = vld [vmem:[%s1 + $0x70] sm:$0xf]
  %v100 = vld [vmem:[%s1 + $0x74] sm:$0xf]
  %v101 = vld [vmem:[%s1 + $0x78] sm:$0xf]
  %v102 = vld [vmem:[%s1 + $0x7c] sm:$0xf]
  %v103 = vld [vmem:[%s1 + $0x80] sm:$0xf]
  %v104 = vld [vmem:[%s1 + $0x84] sm:$0xf]
  %v105 = vld [vmem:[%s1 + $0x88] sm:$0xf]
  %v106 = vld [vmem:[%s1 + $0x8c] sm:$0xf]
  %v107 = vld [vmem:[%s1 + $0x90] sm:$0xf]
  %v108 = vld [vmem:[%s1 + $0x94] sm:$0xf]
  %v109 = vld [vmem:[%s1 + $0x98] sm:$0xf]
  %v110 = vld [vmem:[%s1 + $0x9c] sm:$0xf]
  %v111 = vld [vmem:[%s1 + $0xa0] sm:$0xf]
  %v112 = vld [vmem:[%s1 + $0xa4] sm:$0xf]
  %v113 = vld [vmem:[%s1 + $0xa8] sm:$0xf]
  %v114 = vld [vmem:[%s1 + $0xac] sm:$0xf]
  %v115 = vld [vmem:[%s1 + $0xb0] sm:$0xf]
  %v116 = vld [vmem:[%s1 + $0xb4] sm:$0xf]
  %v117 = vld [vmem:[%s1 + $0xb8] sm:$0xf]
  %v118 = vld [vmem:[%s1 + $0xbc] sm:$0xf]
  %v119 = vld [vmem:[%s1 + $0xc0] sm:$0xf]
  %v120 = vld [vmem:[%s1 + $0xc4] sm:$0xf]
  %v121 = vld [vmem:[%s1 + $0xc8] sm:$0xf]
  %v122 = vld [vmem:[%s1 + $0xcc] sm:$0xf]
  %v123 = vld [vmem:[%s1 + $0xd0] sm:$0xf]
  %v124 = vld [vmem:[%s1 + $0xd4] sm:$0xf]
  %v125 = vld [vmem:[%s1 + $0xd8] sm:$0xf]
  %v126 = vld [vmem:[%s1 + $0xdc] sm:$0xf]
  %v127 = vld [vmem:[%s1 + $0xe0] sm:$0xf]
  %v128 = vld [vmem:[%s1 + $0xe4] sm:$0xf]
  %v129 = vld [vmem:[%s1 + $0xe8] sm:$0xf]
  %v130 = vld [vmem:[%s1 + $0xec] sm:$0xf]
  %v131 = vld [vmem:[%s1 + $0xf0] sm:$0xf]
  %v132 = vld [vmem:[%s1 + $0xf4] sm:$0xf]
  %v133 = vld [vmem:[%s1 + $0xf8] sm:$0xf]
  %v134 = vld [vmem:[%s1 + $0xfc] sm:$0xf]
  %v135 = vld [vmem:[%s1 + $0x100] sm:$0xf]
  %v136 = vld [vmem:[%s1 + $0x104] sm:$0xf]
  %v137 = vld [vmem:[%s1 + $0x108] sm:$0xf]
  %v138 = vld [vmem:[%s1 + $0x10c] sm:$0xf]
  %v139 = vld [vmem:[%s1 + $0x110] sm:$0xf]
  %v140 = vld [vmem:[%s1 + $0x114] sm:$0xf]
  %v141 = vld [vmem:[%s1 + $0x118] sm:$0xf]
  %v142 = vld [vmem:[%s1 + $0x11c] sm:$0xf]
  %v143 = vld [vmem:[%s1 + $0x120] sm:$0xf]
  %v144 = vld [vmem:[%s1 + $0x124] sm:$0xf]
  %v145 = vld [vmem:[%s1 + $0x128] sm:$0xf]
  %v146 = vld [vmem:[%s1 + $0x12c] sm:$0xf]
  %v147 = vld [vmem:[%s1 + $0x130] sm:$0xf]
  %v148 = vld [vmem:[%s1 + $0x134] sm:$0xf]
  %v149 = vld [vmem:[%s1 + $0x138] sm:$0xf]
  %v150 = vld [vmem:[%s1 + $0x13c] sm:$0xf]
  %v151 = vld [vmem:[%s1 + $0x140] sm:$0xf]
  %v152 = vld [vmem:[%s1 + $0x144] sm:$0xf]
  %v153 = vld [vmem:[%s1 + $0x148] sm:$0xf]
  %v154 = vld [vmem:[%s1 + $0x14c] sm:$0xf]
  %v155 = vld [vmem:[%s1 + $0x150] sm:$0xf]
  %v156 = vld [vmem:[%s1 + $0x154] sm:$0xf]
  %v157 = vld [vmem:[%s1 + $0x158] sm:$0xf]
  %v158 = vld [vmem:[%s1 + $0x15c] sm:$0xf]
  %v159 = vld [vmem:[%s1 + $0x160] sm:$0xf]
  %v160 = vld [vmem:[%s1 + $0x164] sm:$0xf]
  %v161 = vld [vmem:[%s1 + $0x168] sm:$0xf]
  %v162 = vld [vmem:[%s1 + $0x16c] sm:$0xf]
  %v163 = vld [vmem:[%s1 + $0x170] sm:$0xf]
  %v164 = vld [vmem:[%s1 + $0x174] sm:$0xf]
  %v165 = vld [vmem:[%s1 + $0x178] sm:$0xf]
  %v166 = vld [vmem:[%s1 + $0x17c] sm:$0xf]
  %v167 = vld [vmem:[%s1 + $0x180] sm:$0xf]
  %v168 = vld [vmem:[%s1 + $0x184] sm:$0xf]
  %v169 = vld [vmem:[%s1 + $0x188] sm:$0xf]
  %v170 = vld [vmem:[%s1 + $0x18c] sm:$0xf]
  %v171 = vld [vmem:[%s1 + $0x190] sm:$0xf]
  %v172 = vld [vmem:[%s1 + $0x194] sm:$0xf]
  %v173 = vld [vmem:[%s1 + $0x198] sm:$0xf]
  %v174 = vld [vmem:[%s1 + $0x19c] sm:$0xf]
  %v175 = vld [vmem:[%s1 + $0x1a0] sm:$0xf]
  %v176 = vld [vmem:[%s1 + $0x1a4] sm:$0xf]
  %v177 = vld [vmem:[%s1 + $0x1a8] sm:$0xf]
  %v178 = vld [vmem:[%s1 + $0x1ac] sm:$0xf]
  %v179 = vld [vmem:[%s1 + $0x1b0] sm:$0xf]
  %v180 = vld [vmem:[%s1 + $0x1b4] sm:$0xf]
  %v181 = vld [vmem:[%s1 + $0x1b8] sm:$0xf]
  %v182 = vld [vmem:[%s1 + $0x1bc] sm:$0xf]
  %v183 = vld [vmem:[%s1 + $0x1c0] sm:$0xf]
  %v184 = vld [vmem:[%s1 + $0x1c4] sm:$0xf]
  %v185 = vld [vmem:[%s1 + $0x1c8] sm:$0xf]
  %v186 = vld [vmem:[%s1 + $0x1cc] sm:$0xf]
  %v187 = vld [vmem:[%s1 + $0x1d0] sm:$0xf]
  %v188 = vld [vmem:[%s1 + $0x1d4] sm:$0xf]
  %v189 = vld [vmem:[%s1 + $0x1d8] sm:$0xf]
  %v190 = vld [vmem:[%s1 + $0x1dc] sm:$0xf]
  %v191 = vld [vmem:[%s1 + $0x1e0] sm:$0xf]
  %v192 = vld [vmem:[%s1 + $0x1e4] sm:$0xf]
  %v193 = vld [vmem:[%s1 + $0x1e8] sm:$0xf]
  %v194 = vld [vmem:[%s1 + $0x1ec] sm:$0xf]
  %v195 = vld [vmem:[%s1 + $0x1f0] sm:$0xf]
  %v196 = vld [vmem:[%s1 + $0x1f4] sm:$0xf]
  %v197 = vld [vmem:[%s1 + $0x1f8] sm:$0xf]
  %v198 = vld [vmem:[%s1 + $0x1fc] sm:$0xf]
  %v199 = vld [vmem:[%s2] sm:$0x1]
  %v201 = vlaneseq
  %v202 = vshrl.u32 %v201, 7
  %v203 = vsub.s32 0, %v202
  %v204 = vrot.slane %v199, %v203
  %v214 = vunpack.c.l.b16 %v63
  %v215 = vunpack.c.h.b16 %v63
  %v216 = vunpack.c.l.b16 %v64
  %v217 = vunpack.c.h.b16 %v64
  %v218 = vunpack.c.l.b16 %v65
  %v219 = vunpack.c.h.b16 %v65
  %v220 = vunpack.c.l.b16 %v66
  %v221 = vunpack.c.h.b16 %v66
  %v222 = vunpack.c.l.b16 %v67
  %v223 = vunpack.c.h.b16 %v67
  %v224 = vunpack.c.l.b16 %v68
  %v225 = vunpack.c.h.b16 %v68
  %v226 = vunpack.c.l.b16 %v69
  %v227 = vunpack.c.h.b16 %v69
  %v228 = vunpack.c.l.b16 %v70
  %v229 = vunpack.c.h.b16 %v70
  %v230 = vpack.c.b16 %v222, %v214
  %v231 = vpack.c.b16 %v223, %v215
  %v232 = vpack.c.b16 %v224, %v216
  %v233 = vpack.c.b16 %v225, %v217
  %v234 = vpack.c.b16 %v226, %v218
  %v235 = vpack.c.b16 %v227, %v219
  %v236 = vpack.c.b16 %v228, %v220
  %v237 = vpack.c.b16 %v229, %v221
  %v374 = vunpack.c.l.b16 %v71
  %v375 = vunpack.c.l.b16 %v72
  %v376 = vunpack.c.l.b16 %v73
  %v377 = vunpack.c.l.b16 %v74
  %v378 = vunpack.c.l.b16 %v75
  %v379 = vunpack.c.l.b16 %v76
  %v380 = vunpack.c.l.b16 %v77
  %v381 = vunpack.c.l.b16 %v78
  %v382 = vunpack.c.l.b16 %v79
  %v383 = vunpack.c.l.b16 %v80
  %v384 = vunpack.c.l.b16 %v81
  %v385 = vunpack.c.l.b16 %v82
  %v386 = vunpack.c.l.b16 %v83
  %v387 = vunpack.c.l.b16 %v84
  %v388 = vunpack.c.l.b16 %v85
  %v389 = vunpack.c.l.b16 %v86
  %v390 = vunpack.c.l.b16 %v87
  %v391 = vunpack.c.l.b16 %v88
  %v392 = vunpack.c.l.b16 %v89
  %v393 = vunpack.c.l.b16 %v90
  %v394 = vunpack.c.l.b16 %v91
  %v395 = vunpack.c.l.b16 %v92
  %v396 = vunpack.c.l.b16 %v93
  %v397 = vunpack.c.l.b16 %v94
  %v398 = vunpack.c.l.b16 %v95
  %v399 = vunpack.c.l.b16 %v96
  %v400 = vunpack.c.l.b16 %v97
  %v401 = vunpack.c.l.b16 %v98
  %v402 = vunpack.c.l.b16 %v99
  %v403 = vunpack.c.l.b16 %v100
  %v404 = vunpack.c.l.b16 %v101
  %v405 = vunpack.c.l.b16 %v102
  %v406 = vunpack.c.l.b16 %v103
  %v407 = vunpack.c.l.b16 %v104
  %v408 = vunpack.c.l.b16 %v105
  %v409 = vunpack.c.l.b16 %v106
  %v410 = vunpack.c.l.b16 %v107
  %v411 = vunpack.c.l.b16 %v108
  %v412 = vunpack.c.l.b16 %v109
  %v413 = vunpack.c.l.b16 %v110
  %v414 = vunpack.c.l.b16 %v111
  %v415 = vunpack.c.l.b16 %v112
  %v416 = vunpack.c.l.b16 %v113
  %v417 = vunpack.c.l.b16 %v114
  %v418 = vunpack.c.l.b16 %v115
  %v419 = vunpack.c.l.b16 %v116
  %v420 = vunpack.c.l.b16 %v117
  %v421 = vunpack.c.l.b16 %v118
  %v422 = vunpack.c.l.b16 %v119
  %v423 = vunpack.c.l.b16 %v120
  %v424 = vunpack.c.l.b16 %v121
  %v425 = vunpack.c.l.b16 %v122
  %v426 = vunpack.c.l.b16 %v123
  %v427 = vunpack.c.l.b16 %v124
  %v428 = vunpack.c.l.b16 %v125
  %v429 = vunpack.c.l.b16 %v126
  %v430 = vunpack.c.l.b16 %v127
  %v431 = vunpack.c.l.b16 %v128
  %v432 = vunpack.c.l.b16 %v129
  %v433 = vunpack.c.l.b16 %v130
  %v434 = vunpack.c.l.b16 %v131
  %v435 = vunpack.c.l.b16 %v132
  %v436 = vunpack.c.l.b16 %v133
  %v437 = vunpack.c.l.b16 %v134
  %v438 = vunpack.c.l.b16 %v135
  %v439 = vunpack.c.l.b16 %v136
  %v440 = vunpack.c.l.b16 %v137
  %v441 = vunpack.c.l.b16 %v138
  %v442 = vunpack.c.l.b16 %v139
  %v443 = vunpack.c.l.b16 %v140
  %v444 = vunpack.c.l.b16 %v141
  %v445 = vunpack.c.l.b16 %v142
  %v446 = vunpack.c.l.b16 %v143
  %v447 = vunpack.c.l.b16 %v144
  %v448 = vunpack.c.l.b16 %v145
  %v449 = vunpack.c.l.b16 %v146
  %v450 = vunpack.c.l.b16 %v147
  %v451 = vunpack.c.l.b16 %v148
  %v452 = vunpack.c.l.b16 %v149
  %v453 = vunpack.c.l.b16 %v150
  %v454 = vunpack.c.l.b16 %v151
  %v455 = vunpack.c.l.b16 %v152
  %v456 = vunpack.c.l.b16 %v153
  %v457 = vunpack.c.l.b16 %v154
  %v458 = vunpack.c.l.b16 %v155
  %v459 = vunpack.c.l.b16 %v156
  %v460 = vunpack.c.l.b16 %v157
  %v461 = vunpack.c.l.b16 %v158
  %v462 = vunpack.c.l.b16 %v159
  %v463 = vunpack.c.l.b16 %v160
  %v464 = vunpack.c.l.b16 %v161
  %v465 = vunpack.c.l.b16 %v162
  %v466 = vunpack.c.l.b16 %v163
  %v467 = vunpack.c.l.b16 %v164
  %v468 = vunpack.c.l.b16 %v165
  %v469 = vunpack.c.l.b16 %v166
  %v470 = vunpack.c.l.b16 %v167
  %v471 = vunpack.c.l.b16 %v168
  %v472 = vunpack.c.l.b16 %v169
  %v473 = vunpack.c.l.b16 %v170
  %v474 = vunpack.c.l.b16 %v171
  %v475 = vunpack.c.l.b16 %v172
  %v476 = vunpack.c.l.b16 %v173
  %v477 = vunpack.c.l.b16 %v174
  %v478 = vunpack.c.l.b16 %v175
  %v479 = vunpack.c.l.b16 %v176
  %v480 = vunpack.c.l.b16 %v177
  %v481 = vunpack.c.l.b16 %v178
  %v482 = vunpack.c.l.b16 %v179
  %v483 = vunpack.c.l.b16 %v180
  %v484 = vunpack.c.l.b16 %v181
  %v485 = vunpack.c.l.b16 %v182
  %v486 = vunpack.c.l.b16 %v183
  %v487 = vunpack.c.l.b16 %v184
  %v488 = vunpack.c.l.b16 %v185
  %v489 = vunpack.c.l.b16 %v186
  %v490 = vunpack.c.l.b16 %v187
  %v491 = vunpack.c.l.b16 %v188
  %v492 = vunpack.c.l.b16 %v189
  %v493 = vunpack.c.l.b16 %v190
  %v494 = vunpack.c.l.b16 %v191
  %v495 = vunpack.c.l.b16 %v192
  %v496 = vunpack.c.l.b16 %v193
  %v497 = vunpack.c.l.b16 %v194
  %v498 = vunpack.c.l.b16 %v195
  %v499 = vunpack.c.l.b16 %v196
  %v500 = vunpack.c.l.b16 %v197
  %v501 = vunpack.c.l.b16 %v198
  %v502 = vpack.c.b16 %v375, %v374
  %v503 = vpack.c.b16 %v377, %v376
  %v504 = vpack.c.b16 %v379, %v378
  %v505 = vpack.c.b16 %v381, %v380
  %v506 = vpack.c.b16 %v383, %v382
  %v507 = vpack.c.b16 %v385, %v384
  %v508 = vpack.c.b16 %v387, %v386
  %v509 = vpack.c.b16 %v389, %v388
  %v510 = vpack.c.b16 %v391, %v390
  %v511 = vpack.c.b16 %v393, %v392
  %v512 = vpack.c.b16 %v395, %v394
  %v513 = vpack.c.b16 %v397, %v396
  %v514 = vpack.c.b16 %v399, %v398
  %v515 = vpack.c.b16 %v401, %v400
  %v516 = vpack.c.b16 %v403, %v402
  %v517 = vpack.c.b16 %v405, %v404
  %v518 = vpack.c.b16 %v407, %v406
  %v519 = vpack.c.b16 %v409, %v408
  %v520 = vpack.c.b16 %v411, %v410
  %v521 = vpack.c.b16 %v413, %v412
  %v522 = vpack.c.b16 %v415, %v414
  %v523 = vpack.c.b16 %v417, %v416
  %v524 = vpack.c.b16 %v419, %v418
  %v525 = vpack.c.b16 %v421, %v420
  %v526 = vpack.c.b16 %v423, %v422
  %v527 = vpack.c.b16 %v425, %v424
  %v528 = vpack.c.b16 %v427, %v426
  %v529 = vpack.c.b16 %v429, %v428
  %v530 = vpack.c.b16 %v431, %v430
  %v531 = vpack.c.b16 %v433, %v432
  %v532 = vpack.c.b16 %v435, %v434
  %v533 = vpack.c.b16 %v437, %v436
  %v534 = vpack.c.b16 %v439, %v438
  %v535 = vpack.c.b16 %v441, %v440
  %v536 = vpack.c.b16 %v443, %v442
  %v537 = vpack.c.b16 %v445, %v444
  %v538 = vpack.c.b16 %v447, %v446
  %v539 = vpack.c.b16 %v449, %v448
  %v540 = vpack.c.b16 %v451, %v450
  %v541 = vpack.c.b16 %v453, %v452
  %v542 = vpack.c.b16 %v455, %v454
  %v543 = vpack.c.b16 %v457, %v456
  %v544 = vpack.c.b16 %v459, %v458
  %v545 = vpack.c.b16 %v461, %v460
  %v546 = vpack.c.b16 %v463, %v462
  %v547 = vpack.c.b16 %v465, %v464
  %v548 = vpack.c.b16 %v467, %v466
  %v549 = vpack.c.b16 %v469, %v468
  %v550 = vpack.c.b16 %v471, %v470
  %v551 = vpack.c.b16 %v473, %v472
  %v552 = vpack.c.b16 %v475, %v474
  %v553 = vpack.c.b16 %v477, %v476
  %v554 = vpack.c.b16 %v479, %v478
  %v555 = vpack.c.b16 %v481, %v480
  %v556 = vpack.c.b16 %v483, %v482
  %v557 = vpack.c.b16 %v485, %v484
  %v558 = vpack.c.b16 %v487, %v486
  %v559 = vpack.c.b16 %v489, %v488
  %v560 = vpack.c.b16 %v491, %v490
  %v561 = vpack.c.b16 %v493, %v492
  %v562 = vpack.c.b16 %v495, %v494
  %v563 = vpack.c.b16 %v497, %v496
  %v564 = vpack.c.b16 %v499, %v498
  %v565 = vpack.c.b16 %v501, %v500
  %630 = vmatprep.subr.bf16.mxu0 0
  %631 = vmatpush1.bf16.msra.mxu0 %v502
  %632 = vmatprep.subr.bf16.mxu0 0
  %633 = vmatpush1.bf16.msra.mxu0 %v503
  %634 = vmatprep.subr.bf16.mxu0 0
  %635 = vmatpush1.bf16.msra.mxu0 %v504
  %636 = vmatprep.subr.bf16.mxu0 0
  %637 = vmatpush1.bf16.msra.mxu0 %v505
  %638 = vmatprep.subr.bf16.mxu0 0
  %639 = vmatpush1.bf16.msra.mxu0 %v506
  %640 = vmatprep.subr.bf16.mxu0 0
  %641 = vmatpush1.bf16.msra.mxu0 %v507
  %642 = vmatprep.subr.bf16.mxu0 0
  %643 = vmatpush1.bf16.msra.mxu0 %v508
  %644 = vmatprep.subr.bf16.mxu0 0
  %645 = vmatpush1.bf16.msra.mxu0 %v509
  %646 = vmatprep.subr.bf16.mxu0 0
  %647 = vmatpush1.bf16.msra.mxu0 %v510
  %648 = vmatprep.subr.bf16.mxu0 0
  %649 = vmatpush1.bf16.msra.mxu0 %v511
  %650 = vmatprep.subr.bf16.mxu0 0
  %651 = vmatpush1.bf16.msra.mxu0 %v512
  %652 = vmatprep.subr.bf16.mxu0 0
  %653 = vmatpush1.bf16.msra.mxu0 %v513
  %654 = vmatprep.subr.bf16.mxu0 0
  %655 = vmatpush1.bf16.msra.mxu0 %v514
  %656 = vmatprep.subr.bf16.mxu0 0
  %657 = vmatpush1.bf16.msra.mxu0 %v515
  %658 = vmatprep.subr.bf16.mxu0 0
  %659 = vmatpush1.bf16.msra.mxu0 %v516
  %660 = vmatprep.subr.bf16.mxu0 0
  %661 = vmatpush1.bf16.msra.mxu0 %v517
  %662 = vmatprep.mubr.bf16.mxu0 %v231
  %663 = vmatmul.mubr.bf16.gmra.mrb[0].mxu0 %v230
  %v664 = vpop.f32.mrb[0].mxu0
  %v665 = vadd.f32 %v204, %v664
  %v666 = vpop.f32.mrb[0].mxu0
  %v667 = vpop.f32.mrb[0].mxu0
  %v668 = vadd.f32 %v204, %v667
  %v669 = vpop.f32.mrb[0].mxu0
  %670 = vdwg.mxu0
  %671 = vmatprep.subr.bf16.mxu0 0
  %672 = vmatpush1.bf16.msra.mxu0 %v518
  %673 = vmatprep.subr.bf16.mxu0 0
  %674 = vmatpush1.bf16.msra.mxu0 %v519
  %675 = vmatprep.subr.bf16.mxu0 0
  %676 = vmatpush1.bf16.msra.mxu0 %v520
  %677 = vmatprep.subr.bf16.mxu0 0
  %678 = vmatpush1.bf16.msra.mxu0 %v521
  %679 = vmatprep.subr.bf16.mxu0 0
  %680 = vmatpush1.bf16.msra.mxu0 %v522
  %681 = vmatprep.subr.bf16.mxu0 0
  %682 = vmatpush1.bf16.msra.mxu0 %v523
  %683 = vmatprep.subr.bf16.mxu0 0
  %684 = vmatpush1.bf16.msra.mxu0 %v524
  %685 = vmatprep.subr.bf16.mxu0 0
  %686 = vmatpush1.bf16.msra.mxu0 %v525
  %687 = vmatprep.subr.bf16.mxu0 0
  %688 = vmatpush1.bf16.msra.mxu0 %v526
  %689 = vmatprep.subr.bf16.mxu0 0
  %690 = vmatpush1.bf16.msra.mxu0 %v527
  %691 = vmatprep.subr.bf16.mxu0 0
  %692 = vmatpush1.bf16.msra.mxu0 %v528
  %693 = vmatprep.subr.bf16.mxu0 0
  %694 = vmatpush1.bf16.msra.mxu0 %v529
  %695 = vmatprep.subr.bf16.mxu0 0
  %696 = vmatpush1.bf16.msra.mxu0 %v530
  %697 = vmatprep.subr.bf16.mxu0 0
  %698 = vmatpush1.bf16.msra.mxu0 %v531
  %699 = vmatprep.subr.bf16.mxu0 0
  %700 = vmatpush1.bf16.msra.mxu0 %v532
  %701 = vmatprep.subr.bf16.mxu0 0
  %702 = vmatpush1.bf16.msra.mxu0 %v533
  %703 = vmatprep.mubr.bf16.mxu0 %v233
  %704 = vmatmul.mubr.bf16.gmra.mrb[0].mxu0 %v232
  %v705 = vpop.f32.mrb[0].mxu0
  %v706 = vadd.f32 %v665, %v705
  %v707 = vpop.f32.mrb[0].mxu0
  %v708 = vpop.f32.mrb[0].mxu0
  %v709 = vadd.f32 %v668, %v708
  %v710 = vpop.f32.mrb[0].mxu0
  %711 = vdwg.mxu0
  %712 = vmatprep.subr.bf16.mxu0 0
  %713 = vmatpush1.bf16.msra.mxu0 %v534
  %714 = vmatprep.subr.bf16.mxu0 0
  %715 = vmatpush1.bf16.msra.mxu0 %v535
  %716 = vmatprep.subr.bf16.mxu0 0
  %717 = vmatpush1.bf16.msra.mxu0 %v536
  %718 = vmatprep.subr.bf16.mxu0 0
  %719 = vmatpush1.bf16.msra.mxu0 %v537
  %720 = vmatprep.subr.bf16.mxu0 0
  %721 = vmatpush1.bf16.msra.mxu0 %v538
  %722 = vmatprep.subr.bf16.mxu0 0
  %723 = vmatpush1.bf16.msra.mxu0 %v539
  %724 = vmatprep.subr.bf16.mxu0 0
  %725 = vmatpush1.bf16.msra.mxu0 %v540
  %726 = vmatprep.subr.bf16.mxu0 0
  %727 = vmatpush1.bf16.msra.mxu0 %v541
  %728 = vmatprep.subr.bf16.mxu0 0
  %729 = vmatpush1.bf16.msra.mxu0 %v542
  %730 = vmatprep.subr.bf16.mxu0 0
  %731 = vmatpush1.bf16.msra.mxu0 %v543
  %732 = vmatprep.subr.bf16.mxu0 0
  %733 = vmatpush1.bf16.msra.mxu0 %v544
  %734 = vmatprep.subr.bf16.mxu0 0
  %735 = vmatpush1.bf16.msra.mxu0 %v545
  %736 = vmatprep.subr.bf16.mxu0 0
  %737 = vmatpush1.bf16.msra.mxu0 %v546
  %738 = vmatprep.subr.bf16.mxu0 0
  %739 = vmatpush1.bf16.msra.mxu0 %v547
  %740 = vmatprep.subr.bf16.mxu0 0
  %741 = vmatpush1.bf16.msra.mxu0 %v548
  %742 = vmatprep.subr.bf16.mxu0 0
  %743 = vmatpush1.bf16.msra.mxu0 %v549
  %744 = vmatprep.mubr.bf16.mxu0 %v235
  %745 = vmatmul.mubr.bf16.gmra.mrb[0].mxu0 %v234
  %v746 = vpop.f32.mrb[0].mxu0
  %v747 = vadd.f32 %v706, %v746
  %v748 = vpop.f32.mrb[0].mxu0
  %v749 = vpop.f32.mrb[0].mxu0
  %v750 = vadd.f32 %v709, %v749
  %v751 = vpop.f32.mrb[0].mxu0
  %752 = vdwg.mxu0
  %753 = vmatprep.subr.bf16.mxu0 0
  %754 = vmatpush1.bf16.msra.mxu0 %v550
  %755 = vmatprep.subr.bf16.mxu0 0
  %756 = vmatpush1.bf16.msra.mxu0 %v551
  %757 = vmatprep.subr.bf16.mxu0 0
  %758 = vmatpush1.bf16.msra.mxu0 %v552
  %759 = vmatprep.subr.bf16.mxu0 0
  %760 = vmatpush1.bf16.msra.mxu0 %v553
  %761 = vmatprep.subr.bf16.mxu0 0
  %762 = vmatpush1.bf16.msra.mxu0 %v554
  %763 = vmatprep.subr.bf16.mxu0 0
  %764 = vmatpush1.bf16.msra.mxu0 %v555
  %765 = vmatprep.subr.bf16.mxu0 0
  %766 = vmatpush1.bf16.msra.mxu0 %v556
  %767 = vmatprep.subr.bf16.mxu0 0
  %768 = vmatpush1.bf16.msra.mxu0 %v557
  %769 = vmatprep.subr.bf16.mxu0 0
  %770 = vmatpush1.bf16.msra.mxu0 %v558
  %771 = vmatprep.subr.bf16.mxu0 0
  %772 = vmatpush1.bf16.msra.mxu0 %v559
  %773 = vmatprep.subr.bf16.mxu0 0
  %774 = vmatpush1.bf16.msra.mxu0 %v560
  %775 = vmatprep.subr.bf16.mxu0 0
  %776 = vmatpush1.bf16.msra.mxu0 %v561
  %777 = vmatprep.subr.bf16.mxu0 0
  %778 = vmatpush1.bf16.msra.mxu0 %v562
  %779 = vmatprep.subr.bf16.mxu0 0
  %780 = vmatpush1.bf16.msra.mxu0 %v563
  %781 = vmatprep.subr.bf16.mxu0 0
  %782 = vmatpush1.bf16.msra.mxu0 %v564
  %783 = vmatprep.subr.bf16.mxu0 0
  %784 = vmatpush1.bf16.msra.mxu0 %v565
  %785 = vmatprep.mubr.bf16.mxu0 %v237
  %786 = vmatmul.mubr.bf16.gmra.mrb[0].mxu0 %v236
  %v787 = vpop.f32.mrb[0].mxu0
  %v788 = vadd.f32 %v747, %v787
  %v789 = vpop.f32.mrb[0].mxu0
  %v790 = vpop.f32.mrb[0].mxu0
  %v791 = vadd.f32 %v750, %v790
  %v792 = vpop.f32.mrb[0].mxu0
  %793 = vdwg.mxu0
  %v794 = vld [vmem:[%s3] sm:$0xff]
  %v795 = vld [vmem:[%s3 + $0x8] sm:$0xff]
  %v796 = vadd.f32 %v788, %v794
  %v797 = vadd.f32 %v791, %v795
  %v798 = vld [vmem:[%s4] sm:$0x1]
  %v799 = vld [vmem:[%s5] sm:$0x1]
  %vm800 = vcmask 523264
  %v801 = vsel %vm800, %v796, 0.0
  %802 = vadd.xlane.f32.xlu0 %v801
  %v803 = vpop.xlane.xlu0 %802
  %v804 = vsel %vm800, %v797, 0.0
  %805 = vadd.xlane.f32.xlu0 %v804
  %v806 = vpop.xlane.xlu0 %805
  %v807 = vrcp.pop 64.0
  %v808 = vmul.f32 %v803, %v807
  %v809 = vmul.f32 %v806, %v807
  %v810 = vsub.f32 %v796, %v808
  %v811 = vsub.f32 %v797, %v809
  %v812 = vmul.f32 %v810, %v810
  %v813 = vmul.f32 %v811, %v811
  %v814 = vsel %vm800, %v812, 0.0
  %815 = vadd.xlane.f32.xlu0 %v814
  %v816 = vpop.xlane.xlu0 %815
  %v817 = vsel %vm800, %v813, 0.0
  %818 = vadd.xlane.f32.xlu0 %v817
  %v819 = vpop.xlane.xlu0 %818
  %v820 = vmul.f32 %v816, %v807
  %v821 = vmul.f32 %v819, %v807
  %v822 = vadd.f32 %v820, 1e-05
  %v823 = vadd.f32 %v821, 1e-05
  %v824 = vrsqrt.pop %v822
  %v825 = vrsqrt.pop %v823
  %v826 = vmul.f32 %v810, %v824
  %v827 = vmul.f32 %v811, %v825
  %v829 = vlaneseq
  %v830 = vshrl.u32 %v829, 7
  %v831 = vsub.s32 0, %v830
  %v832 = vrot.slane %v798, %v831
  %v834 = vmul.f32 %v826, %v832
  %v835 = vmul.f32 %v827, %v832
  %v837 = vlaneseq
  %v838 = vshrl.u32 %v837, 7
  %v839 = vsub.s32 0, %v838
  %v840 = vrot.slane %v799, %v839
  %v842 = vadd.f32 %v834, %v840
  %v843 = vadd.f32 %v835, %v840
  %v844 = vld [vmem:[%s6] sm:$0xff]
  %v845 = vld [vmem:[%s6 + $0x8] sm:$0xff]
  %v846 = vld [vmem:[%s6 + $0x10] sm:$0xff]
  %v847 = vld [vmem:[%s6 + $0x18] sm:$0xff]
  %v848 = vld [vmem:[%s6 + $0x20] sm:$0xff]
  %v849 = vld [vmem:[%s6 + $0x28] sm:$0xff]
  %v850 = vld [vmem:[%s6 + $0x30] sm:$0xff]
  %v851 = vld [vmem:[%s6 + $0x38] sm:$0xff]
  %v853 = vsel %vm800, %v842, 0
  %855 = vmatprep.subr.mxu0 0.0
  %856 = vmatpush1.msra.mxu0 %v844
  %857 = vmatprep.subr.mxu0 0.0
  %858 = vmatpush1.msra.mxu0 %v845
  %859 = vmatprep.subr.mxu0 0.0
  %860 = vmatpush1.msra.mxu0 %v846
  %861 = vmatprep.subr.mxu0 0.0
  %862 = vmatpush1.msra.mxu0 %v847
  %863 = vmatprep.subr.mxu0 0.0
  %864 = vmatpush1.msra.mxu0 %v848
  %865 = vmatprep.subr.mxu0 0.0
  %866 = vmatpush1.msra.mxu0 %v849
  %867 = vmatprep.subr.mxu0 0.0
  %868 = vmatpush1.msra.mxu0 %v850
  %869 = vmatprep.subr.mxu0 0.0
  %870 = vmatpush1.msra.mxu0 %v851
  %871 = vmatprep.subr.mxu0 0.0
  %872 = vmatpush1.msra.mxu0 0.0
  %873 = vmatprep.subr.mxu0 0.0
  %874 = vmatpush1.msra.mxu0 0.0
  %875 = vmatprep.subr.mxu0 0.0
  %876 = vmatpush1.msra.mxu0 0.0
  %877 = vmatprep.subr.mxu0 0.0
  %878 = vmatpush1.msra.mxu0 0.0
  %879 = vmatprep.subr.mxu0 0.0
  %880 = vmatpush1.msra.mxu0 0.0
  %881 = vmatprep.subr.mxu0 0.0
  %882 = vmatpush1.msra.mxu0 0.0
  %883 = vmatprep.subr.mxu0 0.0
  %884 = vmatpush1.msra.mxu0 0.0
  %885 = vmatprep.subr.mxu0 0.0
  %886 = vmatpush1.msra.mxu0 0.0
  %887 = vmatprep.subr.mxu0 0.0
  %888 = vmatpush1.msra.mxu0 0.0
  %889 = vmatprep.subr.mxu0 0.0
  %890 = vmatpush1.msra.mxu0 0.0
  %891 = vmatprep.subr.mxu0 0.0
  %892 = vmatpush1.msra.mxu0 0.0
  %893 = vmatprep.subr.mxu0 0.0
  %894 = vmatpush1.msra.mxu0 0.0
  %895 = vmatprep.subr.mxu0 0.0
  %896 = vmatpush1.msra.mxu0 0.0
  %897 = vmatprep.subr.mxu0 0.0
  %898 = vmatpush1.msra.mxu0 0.0
  %899 = vmatprep.subr.mxu0 0.0
  %900 = vmatpush1.msra.mxu0 0.0
  %901 = vmatprep.subr.mxu0 0.0
  %902 = vmatpush1.msra.mxu0 0.0
  %903 = vmatprep.subr.mxu0 0.0
  %904 = vmatpush1.msra.mxu0 0.0
  %905 = vmatprep.subr.mxu0 0.0
  %906 = vmatpush1.msra.mxu0 0.0
  %907 = vmatprep.subr.mxu0 0.0
  %908 = vmatpush1.msra.mxu0 0.0
  %909 = vmatprep.subr.mxu0 0.0
  %910 = vmatpush1.msra.mxu0 0.0
  %911 = vmatprep.subr.mxu0 0.0
  %912 = vmatpush1.msra.mxu0 0.0
  %913 = vmatprep.subr.mxu0 0.0
  %914 = vmatpush1.msra.mxu0 0.0
  %915 = vmatprep.subr.mxu0 0.0
  %916 = vmatpush1.msra.mxu0 0.0
  %917 = vmatprep.subr.mxu0 0.0
  %918 = vmatpush1.msra.mxu0 0.0
  %919 = vmatprep.mubr.f32.mxu0 0.0
  %920 = vmatmul.mubr.f32.gmra.mrb[0].mxu0 %v853
  %v921 = vpop.f32.mrb[0].mxu0
  %v922 = vadd.f32 0.0, %v921
  %v923 = vpop.f32.mrb[0].mxu0
  %924 = vdwg.mxu0
  %v925 = vld [vmem:[%s7] sm:$0xff]
  %v926 = vld [vmem:[%s7 + $0x8] sm:$0xff]
  %v927 = vld [vmem:[%s7 + $0x10] sm:$0xff]
  %v928 = vld [vmem:[%s7 + $0x18] sm:$0xff]
  %v929 = vld [vmem:[%s7 + $0x20] sm:$0xff]
  %v930 = vld [vmem:[%s7 + $0x28] sm:$0xff]
  %v931 = vld [vmem:[%s7 + $0x30] sm:$0xff]
  %v932 = vld [vmem:[%s7 + $0x38] sm:$0xff]
  %933 = vmatprep.subr.mxu0 0.0
  %934 = vmatpush1.msra.mxu0 %v925
  %935 = vmatprep.subr.mxu0 0.0
  %936 = vmatpush1.msra.mxu0 %v926
  %937 = vmatprep.subr.mxu0 0.0
  %938 = vmatpush1.msra.mxu0 %v927
  %939 = vmatprep.subr.mxu0 0.0
  %940 = vmatpush1.msra.mxu0 %v928
  %941 = vmatprep.subr.mxu0 0.0
  %942 = vmatpush1.msra.mxu0 %v929
  %943 = vmatprep.subr.mxu0 0.0
  %944 = vmatpush1.msra.mxu0 %v930
  %945 = vmatprep.subr.mxu0 0.0
  %946 = vmatpush1.msra.mxu0 %v931
  %947 = vmatprep.subr.mxu0 0.0
  %948 = vmatpush1.msra.mxu0 %v932
  %949 = vmatprep.subr.mxu0 0.0
  %950 = vmatpush1.msra.mxu0 0.0
  %951 = vmatprep.subr.mxu0 0.0
  %952 = vmatpush1.msra.mxu0 0.0
  %953 = vmatprep.subr.mxu0 0.0
  %954 = vmatpush1.msra.mxu0 0.0
  %955 = vmatprep.subr.mxu0 0.0
  %956 = vmatpush1.msra.mxu0 0.0
  %957 = vmatprep.subr.mxu0 0.0
  %958 = vmatpush1.msra.mxu0 0.0
  %959 = vmatprep.subr.mxu0 0.0
  %960 = vmatpush1.msra.mxu0 0.0
  %961 = vmatprep.subr.mxu0 0.0
  %962 = vmatpush1.msra.mxu0 0.0
  %963 = vmatprep.subr.mxu0 0.0
  %964 = vmatpush1.msra.mxu0 0.0
  %965 = vmatprep.subr.mxu0 0.0
  %966 = vmatpush1.msra.mxu0 0.0
  %967 = vmatprep.subr.mxu0 0.0
  %968 = vmatpush1.msra.mxu0 0.0
  %969 = vmatprep.subr.mxu0 0.0
  %970 = vmatpush1.msra.mxu0 0.0
  %971 = vmatprep.subr.mxu0 0.0
  %972 = vmatpush1.msra.mxu0 0.0
  %973 = vmatprep.subr.mxu0 0.0
  %974 = vmatpush1.msra.mxu0 0.0
  %975 = vmatprep.subr.mxu0 0.0
  %976 = vmatpush1.msra.mxu0 0.0
  %977 = vmatprep.subr.mxu0 0.0
  %978 = vmatpush1.msra.mxu0 0.0
  %979 = vmatprep.subr.mxu0 0.0
  %980 = vmatpush1.msra.mxu0 0.0
  %981 = vmatprep.subr.mxu0 0.0
  %982 = vmatpush1.msra.mxu0 0.0
  %983 = vmatprep.subr.mxu0 0.0
  %984 = vmatpush1.msra.mxu0 0.0
  %985 = vmatprep.subr.mxu0 0.0
  %986 = vmatpush1.msra.mxu0 0.0
  %987 = vmatprep.subr.mxu0 0.0
  %988 = vmatpush1.msra.mxu0 0.0
  %989 = vmatprep.subr.mxu0 0.0
  %990 = vmatpush1.msra.mxu0 0.0
  %991 = vmatprep.subr.mxu0 0.0
  %992 = vmatpush1.msra.mxu0 0.0
  %993 = vmatprep.subr.mxu0 0.0
  %994 = vmatpush1.msra.mxu0 0.0
  %995 = vmatprep.subr.mxu0 0.0
  %996 = vmatpush1.msra.mxu0 0.0
  %997 = vmatprep.mubr.f32.mxu0 0.0
  %998 = vmatmul.mubr.f32.gmra.mrb[0].mxu0 %v853
  %v999 = vpop.f32.mrb[0].mxu0
  %v1000 = vadd.f32 0.0, %v999
  %v1001 = vpop.f32.mrb[0].mxu0
  %1002 = vdwg.mxu0
  %v1003 = vld [vmem:[%s8] sm:$0xff]
  %v1004 = vld [vmem:[%s8 + $0x8] sm:$0xff]
  %v1005 = vld [vmem:[%s8 + $0x10] sm:$0xff]
  %v1006 = vld [vmem:[%s8 + $0x18] sm:$0xff]
  %v1007 = vld [vmem:[%s8 + $0x20] sm:$0xff]
  %v1008 = vld [vmem:[%s8 + $0x28] sm:$0xff]
  %v1009 = vld [vmem:[%s8 + $0x30] sm:$0xff]
  %v1010 = vld [vmem:[%s8 + $0x38] sm:$0xff]
  %1011 = vmatprep.subr.mxu0 0.0
  %1012 = vmatpush1.msra.mxu0 %v1003
  %1013 = vmatprep.subr.mxu0 0.0
  %1014 = vmatpush1.msra.mxu0 %v1004
  %1015 = vmatprep.subr.mxu0 0.0
  %1016 = vmatpush1.msra.mxu0 %v1005
  %1017 = vmatprep.subr.mxu0 0.0
  %1018 = vmatpush1.msra.mxu0 %v1006
  %1019 = vmatprep.subr.mxu0 0.0
  %1020 = vmatpush1.msra.mxu0 %v1007
  %1021 = vmatprep.subr.mxu0 0.0
  %1022 = vmatpush1.msra.mxu0 %v1008
  %1023 = vmatprep.subr.mxu0 0.0
  %1024 = vmatpush1.msra.mxu0 %v1009
  %1025 = vmatprep.subr.mxu0 0.0
  %1026 = vmatpush1.msra.mxu0 %v1010
  %1027 = vmatprep.subr.mxu0 0.0
  %1028 = vmatpush1.msra.mxu0 0.0
  %1029 = vmatprep.subr.mxu0 0.0
  %1030 = vmatpush1.msra.mxu0 0.0
  %1031 = vmatprep.subr.mxu0 0.0
  %1032 = vmatpush1.msra.mxu0 0.0
  %1033 = vmatprep.subr.mxu0 0.0
  %1034 = vmatpush1.msra.mxu0 0.0
  %1035 = vmatprep.subr.mxu0 0.0
  %1036 = vmatpush1.msra.mxu0 0.0
  %1037 = vmatprep.subr.mxu0 0.0
  %1038 = vmatpush1.msra.mxu0 0.0
  %1039 = vmatprep.subr.mxu0 0.0
  %1040 = vmatpush1.msra.mxu0 0.0
  %1041 = vmatprep.subr.mxu0 0.0
  %1042 = vmatpush1.msra.mxu0 0.0
  %1043 = vmatprep.subr.mxu0 0.0
  %1044 = vmatpush1.msra.mxu0 0.0
  %1045 = vmatprep.subr.mxu0 0.0
  %1046 = vmatpush1.msra.mxu0 0.0
  %1047 = vmatprep.subr.mxu0 0.0
  %1048 = vmatpush1.msra.mxu0 0.0
  %1049 = vmatprep.subr.mxu0 0.0
  %1050 = vmatpush1.msra.mxu0 0.0
  %1051 = vmatprep.subr.mxu0 0.0
  %1052 = vmatpush1.msra.mxu0 0.0
  %1053 = vmatprep.subr.mxu0 0.0
  %1054 = vmatpush1.msra.mxu0 0.0
  %1055 = vmatprep.subr.mxu0 0.0
  %1056 = vmatpush1.msra.mxu0 0.0
  %1057 = vmatprep.subr.mxu0 0.0
  %1058 = vmatpush1.msra.mxu0 0.0
  %1059 = vmatprep.subr.mxu0 0.0
  %1060 = vmatpush1.msra.mxu0 0.0
  %1061 = vmatprep.subr.mxu0 0.0
  %1062 = vmatpush1.msra.mxu0 0.0
  %1063 = vmatprep.subr.mxu0 0.0
  %1064 = vmatpush1.msra.mxu0 0.0
  %1065 = vmatprep.subr.mxu0 0.0
  %1066 = vmatpush1.msra.mxu0 0.0
  %1067 = vmatprep.subr.mxu0 0.0
  %1068 = vmatpush1.msra.mxu0 0.0
  %1069 = vmatprep.subr.mxu0 0.0
  %1070 = vmatpush1.msra.mxu0 0.0
  %1071 = vmatprep.subr.mxu0 0.0
  %1072 = vmatpush1.msra.mxu0 0.0
  %1073 = vmatprep.subr.mxu0 0.0
  %1074 = vmatpush1.msra.mxu0 0.0
  %1075 = vmatprep.mubr.f32.mxu0 0.0
  %1076 = vmatmul.mubr.f32.gmra.mrb[0].mxu0 %v853
  %v1077 = vpop.f32.mrb[0].mxu0
  %v1078 = vadd.f32 0.0, %v1077
  %v1079 = vpop.f32.mrb[0].mxu0
  %1080 = vdwg.mxu0
  %vm1081 = vcmask 130048
  %v1083 = vsel %vm1081, %v922, 0
  %v1086 = vsel %vm1081, %v1000, 0
  %1088 = vmatprep.subr.mxu0 0.0
  %1089 = vmatpush1.xpose.msra.mxu0 %v1086
  %1090 = vmatprep.subr.mxu0 0.0
  %1091 = vmatpush1.xpose.msra.mxu0 0.0
  %1092 = vmatprep.subr.mxu0 0.0
  %1093 = vmatpush1.xpose.msra.mxu0 0.0
  %1094 = vmatprep.subr.mxu0 0.0
  %1095 = vmatpush1.xpose.msra.mxu0 0.0
  %1096 = vmatprep.subr.mxu0 0.0
  %1097 = vmatpush1.xpose.msra.mxu0 0.0
  %1098 = vmatprep.subr.mxu0 0.0
  %1099 = vmatpush1.xpose.msra.mxu0 0.0
  %1100 = vmatprep.subr.mxu0 0.0
  %1101 = vmatpush1.xpose.msra.mxu0 0.0
  %1102 = vmatprep.subr.mxu0 0.0
  %1103 = vmatpush1.xpose.msra.mxu0 0.0
  %1104 = vmatprep.subr.mxu0 0.0
  %1105 = vmatpush1.xpose.msra.mxu0 0.0
  %1106 = vmatprep.subr.mxu0 0.0
  %1107 = vmatpush1.xpose.msra.mxu0 0.0
  %1108 = vmatprep.subr.mxu0 0.0
  %1109 = vmatpush1.xpose.msra.mxu0 0.0
  %1110 = vmatprep.subr.mxu0 0.0
  %1111 = vmatpush1.xpose.msra.mxu0 0.0
  %1112 = vmatprep.subr.mxu0 0.0
  %1113 = vmatpush1.xpose.msra.mxu0 0.0
  %1114 = vmatprep.subr.mxu0 0.0
  %1115 = vmatpush1.xpose.msra.mxu0 0.0
  %1116 = vmatprep.subr.mxu0 0.0
  %1117 = vmatpush1.xpose.msra.mxu0 0.0
  %1118 = vmatprep.subr.mxu0 0.0
  %1119 = vmatpush1.xpose.msra.mxu0 0.0
  %1120 = vmatprep.subr.mxu0 0.0
  %1121 = vmatpush1.xpose.msra.mxu0 0.0
  %1122 = vmatprep.subr.mxu0 0.0
  %1123 = vmatpush1.xpose.msra.mxu0 0.0
  %1124 = vmatprep.subr.mxu0 0.0
  %1125 = vmatpush1.xpose.msra.mxu0 0.0
  %1126 = vmatprep.subr.mxu0 0.0
  %1127 = vmatpush1.xpose.msra.mxu0 0.0
  %1128 = vmatprep.subr.mxu0 0.0
  %1129 = vmatpush1.xpose.msra.mxu0 0.0
  %1130 = vmatprep.subr.mxu0 0.0
  %1131 = vmatpush1.xpose.msra.mxu0 0.0
  %1132 = vmatprep.subr.mxu0 0.0
  %1133 = vmatpush1.xpose.msra.mxu0 0.0
  %1134 = vmatprep.subr.mxu0 0.0
  %1135 = vmatpush1.xpose.msra.mxu0 0.0
  %1136 = vmatprep.subr.mxu0 0.0
  %1137 = vmatpush1.xpose.msra.mxu0 0.0
  %1138 = vmatprep.subr.mxu0 0.0
  %1139 = vmatpush1.xpose.msra.mxu0 0.0
  %1140 = vmatprep.subr.mxu0 0.0
  %1141 = vmatpush1.xpose.msra.mxu0 0.0
  %1142 = vmatprep.subr.mxu0 0.0
  %1143 = vmatpush1.xpose.msra.mxu0 0.0
  %1144 = vmatprep.subr.mxu0 0.0
  %1145 = vmatpush1.xpose.msra.mxu0 0.0
  %1146 = vmatprep.subr.mxu0 0.0
  %1147 = vmatpush1.xpose.msra.mxu0 0.0
  %1148 = vmatprep.subr.mxu0 0.0
  %1149 = vmatpush1.xpose.msra.mxu0 0.0
  %1150 = vmatprep.subr.mxu0 0.0
  %1151 = vmatpush1.xpose.msra.mxu0 0.0
  %1152 = vmatprep.mubr.f32.mxu0 0.0
  %1153 = vmatmul.mubr.f32.gmra.mrb[0].mxu0 %v1083
  %v1154 = vpop.f32.mrb[0].mxu0
  %v1155 = vadd.f32 0.0, %v1154
  %v1156 = vpop.f32.mrb[0].mxu0
  %1157 = vdwg.mxu0
  %vm1158 = vcmask 64512
  %v1159 = vsel %vm1158, %v1155, -inf
  %1160 = vmax.xlane.f32.xlu0 %v1159
  %v1161 = vpop.xlane.xlu0 %1160
  %v1162 = vsub.f32 %v1155, %v1161
  %v1163 = vmul.f32 %v1162, 1.442695
  %v1164 = vpow.pop %v1163
  %v1165 = vsel %vm1158, %v1164, 0.0
  %1166 = vadd.xlane.f32.xlu0 %v1165
  %v1167 = vpop.xlane.xlu0 %1166
  %v1168 = vrcp.pop %v1167
  %v1169 = vmul.f32 %v1164, %v1168
  %v1171 = vsel %vm1158, %v1169, 0
  %1173 = vmatprep.subr.mxu0 0.0
  %1174 = vmatpush1.msra.mxu0 %v1078
  %1175 = vmatprep.subr.mxu0 0.0
  %1176 = vmatpush1.msra.mxu0 0.0
  %1177 = vmatprep.subr.mxu0 0.0
  %1178 = vmatpush1.msra.mxu0 0.0
  %1179 = vmatprep.subr.mxu0 0.0
  %1180 = vmatpush1.msra.mxu0 0.0
  %1181 = vmatprep.subr.mxu0 0.0
  %1182 = vmatpush1.msra.mxu0 0.0
  %1183 = vmatprep.subr.mxu0 0.0
  %1184 = vmatpush1.msra.mxu0 0.0
  %1185 = vmatprep.subr.mxu0 0.0
  %1186 = vmatpush1.msra.mxu0 0.0
  %1187 = vmatprep.subr.mxu0 0.0
  %1188 = vmatpush1.msra.mxu0 0.0
  %1189 = vmatprep.subr.mxu0 0.0
  %1190 = vmatpush1.msra.mxu0 0.0
  %1191 = vmatprep.subr.mxu0 0.0
  %1192 = vmatpush1.msra.mxu0 0.0
  %1193 = vmatprep.subr.mxu0 0.0
  %1194 = vmatpush1.msra.mxu0 0.0
  %1195 = vmatprep.subr.mxu0 0.0
  %1196 = vmatpush1.msra.mxu0 0.0
  %1197 = vmatprep.subr.mxu0 0.0
  %1198 = vmatpush1.msra.mxu0 0.0
  %1199 = vmatprep.subr.mxu0 0.0
  %1200 = vmatpush1.msra.mxu0 0.0
  %1201 = vmatprep.subr.mxu0 0.0
  %1202 = vmatpush1.msra.mxu0 0.0
  %1203 = vmatprep.subr.mxu0 0.0
  %1204 = vmatpush1.msra.mxu0 0.0
  %1205 = vmatprep.subr.mxu0 0.0
  %1206 = vmatpush1.msra.mxu0 0.0
  %1207 = vmatprep.subr.mxu0 0.0
  %1208 = vmatpush1.msra.mxu0 0.0
  %1209 = vmatprep.subr.mxu0 0.0
  %1210 = vmatpush1.msra.mxu0 0.0
  %1211 = vmatprep.subr.mxu0 0.0
  %1212 = vmatpush1.msra.mxu0 0.0
  %1213 = vmatprep.subr.mxu0 0.0
  %1214 = vmatpush1.msra.mxu0 0.0
  %1215 = vmatprep.subr.mxu0 0.0
  %1216 = vmatpush1.msra.mxu0 0.0
  %1217 = vmatprep.subr.mxu0 0.0
  %1218 = vmatpush1.msra.mxu0 0.0
  %1219 = vmatprep.subr.mxu0 0.0
  %1220 = vmatpush1.msra.mxu0 0.0
  %1221 = vmatprep.subr.mxu0 0.0
  %1222 = vmatpush1.msra.mxu0 0.0
  %1223 = vmatprep.subr.mxu0 0.0
  %1224 = vmatpush1.msra.mxu0 0.0
  %1225 = vmatprep.subr.mxu0 0.0
  %1226 = vmatpush1.msra.mxu0 0.0
  %1227 = vmatprep.subr.mxu0 0.0
  %1228 = vmatpush1.msra.mxu0 0.0
  %1229 = vmatprep.subr.mxu0 0.0
  %1230 = vmatpush1.msra.mxu0 0.0
  %1231 = vmatprep.subr.mxu0 0.0
  %1232 = vmatpush1.msra.mxu0 0.0
  %1233 = vmatprep.subr.mxu0 0.0
  %1234 = vmatpush1.msra.mxu0 0.0
  %1235 = vmatprep.subr.mxu0 0.0
  %1236 = vmatpush1.msra.mxu0 0.0
  %1237 = vmatprep.mubr.f32.mxu0 0.0
  %1238 = vmatmul.mubr.f32.gmra.mrb[0].mxu0 %v1171
  %v1239 = vpop.f32.mrb[0].mxu0
  %v1240 = vadd.f32 0.0, %v1239
  %v1241 = vpop.f32.mrb[0].mxu0
  %1242 = vdwg.mxu0
  %v1243 = vld [vmem:[%s9] sm:$0xff]
  %v1244 = vld [vmem:[%s9 + $0x8] sm:$0xff]
  %s1245 = scalar_lea.vmem %s6, 64
  %v1246 = vld [vmem:[%s1245] sm:$0xff]
  %v1247 = vld [vmem:[%s1245 + $0x8] sm:$0xff]
  %v1248 = vld [vmem:[%s1245 + $0x10] sm:$0xff]
  %v1249 = vld [vmem:[%s1245 + $0x18] sm:$0xff]
  %v1250 = vld [vmem:[%s1245 + $0x20] sm:$0xff]
  %v1251 = vld [vmem:[%s1245 + $0x28] sm:$0xff]
  %v1252 = vld [vmem:[%s1245 + $0x30] sm:$0xff]
  %v1253 = vld [vmem:[%s1245 + $0x38] sm:$0xff]
  %1254 = vmatprep.subr.mxu0 0.0
  %1255 = vmatpush1.msra.mxu0 %v1246
  %1256 = vmatprep.subr.mxu0 0.0
  %1257 = vmatpush1.msra.mxu0 %v1247
  %1258 = vmatprep.subr.mxu0 0.0
  %1259 = vmatpush1.msra.mxu0 %v1248
  %1260 = vmatprep.subr.mxu0 0.0
  %1261 = vmatpush1.msra.mxu0 %v1249
  %1262 = vmatprep.subr.mxu0 0.0
  %1263 = vmatpush1.msra.mxu0 %v1250
  %1264 = vmatprep.subr.mxu0 0.0
  %1265 = vmatpush1.msra.mxu0 %v1251
  %1266 = vmatprep.subr.mxu0 0.0
  %1267 = vmatpush1.msra.mxu0 %v1252
  %1268 = vmatprep.subr.mxu0 0.0
  %1269 = vmatpush1.msra.mxu0 %v1253
  %1270 = vmatprep.subr.mxu0 0.0
  %1271 = vmatpush1.msra.mxu0 0.0
  %1272 = vmatprep.subr.mxu0 0.0
  %1273 = vmatpush1.msra.mxu0 0.0
  %1274 = vmatprep.subr.mxu0 0.0
  %1275 = vmatpush1.msra.mxu0 0.0
  %1276 = vmatprep.subr.mxu0 0.0
  %1277 = vmatpush1.msra.mxu0 0.0
  %1278 = vmatprep.subr.mxu0 0.0
  %1279 = vmatpush1.msra.mxu0 0.0
  %1280 = vmatprep.subr.mxu0 0.0
  %1281 = vmatpush1.msra.mxu0 0.0
  %1282 = vmatprep.subr.mxu0 0.0
  %1283 = vmatpush1.msra.mxu0 0.0
  %1284 = vmatprep.subr.mxu0 0.0
  %1285 = vmatpush1.msra.mxu0 0.0
  %1286 = vmatprep.subr.mxu0 0.0
  %1287 = vmatpush1.msra.mxu0 0.0
  %1288 = vmatprep.subr.mxu0 0.0
  %1289 = vmatpush1.msra.mxu0 0.0
  %1290 = vmatprep.subr.mxu0 0.0
  %1291 = vmatpush1.msra.mxu0 0.0
  %1292 = vmatprep.subr.mxu0 0.0
  %1293 = vmatpush1.msra.mxu0 0.0
  %1294 = vmatprep.subr.mxu0 0.0
  %1295 = vmatpush1.msra.mxu0 0.0
  %1296 = vmatprep.subr.mxu0 0.0
  %1297 = vmatpush1.msra.mxu0 0.0
  %1298 = vmatprep.subr.mxu0 0.0
  %1299 = vmatpush1.msra.mxu0 0.0
  %1300 = vmatprep.subr.mxu0 0.0
  %1301 = vmatpush1.msra.mxu0 0.0
  %1302 = vmatprep.subr.mxu0 0.0
  %1303 = vmatpush1.msra.mxu0 0.0
  %1304 = vmatprep.subr.mxu0 0.0
  %1305 = vmatpush1.msra.mxu0 0.0
  %1306 = vmatprep.subr.mxu0 0.0
  %1307 = vmatpush1.msra.mxu0 0.0
  %1308 = vmatprep.subr.mxu0 0.0
  %1309 = vmatpush1.msra.mxu0 0.0
  %1310 = vmatprep.subr.mxu0 0.0
  %1311 = vmatpush1.msra.mxu0 0.0
  %1312 = vmatprep.subr.mxu0 0.0
  %1313 = vmatpush1.msra.mxu0 0.0
  %1314 = vmatprep.subr.mxu0 0.0
  %1315 = vmatpush1.msra.mxu0 0.0
  %1316 = vmatprep.subr.mxu0 0.0
  %1317 = vmatpush1.msra.mxu0 0.0
  %1318 = vmatprep.mubr.f32.mxu0 0.0
  %1319 = vmatmul.mubr.f32.gmra.mrb[0].mxu0 %v853
  %v1320 = vpop.f32.mrb[0].mxu0
  %v1321 = vadd.f32 0.0, %v1320
  %v1322 = vpop.f32.mrb[0].mxu0
  %1323 = vdwg.mxu0
  %s1324 = scalar_lea.vmem %s7, 64
  %v1325 = vld [vmem:[%s1324] sm:$0xff]
  %v1326 = vld [vmem:[%s1324 + $0x8] sm:$0xff]
  %v1327 = vld [vmem:[%s1324 + $0x10] sm:$0xff]
  %v1328 = vld [vmem:[%s1324 + $0x18] sm:$0xff]
  %v1329 = vld [vmem:[%s1324 + $0x20] sm:$0xff]
  %v1330 = vld [vmem:[%s1324 + $0x28] sm:$0xff]
  %v1331 = vld [vmem:[%s1324 + $0x30] sm:$0xff]
  %v1332 = vld [vmem:[%s1324 + $0x38] sm:$0xff]
  %1333 = vmatprep.subr.mxu0 0.0
  %1334 = vmatpush1.msra.mxu0 %v1325
  %1335 = vmatprep.subr.mxu0 0.0
  %1336 = vmatpush1.msra.mxu0 %v1326
  %1337 = vmatprep.subr.mxu0 0.0
  %1338 = vmatpush1.msra.mxu0 %v1327
  %1339 = vmatprep.subr.mxu0 0.0
  %1340 = vmatpush1.msra.mxu0 %v1328
  %1341 = vmatprep.subr.mxu0 0.0
  %1342 = vmatpush1.msra.mxu0 %v1329
  %1343 = vmatprep.subr.mxu0 0.0
  %1344 = vmatpush1.msra.mxu0 %v1330
  %1345 = vmatprep.subr.mxu0 0.0
  %1346 = vmatpush1.msra.mxu0 %v1331
  %1347 = vmatprep.subr.mxu0 0.0
  %1348 = vmatpush1.msra.mxu0 %v1332
  %1349 = vmatprep.subr.mxu0 0.0
  %1350 = vmatpush1.msra.mxu0 0.0
  %1351 = vmatprep.subr.mxu0 0.0
  %1352 = vmatpush1.msra.mxu0 0.0
  %1353 = vmatprep.subr.mxu0 0.0
  %1354 = vmatpush1.msra.mxu0 0.0
  %1355 = vmatprep.subr.mxu0 0.0
  %1356 = vmatpush1.msra.mxu0 0.0
  %1357 = vmatprep.subr.mxu0 0.0
  %1358 = vmatpush1.msra.mxu0 0.0
  %1359 = vmatprep.subr.mxu0 0.0
  %1360 = vmatpush1.msra.mxu0 0.0
  %1361 = vmatprep.subr.mxu0 0.0
  %1362 = vmatpush1.msra.mxu0 0.0
  %1363 = vmatprep.subr.mxu0 0.0
  %1364 = vmatpush1.msra.mxu0 0.0
  %1365 = vmatprep.subr.mxu0 0.0
  %1366 = vmatpush1.msra.mxu0 0.0
  %1367 = vmatprep.subr.mxu0 0.0
  %1368 = vmatpush1.msra.mxu0 0.0
  %1369 = vmatprep.subr.mxu0 0.0
  %1370 = vmatpush1.msra.mxu0 0.0
  %1371 = vmatprep.subr.mxu0 0.0
  %1372 = vmatpush1.msra.mxu0 0.0
  %1373 = vmatprep.subr.mxu0 0.0
  %1374 = vmatpush1.msra.mxu0 0.0
  %1375 = vmatprep.subr.mxu0 0.0
  %1376 = vmatpush1.msra.mxu0 0.0
  %1377 = vmatprep.subr.mxu0 0.0
  %1378 = vmatpush1.msra.mxu0 0.0
  %1379 = vmatprep.subr.mxu0 0.0
  %1380 = vmatpush1.msra.mxu0 0.0
  %1381 = vmatprep.subr.mxu0 0.0
  %1382 = vmatpush1.msra.mxu0 0.0
  %1383 = vmatprep.subr.mxu0 0.0
  %1384 = vmatpush1.msra.mxu0 0.0
  %1385 = vmatprep.subr.mxu0 0.0
  %1386 = vmatpush1.msra.mxu0 0.0
  %1387 = vmatprep.subr.mxu0 0.0
  %1388 = vmatpush1.msra.mxu0 0.0
  %1389 = vmatprep.subr.mxu0 0.0
  %1390 = vmatpush1.msra.mxu0 0.0
  %1391 = vmatprep.subr.mxu0 0.0
  %1392 = vmatpush1.msra.mxu0 0.0
  %1393 = vmatprep.subr.mxu0 0.0
  %1394 = vmatpush1.msra.mxu0 0.0
  %1395 = vmatprep.subr.mxu0 0.0
  %1396 = vmatpush1.msra.mxu0 0.0
  %1397 = vmatprep.mubr.f32.mxu0 0.0
  %1398 = vmatmul.mubr.f32.gmra.mrb[0].mxu0 %v853
  %v1399 = vpop.f32.mrb[0].mxu0
  %v1400 = vadd.f32 0.0, %v1399
  %v1401 = vpop.f32.mrb[0].mxu0
  %1402 = vdwg.mxu0
  %s1403 = scalar_lea.vmem %s8, 64
  %v1404 = vld [vmem:[%s1403] sm:$0xff]
  %v1405 = vld [vmem:[%s1403 + $0x8] sm:$0xff]
  %v1406 = vld [vmem:[%s1403 + $0x10] sm:$0xff]
  %v1407 = vld [vmem:[%s1403 + $0x18] sm:$0xff]
  %v1408 = vld [vmem:[%s1403 + $0x20] sm:$0xff]
  %v1409 = vld [vmem:[%s1403 + $0x28] sm:$0xff]
  %v1410 = vld [vmem:[%s1403 + $0x30] sm:$0xff]
  %v1411 = vld [vmem:[%s1403 + $0x38] sm:$0xff]
  %1412 = vmatprep.subr.mxu0 0.0
  %1413 = vmatpush1.msra.mxu0 %v1404
  %1414 = vmatprep.subr.mxu0 0.0
  %1415 = vmatpush1.msra.mxu0 %v1405
  %1416 = vmatprep.subr.mxu0 0.0
  %1417 = vmatpush1.msra.mxu0 %v1406
  %1418 = vmatprep.subr.mxu0 0.0
  %1419 = vmatpush1.msra.mxu0 %v1407
  %1420 = vmatprep.subr.mxu0 0.0
  %1421 = vmatpush1.msra.mxu0 %v1408
  %1422 = vmatprep.subr.mxu0 0.0
  %1423 = vmatpush1.msra.mxu0 %v1409
  %1424 = vmatprep.subr.mxu0 0.0
  %1425 = vmatpush1.msra.mxu0 %v1410
  %1426 = vmatprep.subr.mxu0 0.0
  %1427 = vmatpush1.msra.mxu0 %v1411
  %1428 = vmatprep.subr.mxu0 0.0
  %1429 = vmatpush1.msra.mxu0 0.0
  %1430 = vmatprep.subr.mxu0 0.0
  %1431 = vmatpush1.msra.mxu0 0.0
  %1432 = vmatprep.subr.mxu0 0.0
  %1433 = vmatpush1.msra.mxu0 0.0
  %1434 = vmatprep.subr.mxu0 0.0
  %1435 = vmatpush1.msra.mxu0 0.0
  %1436 = vmatprep.subr.mxu0 0.0
  %1437 = vmatpush1.msra.mxu0 0.0
  %1438 = vmatprep.subr.mxu0 0.0
  %1439 = vmatpush1.msra.mxu0 0.0
  %1440 = vmatprep.subr.mxu0 0.0
  %1441 = vmatpush1.msra.mxu0 0.0
  %1442 = vmatprep.subr.mxu0 0.0
  %1443 = vmatpush1.msra.mxu0 0.0
  %1444 = vmatprep.subr.mxu0 0.0
  %1445 = vmatpush1.msra.mxu0 0.0
  %1446 = vmatprep.subr.mxu0 0.0
  %1447 = vmatpush1.msra.mxu0 0.0
  %1448 = vmatprep.subr.mxu0 0.0
  %1449 = vmatpush1.msra.mxu0 0.0
  %1450 = vmatprep.subr.mxu0 0.0
  %1451 = vmatpush1.msra.mxu0 0.0
  %1452 = vmatprep.subr.mxu0 0.0
  %1453 = vmatpush1.msra.mxu0 0.0
  %1454 = vmatprep.subr.mxu0 0.0
  %1455 = vmatpush1.msra.mxu0 0.0
  %1456 = vmatprep.subr.mxu0 0.0
  %1457 = vmatpush1.msra.mxu0 0.0
  %1458 = vmatprep.subr.mxu0 0.0
  %1459 = vmatpush1.msra.mxu0 0.0
  %1460 = vmatprep.subr.mxu0 0.0
  %1461 = vmatpush1.msra.mxu0 0.0
  %1462 = vmatprep.subr.mxu0 0.0
  %1463 = vmatpush1.msra.mxu0 0.0
  %1464 = vmatprep.subr.mxu0 0.0
  %1465 = vmatpush1.msra.mxu0 0.0
  %1466 = vmatprep.subr.mxu0 0.0
  %1467 = vmatpush1.msra.mxu0 0.0
  %1468 = vmatprep.subr.mxu0 0.0
  %1469 = vmatpush1.msra.mxu0 0.0
  %1470 = vmatprep.subr.mxu0 0.0
  %1471 = vmatpush1.msra.mxu0 0.0
  %1472 = vmatprep.subr.mxu0 0.0
  %1473 = vmatpush1.msra.mxu0 0.0
  %1474 = vmatprep.subr.mxu0 0.0
  %1475 = vmatpush1.msra.mxu0 0.0
  %1476 = vmatprep.mubr.f32.mxu0 0.0
  %1477 = vmatmul.mubr.f32.gmra.mrb[0].mxu0 %v853
  %v1478 = vpop.f32.mrb[0].mxu0
  %v1479 = vadd.f32 0.0, %v1478
  %v1480 = vpop.f32.mrb[0].mxu0
  %1481 = vdwg.mxu0
  %v1483 = vsel %vm1081, %v1321, 0
  %v1486 = vsel %vm1081, %v1400, 0
  %1488 = vmatprep.subr.mxu0 0.0
  %1489 = vmatpush1.xpose.msra.mxu0 %v1486
  %1490 = vmatprep.subr.mxu0 0.0
  %1491 = vmatpush1.xpose.msra.mxu0 0.0
  %1492 = vmatprep.subr.mxu0 0.0
  %1493 = vmatpush1.xpose.msra.mxu0 0.0
  %1494 = vmatprep.subr.mxu0 0.0
  %1495 = vmatpush1.xpose.msra.mxu0 0.0
  %1496 = vmatprep.subr.mxu0 0.0
  %1497 = vmatpush1.xpose.msra.mxu0 0.0
  %1498 = vmatprep.subr.mxu0 0.0
  %1499 = vmatpush1.xpose.msra.mxu0 0.0
  %1500 = vmatprep.subr.mxu0 0.0
  %1501 = vmatpush1.xpose.msra.mxu0 0.0
  %1502 = vmatprep.subr.mxu0 0.0
  %1503 = vmatpush1.xpose.msra.mxu0 0.0
  %1504 = vmatprep.subr.mxu0 0.0
  %1505 = vmatpush1.xpose.msra.mxu0 0.0
  %1506 = vmatprep.subr.mxu0 0.0
  %1507 = vmatpush1.xpose.msra.mxu0 0.0
  %1508 = vmatprep.subr.mxu0 0.0
  %1509 = vmatpush1.xpose.msra.mxu0 0.0
  %1510 = vmatprep.subr.mxu0 0.0
  %1511 = vmatpush1.xpose.msra.mxu0 0.0
  %1512 = vmatprep.subr.mxu0 0.0
  %1513 = vmatpush1.xpose.msra.mxu0 0.0
  %1514 = vmatprep.subr.mxu0 0.0
  %1515 = vmatpush1.xpose.msra.mxu0 0.0
  %1516 = vmatprep.subr.mxu0 0.0
  %1517 = vmatpush1.xpose.msra.mxu0 0.0
  %1518 = vmatprep.subr.mxu0 0.0
  %1519 = vmatpush1.xpose.msra.mxu0 0.0
  %1520 = vmatprep.subr.mxu0 0.0
  %1521 = vmatpush1.xpose.msra.mxu0 0.0
  %1522 = vmatprep.subr.mxu0 0.0
  %1523 = vmatpush1.xpose.msra.mxu0 0.0
  %1524 = vmatprep.subr.mxu0 0.0
  %1525 = vmatpush1.xpose.msra.mxu0 0.0
  %1526 = vmatprep.subr.mxu0 0.0
  %1527 = vmatpush1.xpose.msra.mxu0 0.0
  %1528 = vmatprep.subr.mxu0 0.0
  %1529 = vmatpush1.xpose.msra.mxu0 0.0
  %1530 = vmatprep.subr.mxu0 0.0
  %1531 = vmatpush1.xpose.msra.mxu0 0.0
  %1532 = vmatprep.subr.mxu0 0.0
  %1533 = vmatpush1.xpose.msra.mxu0 0.0
  %1534 = vmatprep.subr.mxu0 0.0
  %1535 = vmatpush1.xpose.msra.mxu0 0.0
  %1536 = vmatprep.subr.mxu0 0.0
  %1537 = vmatpush1.xpose.msra.mxu0 0.0
  %1538 = vmatprep.subr.mxu0 0.0
  %1539 = vmatpush1.xpose.msra.mxu0 0.0
  %1540 = vmatprep.subr.mxu0 0.0
  %1541 = vmatpush1.xpose.msra.mxu0 0.0
  %1542 = vmatprep.subr.mxu0 0.0
  %1543 = vmatpush1.xpose.msra.mxu0 0.0
  %1544 = vmatprep.subr.mxu0 0.0
  %1545 = vmatpush1.xpose.msra.mxu0 0.0
  %1546 = vmatprep.subr.mxu0 0.0
  %1547 = vmatpush1.xpose.msra.mxu0 0.0
  %1548 = vmatprep.subr.mxu0 0.0
  %1549 = vmatpush1.xpose.msra.mxu0 0.0
  %1550 = vmatprep.subr.mxu0 0.0
  %1551 = vmatpush1.xpose.msra.mxu0 0.0
  %1552 = vmatprep.mubr.f32.mxu0 0.0
  %1553 = vmatmul.mubr.f32.gmra.mrb[0].mxu0 %v1483
  %v1554 = vpop.f32.mrb[0].mxu0
  %v1555 = vadd.f32 0.0, %v1554
  %v1556 = vpop.f32.mrb[0].mxu0
  %1557 = vdwg.mxu0
  %v1558 = vsel %vm1158, %v1555, -inf
  %1559 = vmax.xlane.f32.xlu0 %v1558
  %v1560 = vpop.xlane.xlu0 %1559
  %v1561 = vsub.f32 %v1555, %v1560
  %v1562 = vmul.f32 %v1561, 1.442695
  %v1563 = vpow.pop %v1562
  %v1564 = vsel %vm1158, %v1563, 0.0
  %1565 = vadd.xlane.f32.xlu0 %v1564
  %v1566 = vpop.xlane.xlu0 %1565
  %v1567 = vrcp.pop %v1566
  %v1568 = vmul.f32 %v1563, %v1567
  %v1570 = vsel %vm1158, %v1568, 0
  %1572 = vmatprep.subr.mxu0 0.0
  %1573 = vmatpush1.msra.mxu0 %v1479
  %1574 = vmatprep.subr.mxu0 0.0
  %1575 = vmatpush1.msra.mxu0 0.0
  %1576 = vmatprep.subr.mxu0 0.0
  %1577 = vmatpush1.msra.mxu0 0.0
  %1578 = vmatprep.subr.mxu0 0.0
  %1579 = vmatpush1.msra.mxu0 0.0
  %1580 = vmatprep.subr.mxu0 0.0
  %1581 = vmatpush1.msra.mxu0 0.0
  %1582 = vmatprep.subr.mxu0 0.0
  %1583 = vmatpush1.msra.mxu0 0.0
  %1584 = vmatprep.subr.mxu0 0.0
  %1585 = vmatpush1.msra.mxu0 0.0
  %1586 = vmatprep.subr.mxu0 0.0
  %1587 = vmatpush1.msra.mxu0 0.0
  %1588 = vmatprep.subr.mxu0 0.0
  %1589 = vmatpush1.msra.mxu0 0.0
  %1590 = vmatprep.subr.mxu0 0.0
  %1591 = vmatpush1.msra.mxu0 0.0
  %1592 = vmatprep.subr.mxu0 0.0
  %1593 = vmatpush1.msra.mxu0 0.0
  %1594 = vmatprep.subr.mxu0 0.0
  %1595 = vmatpush1.msra.mxu0 0.0
  %1596 = vmatprep.subr.mxu0 0.0
  %1597 = vmatpush1.msra.mxu0 0.0
  %1598 = vmatprep.subr.mxu0 0.0
  %1599 = vmatpush1.msra.mxu0 0.0
  %1600 = vmatprep.subr.mxu0 0.0
  %1601 = vmatpush1.msra.mxu0 0.0
  %1602 = vmatprep.subr.mxu0 0.0
  %1603 = vmatpush1.msra.mxu0 0.0
  %1604 = vmatprep.subr.mxu0 0.0
  %1605 = vmatpush1.msra.mxu0 0.0
  %1606 = vmatprep.subr.mxu0 0.0
  %1607 = vmatpush1.msra.mxu0 0.0
  %1608 = vmatprep.subr.mxu0 0.0
  %1609 = vmatpush1.msra.mxu0 0.0
  %1610 = vmatprep.subr.mxu0 0.0
  %1611 = vmatpush1.msra.mxu0 0.0
  %1612 = vmatprep.subr.mxu0 0.0
  %1613 = vmatpush1.msra.mxu0 0.0
  %1614 = vmatprep.subr.mxu0 0.0
  %1615 = vmatpush1.msra.mxu0 0.0
  %1616 = vmatprep.subr.mxu0 0.0
  %1617 = vmatpush1.msra.mxu0 0.0
  %1618 = vmatprep.subr.mxu0 0.0
  %1619 = vmatpush1.msra.mxu0 0.0
  %1620 = vmatprep.subr.mxu0 0.0
  %1621 = vmatpush1.msra.mxu0 0.0
  %1622 = vmatprep.subr.mxu0 0.0
  %1623 = vmatpush1.msra.mxu0 0.0
  %1624 = vmatprep.subr.mxu0 0.0
  %1625 = vmatpush1.msra.mxu0 0.0
  %1626 = vmatprep.subr.mxu0 0.0
  %1627 = vmatpush1.msra.mxu0 0.0
  %1628 = vmatprep.subr.mxu0 0.0
  %1629 = vmatpush1.msra.mxu0 0.0
  %1630 = vmatprep.subr.mxu0 0.0
  %1631 = vmatpush1.msra.mxu0 0.0
  %1632 = vmatprep.subr.mxu0 0.0
  %1633 = vmatpush1.msra.mxu0 0.0
  %1634 = vmatprep.subr.mxu0 0.0
  %1635 = vmatpush1.msra.mxu0 0.0
  %1636 = vmatprep.mubr.f32.mxu0 0.0
  %1637 = vmatmul.mubr.f32.gmra.mrb[0].mxu0 %v1570
  %v1638 = vpop.f32.mrb[0].mxu0
  %v1639 = vadd.f32 0.0, %v1638
  %v1640 = vpop.f32.mrb[0].mxu0
  %1641 = vdwg.mxu0
  %s1642 = scalar_lea.vmem %s9, 16
  %v1643 = vld [vmem:[%s1642] sm:$0xff]
  %v1644 = vld [vmem:[%s1642 + $0x8] sm:$0xff]
  %v1646 = vsel %vm1081, %v1639, 0
  %1648 = vmatprep.subr.mxu0 0.0
  %1649 = vmatpush1.msra.mxu0 %v1643
  %1650 = vmatprep.subr.mxu0 0.0
  %1651 = vmatpush1.msra.mxu0 %v1644
  %1652 = vmatprep.subr.mxu0 0.0
  %1653 = vmatpush1.msra.mxu0 0.0
  %1654 = vmatprep.subr.mxu0 0.0
  %1655 = vmatpush1.msra.mxu0 0.0
  %1656 = vmatprep.subr.mxu0 0.0
  %1657 = vmatpush1.msra.mxu0 0.0
  %1658 = vmatprep.subr.mxu0 0.0
  %1659 = vmatpush1.msra.mxu0 0.0
  %1660 = vmatprep.subr.mxu0 0.0
  %1661 = vmatpush1.msra.mxu0 0.0
  %1662 = vmatprep.subr.mxu0 0.0
  %1663 = vmatpush1.msra.mxu0 0.0
  %1664 = vmatprep.subr.mxu0 0.0
  %1665 = vmatpush1.msra.mxu0 0.0
  %1666 = vmatprep.subr.mxu0 0.0
  %1667 = vmatpush1.msra.mxu0 0.0
  %1668 = vmatprep.subr.mxu0 0.0
  %1669 = vmatpush1.msra.mxu0 0.0
  %1670 = vmatprep.subr.mxu0 0.0
  %1671 = vmatpush1.msra.mxu0 0.0
  %1672 = vmatprep.subr.mxu0 0.0
  %1673 = vmatpush1.msra.mxu0 0.0
  %1674 = vmatprep.subr.mxu0 0.0
  %1675 = vmatpush1.msra.mxu0 0.0
  %1676 = vmatprep.subr.mxu0 0.0
  %1677 = vmatpush1.msra.mxu0 0.0
  %1678 = vmatprep.subr.mxu0 0.0
  %1679 = vmatpush1.msra.mxu0 0.0
  %1680 = vmatprep.subr.mxu0 0.0
  %1681 = vmatpush1.msra.mxu0 0.0
  %1682 = vmatprep.subr.mxu0 0.0
  %1683 = vmatpush1.msra.mxu0 0.0
  %1684 = vmatprep.subr.mxu0 0.0
  %1685 = vmatpush1.msra.mxu0 0.0
  %1686 = vmatprep.subr.mxu0 0.0
  %1687 = vmatpush1.msra.mxu0 0.0
  %1688 = vmatprep.subr.mxu0 0.0
  %1689 = vmatpush1.msra.mxu0 0.0
  %1690 = vmatprep.subr.mxu0 0.0
  %1691 = vmatpush1.msra.mxu0 0.0
  %1692 = vmatprep.subr.mxu0 0.0
  %1693 = vmatpush1.msra.mxu0 0.0
  %1694 = vmatprep.subr.mxu0 0.0
  %1695 = vmatpush1.msra.mxu0 0.0
  %1696 = vmatprep.subr.mxu0 0.0
  %1697 = vmatpush1.msra.mxu0 0.0
  %1698 = vmatprep.subr.mxu0 0.0
  %1699 = vmatpush1.msra.mxu0 0.0
  %1700 = vmatprep.subr.mxu0 0.0
  %1701 = vmatpush1.msra.mxu0 0.0
  %1702 = vmatprep.subr.mxu0 0.0
  %1703 = vmatpush1.msra.mxu0 0.0
  %1704 = vmatprep.subr.mxu0 0.0
  %1705 = vmatpush1.msra.mxu0 0.0
  %1706 = vmatprep.subr.mxu0 0.0
  %1707 = vmatpush1.msra.mxu0 0.0
  %1708 = vmatprep.subr.mxu0 0.0
  %1709 = vmatpush1.msra.mxu0 0.0
  %1710 = vmatprep.subr.mxu0 0.0
  %1711 = vmatpush1.msra.mxu0 0.0
  %1712 = vmatprep.mubr.f32.mxu0 0.0
  %1713 = vmatmul.mubr.f32.gmra.mrb[0].mxu0 %v1646
  %v1714 = vpop.f32.mrb[0].mxu0
  %v1715 = vadd.f32 0.0, %v1714
  %v1716 = vpop.f32.mrb[0].mxu0
  %1717 = vdwg.mxu0
  %v1719 = vsel %vm1081, %v1240, 0
  %1721 = vmatprep.subr.mxu0 0.0
  %1722 = vmatpush1.msra.mxu0 %v1243
  %1723 = vmatprep.subr.mxu0 0.0
  %1724 = vmatpush1.msra.mxu0 %v1244
  %1725 = vmatprep.subr.mxu0 0.0
  %1726 = vmatpush1.msra.mxu0 0.0
  %1727 = vmatprep.subr.mxu0 0.0
  %1728 = vmatpush1.msra.mxu0 0.0
  %1729 = vmatprep.subr.mxu0 0.0
  %1730 = vmatpush1.msra.mxu0 0.0
  %1731 = vmatprep.subr.mxu0 0.0
  %1732 = vmatpush1.msra.mxu0 0.0
  %1733 = vmatprep.subr.mxu0 0.0
  %1734 = vmatpush1.msra.mxu0 0.0
  %1735 = vmatprep.subr.mxu0 0.0
  %1736 = vmatpush1.msra.mxu0 0.0
  %1737 = vmatprep.subr.mxu0 0.0
  %1738 = vmatpush1.msra.mxu0 0.0
  %1739 = vmatprep.subr.mxu0 0.0
  %1740 = vmatpush1.msra.mxu0 0.0
  %1741 = vmatprep.subr.mxu0 0.0
  %1742 = vmatpush1.msra.mxu0 0.0
  %1743 = vmatprep.subr.mxu0 0.0
  %1744 = vmatpush1.msra.mxu0 0.0
  %1745 = vmatprep.subr.mxu0 0.0
  %1746 = vmatpush1.msra.mxu0 0.0
  %1747 = vmatprep.subr.mxu0 0.0
  %1748 = vmatpush1.msra.mxu0 0.0
  %1749 = vmatprep.subr.mxu0 0.0
  %1750 = vmatpush1.msra.mxu0 0.0
  %1751 = vmatprep.subr.mxu0 0.0
  %1752 = vmatpush1.msra.mxu0 0.0
  %1753 = vmatprep.subr.mxu0 0.0
  %1754 = vmatpush1.msra.mxu0 0.0
  %1755 = vmatprep.subr.mxu0 0.0
  %1756 = vmatpush1.msra.mxu0 0.0
  %1757 = vmatprep.subr.mxu0 0.0
  %1758 = vmatpush1.msra.mxu0 0.0
  %1759 = vmatprep.subr.mxu0 0.0
  %1760 = vmatpush1.msra.mxu0 0.0
  %1761 = vmatprep.subr.mxu0 0.0
  %1762 = vmatpush1.msra.mxu0 0.0
  %1763 = vmatprep.subr.mxu0 0.0
  %1764 = vmatpush1.msra.mxu0 0.0
  %1765 = vmatprep.subr.mxu0 0.0
  %1766 = vmatpush1.msra.mxu0 0.0
  %1767 = vmatprep.subr.mxu0 0.0
  %1768 = vmatpush1.msra.mxu0 0.0
  %1769 = vmatprep.subr.mxu0 0.0
  %1770 = vmatpush1.msra.mxu0 0.0
  %1771 = vmatprep.subr.mxu0 0.0
  %1772 = vmatpush1.msra.mxu0 0.0
  %1773 = vmatprep.subr.mxu0 0.0
  %1774 = vmatpush1.msra.mxu0 0.0
  %1775 = vmatprep.subr.mxu0 0.0
  %1776 = vmatpush1.msra.mxu0 0.0
  %1777 = vmatprep.subr.mxu0 0.0
  %1778 = vmatpush1.msra.mxu0 0.0
  %1779 = vmatprep.subr.mxu0 0.0
  %1780 = vmatpush1.msra.mxu0 0.0
  %1781 = vmatprep.subr.mxu0 0.0
  %1782 = vmatpush1.msra.mxu0 0.0
  %1783 = vmatprep.subr.mxu0 0.0
  %1784 = vmatpush1.msra.mxu0 0.0
  %1785 = vmatprep.mubr.f32.mxu0 0.0
  %1786 = vmatmul.mubr.f32.gmra.mrb[0].mxu0 %v1719
  %v1787 = vpop.f32.mrb[0].mxu0
  %v1788 = vadd.f32 %v1715, %v1787
  %v1789 = vpop.f32.mrb[0].mxu0
  %1790 = vdwg.mxu0
  %s1791 = scalar_lea.vmem %s6, 128
  %v1792 = vld [vmem:[%s1791] sm:$0xff]
  %v1793 = vld [vmem:[%s1791 + $0x8] sm:$0xff]
  %v1794 = vld [vmem:[%s1791 + $0x10] sm:$0xff]
  %v1795 = vld [vmem:[%s1791 + $0x18] sm:$0xff]
  %v1796 = vld [vmem:[%s1791 + $0x20] sm:$0xff]
  %v1797 = vld [vmem:[%s1791 + $0x28] sm:$0xff]
  %v1798 = vld [vmem:[%s1791 + $0x30] sm:$0xff]
  %v1799 = vld [vmem:[%s1791 + $0x38] sm:$0xff]
  %1800 = vmatprep.subr.mxu0 0.0
  %1801 = vmatpush1.msra.mxu0 %v1792
  %1802 = vmatprep.subr.mxu0 0.0
  %1803 = vmatpush1.msra.mxu0 %v1793
  %1804 = vmatprep.subr.mxu0 0.0
  %1805 = vmatpush1.msra.mxu0 %v1794
  %1806 = vmatprep.subr.mxu0 0.0
  %1807 = vmatpush1.msra.mxu0 %v1795
  %1808 = vmatprep.subr.mxu0 0.0
  %1809 = vmatpush1.msra.mxu0 %v1796
  %1810 = vmatprep.subr.mxu0 0.0
  %1811 = vmatpush1.msra.mxu0 %v1797
  %1812 = vmatprep.subr.mxu0 0.0
  %1813 = vmatpush1.msra.mxu0 %v1798
  %1814 = vmatprep.subr.mxu0 0.0
  %1815 = vmatpush1.msra.mxu0 %v1799
  %1816 = vmatprep.subr.mxu0 0.0
  %1817 = vmatpush1.msra.mxu0 0.0
  %1818 = vmatprep.subr.mxu0 0.0
  %1819 = vmatpush1.msra.mxu0 0.0
  %1820 = vmatprep.subr.mxu0 0.0
  %1821 = vmatpush1.msra.mxu0 0.0
  %1822 = vmatprep.subr.mxu0 0.0
  %1823 = vmatpush1.msra.mxu0 0.0
  %1824 = vmatprep.subr.mxu0 0.0
  %1825 = vmatpush1.msra.mxu0 0.0
  %1826 = vmatprep.subr.mxu0 0.0
  %1827 = vmatpush1.msra.mxu0 0.0
  %1828 = vmatprep.subr.mxu0 0.0
  %1829 = vmatpush1.msra.mxu0 0.0
  %1830 = vmatprep.subr.mxu0 0.0
  %1831 = vmatpush1.msra.mxu0 0.0
  %1832 = vmatprep.subr.mxu0 0.0
  %1833 = vmatpush1.msra.mxu0 0.0
  %1834 = vmatprep.subr.mxu0 0.0
  %1835 = vmatpush1.msra.mxu0 0.0
  %1836 = vmatprep.subr.mxu0 0.0
  %1837 = vmatpush1.msra.mxu0 0.0
  %1838 = vmatprep.subr.mxu0 0.0
  %1839 = vmatpush1.msra.mxu0 0.0
  %1840 = vmatprep.subr.mxu0 0.0
  %1841 = vmatpush1.msra.mxu0 0.0
  %1842 = vmatprep.subr.mxu0 0.0
  %1843 = vmatpush1.msra.mxu0 0.0
  %1844 = vmatprep.subr.mxu0 0.0
  %1845 = vmatpush1.msra.mxu0 0.0
  %1846 = vmatprep.subr.mxu0 0.0
  %1847 = vmatpush1.msra.mxu0 0.0
  %1848 = vmatprep.subr.mxu0 0.0
  %1849 = vmatpush1.msra.mxu0 0.0
  %1850 = vmatprep.subr.mxu0 0.0
  %1851 = vmatpush1.msra.mxu0 0.0
  %1852 = vmatprep.subr.mxu0 0.0
  %1853 = vmatpush1.msra.mxu0 0.0
  %1854 = vmatprep.subr.mxu0 0.0
  %1855 = vmatpush1.msra.mxu0 0.0
  %1856 = vmatprep.subr.mxu0 0.0
  %1857 = vmatpush1.msra.mxu0 0.0
  %1858 = vmatprep.subr.mxu0 0.0
  %1859 = vmatpush1.msra.mxu0 0.0
  %1860 = vmatprep.subr.mxu0 0.0
  %1861 = vmatpush1.msra.mxu0 0.0
  %1862 = vmatprep.subr.mxu0 0.0
  %1863 = vmatpush1.msra.mxu0 0.0
  %1864 = vmatprep.mubr.f32.mxu0 0.0
  %1865 = vmatmul.mubr.f32.gmra.mrb[0].mxu0 %v853
  %v1866 = vpop.f32.mrb[0].mxu0
  %v1867 = vadd.f32 0.0, %v1866
  %v1868 = vpop.f32.mrb[0].mxu0
  %1869 = vdwg.mxu0
  %s1870 = scalar_lea.vmem %s7, 128
  %v1871 = vld [vmem:[%s1870] sm:$0xff]
  %v1872 = vld [vmem:[%s1870 + $0x8] sm:$0xff]
  %v1873 = vld [vmem:[%s1870 + $0x10] sm:$0xff]
  %v1874 = vld [vmem:[%s1870 + $0x18] sm:$0xff]
  %v1875 = vld [vmem:[%s1870 + $0x20] sm:$0xff]
  %v1876 = vld [vmem:[%s1870 + $0x28] sm:$0xff]
  %v1877 = vld [vmem:[%s1870 + $0x30] sm:$0xff]
  %v1878 = vld [vmem:[%s1870 + $0x38] sm:$0xff]
  %1879 = vmatprep.subr.mxu0 0.0
  %1880 = vmatpush1.msra.mxu0 %v1871
  %1881 = vmatprep.subr.mxu0 0.0
  %1882 = vmatpush1.msra.mxu0 %v1872
  %1883 = vmatprep.subr.mxu0 0.0
  %1884 = vmatpush1.msra.mxu0 %v1873
  %1885 = vmatprep.subr.mxu0 0.0
  %1886 = vmatpush1.msra.mxu0 %v1874
  %1887 = vmatprep.subr.mxu0 0.0
  %1888 = vmatpush1.msra.mxu0 %v1875
  %1889 = vmatprep.subr.mxu0 0.0
  %1890 = vmatpush1.msra.mxu0 %v1876
  %1891 = vmatprep.subr.mxu0 0.0
  %1892 = vmatpush1.msra.mxu0 %v1877
  %1893 = vmatprep.subr.mxu0 0.0
  %1894 = vmatpush1.msra.mxu0 %v1878
  %1895 = vmatprep.subr.mxu0 0.0
  %1896 = vmatpush1.msra.mxu0 0.0
  %1897 = vmatprep.subr.mxu0 0.0
  %1898 = vmatpush1.msra.mxu0 0.0
  %1899 = vmatprep.subr.mxu0 0.0
  %1900 = vmatpush1.msra.mxu0 0.0
  %1901 = vmatprep.subr.mxu0 0.0
  %1902 = vmatpush1.msra.mxu0 0.0
  %1903 = vmatprep.subr.mxu0 0.0
  %1904 = vmatpush1.msra.mxu0 0.0
  %1905 = vmatprep.subr.mxu0 0.0
  %1906 = vmatpush1.msra.mxu0 0.0
  %1907 = vmatprep.subr.mxu0 0.0
  %1908 = vmatpush1.msra.mxu0 0.0
  %1909 = vmatprep.subr.mxu0 0.0
  %1910 = vmatpush1.msra.mxu0 0.0
  %1911 = vmatprep.subr.mxu0 0.0
  %1912 = vmatpush1.msra.mxu0 0.0
  %1913 = vmatprep.subr.mxu0 0.0
  %1914 = vmatpush1.msra.mxu0 0.0
  %1915 = vmatprep.subr.mxu0 0.0
  %1916 = vmatpush1.msra.mxu0 0.0
  %1917 = vmatprep.subr.mxu0 0.0
  %1918 = vmatpush1.msra.mxu0 0.0
  %1919 = vmatprep.subr.mxu0 0.0
  %1920 = vmatpush1.msra.mxu0 0.0
  %1921 = vmatprep.subr.mxu0 0.0
  %1922 = vmatpush1.msra.mxu0 0.0
  %1923 = vmatprep.subr.mxu0 0.0
  %1924 = vmatpush1.msra.mxu0 0.0
  %1925 = vmatprep.subr.mxu0 0.0
  %1926 = vmatpush1.msra.mxu0 0.0
  %1927 = vmatprep.subr.mxu0 0.0
  %1928 = vmatpush1.msra.mxu0 0.0
  %1929 = vmatprep.subr.mxu0 0.0
  %1930 = vmatpush1.msra.mxu0 0.0
  %1931 = vmatprep.subr.mxu0 0.0
  %1932 = vmatpush1.msra.mxu0 0.0
  %1933 = vmatprep.subr.mxu0 0.0
  %1934 = vmatpush1.msra.mxu0 0.0
  %1935 = vmatprep.subr.mxu0 0.0
  %1936 = vmatpush1.msra.mxu0 0.0
  %1937 = vmatprep.subr.mxu0 0.0
  %1938 = vmatpush1.msra.mxu0 0.0
  %1939 = vmatprep.subr.mxu0 0.0
  %1940 = vmatpush1.msra.mxu0 0.0
  %1941 = vmatprep.subr.mxu0 0.0
  %1942 = vmatpush1.msra.mxu0 0.0
  %1943 = vmatprep.mubr.f32.mxu0 0.0
  %1944 = vmatmul.mubr.f32.gmra.mrb[0].mxu0 %v853
  %v1945 = vpop.f32.mrb[0].mxu0
  %v1946 = vadd.f32 0.0, %v1945
  %v1947 = vpop.f32.mrb[0].mxu0
  %1948 = vdwg.mxu0
  %s1949 = scalar_lea.vmem %s8, 128
  %v1950 = vld [vmem:[%s1949] sm:$0xff]
  %v1951 = vld [vmem:[%s1949 + $0x8] sm:$0xff]
  %v1952 = vld [vmem:[%s1949 + $0x10] sm:$0xff]
  %v1953 = vld [vmem:[%s1949 + $0x18] sm:$0xff]
  %v1954 = vld [vmem:[%s1949 + $0x20] sm:$0xff]
  %v1955 = vld [vmem:[%s1949 + $0x28] sm:$0xff]
  %v1956 = vld [vmem:[%s1949 + $0x30] sm:$0xff]
  %v1957 = vld [vmem:[%s1949 + $0x38] sm:$0xff]
  %1958 = vmatprep.subr.mxu0 0.0
  %1959 = vmatpush1.msra.mxu0 %v1950
  %1960 = vmatprep.subr.mxu0 0.0
  %1961 = vmatpush1.msra.mxu0 %v1951
  %1962 = vmatprep.subr.mxu0 0.0
  %1963 = vmatpush1.msra.mxu0 %v1952
  %1964 = vmatprep.subr.mxu0 0.0
  %1965 = vmatpush1.msra.mxu0 %v1953
  %1966 = vmatprep.subr.mxu0 0.0
  %1967 = vmatpush1.msra.mxu0 %v1954
  %1968 = vmatprep.subr.mxu0 0.0
  %1969 = vmatpush1.msra.mxu0 %v1955
  %1970 = vmatprep.subr.mxu0 0.0
  %1971 = vmatpush1.msra.mxu0 %v1956
  %1972 = vmatprep.subr.mxu0 0.0
  %1973 = vmatpush1.msra.mxu0 %v1957
  %1974 = vmatprep.subr.mxu0 0.0
  %1975 = vmatpush1.msra.mxu0 0.0
  %1976 = vmatprep.subr.mxu0 0.0
  %1977 = vmatpush1.msra.mxu0 0.0
  %1978 = vmatprep.subr.mxu0 0.0
  %1979 = vmatpush1.msra.mxu0 0.0
  %1980 = vmatprep.subr.mxu0 0.0
  %1981 = vmatpush1.msra.mxu0 0.0
  %1982 = vmatprep.subr.mxu0 0.0
  %1983 = vmatpush1.msra.mxu0 0.0
  %1984 = vmatprep.subr.mxu0 0.0
  %1985 = vmatpush1.msra.mxu0 0.0
  %1986 = vmatprep.subr.mxu0 0.0
  %1987 = vmatpush1.msra.mxu0 0.0
  %1988 = vmatprep.subr.mxu0 0.0
  %1989 = vmatpush1.msra.mxu0 0.0
  %1990 = vmatprep.subr.mxu0 0.0
  %1991 = vmatpush1.msra.mxu0 0.0
  %1992 = vmatprep.subr.mxu0 0.0
  %1993 = vmatpush1.msra.mxu0 0.0
  %1994 = vmatprep.subr.mxu0 0.0
  %1995 = vmatpush1.msra.mxu0 0.0
  %1996 = vmatprep.subr.mxu0 0.0
  %1997 = vmatpush1.msra.mxu0 0.0
  %1998 = vmatprep.subr.mxu0 0.0
  %1999 = vmatpush1.msra.mxu0 0.0
  %2000 = vmatprep.subr.mxu0 0.0
  %2001 = vmatpush1.msra.mxu0 0.0
  %2002 = vmatprep.subr.mxu0 0.0
  %2003 = vmatpush1.msra.mxu0 0.0
  %2004 = vmatprep.subr.mxu0 0.0
  %2005 = vmatpush1.msra.mxu0 0.0
  %2006 = vmatprep.subr.mxu0 0.0
  %2007 = vmatpush1.msra.mxu0 0.0
  %2008 = vmatprep.subr.mxu0 0.0
  %2009 = vmatpush1.msra.mxu0 0.0
  %2010 = vmatprep.subr.mxu0 0.0
  %2011 = vmatpush1.msra.mxu0 0.0
  %2012 = vmatprep.subr.mxu0 0.0
  %2013 = vmatpush1.msra.mxu0 0.0
  %2014 = vmatprep.subr.mxu0 0.0
  %2015 = vmatpush1.msra.mxu0 0.0
  %2016 = vmatprep.subr.mxu0 0.0
  %2017 = vmatpush1.msra.mxu0 0.0
  %2018 = vmatprep.subr.mxu0 0.0
  %2019 = vmatpush1.msra.mxu0 0.0
  %2020 = vmatprep.subr.mxu0 0.0
  %2021 = vmatpush1.msra.mxu0 0.0
  %2022 = vmatprep.mubr.f32.mxu0 0.0
  %2023 = vmatmul.mubr.f32.gmra.mrb[0].mxu0 %v853
  %v2024 = vpop.f32.mrb[0].mxu0
  %v2025 = vadd.f32 0.0, %v2024
  %v2026 = vpop.f32.mrb[0].mxu0
  %2027 = vdwg.mxu0
  %v2029 = vsel %vm1081, %v1867, 0
  %v2032 = vsel %vm1081, %v1946, 0
  %2034 = vmatprep.subr.mxu0 0.0
  %2035 = vmatpush1.xpose.msra.mxu0 %v2032
  %2036 = vmatprep.subr.mxu0 0.0
  %2037 = vmatpush1.xpose.msra.mxu0 0.0
  %2038 = vmatprep.subr.mxu0 0.0
  %2039 = vmatpush1.xpose.msra.mxu0 0.0
  %2040 = vmatprep.subr.mxu0 0.0
  %2041 = vmatpush1.xpose.msra.mxu0 0.0
  %2042 = vmatprep.subr.mxu0 0.0
  %2043 = vmatpush1.xpose.msra.mxu0 0.0
  %2044 = vmatprep.subr.mxu0 0.0
  %2045 = vmatpush1.xpose.msra.mxu0 0.0
  %2046 = vmatprep.subr.mxu0 0.0
  %2047 = vmatpush1.xpose.msra.mxu0 0.0
  %2048 = vmatprep.subr.mxu0 0.0
  %2049 = vmatpush1.xpose.msra.mxu0 0.0
  %2050 = vmatprep.subr.mxu0 0.0
  %2051 = vmatpush1.xpose.msra.mxu0 0.0
  %2052 = vmatprep.subr.mxu0 0.0
  %2053 = vmatpush1.xpose.msra.mxu0 0.0
  %2054 = vmatprep.subr.mxu0 0.0
  %2055 = vmatpush1.xpose.msra.mxu0 0.0
  %2056 = vmatprep.subr.mxu0 0.0
  %2057 = vmatpush1.xpose.msra.mxu0 0.0
  %2058 = vmatprep.subr.mxu0 0.0
  %2059 = vmatpush1.xpose.msra.mxu0 0.0
  %2060 = vmatprep.subr.mxu0 0.0
  %2061 = vmatpush1.xpose.msra.mxu0 0.0
  %2062 = vmatprep.subr.mxu0 0.0
  %2063 = vmatpush1.xpose.msra.mxu0 0.0
  %2064 = vmatprep.subr.mxu0 0.0
  %2065 = vmatpush1.xpose.msra.mxu0 0.0
  %2066 = vmatprep.subr.mxu0 0.0
  %2067 = vmatpush1.xpose.msra.mxu0 0.0
  %2068 = vmatprep.subr.mxu0 0.0
  %2069 = vmatpush1.xpose.msra.mxu0 0.0
  %2070 = vmatprep.subr.mxu0 0.0
  %2071 = vmatpush1.xpose.msra.mxu0 0.0
  %2072 = vmatprep.subr.mxu0 0.0
  %2073 = vmatpush1.xpose.msra.mxu0 0.0
  %2074 = vmatprep.subr.mxu0 0.0
  %2075 = vmatpush1.xpose.msra.mxu0 0.0
  %2076 = vmatprep.subr.mxu0 0.0
  %2077 = vmatpush1.xpose.msra.mxu0 0.0
  %2078 = vmatprep.subr.mxu0 0.0
  %2079 = vmatpush1.xpose.msra.mxu0 0.0
  %2080 = vmatprep.subr.mxu0 0.0
  %2081 = vmatpush1.xpose.msra.mxu0 0.0
  %2082 = vmatprep.subr.mxu0 0.0
  %2083 = vmatpush1.xpose.msra.mxu0 0.0
  %2084 = vmatprep.subr.mxu0 0.0
  %2085 = vmatpush1.xpose.msra.mxu0 0.0
  %2086 = vmatprep.subr.mxu0 0.0
  %2087 = vmatpush1.xpose.msra.mxu0 0.0
  %2088 = vmatprep.subr.mxu0 0.0
  %2089 = vmatpush1.xpose.msra.mxu0 0.0
  %2090 = vmatprep.subr.mxu0 0.0
  %2091 = vmatpush1.xpose.msra.mxu0 0.0
  %2092 = vmatprep.subr.mxu0 0.0
  %2093 = vmatpush1.xpose.msra.mxu0 0.0
  %2094 = vmatprep.subr.mxu0 0.0
  %2095 = vmatpush1.xpose.msra.mxu0 0.0
  %2096 = vmatprep.subr.mxu0 0.0
  %2097 = vmatpush1.xpose.msra.mxu0 0.0
  %2098 = vmatprep.mubr.f32.mxu0 0.0
  %2099 = vmatmul.mubr.f32.gmra.mrb[0].mxu0 %v2029
  %v2100 = vpop.f32.mrb[0].mxu0
  %v2101 = vadd.f32 0.0, %v2100
  %v2102 = vpop.f32.mrb[0].mxu0
  %2103 = vdwg.mxu0
  %v2104 = vsel %vm1158, %v2101, -inf
  %2105 = vmax.xlane.f32.xlu0 %v2104
  %v2106 = vpop.xlane.xlu0 %2105
  %v2107 = vsub.f32 %v2101, %v2106
  %v2108 = vmul.f32 %v2107, 1.442695
  %v2109 = vpow.pop %v2108
  %v2110 = vsel %vm1158, %v2109, 0.0
  %2111 = vadd.xlane.f32.xlu0 %v2110
  %v2112 = vpop.xlane.xlu0 %2111
  %v2113 = vrcp.pop %v2112
  %v2114 = vmul.f32 %v2109, %v2113
  %v2116 = vsel %vm1158, %v2114, 0
  %2118 = vmatprep.subr.mxu0 0.0
  %2119 = vmatpush1.msra.mxu0 %v2025
  %2120 = vmatprep.subr.mxu0 0.0
  %2121 = vmatpush1.msra.mxu0 0.0
  %2122 = vmatprep.subr.mxu0 0.0
  %2123 = vmatpush1.msra.mxu0 0.0
  %2124 = vmatprep.subr.mxu0 0.0
  %2125 = vmatpush1.msra.mxu0 0.0
  %2126 = vmatprep.subr.mxu0 0.0
  %2127 = vmatpush1.msra.mxu0 0.0
  %2128 = vmatprep.subr.mxu0 0.0
  %2129 = vmatpush1.msra.mxu0 0.0
  %2130 = vmatprep.subr.mxu0 0.0
  %2131 = vmatpush1.msra.mxu0 0.0
  %2132 = vmatprep.subr.mxu0 0.0
  %2133 = vmatpush1.msra.mxu0 0.0
  %2134 = vmatprep.subr.mxu0 0.0
  %2135 = vmatpush1.msra.mxu0 0.0
  %2136 = vmatprep.subr.mxu0 0.0
  %2137 = vmatpush1.msra.mxu0 0.0
  %2138 = vmatprep.subr.mxu0 0.0
  %2139 = vmatpush1.msra.mxu0 0.0
  %2140 = vmatprep.subr.mxu0 0.0
  %2141 = vmatpush1.msra.mxu0 0.0
  %2142 = vmatprep.subr.mxu0 0.0
  %2143 = vmatpush1.msra.mxu0 0.0
  %2144 = vmatprep.subr.mxu0 0.0
  %2145 = vmatpush1.msra.mxu0 0.0
  %2146 = vmatprep.subr.mxu0 0.0
  %2147 = vmatpush1.msra.mxu0 0.0
  %2148 = vmatprep.subr.mxu0 0.0
  %2149 = vmatpush1.msra.mxu0 0.0
  %2150 = vmatprep.subr.mxu0 0.0
  %2151 = vmatpush1.msra.mxu0 0.0
  %2152 = vmatprep.subr.mxu0 0.0
  %2153 = vmatpush1.msra.mxu0 0.0
  %2154 = vmatprep.subr.mxu0 0.0
  %2155 = vmatpush1.msra.mxu0 0.0
  %2156 = vmatprep.subr.mxu0 0.0
  %2157 = vmatpush1.msra.mxu0 0.0
  %2158 = vmatprep.subr.mxu0 0.0
  %2159 = vmatpush1.msra.mxu0 0.0
  %2160 = vmatprep.subr.mxu0 0.0
  %2161 = vmatpush1.msra.mxu0 0.0
  %2162 = vmatprep.subr.mxu0 0.0
  %2163 = vmatpush1.msra.mxu0 0.0
  %2164 = vmatprep.subr.mxu0 0.0
  %2165 = vmatpush1.msra.mxu0 0.0
  %2166 = vmatprep.subr.mxu0 0.0
  %2167 = vmatpush1.msra.mxu0 0.0
  %2168 = vmatprep.subr.mxu0 0.0
  %2169 = vmatpush1.msra.mxu0 0.0
  %2170 = vmatprep.subr.mxu0 0.0
  %2171 = vmatpush1.msra.mxu0 0.0
  %2172 = vmatprep.subr.mxu0 0.0
  %2173 = vmatpush1.msra.mxu0 0.0
  %2174 = vmatprep.subr.mxu0 0.0
  %2175 = vmatpush1.msra.mxu0 0.0
  %2176 = vmatprep.subr.mxu0 0.0
  %2177 = vmatpush1.msra.mxu0 0.0
  %2178 = vmatprep.subr.mxu0 0.0
  %2179 = vmatpush1.msra.mxu0 0.0
  %2180 = vmatprep.subr.mxu0 0.0
  %2181 = vmatpush1.msra.mxu0 0.0
  %2182 = vmatprep.mubr.f32.mxu0 0.0
  %2183 = vmatmul.mubr.f32.gmra.mrb[0].mxu0 %v2116
  %v2184 = vpop.f32.mrb[0].mxu0
  %v2185 = vadd.f32 0.0, %v2184
  %v2186 = vpop.f32.mrb[0].mxu0
  %2187 = vdwg.mxu0
  %s2188 = scalar_lea.vmem %s9, 32
  %v2189 = vld [vmem:[%s2188] sm:$0xff]
  %v2190 = vld [vmem:[%s2188 + $0x8] sm:$0xff]
  %v2192 = vsel %vm1081, %v2185, 0
  %2194 = vmatprep.subr.mxu0 0.0
  %2195 = vmatpush1.msra.mxu0 %v2189
  %2196 = vmatprep.subr.mxu0 0.0
  %2197 = vmatpush1.msra.mxu0 %v2190
  %2198 = vmatprep.subr.mxu0 0.0
  %2199 = vmatpush1.msra.mxu0 0.0
  %2200 = vmatprep.subr.mxu0 0.0
  %2201 = vmatpush1.msra.mxu0 0.0
  %2202 = vmatprep.subr.mxu0 0.0
  %2203 = vmatpush1.msra.mxu0 0.0
  %2204 = vmatprep.subr.mxu0 0.0
  %2205 = vmatpush1.msra.mxu0 0.0
  %2206 = vmatprep.subr.mxu0 0.0
  %2207 = vmatpush1.msra.mxu0 0.0
  %2208 = vmatprep.subr.mxu0 0.0
  %2209 = vmatpush1.msra.mxu0 0.0
  %2210 = vmatprep.subr.mxu0 0.0
  %2211 = vmatpush1.msra.mxu0 0.0
  %2212 = vmatprep.subr.mxu0 0.0
  %2213 = vmatpush1.msra.mxu0 0.0
  %2214 = vmatprep.subr.mxu0 0.0
  %2215 = vmatpush1.msra.mxu0 0.0
  %2216 = vmatprep.subr.mxu0 0.0
  %2217 = vmatpush1.msra.mxu0 0.0
  %2218 = vmatprep.subr.mxu0 0.0
  %2219 = vmatpush1.msra.mxu0 0.0
  %2220 = vmatprep.subr.mxu0 0.0
  %2221 = vmatpush1.msra.mxu0 0.0
  %2222 = vmatprep.subr.mxu0 0.0
  %2223 = vmatpush1.msra.mxu0 0.0
  %2224 = vmatprep.subr.mxu0 0.0
  %2225 = vmatpush1.msra.mxu0 0.0
  %2226 = vmatprep.subr.mxu0 0.0
  %2227 = vmatpush1.msra.mxu0 0.0
  %2228 = vmatprep.subr.mxu0 0.0
  %2229 = vmatpush1.msra.mxu0 0.0
  %2230 = vmatprep.subr.mxu0 0.0
  %2231 = vmatpush1.msra.mxu0 0.0
  %2232 = vmatprep.subr.mxu0 0.0
  %2233 = vmatpush1.msra.mxu0 0.0
  %2234 = vmatprep.subr.mxu0 0.0
  %2235 = vmatpush1.msra.mxu0 0.0
  %2236 = vmatprep.subr.mxu0 0.0
  %2237 = vmatpush1.msra.mxu0 0.0
  %2238 = vmatprep.subr.mxu0 0.0
  %2239 = vmatpush1.msra.mxu0 0.0
  %2240 = vmatprep.subr.mxu0 0.0
  %2241 = vmatpush1.msra.mxu0 0.0
  %2242 = vmatprep.subr.mxu0 0.0
  %2243 = vmatpush1.msra.mxu0 0.0
  %2244 = vmatprep.subr.mxu0 0.0
  %2245 = vmatpush1.msra.mxu0 0.0
  %2246 = vmatprep.subr.mxu0 0.0
  %2247 = vmatpush1.msra.mxu0 0.0
  %2248 = vmatprep.subr.mxu0 0.0
  %2249 = vmatpush1.msra.mxu0 0.0
  %2250 = vmatprep.subr.mxu0 0.0
  %2251 = vmatpush1.msra.mxu0 0.0
  %2252 = vmatprep.subr.mxu0 0.0
  %2253 = vmatpush1.msra.mxu0 0.0
  %2254 = vmatprep.subr.mxu0 0.0
  %2255 = vmatpush1.msra.mxu0 0.0
  %2256 = vmatprep.subr.mxu0 0.0
  %2257 = vmatpush1.msra.mxu0 0.0
  %2258 = vmatprep.mubr.f32.mxu0 0.0
  %2259 = vmatmul.mubr.f32.gmra.mrb[0].mxu0 %v2192
  %v2260 = vpop.f32.mrb[0].mxu0
  %v2261 = vadd.f32 0.0, %v2260
  %v2262 = vpop.f32.mrb[0].mxu0
  %2263 = vdwg.mxu0
  %v2264 = vadd.f32 %v1788, %v2261
  %s2265 = scalar_lea.vmem %s6, 192
  %v2266 = vld [vmem:[%s2265] sm:$0xff]
  %v2267 = vld [vmem:[%s2265 + $0x8] sm:$0xff]
  %v2268 = vld [vmem:[%s2265 + $0x10] sm:$0xff]
  %v2269 = vld [vmem:[%s2265 + $0x18] sm:$0xff]
  %v2270 = vld [vmem:[%s2265 + $0x20] sm:$0xff]
  %v2271 = vld [vmem:[%s2265 + $0x28] sm:$0xff]
  %v2272 = vld [vmem:[%s2265 + $0x30] sm:$0xff]
  %v2273 = vld [vmem:[%s2265 + $0x38] sm:$0xff]
  %2274 = vmatprep.subr.mxu0 0.0
  %2275 = vmatpush1.msra.mxu0 %v2266
  %2276 = vmatprep.subr.mxu0 0.0
  %2277 = vmatpush1.msra.mxu0 %v2267
  %2278 = vmatprep.subr.mxu0 0.0
  %2279 = vmatpush1.msra.mxu0 %v2268
  %2280 = vmatprep.subr.mxu0 0.0
  %2281 = vmatpush1.msra.mxu0 %v2269
  %2282 = vmatprep.subr.mxu0 0.0
  %2283 = vmatpush1.msra.mxu0 %v2270
  %2284 = vmatprep.subr.mxu0 0.0
  %2285 = vmatpush1.msra.mxu0 %v2271
  %2286 = vmatprep.subr.mxu0 0.0
  %2287 = vmatpush1.msra.mxu0 %v2272
  %2288 = vmatprep.subr.mxu0 0.0
  %2289 = vmatpush1.msra.mxu0 %v2273
  %2290 = vmatprep.subr.mxu0 0.0
  %2291 = vmatpush1.msra.mxu0 0.0
  %2292 = vmatprep.subr.mxu0 0.0
  %2293 = vmatpush1.msra.mxu0 0.0
  %2294 = vmatprep.subr.mxu0 0.0
  %2295 = vmatpush1.msra.mxu0 0.0
  %2296 = vmatprep.subr.mxu0 0.0
  %2297 = vmatpush1.msra.mxu0 0.0
  %2298 = vmatprep.subr.mxu0 0.0
  %2299 = vmatpush1.msra.mxu0 0.0
  %2300 = vmatprep.subr.mxu0 0.0
  %2301 = vmatpush1.msra.mxu0 0.0
  %2302 = vmatprep.subr.mxu0 0.0
  %2303 = vmatpush1.msra.mxu0 0.0
  %2304 = vmatprep.subr.mxu0 0.0
  %2305 = vmatpush1.msra.mxu0 0.0
  %2306 = vmatprep.subr.mxu0 0.0
  %2307 = vmatpush1.msra.mxu0 0.0
  %2308 = vmatprep.subr.mxu0 0.0
  %2309 = vmatpush1.msra.mxu0 0.0
  %2310 = vmatprep.subr.mxu0 0.0
  %2311 = vmatpush1.msra.mxu0 0.0
  %2312 = vmatprep.subr.mxu0 0.0
  %2313 = vmatpush1.msra.mxu0 0.0
  %2314 = vmatprep.subr.mxu0 0.0
  %2315 = vmatpush1.msra.mxu0 0.0
  %2316 = vmatprep.subr.mxu0 0.0
  %2317 = vmatpush1.msra.mxu0 0.0
  %2318 = vmatprep.subr.mxu0 0.0
  %2319 = vmatpush1.msra.mxu0 0.0
  %2320 = vmatprep.subr.mxu0 0.0
  %2321 = vmatpush1.msra.mxu0 0.0
  %2322 = vmatprep.subr.mxu0 0.0
  %2323 = vmatpush1.msra.mxu0 0.0
  %2324 = vmatprep.subr.mxu0 0.0
  %2325 = vmatpush1.msra.mxu0 0.0
  %2326 = vmatprep.subr.mxu0 0.0
  %2327 = vmatpush1.msra.mxu0 0.0
  %2328 = vmatprep.subr.mxu0 0.0
  %2329 = vmatpush1.msra.mxu0 0.0
  %2330 = vmatprep.subr.mxu0 0.0
  %2331 = vmatpush1.msra.mxu0 0.0
  %2332 = vmatprep.subr.mxu0 0.0
  %2333 = vmatpush1.msra.mxu0 0.0
  %2334 = vmatprep.subr.mxu0 0.0
  %2335 = vmatpush1.msra.mxu0 0.0
  %2336 = vmatprep.subr.mxu0 0.0
  %2337 = vmatpush1.msra.mxu0 0.0
  %2338 = vmatprep.mubr.f32.mxu0 0.0
  %2339 = vmatmul.mubr.f32.gmra.mrb[0].mxu0 %v853
  %v2340 = vpop.f32.mrb[0].mxu0
  %v2341 = vadd.f32 0.0, %v2340
  %v2342 = vpop.f32.mrb[0].mxu0
  %2343 = vdwg.mxu0
  %s2344 = scalar_lea.vmem %s7, 192
  %v2345 = vld [vmem:[%s2344] sm:$0xff]
  %v2346 = vld [vmem:[%s2344 + $0x8] sm:$0xff]
  %v2347 = vld [vmem:[%s2344 + $0x10] sm:$0xff]
  %v2348 = vld [vmem:[%s2344 + $0x18] sm:$0xff]
  %v2349 = vld [vmem:[%s2344 + $0x20] sm:$0xff]
  %v2350 = vld [vmem:[%s2344 + $0x28] sm:$0xff]
  %v2351 = vld [vmem:[%s2344 + $0x30] sm:$0xff]
  %v2352 = vld [vmem:[%s2344 + $0x38] sm:$0xff]
  %2353 = vmatprep.subr.mxu0 0.0
  %2354 = vmatpush1.msra.mxu0 %v2345
  %2355 = vmatprep.subr.mxu0 0.0
  %2356 = vmatpush1.msra.mxu0 %v2346
  %2357 = vmatprep.subr.mxu0 0.0
  %2358 = vmatpush1.msra.mxu0 %v2347
  %2359 = vmatprep.subr.mxu0 0.0
  %2360 = vmatpush1.msra.mxu0 %v2348
  %2361 = vmatprep.subr.mxu0 0.0
  %2362 = vmatpush1.msra.mxu0 %v2349
  %2363 = vmatprep.subr.mxu0 0.0
  %2364 = vmatpush1.msra.mxu0 %v2350
  %2365 = vmatprep.subr.mxu0 0.0
  %2366 = vmatpush1.msra.mxu0 %v2351
  %2367 = vmatprep.subr.mxu0 0.0
  %2368 = vmatpush1.msra.mxu0 %v2352
  %2369 = vmatprep.subr.mxu0 0.0
  %2370 = vmatpush1.msra.mxu0 0.0
  %2371 = vmatprep.subr.mxu0 0.0
  %2372 = vmatpush1.msra.mxu0 0.0
  %2373 = vmatprep.subr.mxu0 0.0
  %2374 = vmatpush1.msra.mxu0 0.0
  %2375 = vmatprep.subr.mxu0 0.0
  %2376 = vmatpush1.msra.mxu0 0.0
  %2377 = vmatprep.subr.mxu0 0.0
  %2378 = vmatpush1.msra.mxu0 0.0
  %2379 = vmatprep.subr.mxu0 0.0
  %2380 = vmatpush1.msra.mxu0 0.0
  %2381 = vmatprep.subr.mxu0 0.0
  %2382 = vmatpush1.msra.mxu0 0.0
  %2383 = vmatprep.subr.mxu0 0.0
  %2384 = vmatpush1.msra.mxu0 0.0
  %2385 = vmatprep.subr.mxu0 0.0
  %2386 = vmatpush1.msra.mxu0 0.0
  %2387 = vmatprep.subr.mxu0 0.0
  %2388 = vmatpush1.msra.mxu0 0.0
  %2389 = vmatprep.subr.mxu0 0.0
  %2390 = vmatpush1.msra.mxu0 0.0
  %2391 = vmatprep.subr.mxu0 0.0
  %2392 = vmatpush1.msra.mxu0 0.0
  %2393 = vmatprep.subr.mxu0 0.0
  %2394 = vmatpush1.msra.mxu0 0.0
  %2395 = vmatprep.subr.mxu0 0.0
  %2396 = vmatpush1.msra.mxu0 0.0
  %2397 = vmatprep.subr.mxu0 0.0
  %2398 = vmatpush1.msra.mxu0 0.0
  %2399 = vmatprep.subr.mxu0 0.0
  %2400 = vmatpush1.msra.mxu0 0.0
  %2401 = vmatprep.subr.mxu0 0.0
  %2402 = vmatpush1.msra.mxu0 0.0
  %2403 = vmatprep.subr.mxu0 0.0
  %2404 = vmatpush1.msra.mxu0 0.0
  %2405 = vmatprep.subr.mxu0 0.0
  %2406 = vmatpush1.msra.mxu0 0.0
  %2407 = vmatprep.subr.mxu0 0.0
  %2408 = vmatpush1.msra.mxu0 0.0
  %2409 = vmatprep.subr.mxu0 0.0
  %2410 = vmatpush1.msra.mxu0 0.0
  %2411 = vmatprep.subr.mxu0 0.0
  %2412 = vmatpush1.msra.mxu0 0.0
  %2413 = vmatprep.subr.mxu0 0.0
  %2414 = vmatpush1.msra.mxu0 0.0
  %2415 = vmatprep.subr.mxu0 0.0
  %2416 = vmatpush1.msra.mxu0 0.0
  %2417 = vmatprep.mubr.f32.mxu0 0.0
  %2418 = vmatmul.mubr.f32.gmra.mrb[0].mxu0 %v853
  %v2419 = vpop.f32.mrb[0].mxu0
  %v2420 = vadd.f32 0.0, %v2419
  %v2421 = vpop.f32.mrb[0].mxu0
  %2422 = vdwg.mxu0
  %s2423 = scalar_lea.vmem %s8, 192
  %v2424 = vld [vmem:[%s2423] sm:$0xff]
  %v2425 = vld [vmem:[%s2423 + $0x8] sm:$0xff]
  %v2426 = vld [vmem:[%s2423 + $0x10] sm:$0xff]
  %v2427 = vld [vmem:[%s2423 + $0x18] sm:$0xff]
  %v2428 = vld [vmem:[%s2423 + $0x20] sm:$0xff]
  %v2429 = vld [vmem:[%s2423 + $0x28] sm:$0xff]
  %v2430 = vld [vmem:[%s2423 + $0x30] sm:$0xff]
  %v2431 = vld [vmem:[%s2423 + $0x38] sm:$0xff]
  %2432 = vmatprep.subr.mxu0 0.0
  %2433 = vmatpush1.msra.mxu0 %v2424
  %2434 = vmatprep.subr.mxu0 0.0
  %2435 = vmatpush1.msra.mxu0 %v2425
  %2436 = vmatprep.subr.mxu0 0.0
  %2437 = vmatpush1.msra.mxu0 %v2426
  %2438 = vmatprep.subr.mxu0 0.0
  %2439 = vmatpush1.msra.mxu0 %v2427
  %2440 = vmatprep.subr.mxu0 0.0
  %2441 = vmatpush1.msra.mxu0 %v2428
  %2442 = vmatprep.subr.mxu0 0.0
  %2443 = vmatpush1.msra.mxu0 %v2429
  %2444 = vmatprep.subr.mxu0 0.0
  %2445 = vmatpush1.msra.mxu0 %v2430
  %2446 = vmatprep.subr.mxu0 0.0
  %2447 = vmatpush1.msra.mxu0 %v2431
  %2448 = vmatprep.subr.mxu0 0.0
  %2449 = vmatpush1.msra.mxu0 0.0
  %2450 = vmatprep.subr.mxu0 0.0
  %2451 = vmatpush1.msra.mxu0 0.0
  %2452 = vmatprep.subr.mxu0 0.0
  %2453 = vmatpush1.msra.mxu0 0.0
  %2454 = vmatprep.subr.mxu0 0.0
  %2455 = vmatpush1.msra.mxu0 0.0
  %2456 = vmatprep.subr.mxu0 0.0
  %2457 = vmatpush1.msra.mxu0 0.0
  %2458 = vmatprep.subr.mxu0 0.0
  %2459 = vmatpush1.msra.mxu0 0.0
  %2460 = vmatprep.subr.mxu0 0.0
  %2461 = vmatpush1.msra.mxu0 0.0
  %2462 = vmatprep.subr.mxu0 0.0
  %2463 = vmatpush1.msra.mxu0 0.0
  %2464 = vmatprep.subr.mxu0 0.0
  %2465 = vmatpush1.msra.mxu0 0.0
  %2466 = vmatprep.subr.mxu0 0.0
  %2467 = vmatpush1.msra.mxu0 0.0
  %2468 = vmatprep.subr.mxu0 0.0
  %2469 = vmatpush1.msra.mxu0 0.0
  %2470 = vmatprep.subr.mxu0 0.0
  %2471 = vmatpush1.msra.mxu0 0.0
  %2472 = vmatprep.subr.mxu0 0.0
  %2473 = vmatpush1.msra.mxu0 0.0
  %2474 = vmatprep.subr.mxu0 0.0
  %2475 = vmatpush1.msra.mxu0 0.0
  %2476 = vmatprep.subr.mxu0 0.0
  %2477 = vmatpush1.msra.mxu0 0.0
  %2478 = vmatprep.subr.mxu0 0.0
  %2479 = vmatpush1.msra.mxu0 0.0
  %2480 = vmatprep.subr.mxu0 0.0
  %2481 = vmatpush1.msra.mxu0 0.0
  %2482 = vmatprep.subr.mxu0 0.0
  %2483 = vmatpush1.msra.mxu0 0.0
  %2484 = vmatprep.subr.mxu0 0.0
  %2485 = vmatpush1.msra.mxu0 0.0
  %2486 = vmatprep.subr.mxu0 0.0
  %2487 = vmatpush1.msra.mxu0 0.0
  %2488 = vmatprep.subr.mxu0 0.0
  %2489 = vmatpush1.msra.mxu0 0.0
  %2490 = vmatprep.subr.mxu0 0.0
  %2491 = vmatpush1.msra.mxu0 0.0
  %2492 = vmatprep.subr.mxu0 0.0
  %2493 = vmatpush1.msra.mxu0 0.0
  %2494 = vmatprep.subr.mxu0 0.0
  %2495 = vmatpush1.msra.mxu0 0.0
  %2496 = vmatprep.mubr.f32.mxu0 0.0
  %2497 = vmatmul.mubr.f32.gmra.mrb[0].mxu0 %v853
  %v2498 = vpop.f32.mrb[0].mxu0
  %v2499 = vadd.f32 0.0, %v2498
  %v2500 = vpop.f32.mrb[0].mxu0
  %2501 = vdwg.mxu0
  %v2503 = vsel %vm1081, %v2341, 0
  %v2506 = vsel %vm1081, %v2420, 0
  %2508 = vmatprep.subr.mxu0 0.0
  %2509 = vmatpush1.xpose.msra.mxu0 %v2506
  %2510 = vmatprep.subr.mxu0 0.0
  %2511 = vmatpush1.xpose.msra.mxu0 0.0
  %2512 = vmatprep.subr.mxu0 0.0
  %2513 = vmatpush1.xpose.msra.mxu0 0.0
  %2514 = vmatprep.subr.mxu0 0.0
  %2515 = vmatpush1.xpose.msra.mxu0 0.0
  %2516 = vmatprep.subr.mxu0 0.0
  %2517 = vmatpush1.xpose.msra.mxu0 0.0
  %2518 = vmatprep.subr.mxu0 0.0
  %2519 = vmatpush1.xpose.msra.mxu0 0.0
  %2520 = vmatprep.subr.mxu0 0.0
  %2521 = vmatpush1.xpose.msra.mxu0 0.0
  %2522 = vmatprep.subr.mxu0 0.0
  %2523 = vmatpush1.xpose.msra.mxu0 0.0
  %2524 = vmatprep.subr.mxu0 0.0
  %2525 = vmatpush1.xpose.msra.mxu0 0.0
  %2526 = vmatprep.subr.mxu0 0.0
  %2527 = vmatpush1.xpose.msra.mxu0 0.0
  %2528 = vmatprep.subr.mxu0 0.0
  %2529 = vmatpush1.xpose.msra.mxu0 0.0
  %2530 = vmatprep.subr.mxu0 0.0
  %2531 = vmatpush1.xpose.msra.mxu0 0.0
  %2532 = vmatprep.subr.mxu0 0.0
  %2533 = vmatpush1.xpose.msra.mxu0 0.0
  %2534 = vmatprep.subr.mxu0 0.0
  %2535 = vmatpush1.xpose.msra.mxu0 0.0
  %2536 = vmatprep.subr.mxu0 0.0
  %2537 = vmatpush1.xpose.msra.mxu0 0.0
  %2538 = vmatprep.subr.mxu0 0.0
  %2539 = vmatpush1.xpose.msra.mxu0 0.0
  %2540 = vmatprep.subr.mxu0 0.0
  %2541 = vmatpush1.xpose.msra.mxu0 0.0
  %2542 = vmatprep.subr.mxu0 0.0
  %2543 = vmatpush1.xpose.msra.mxu0 0.0
  %2544 = vmatprep.subr.mxu0 0.0
  %2545 = vmatpush1.xpose.msra.mxu0 0.0
  %2546 = vmatprep.subr.mxu0 0.0
  %2547 = vmatpush1.xpose.msra.mxu0 0.0
  %2548 = vmatprep.subr.mxu0 0.0
  %2549 = vmatpush1.xpose.msra.mxu0 0.0
  %2550 = vmatprep.subr.mxu0 0.0
  %2551 = vmatpush1.xpose.msra.mxu0 0.0
  %2552 = vmatprep.subr.mxu0 0.0
  %2553 = vmatpush1.xpose.msra.mxu0 0.0
  %2554 = vmatprep.subr.mxu0 0.0
  %2555 = vmatpush1.xpose.msra.mxu0 0.0
  %2556 = vmatprep.subr.mxu0 0.0
  %2557 = vmatpush1.xpose.msra.mxu0 0.0
  %2558 = vmatprep.subr.mxu0 0.0
  %2559 = vmatpush1.xpose.msra.mxu0 0.0
  %2560 = vmatprep.subr.mxu0 0.0
  %2561 = vmatpush1.xpose.msra.mxu0 0.0
  %2562 = vmatprep.subr.mxu0 0.0
  %2563 = vmatpush1.xpose.msra.mxu0 0.0
  %2564 = vmatprep.subr.mxu0 0.0
  %2565 = vmatpush1.xpose.msra.mxu0 0.0
  %2566 = vmatprep.subr.mxu0 0.0
  %2567 = vmatpush1.xpose.msra.mxu0 0.0
  %2568 = vmatprep.subr.mxu0 0.0
  %2569 = vmatpush1.xpose.msra.mxu0 0.0
  %2570 = vmatprep.subr.mxu0 0.0
  %2571 = vmatpush1.xpose.msra.mxu0 0.0
  %2572 = vmatprep.mubr.f32.mxu0 0.0
  %2573 = vmatmul.mubr.f32.gmra.mrb[0].mxu0 %v2503
  %v2574 = vpop.f32.mrb[0].mxu0
  %v2575 = vadd.f32 0.0, %v2574
  %v2576 = vpop.f32.mrb[0].mxu0
  %2577 = vdwg.mxu0
  %v2578 = vsel %vm1158, %v2575, -inf
  %2579 = vmax.xlane.f32.xlu0 %v2578
  %v2580 = vpop.xlane.xlu0 %2579
  %v2581 = vsub.f32 %v2575, %v2580
  %v2582 = vmul.f32 %v2581, 1.442695
  %v2583 = vpow.pop %v2582
  %v2584 = vsel %vm1158, %v2583, 0.0
  %2585 = vadd.xlane.f32.xlu0 %v2584
  %v2586 = vpop.xlane.xlu0 %2585
  %v2587 = vrcp.pop %v2586
  %v2588 = vmul.f32 %v2583, %v2587
  %v2590 = vsel %vm1158, %v2588, 0
  %2592 = vmatprep.subr.mxu0 0.0
  %2593 = vmatpush1.msra.mxu0 %v2499
  %2594 = vmatprep.subr.mxu0 0.0
  %2595 = vmatpush1.msra.mxu0 0.0
  %2596 = vmatprep.subr.mxu0 0.0
  %2597 = vmatpush1.msra.mxu0 0.0
  %2598 = vmatprep.subr.mxu0 0.0
  %2599 = vmatpush1.msra.mxu0 0.0
  %2600 = vmatprep.subr.mxu0 0.0
  %2601 = vmatpush1.msra.mxu0 0.0
  %2602 = vmatprep.subr.mxu0 0.0
  %2603 = vmatpush1.msra.mxu0 0.0
  %2604 = vmatprep.subr.mxu0 0.0
  %2605 = vmatpush1.msra.mxu0 0.0
  %2606 = vmatprep.subr.mxu0 0.0
  %2607 = vmatpush1.msra.mxu0 0.0
  %2608 = vmatprep.subr.mxu0 0.0
  %2609 = vmatpush1.msra.mxu0 0.0
  %2610 = vmatprep.subr.mxu0 0.0
  %2611 = vmatpush1.msra.mxu0 0.0
  %2612 = vmatprep.subr.mxu0 0.0
  %2613 = vmatpush1.msra.mxu0 0.0
  %2614 = vmatprep.subr.mxu0 0.0
  %2615 = vmatpush1.msra.mxu0 0.0
  %2616 = vmatprep.subr.mxu0 0.0
  %2617 = vmatpush1.msra.mxu0 0.0
  %2618 = vmatprep.subr.mxu0 0.0
  %2619 = vmatpush1.msra.mxu0 0.0
  %2620 = vmatprep.subr.mxu0 0.0
  %2621 = vmatpush1.msra.mxu0 0.0
  %2622 = vmatprep.subr.mxu0 0.0
  %2623 = vmatpush1.msra.mxu0 0.0
  %2624 = vmatprep.subr.mxu0 0.0
  %2625 = vmatpush1.msra.mxu0 0.0
  %2626 = vmatprep.subr.mxu0 0.0
  %2627 = vmatpush1.msra.mxu0 0.0
  %2628 = vmatprep.subr.mxu0 0.0
  %2629 = vmatpush1.msra.mxu0 0.0
  %2630 = vmatprep.subr.mxu0 0.0
  %2631 = vmatpush1.msra.mxu0 0.0
  %2632 = vmatprep.subr.mxu0 0.0
  %2633 = vmatpush1.msra.mxu0 0.0
  %2634 = vmatprep.subr.mxu0 0.0
  %2635 = vmatpush1.msra.mxu0 0.0
  %2636 = vmatprep.subr.mxu0 0.0
  %2637 = vmatpush1.msra.mxu0 0.0
  %2638 = vmatprep.subr.mxu0 0.0
  %2639 = vmatpush1.msra.mxu0 0.0
  %2640 = vmatprep.subr.mxu0 0.0
  %2641 = vmatpush1.msra.mxu0 0.0
  %2642 = vmatprep.subr.mxu0 0.0
  %2643 = vmatpush1.msra.mxu0 0.0
  %2644 = vmatprep.subr.mxu0 0.0
  %2645 = vmatpush1.msra.mxu0 0.0
  %2646 = vmatprep.subr.mxu0 0.0
  %2647 = vmatpush1.msra.mxu0 0.0
  %2648 = vmatprep.subr.mxu0 0.0
  %2649 = vmatpush1.msra.mxu0 0.0
  %2650 = vmatprep.subr.mxu0 0.0
  %2651 = vmatpush1.msra.mxu0 0.0
  %2652 = vmatprep.subr.mxu0 0.0
  %2653 = vmatpush1.msra.mxu0 0.0
  %2654 = vmatprep.subr.mxu0 0.0
  %2655 = vmatpush1.msra.mxu0 0.0
  %2656 = vmatprep.mubr.f32.mxu0 0.0
  %2657 = vmatmul.mubr.f32.gmra.mrb[0].mxu0 %v2590
  %v2658 = vpop.f32.mrb[0].mxu0
  %v2659 = vadd.f32 0.0, %v2658
  %v2660 = vpop.f32.mrb[0].mxu0
  %2661 = vdwg.mxu0
  %s2662 = scalar_lea.vmem %s9, 48
  %v2663 = vld [vmem:[%s2662] sm:$0xff]
  %v2664 = vld [vmem:[%s2662 + $0x8] sm:$0xff]
  %v2666 = vsel %vm1081, %v2659, 0
  %2668 = vmatprep.subr.mxu0 0.0
  %2669 = vmatpush1.msra.mxu0 %v2663
  %2670 = vmatprep.subr.mxu0 0.0
  %2671 = vmatpush1.msra.mxu0 %v2664
  %2672 = vmatprep.subr.mxu0 0.0
  %2673 = vmatpush1.msra.mxu0 0.0
  %2674 = vmatprep.subr.mxu0 0.0
  %2675 = vmatpush1.msra.mxu0 0.0
  %2676 = vmatprep.subr.mxu0 0.0
  %2677 = vmatpush1.msra.mxu0 0.0
  %2678 = vmatprep.subr.mxu0 0.0
  %2679 = vmatpush1.msra.mxu0 0.0
  %2680 = vmatprep.subr.mxu0 0.0
  %2681 = vmatpush1.msra.mxu0 0.0
  %2682 = vmatprep.subr.mxu0 0.0
  %2683 = vmatpush1.msra.mxu0 0.0
  %2684 = vmatprep.subr.mxu0 0.0
  %2685 = vmatpush1.msra.mxu0 0.0
  %2686 = vmatprep.subr.mxu0 0.0
  %2687 = vmatpush1.msra.mxu0 0.0
  %2688 = vmatprep.subr.mxu0 0.0
  %2689 = vmatpush1.msra.mxu0 0.0
  %2690 = vmatprep.subr.mxu0 0.0
  %2691 = vmatpush1.msra.mxu0 0.0
  %2692 = vmatprep.subr.mxu0 0.0
  %2693 = vmatpush1.msra.mxu0 0.0
  %2694 = vmatprep.subr.mxu0 0.0
  %2695 = vmatpush1.msra.mxu0 0.0
  %2696 = vmatprep.subr.mxu0 0.0
  %2697 = vmatpush1.msra.mxu0 0.0
  %2698 = vmatprep.subr.mxu0 0.0
  %2699 = vmatpush1.msra.mxu0 0.0
  %2700 = vmatprep.subr.mxu0 0.0
  %2701 = vmatpush1.msra.mxu0 0.0
  %2702 = vmatprep.subr.mxu0 0.0
  %2703 = vmatpush1.msra.mxu0 0.0
  %2704 = vmatprep.subr.mxu0 0.0
  %2705 = vmatpush1.msra.mxu0 0.0
  %2706 = vmatprep.subr.mxu0 0.0
  %2707 = vmatpush1.msra.mxu0 0.0
  %2708 = vmatprep.subr.mxu0 0.0
  %2709 = vmatpush1.msra.mxu0 0.0
  %2710 = vmatprep.subr.mxu0 0.0
  %2711 = vmatpush1.msra.mxu0 0.0
  %2712 = vmatprep.subr.mxu0 0.0
  %2713 = vmatpush1.msra.mxu0 0.0
  %2714 = vmatprep.subr.mxu0 0.0
  %2715 = vmatpush1.msra.mxu0 0.0
  %2716 = vmatprep.subr.mxu0 0.0
  %2717 = vmatpush1.msra.mxu0 0.0
  %2718 = vmatprep.subr.mxu0 0.0
  %2719 = vmatpush1.msra.mxu0 0.0
  %2720 = vmatprep.subr.mxu0 0.0
  %2721 = vmatpush1.msra.mxu0 0.0
  %2722 = vmatprep.subr.mxu0 0.0
  %2723 = vmatpush1.msra.mxu0 0.0
  %2724 = vmatprep.subr.mxu0 0.0
  %2725 = vmatpush1.msra.mxu0 0.0
  %2726 = vmatprep.subr.mxu0 0.0
  %2727 = vmatpush1.msra.mxu0 0.0
  %2728 = vmatprep.subr.mxu0 0.0
  %2729 = vmatpush1.msra.mxu0 0.0
  %2730 = vmatprep.subr.mxu0 0.0
  %2731 = vmatpush1.msra.mxu0 0.0
  %2732 = vmatprep.mubr.f32.mxu0 0.0
  %2733 = vmatmul.mubr.f32.gmra.mrb[0].mxu0 %v2666
  %v2734 = vpop.f32.mrb[0].mxu0
  %v2735 = vadd.f32 0.0, %v2734
  %v2736 = vpop.f32.mrb[0].mxu0
  %2737 = vdwg.mxu0
  %v2738 = vadd.f32 %v2264, %v2735
  %v2740 = vsel %vm800, %v843, 0
  %2742 = vmatprep.subr.mxu0 0.0
  %2743 = vmatpush1.msra.mxu0 %v844
  %2744 = vmatprep.subr.mxu0 0.0
  %2745 = vmatpush1.msra.mxu0 %v845
  %2746 = vmatprep.subr.mxu0 0.0
  %2747 = vmatpush1.msra.mxu0 %v846
  %2748 = vmatprep.subr.mxu0 0.0
  %2749 = vmatpush1.msra.mxu0 %v847
  %2750 = vmatprep.subr.mxu0 0.0
  %2751 = vmatpush1.msra.mxu0 %v848
  %2752 = vmatprep.subr.mxu0 0.0
  %2753 = vmatpush1.msra.mxu0 %v849
  %2754 = vmatprep.subr.mxu0 0.0
  %2755 = vmatpush1.msra.mxu0 %v850
  %2756 = vmatprep.subr.mxu0 0.0
  %2757 = vmatpush1.msra.mxu0 %v851
  %2758 = vmatprep.subr.mxu0 0.0
  %2759 = vmatpush1.msra.mxu0 0.0
  %2760 = vmatprep.subr.mxu0 0.0
  %2761 = vmatpush1.msra.mxu0 0.0
  %2762 = vmatprep.subr.mxu0 0.0
  %2763 = vmatpush1.msra.mxu0 0.0
  %2764 = vmatprep.subr.mxu0 0.0
  %2765 = vmatpush1.msra.mxu0 0.0
  %2766 = vmatprep.subr.mxu0 0.0
  %2767 = vmatpush1.msra.mxu0 0.0
  %2768 = vmatprep.subr.mxu0 0.0
  %2769 = vmatpush1.msra.mxu0 0.0
  %2770 = vmatprep.subr.mxu0 0.0
  %2771 = vmatpush1.msra.mxu0 0.0
  %2772 = vmatprep.subr.mxu0 0.0
  %2773 = vmatpush1.msra.mxu0 0.0
  %2774 = vmatprep.subr.mxu0 0.0
  %2775 = vmatpush1.msra.mxu0 0.0
  %2776 = vmatprep.subr.mxu0 0.0
  %2777 = vmatpush1.msra.mxu0 0.0
  %2778 = vmatprep.subr.mxu0 0.0
  %2779 = vmatpush1.msra.mxu0 0.0
  %2780 = vmatprep.subr.mxu0 0.0
  %2781 = vmatpush1.msra.mxu0 0.0
  %2782 = vmatprep.subr.mxu0 0.0
  %2783 = vmatpush1.msra.mxu0 0.0
  %2784 = vmatprep.subr.mxu0 0.0
  %2785 = vmatpush1.msra.mxu0 0.0
  %2786 = vmatprep.subr.mxu0 0.0
  %2787 = vmatpush1.msra.mxu0 0.0
  %2788 = vmatprep.subr.mxu0 0.0
  %2789 = vmatpush1.msra.mxu0 0.0
  %2790 = vmatprep.subr.mxu0 0.0
  %2791 = vmatpush1.msra.mxu0 0.0
  %2792 = vmatprep.subr.mxu0 0.0
  %2793 = vmatpush1.msra.mxu0 0.0
  %2794 = vmatprep.subr.mxu0 0.0
  %2795 = vmatpush1.msra.mxu0 0.0
  %2796 = vmatprep.subr.mxu0 0.0
  %2797 = vmatpush1.msra.mxu0 0.0
  %2798 = vmatprep.subr.mxu0 0.0
  %2799 = vmatpush1.msra.mxu0 0.0
  %2800 = vmatprep.subr.mxu0 0.0
  %2801 = vmatpush1.msra.mxu0 0.0
  %2802 = vmatprep.subr.mxu0 0.0
  %2803 = vmatpush1.msra.mxu0 0.0
  %2804 = vmatprep.subr.mxu0 0.0
  %2805 = vmatpush1.msra.mxu0 0.0
  %2806 = vmatprep.mubr.f32.mxu0 0.0
  %2807 = vmatmul.mubr.f32.gmra.mrb[0].mxu0 %v2740
  %v2808 = vpop.f32.mrb[0].mxu0
  %v2809 = vadd.f32 0.0, %v2808
  %v2810 = vpop.f32.mrb[0].mxu0
  %2811 = vdwg.mxu0
  %2812 = vmatprep.subr.mxu0 0.0
  %2813 = vmatpush1.msra.mxu0 %v925
  %2814 = vmatprep.subr.mxu0 0.0
  %2815 = vmatpush1.msra.mxu0 %v926
  %2816 = vmatprep.subr.mxu0 0.0
  %2817 = vmatpush1.msra.mxu0 %v927
  %2818 = vmatprep.subr.mxu0 0.0
  %2819 = vmatpush1.msra.mxu0 %v928
  %2820 = vmatprep.subr.mxu0 0.0
  %2821 = vmatpush1.msra.mxu0 %v929
  %2822 = vmatprep.subr.mxu0 0.0
  %2823 = vmatpush1.msra.mxu0 %v930
  %2824 = vmatprep.subr.mxu0 0.0
  %2825 = vmatpush1.msra.mxu0 %v931
  %2826 = vmatprep.subr.mxu0 0.0
  %2827 = vmatpush1.msra.mxu0 %v932
  %2828 = vmatprep.subr.mxu0 0.0
  %2829 = vmatpush1.msra.mxu0 0.0
  %2830 = vmatprep.subr.mxu0 0.0
  %2831 = vmatpush1.msra.mxu0 0.0
  %2832 = vmatprep.subr.mxu0 0.0
  %2833 = vmatpush1.msra.mxu0 0.0
  %2834 = vmatprep.subr.mxu0 0.0
  %2835 = vmatpush1.msra.mxu0 0.0
  %2836 = vmatprep.subr.mxu0 0.0
  %2837 = vmatpush1.msra.mxu0 0.0
  %2838 = vmatprep.subr.mxu0 0.0
  %2839 = vmatpush1.msra.mxu0 0.0
  %2840 = vmatprep.subr.mxu0 0.0
  %2841 = vmatpush1.msra.mxu0 0.0
  %2842 = vmatprep.subr.mxu0 0.0
  %2843 = vmatpush1.msra.mxu0 0.0
  %2844 = vmatprep.subr.mxu0 0.0
  %2845 = vmatpush1.msra.mxu0 0.0
  %2846 = vmatprep.subr.mxu0 0.0
  %2847 = vmatpush1.msra.mxu0 0.0
  %2848 = vmatprep.subr.mxu0 0.0
  %2849 = vmatpush1.msra.mxu0 0.0
  %2850 = vmatprep.subr.mxu0 0.0
  %2851 = vmatpush1.msra.mxu0 0.0
  %2852 = vmatprep.subr.mxu0 0.0
  %2853 = vmatpush1.msra.mxu0 0.0
  %2854 = vmatprep.subr.mxu0 0.0
  %2855 = vmatpush1.msra.mxu0 0.0
  %2856 = vmatprep.subr.mxu0 0.0
  %2857 = vmatpush1.msra.mxu0 0.0
  %2858 = vmatprep.subr.mxu0 0.0
  %2859 = vmatpush1.msra.mxu0 0.0
  %2860 = vmatprep.subr.mxu0 0.0
  %2861 = vmatpush1.msra.mxu0 0.0
  %2862 = vmatprep.subr.mxu0 0.0
  %2863 = vmatpush1.msra.mxu0 0.0
  %2864 = vmatprep.subr.mxu0 0.0
  %2865 = vmatpush1.msra.mxu0 0.0
  %2866 = vmatprep.subr.mxu0 0.0
  %2867 = vmatpush1.msra.mxu0 0.0
  %2868 = vmatprep.subr.mxu0 0.0
  %2869 = vmatpush1.msra.mxu0 0.0
  %2870 = vmatprep.subr.mxu0 0.0
  %2871 = vmatpush1.msra.mxu0 0.0
  %2872 = vmatprep.subr.mxu0 0.0
  %2873 = vmatpush1.msra.mxu0 0.0
  %2874 = vmatprep.subr.mxu0 0.0
  %2875 = vmatpush1.msra.mxu0 0.0
  %2876 = vmatprep.mubr.f32.mxu0 0.0
  %2877 = vmatmul.mubr.f32.gmra.mrb[0].mxu0 %v2740
  %v2878 = vpop.f32.mrb[0].mxu0
  %v2879 = vadd.f32 0.0, %v2878
  %v2880 = vpop.f32.mrb[0].mxu0
  %2881 = vdwg.mxu0
  %2882 = vmatprep.subr.mxu0 0.0
  %2883 = vmatpush1.msra.mxu0 %v1003
  %2884 = vmatprep.subr.mxu0 0.0
  %2885 = vmatpush1.msra.mxu0 %v1004
  %2886 = vmatprep.subr.mxu0 0.0
  %2887 = vmatpush1.msra.mxu0 %v1005
  %2888 = vmatprep.subr.mxu0 0.0
  %2889 = vmatpush1.msra.mxu0 %v1006
  %2890 = vmatprep.subr.mxu0 0.0
  %2891 = vmatpush1.msra.mxu0 %v1007
  %2892 = vmatprep.subr.mxu0 0.0
  %2893 = vmatpush1.msra.mxu0 %v1008
  %2894 = vmatprep.subr.mxu0 0.0
  %2895 = vmatpush1.msra.mxu0 %v1009
  %2896 = vmatprep.subr.mxu0 0.0
  %2897 = vmatpush1.msra.mxu0 %v1010
  %2898 = vmatprep.subr.mxu0 0.0
  %2899 = vmatpush1.msra.mxu0 0.0
  %2900 = vmatprep.subr.mxu0 0.0
  %2901 = vmatpush1.msra.mxu0 0.0
  %2902 = vmatprep.subr.mxu0 0.0
  %2903 = vmatpush1.msra.mxu0 0.0
  %2904 = vmatprep.subr.mxu0 0.0
  %2905 = vmatpush1.msra.mxu0 0.0
  %2906 = vmatprep.subr.mxu0 0.0
  %2907 = vmatpush1.msra.mxu0 0.0
  %2908 = vmatprep.subr.mxu0 0.0
  %2909 = vmatpush1.msra.mxu0 0.0
  %2910 = vmatprep.subr.mxu0 0.0
  %2911 = vmatpush1.msra.mxu0 0.0
  %2912 = vmatprep.subr.mxu0 0.0
  %2913 = vmatpush1.msra.mxu0 0.0
  %2914 = vmatprep.subr.mxu0 0.0
  %2915 = vmatpush1.msra.mxu0 0.0
  %2916 = vmatprep.subr.mxu0 0.0
  %2917 = vmatpush1.msra.mxu0 0.0
  %2918 = vmatprep.subr.mxu0 0.0
  %2919 = vmatpush1.msra.mxu0 0.0
  %2920 = vmatprep.subr.mxu0 0.0
  %2921 = vmatpush1.msra.mxu0 0.0
  %2922 = vmatprep.subr.mxu0 0.0
  %2923 = vmatpush1.msra.mxu0 0.0
  %2924 = vmatprep.subr.mxu0 0.0
  %2925 = vmatpush1.msra.mxu0 0.0
  %2926 = vmatprep.subr.mxu0 0.0
  %2927 = vmatpush1.msra.mxu0 0.0
  %2928 = vmatprep.subr.mxu0 0.0
  %2929 = vmatpush1.msra.mxu0 0.0
  %2930 = vmatprep.subr.mxu0 0.0
  %2931 = vmatpush1.msra.mxu0 0.0
  %2932 = vmatprep.subr.mxu0 0.0
  %2933 = vmatpush1.msra.mxu0 0.0
  %2934 = vmatprep.subr.mxu0 0.0
  %2935 = vmatpush1.msra.mxu0 0.0
  %2936 = vmatprep.subr.mxu0 0.0
  %2937 = vmatpush1.msra.mxu0 0.0
  %2938 = vmatprep.subr.mxu0 0.0
  %2939 = vmatpush1.msra.mxu0 0.0
  %2940 = vmatprep.subr.mxu0 0.0
  %2941 = vmatpush1.msra.mxu0 0.0
  %2942 = vmatprep.subr.mxu0 0.0
  %2943 = vmatpush1.msra.mxu0 0.0
  %2944 = vmatprep.subr.mxu0 0.0
  %2945 = vmatpush1.msra.mxu0 0.0
  %2946 = vmatprep.mubr.f32.mxu0 0.0
  %2947 = vmatmul.mubr.f32.gmra.mrb[0].mxu0 %v2740
  %v2948 = vpop.f32.mrb[0].mxu0
  %v2949 = vadd.f32 0.0, %v2948
  %v2950 = vpop.f32.mrb[0].mxu0
  %2951 = vdwg.mxu0
  %v2953 = vsel %vm1081, %v2809, 0
  %v2956 = vsel %vm1081, %v2879, 0
  %2958 = vmatprep.subr.mxu0 0.0
  %2959 = vmatpush1.xpose.msra.mxu0 %v2956
  %2960 = vmatprep.subr.mxu0 0.0
  %2961 = vmatpush1.xpose.msra.mxu0 0.0
  %2962 = vmatprep.subr.mxu0 0.0
  %2963 = vmatpush1.xpose.msra.mxu0 0.0
  %2964 = vmatprep.subr.mxu0 0.0
  %2965 = vmatpush1.xpose.msra.mxu0 0.0
  %2966 = vmatprep.subr.mxu0 0.0
  %2967 = vmatpush1.xpose.msra.mxu0 0.0
  %2968 = vmatprep.subr.mxu0 0.0
  %2969 = vmatpush1.xpose.msra.mxu0 0.0
  %2970 = vmatprep.subr.mxu0 0.0
  %2971 = vmatpush1.xpose.msra.mxu0 0.0
  %2972 = vmatprep.subr.mxu0 0.0
  %2973 = vmatpush1.xpose.msra.mxu0 0.0
  %2974 = vmatprep.subr.mxu0 0.0
  %2975 = vmatpush1.xpose.msra.mxu0 0.0
  %2976 = vmatprep.subr.mxu0 0.0
  %2977 = vmatpush1.xpose.msra.mxu0 0.0
  %2978 = vmatprep.subr.mxu0 0.0
  %2979 = vmatpush1.xpose.msra.mxu0 0.0
  %2980 = vmatprep.subr.mxu0 0.0
  %2981 = vmatpush1.xpose.msra.mxu0 0.0
  %2982 = vmatprep.subr.mxu0 0.0
  %2983 = vmatpush1.xpose.msra.mxu0 0.0
  %2984 = vmatprep.subr.mxu0 0.0
  %2985 = vmatpush1.xpose.msra.mxu0 0.0
  %2986 = vmatprep.subr.mxu0 0.0
  %2987 = vmatpush1.xpose.msra.mxu0 0.0
  %2988 = vmatprep.subr.mxu0 0.0
  %2989 = vmatpush1.xpose.msra.mxu0 0.0
  %2990 = vmatprep.subr.mxu0 0.0
  %2991 = vmatpush1.xpose.msra.mxu0 0.0
  %2992 = vmatprep.subr.mxu0 0.0
  %2993 = vmatpush1.xpose.msra.mxu0 0.0
  %2994 = vmatprep.subr.mxu0 0.0
  %2995 = vmatpush1.xpose.msra.mxu0 0.0
  %2996 = vmatprep.subr.mxu0 0.0
  %2997 = vmatpush1.xpose.msra.mxu0 0.0
  %2998 = vmatprep.subr.mxu0 0.0
  %2999 = vmatpush1.xpose.msra.mxu0 0.0
  %3000 = vmatprep.subr.mxu0 0.0
  %3001 = vmatpush1.xpose.msra.mxu0 0.0
  %3002 = vmatprep.subr.mxu0 0.0
  %3003 = vmatpush1.xpose.msra.mxu0 0.0
  %3004 = vmatprep.subr.mxu0 0.0
  %3005 = vmatpush1.xpose.msra.mxu0 0.0
  %3006 = vmatprep.subr.mxu0 0.0
  %3007 = vmatpush1.xpose.msra.mxu0 0.0
  %3008 = vmatprep.subr.mxu0 0.0
  %3009 = vmatpush1.xpose.msra.mxu0 0.0
  %3010 = vmatprep.subr.mxu0 0.0
  %3011 = vmatpush1.xpose.msra.mxu0 0.0
  %3012 = vmatprep.subr.mxu0 0.0
  %3013 = vmatpush1.xpose.msra.mxu0 0.0
  %3014 = vmatprep.subr.mxu0 0.0
  %3015 = vmatpush1.xpose.msra.mxu0 0.0
  %3016 = vmatprep.subr.mxu0 0.0
  %3017 = vmatpush1.xpose.msra.mxu0 0.0
  %3018 = vmatprep.subr.mxu0 0.0
  %3019 = vmatpush1.xpose.msra.mxu0 0.0
  %3020 = vmatprep.subr.mxu0 0.0
  %3021 = vmatpush1.xpose.msra.mxu0 0.0
  %3022 = vmatprep.mubr.f32.mxu0 0.0
  %3023 = vmatmul.mubr.f32.gmra.mrb[0].mxu0 %v2953
  %v3024 = vpop.f32.mrb[0].mxu0
  %v3025 = vadd.f32 0.0, %v3024
  %v3026 = vpop.f32.mrb[0].mxu0
  %3027 = vdwg.mxu0
  %v3028 = vsel %vm1158, %v3025, -inf
  %3029 = vmax.xlane.f32.xlu0 %v3028
  %v3030 = vpop.xlane.xlu0 %3029
  %v3031 = vsub.f32 %v3025, %v3030
  %v3032 = vmul.f32 %v3031, 1.442695
  %v3033 = vpow.pop %v3032
  %v3034 = vsel %vm1158, %v3033, 0.0
  %3035 = vadd.xlane.f32.xlu0 %v3034
  %v3036 = vpop.xlane.xlu0 %3035
  %v3037 = vrcp.pop %v3036
  %v3038 = vmul.f32 %v3033, %v3037
  %v3040 = vsel %vm1158, %v3038, 0
  %3042 = vmatprep.subr.mxu0 0.0
  %3043 = vmatpush1.msra.mxu0 %v2949
  %3044 = vmatprep.subr.mxu0 0.0
  %3045 = vmatpush1.msra.mxu0 0.0
  %3046 = vmatprep.subr.mxu0 0.0
  %3047 = vmatpush1.msra.mxu0 0.0
  %3048 = vmatprep.subr.mxu0 0.0
  %3049 = vmatpush1.msra.mxu0 0.0
  %3050 = vmatprep.subr.mxu0 0.0
  %3051 = vmatpush1.msra.mxu0 0.0
  %3052 = vmatprep.subr.mxu0 0.0
  %3053 = vmatpush1.msra.mxu0 0.0
  %3054 = vmatprep.subr.mxu0 0.0
  %3055 = vmatpush1.msra.mxu0 0.0
  %3056 = vmatprep.subr.mxu0 0.0
  %3057 = vmatpush1.msra.mxu0 0.0
  %3058 = vmatprep.subr.mxu0 0.0
  %3059 = vmatpush1.msra.mxu0 0.0
  %3060 = vmatprep.subr.mxu0 0.0
  %3061 = vmatpush1.msra.mxu0 0.0
  %3062 = vmatprep.subr.mxu0 0.0
  %3063 = vmatpush1.msra.mxu0 0.0
  %3064 = vmatprep.subr.mxu0 0.0
  %3065 = vmatpush1.msra.mxu0 0.0
  %3066 = vmatprep.subr.mxu0 0.0
  %3067 = vmatpush1.msra.mxu0 0.0
  %3068 = vmatprep.subr.mxu0 0.0
  %3069 = vmatpush1.msra.mxu0 0.0
  %3070 = vmatprep.subr.mxu0 0.0
  %3071 = vmatpush1.msra.mxu0 0.0
  %3072 = vmatprep.subr.mxu0 0.0
  %3073 = vmatpush1.msra.mxu0 0.0
  %3074 = vmatprep.subr.mxu0 0.0
  %3075 = vmatpush1.msra.mxu0 0.0
  %3076 = vmatprep.subr.mxu0 0.0
  %3077 = vmatpush1.msra.mxu0 0.0
  %3078 = vmatprep.subr.mxu0 0.0
  %3079 = vmatpush1.msra.mxu0 0.0
  %3080 = vmatprep.subr.mxu0 0.0
  %3081 = vmatpush1.msra.mxu0 0.0
  %3082 = vmatprep.subr.mxu0 0.0
  %3083 = vmatpush1.msra.mxu0 0.0
  %3084 = vmatprep.subr.mxu0 0.0
  %3085 = vmatpush1.msra.mxu0 0.0
  %3086 = vmatprep.subr.mxu0 0.0
  %3087 = vmatpush1.msra.mxu0 0.0
  %3088 = vmatprep.subr.mxu0 0.0
  %3089 = vmatpush1.msra.mxu0 0.0
  %3090 = vmatprep.subr.mxu0 0.0
  %3091 = vmatpush1.msra.mxu0 0.0
  %3092 = vmatprep.subr.mxu0 0.0
  %3093 = vmatpush1.msra.mxu0 0.0
  %3094 = vmatprep.subr.mxu0 0.0
  %3095 = vmatpush1.msra.mxu0 0.0
  %3096 = vmatprep.subr.mxu0 0.0
  %3097 = vmatpush1.msra.mxu0 0.0
  %3098 = vmatprep.subr.mxu0 0.0
  %3099 = vmatpush1.msra.mxu0 0.0
  %3100 = vmatprep.subr.mxu0 0.0
  %3101 = vmatpush1.msra.mxu0 0.0
  %3102 = vmatprep.subr.mxu0 0.0
  %3103 = vmatpush1.msra.mxu0 0.0
  %3104 = vmatprep.subr.mxu0 0.0
  %3105 = vmatpush1.msra.mxu0 0.0
  %3106 = vmatprep.mubr.f32.mxu0 0.0
  %3107 = vmatmul.mubr.f32.gmra.mrb[0].mxu0 %v3040
  %v3108 = vpop.f32.mrb[0].mxu0
  %v3109 = vadd.f32 0.0, %v3108
  %v3110 = vpop.f32.mrb[0].mxu0
  %3111 = vdwg.mxu0
  %3112 = vmatprep.subr.mxu0 0.0
  %3113 = vmatpush1.msra.mxu0 %v1246
  %3114 = vmatprep.subr.mxu0 0.0
  %3115 = vmatpush1.msra.mxu0 %v1247
  %3116 = vmatprep.subr.mxu0 0.0
  %3117 = vmatpush1.msra.mxu0 %v1248
  %3118 = vmatprep.subr.mxu0 0.0
  %3119 = vmatpush1.msra.mxu0 %v1249
  %3120 = vmatprep.subr.mxu0 0.0
  %3121 = vmatpush1.msra.mxu0 %v1250
  %3122 = vmatprep.subr.mxu0 0.0
  %3123 = vmatpush1.msra.mxu0 %v1251
  %3124 = vmatprep.subr.mxu0 0.0
  %3125 = vmatpush1.msra.mxu0 %v1252
  %3126 = vmatprep.subr.mxu0 0.0
  %3127 = vmatpush1.msra.mxu0 %v1253
  %3128 = vmatprep.subr.mxu0 0.0
  %3129 = vmatpush1.msra.mxu0 0.0
  %3130 = vmatprep.subr.mxu0 0.0
  %3131 = vmatpush1.msra.mxu0 0.0
  %3132 = vmatprep.subr.mxu0 0.0
  %3133 = vmatpush1.msra.mxu0 0.0
  %3134 = vmatprep.subr.mxu0 0.0
  %3135 = vmatpush1.msra.mxu0 0.0
  %3136 = vmatprep.subr.mxu0 0.0
  %3137 = vmatpush1.msra.mxu0 0.0
  %3138 = vmatprep.subr.mxu0 0.0
  %3139 = vmatpush1.msra.mxu0 0.0
  %3140 = vmatprep.subr.mxu0 0.0
  %3141 = vmatpush1.msra.mxu0 0.0
  %3142 = vmatprep.subr.mxu0 0.0
  %3143 = vmatpush1.msra.mxu0 0.0
  %3144 = vmatprep.subr.mxu0 0.0
  %3145 = vmatpush1.msra.mxu0 0.0
  %3146 = vmatprep.subr.mxu0 0.0
  %3147 = vmatpush1.msra.mxu0 0.0
  %3148 = vmatprep.subr.mxu0 0.0
  %3149 = vmatpush1.msra.mxu0 0.0
  %3150 = vmatprep.subr.mxu0 0.0
  %3151 = vmatpush1.msra.mxu0 0.0
  %3152 = vmatprep.subr.mxu0 0.0
  %3153 = vmatpush1.msra.mxu0 0.0
  %3154 = vmatprep.subr.mxu0 0.0
  %3155 = vmatpush1.msra.mxu0 0.0
  %3156 = vmatprep.subr.mxu0 0.0
  %3157 = vmatpush1.msra.mxu0 0.0
  %3158 = vmatprep.subr.mxu0 0.0
  %3159 = vmatpush1.msra.mxu0 0.0
  %3160 = vmatprep.subr.mxu0 0.0
  %3161 = vmatpush1.msra.mxu0 0.0
  %3162 = vmatprep.subr.mxu0 0.0
  %3163 = vmatpush1.msra.mxu0 0.0
  %3164 = vmatprep.subr.mxu0 0.0
  %3165 = vmatpush1.msra.mxu0 0.0
  %3166 = vmatprep.subr.mxu0 0.0
  %3167 = vmatpush1.msra.mxu0 0.0
  %3168 = vmatprep.subr.mxu0 0.0
  %3169 = vmatpush1.msra.mxu0 0.0
  %3170 = vmatprep.subr.mxu0 0.0
  %3171 = vmatpush1.msra.mxu0 0.0
  %3172 = vmatprep.subr.mxu0 0.0
  %3173 = vmatpush1.msra.mxu0 0.0
  %3174 = vmatprep.subr.mxu0 0.0
  %3175 = vmatpush1.msra.mxu0 0.0
  %3176 = vmatprep.mubr.f32.mxu0 0.0
  %3177 = vmatmul.mubr.f32.gmra.mrb[0].mxu0 %v2740
  %v3178 = vpop.f32.mrb[0].mxu0
  %v3179 = vadd.f32 0.0, %v3178
  %v3180 = vpop.f32.mrb[0].mxu0
  %3181 = vdwg.mxu0
  %3182 = vmatprep.subr.mxu0 0.0
  %3183 = vmatpush1.msra.mxu0 %v1325
  %3184 = vmatprep.subr.mxu0 0.0
  %3185 = vmatpush1.msra.mxu0 %v1326
  %3186 = vmatprep.subr.mxu0 0.0
  %3187 = vmatpush1.msra.mxu0 %v1327
  %3188 = vmatprep.subr.mxu0 0.0
  %3189 = vmatpush1.msra.mxu0 %v1328
  %3190 = vmatprep.subr.mxu0 0.0
  %3191 = vmatpush1.msra.mxu0 %v1329
  %3192 = vmatprep.subr.mxu0 0.0
  %3193 = vmatpush1.msra.mxu0 %v1330
  %3194 = vmatprep.subr.mxu0 0.0
  %3195 = vmatpush1.msra.mxu0 %v1331
  %3196 = vmatprep.subr.mxu0 0.0
  %3197 = vmatpush1.msra.mxu0 %v1332
  %3198 = vmatprep.subr.mxu0 0.0
  %3199 = vmatpush1.msra.mxu0 0.0
  %3200 = vmatprep.subr.mxu0 0.0
  %3201 = vmatpush1.msra.mxu0 0.0
  %3202 = vmatprep.subr.mxu0 0.0
  %3203 = vmatpush1.msra.mxu0 0.0
  %3204 = vmatprep.subr.mxu0 0.0
  %3205 = vmatpush1.msra.mxu0 0.0
  %3206 = vmatprep.subr.mxu0 0.0
  %3207 = vmatpush1.msra.mxu0 0.0
  %3208 = vmatprep.subr.mxu0 0.0
  %3209 = vmatpush1.msra.mxu0 0.0
  %3210 = vmatprep.subr.mxu0 0.0
  %3211 = vmatpush1.msra.mxu0 0.0
  %3212 = vmatprep.subr.mxu0 0.0
  %3213 = vmatpush1.msra.mxu0 0.0
  %3214 = vmatprep.subr.mxu0 0.0
  %3215 = vmatpush1.msra.mxu0 0.0
  %3216 = vmatprep.subr.mxu0 0.0
  %3217 = vmatpush1.msra.mxu0 0.0
  %3218 = vmatprep.subr.mxu0 0.0
  %3219 = vmatpush1.msra.mxu0 0.0
  %3220 = vmatprep.subr.mxu0 0.0
  %3221 = vmatpush1.msra.mxu0 0.0
  %3222 = vmatprep.subr.mxu0 0.0
  %3223 = vmatpush1.msra.mxu0 0.0
  %3224 = vmatprep.subr.mxu0 0.0
  %3225 = vmatpush1.msra.mxu0 0.0
  %3226 = vmatprep.subr.mxu0 0.0
  %3227 = vmatpush1.msra.mxu0 0.0
  %3228 = vmatprep.subr.mxu0 0.0
  %3229 = vmatpush1.msra.mxu0 0.0
  %3230 = vmatprep.subr.mxu0 0.0
  %3231 = vmatpush1.msra.mxu0 0.0
  %3232 = vmatprep.subr.mxu0 0.0
  %3233 = vmatpush1.msra.mxu0 0.0
  %3234 = vmatprep.subr.mxu0 0.0
  %3235 = vmatpush1.msra.mxu0 0.0
  %3236 = vmatprep.subr.mxu0 0.0
  %3237 = vmatpush1.msra.mxu0 0.0
  %3238 = vmatprep.subr.mxu0 0.0
  %3239 = vmatpush1.msra.mxu0 0.0
  %3240 = vmatprep.subr.mxu0 0.0
  %3241 = vmatpush1.msra.mxu0 0.0
  %3242 = vmatprep.subr.mxu0 0.0
  %3243 = vmatpush1.msra.mxu0 0.0
  %3244 = vmatprep.subr.mxu0 0.0
  %3245 = vmatpush1.msra.mxu0 0.0
  %3246 = vmatprep.mubr.f32.mxu0 0.0
  %3247 = vmatmul.mubr.f32.gmra.mrb[0].mxu0 %v2740
  %v3248 = vpop.f32.mrb[0].mxu0
  %v3249 = vadd.f32 0.0, %v3248
  %v3250 = vpop.f32.mrb[0].mxu0
  %3251 = vdwg.mxu0
  %3252 = vmatprep.subr.mxu0 0.0
  %3253 = vmatpush1.msra.mxu0 %v1404
  %3254 = vmatprep.subr.mxu0 0.0
  %3255 = vmatpush1.msra.mxu0 %v1405
  %3256 = vmatprep.subr.mxu0 0.0
  %3257 = vmatpush1.msra.mxu0 %v1406
  %3258 = vmatprep.subr.mxu0 0.0
  %3259 = vmatpush1.msra.mxu0 %v1407
  %3260 = vmatprep.subr.mxu0 0.0
  %3261 = vmatpush1.msra.mxu0 %v1408
  %3262 = vmatprep.subr.mxu0 0.0
  %3263 = vmatpush1.msra.mxu0 %v1409
  %3264 = vmatprep.subr.mxu0 0.0
  %3265 = vmatpush1.msra.mxu0 %v1410
  %3266 = vmatprep.subr.mxu0 0.0
  %3267 = vmatpush1.msra.mxu0 %v1411
  %3268 = vmatprep.subr.mxu0 0.0
  %3269 = vmatpush1.msra.mxu0 0.0
  %3270 = vmatprep.subr.mxu0 0.0
  %3271 = vmatpush1.msra.mxu0 0.0
  %3272 = vmatprep.subr.mxu0 0.0
  %3273 = vmatpush1.msra.mxu0 0.0
  %3274 = vmatprep.subr.mxu0 0.0
  %3275 = vmatpush1.msra.mxu0 0.0
  %3276 = vmatprep.subr.mxu0 0.0
  %3277 = vmatpush1.msra.mxu0 0.0
  %3278 = vmatprep.subr.mxu0 0.0
  %3279 = vmatpush1.msra.mxu0 0.0
  %3280 = vmatprep.subr.mxu0 0.0
  %3281 = vmatpush1.msra.mxu0 0.0
  %3282 = vmatprep.subr.mxu0 0.0
  %3283 = vmatpush1.msra.mxu0 0.0
  %3284 = vmatprep.subr.mxu0 0.0
  %3285 = vmatpush1.msra.mxu0 0.0
  %3286 = vmatprep.subr.mxu0 0.0
  %3287 = vmatpush1.msra.mxu0 0.0
  %3288 = vmatprep.subr.mxu0 0.0
  %3289 = vmatpush1.msra.mxu0 0.0
  %3290 = vmatprep.subr.mxu0 0.0
  %3291 = vmatpush1.msra.mxu0 0.0
  %3292 = vmatprep.subr.mxu0 0.0
  %3293 = vmatpush1.msra.mxu0 0.0
  %3294 = vmatprep.subr.mxu0 0.0
  %3295 = vmatpush1.msra.mxu0 0.0
  %3296 = vmatprep.subr.mxu0 0.0
  %3297 = vmatpush1.msra.mxu0 0.0
  %3298 = vmatprep.subr.mxu0 0.0
  %3299 = vmatpush1.msra.mxu0 0.0
  %3300 = vmatprep.subr.mxu0 0.0
  %3301 = vmatpush1.msra.mxu0 0.0
  %3302 = vmatprep.subr.mxu0 0.0
  %3303 = vmatpush1.msra.mxu0 0.0
  %3304 = vmatprep.subr.mxu0 0.0
  %3305 = vmatpush1.msra.mxu0 0.0
  %3306 = vmatprep.subr.mxu0 0.0
  %3307 = vmatpush1.msra.mxu0 0.0
  %3308 = vmatprep.subr.mxu0 0.0
  %3309 = vmatpush1.msra.mxu0 0.0
  %3310 = vmatprep.subr.mxu0 0.0
  %3311 = vmatpush1.msra.mxu0 0.0
  %3312 = vmatprep.subr.mxu0 0.0
  %3313 = vmatpush1.msra.mxu0 0.0
  %3314 = vmatprep.subr.mxu0 0.0
  %3315 = vmatpush1.msra.mxu0 0.0
  %3316 = vmatprep.mubr.f32.mxu0 0.0
  %3317 = vmatmul.mubr.f32.gmra.mrb[0].mxu0 %v2740
  %v3318 = vpop.f32.mrb[0].mxu0
  %v3319 = vadd.f32 0.0, %v3318
  %v3320 = vpop.f32.mrb[0].mxu0
  %3321 = vdwg.mxu0
  %v3323 = vsel %vm1081, %v3179, 0
  %v3326 = vsel %vm1081, %v3249, 0
  %3328 = vmatprep.subr.mxu0 0.0
  %3329 = vmatpush1.xpose.msra.mxu0 %v3326
  %3330 = vmatprep.subr.mxu0 0.0
  %3331 = vmatpush1.xpose.msra.mxu0 0.0
  %3332 = vmatprep.subr.mxu0 0.0
  %3333 = vmatpush1.xpose.msra.mxu0 0.0
  %3334 = vmatprep.subr.mxu0 0.0
  %3335 = vmatpush1.xpose.msra.mxu0 0.0
  %3336 = vmatprep.subr.mxu0 0.0
  %3337 = vmatpush1.xpose.msra.mxu0 0.0
  %3338 = vmatprep.subr.mxu0 0.0
  %3339 = vmatpush1.xpose.msra.mxu0 0.0
  %3340 = vmatprep.subr.mxu0 0.0
  %3341 = vmatpush1.xpose.msra.mxu0 0.0
  %3342 = vmatprep.subr.mxu0 0.0
  %3343 = vmatpush1.xpose.msra.mxu0 0.0
  %3344 = vmatprep.subr.mxu0 0.0
  %3345 = vmatpush1.xpose.msra.mxu0 0.0
  %3346 = vmatprep.subr.mxu0 0.0
  %3347 = vmatpush1.xpose.msra.mxu0 0.0
  %3348 = vmatprep.subr.mxu0 0.0
  %3349 = vmatpush1.xpose.msra.mxu0 0.0
  %3350 = vmatprep.subr.mxu0 0.0
  %3351 = vmatpush1.xpose.msra.mxu0 0.0
  %3352 = vmatprep.subr.mxu0 0.0
  %3353 = vmatpush1.xpose.msra.mxu0 0.0
  %3354 = vmatprep.subr.mxu0 0.0
  %3355 = vmatpush1.xpose.msra.mxu0 0.0
  %3356 = vmatprep.subr.mxu0 0.0
  %3357 = vmatpush1.xpose.msra.mxu0 0.0
  %3358 = vmatprep.subr.mxu0 0.0
  %3359 = vmatpush1.xpose.msra.mxu0 0.0
  %3360 = vmatprep.subr.mxu0 0.0
  %3361 = vmatpush1.xpose.msra.mxu0 0.0
  %3362 = vmatprep.subr.mxu0 0.0
  %3363 = vmatpush1.xpose.msra.mxu0 0.0
  %3364 = vmatprep.subr.mxu0 0.0
  %3365 = vmatpush1.xpose.msra.mxu0 0.0
  %3366 = vmatprep.subr.mxu0 0.0
  %3367 = vmatpush1.xpose.msra.mxu0 0.0
  %3368 = vmatprep.subr.mxu0 0.0
  %3369 = vmatpush1.xpose.msra.mxu0 0.0
  %3370 = vmatprep.subr.mxu0 0.0
  %3371 = vmatpush1.xpose.msra.mxu0 0.0
  %3372 = vmatprep.subr.mxu0 0.0
  %3373 = vmatpush1.xpose.msra.mxu0 0.0
  %3374 = vmatprep.subr.mxu0 0.0
  %3375 = vmatpush1.xpose.msra.mxu0 0.0
  %3376 = vmatprep.subr.mxu0 0.0
  %3377 = vmatpush1.xpose.msra.mxu0 0.0
  %3378 = vmatprep.subr.mxu0 0.0
  %3379 = vmatpush1.xpose.msra.mxu0 0.0
  %3380 = vmatprep.subr.mxu0 0.0
  %3381 = vmatpush1.xpose.msra.mxu0 0.0
  %3382 = vmatprep.subr.mxu0 0.0
  %3383 = vmatpush1.xpose.msra.mxu0 0.0
  %3384 = vmatprep.subr.mxu0 0.0
  %3385 = vmatpush1.xpose.msra.mxu0 0.0
  %3386 = vmatprep.subr.mxu0 0.0
  %3387 = vmatpush1.xpose.msra.mxu0 0.0
  %3388 = vmatprep.subr.mxu0 0.0
  %3389 = vmatpush1.xpose.msra.mxu0 0.0
  %3390 = vmatprep.subr.mxu0 0.0
  %3391 = vmatpush1.xpose.msra.mxu0 0.0
  %3392 = vmatprep.mubr.f32.mxu0 0.0
  %3393 = vmatmul.mubr.f32.gmra.mrb[0].mxu0 %v3323
  %v3394 = vpop.f32.mrb[0].mxu0
  %v3395 = vadd.f32 0.0, %v3394
  %v3396 = vpop.f32.mrb[0].mxu0
  %3397 = vdwg.mxu0
  %v3398 = vsel %vm1158, %v3395, -inf
  %3399 = vmax.xlane.f32.xlu0 %v3398
  %v3400 = vpop.xlane.xlu0 %3399
  %v3401 = vsub.f32 %v3395, %v3400
  %v3402 = vmul.f32 %v3401, 1.442695
  %v3403 = vpow.pop %v3402
  %v3404 = vsel %vm1158, %v3403, 0.0
  %3405 = vadd.xlane.f32.xlu0 %v3404
  %v3406 = vpop.xlane.xlu0 %3405
  %v3407 = vrcp.pop %v3406
  %v3408 = vmul.f32 %v3403, %v3407
  %v3410 = vsel %vm1158, %v3408, 0
  %3412 = vmatprep.subr.mxu0 0.0
  %3413 = vmatpush1.msra.mxu0 %v3319
  %3414 = vmatprep.subr.mxu0 0.0
  %3415 = vmatpush1.msra.mxu0 0.0
  %3416 = vmatprep.subr.mxu0 0.0
  %3417 = vmatpush1.msra.mxu0 0.0
  %3418 = vmatprep.subr.mxu0 0.0
  %3419 = vmatpush1.msra.mxu0 0.0
  %3420 = vmatprep.subr.mxu0 0.0
  %3421 = vmatpush1.msra.mxu0 0.0
  %3422 = vmatprep.subr.mxu0 0.0
  %3423 = vmatpush1.msra.mxu0 0.0
  %3424 = vmatprep.subr.mxu0 0.0
  %3425 = vmatpush1.msra.mxu0 0.0
  %3426 = vmatprep.subr.mxu0 0.0
  %3427 = vmatpush1.msra.mxu0 0.0
  %3428 = vmatprep.subr.mxu0 0.0
  %3429 = vmatpush1.msra.mxu0 0.0
  %3430 = vmatprep.subr.mxu0 0.0
  %3431 = vmatpush1.msra.mxu0 0.0
  %3432 = vmatprep.subr.mxu0 0.0
  %3433 = vmatpush1.msra.mxu0 0.0
  %3434 = vmatprep.subr.mxu0 0.0
  %3435 = vmatpush1.msra.mxu0 0.0
  %3436 = vmatprep.subr.mxu0 0.0
  %3437 = vmatpush1.msra.mxu0 0.0
  %3438 = vmatprep.subr.mxu0 0.0
  %3439 = vmatpush1.msra.mxu0 0.0
  %3440 = vmatprep.subr.mxu0 0.0
  %3441 = vmatpush1.msra.mxu0 0.0
  %3442 = vmatprep.subr.mxu0 0.0
  %3443 = vmatpush1.msra.mxu0 0.0
  %3444 = vmatprep.subr.mxu0 0.0
  %3445 = vmatpush1.msra.mxu0 0.0
  %3446 = vmatprep.subr.mxu0 0.0
  %3447 = vmatpush1.msra.mxu0 0.0
  %3448 = vmatprep.subr.mxu0 0.0
  %3449 = vmatpush1.msra.mxu0 0.0
  %3450 = vmatprep.subr.mxu0 0.0
  %3451 = vmatpush1.msra.mxu0 0.0
  %3452 = vmatprep.subr.mxu0 0.0
  %3453 = vmatpush1.msra.mxu0 0.0
  %3454 = vmatprep.subr.mxu0 0.0
  %3455 = vmatpush1.msra.mxu0 0.0
  %3456 = vmatprep.subr.mxu0 0.0
  %3457 = vmatpush1.msra.mxu0 0.0
  %3458 = vmatprep.subr.mxu0 0.0
  %3459 = vmatpush1.msra.mxu0 0.0
  %3460 = vmatprep.subr.mxu0 0.0
  %3461 = vmatpush1.msra.mxu0 0.0
  %3462 = vmatprep.subr.mxu0 0.0
  %3463 = vmatpush1.msra.mxu0 0.0
  %3464 = vmatprep.subr.mxu0 0.0
  %3465 = vmatpush1.msra.mxu0 0.0
  %3466 = vmatprep.subr.mxu0 0.0
  %3467 = vmatpush1.msra.mxu0 0.0
  %3468 = vmatprep.subr.mxu0 0.0
  %3469 = vmatpush1.msra.mxu0 0.0
  %3470 = vmatprep.subr.mxu0 0.0
  %3471 = vmatpush1.msra.mxu0 0.0
  %3472 = vmatprep.subr.mxu0 0.0
  %3473 = vmatpush1.msra.mxu0 0.0
  %3474 = vmatprep.subr.mxu0 0.0
  %3475 = vmatpush1.msra.mxu0 0.0
  %3476 = vmatprep.mubr.f32.mxu0 0.0
  %3477 = vmatmul.mubr.f32.gmra.mrb[0].mxu0 %v3410
  %v3478 = vpop.f32.mrb[0].mxu0
  %v3479 = vadd.f32 0.0, %v3478
  %v3480 = vpop.f32.mrb[0].mxu0
  %3481 = vdwg.mxu0
  %v3483 = vsel %vm1081, %v3479, 0
  %3485 = vmatprep.subr.mxu0 0.0
  %3486 = vmatpush1.msra.mxu0 %v1643
  %3487 = vmatprep.subr.mxu0 0.0
  %3488 = vmatpush1.msra.mxu0 %v1644
  %3489 = vmatprep.subr.mxu0 0.0
  %3490 = vmatpush1.msra.mxu0 0.0
  %3491 = vmatprep.subr.mxu0 0.0
  %3492 = vmatpush1.msra.mxu0 0.0
  %3493 = vmatprep.subr.mxu0 0.0
  %3494 = vmatpush1.msra.mxu0 0.0
  %3495 = vmatprep.subr.mxu0 0.0
  %3496 = vmatpush1.msra.mxu0 0.0
  %3497 = vmatprep.subr.mxu0 0.0
  %3498 = vmatpush1.msra.mxu0 0.0
  %3499 = vmatprep.subr.mxu0 0.0
  %3500 = vmatpush1.msra.mxu0 0.0
  %3501 = vmatprep.subr.mxu0 0.0
  %3502 = vmatpush1.msra.mxu0 0.0
  %3503 = vmatprep.subr.mxu0 0.0
  %3504 = vmatpush1.msra.mxu0 0.0
  %3505 = vmatprep.subr.mxu0 0.0
  %3506 = vmatpush1.msra.mxu0 0.0
  %3507 = vmatprep.subr.mxu0 0.0
  %3508 = vmatpush1.msra.mxu0 0.0
  %3509 = vmatprep.subr.mxu0 0.0
  %3510 = vmatpush1.msra.mxu0 0.0
  %3511 = vmatprep.subr.mxu0 0.0
  %3512 = vmatpush1.msra.mxu0 0.0
  %3513 = vmatprep.subr.mxu0 0.0
  %3514 = vmatpush1.msra.mxu0 0.0
  %3515 = vmatprep.subr.mxu0 0.0
  %3516 = vmatpush1.msra.mxu0 0.0
  %3517 = vmatprep.subr.mxu0 0.0
  %3518 = vmatpush1.msra.mxu0 0.0
  %3519 = vmatprep.subr.mxu0 0.0
  %3520 = vmatpush1.msra.mxu0 0.0
  %3521 = vmatprep.subr.mxu0 0.0
  %3522 = vmatpush1.msra.mxu0 0.0
  %3523 = vmatprep.subr.mxu0 0.0
  %3524 = vmatpush1.msra.mxu0 0.0
  %3525 = vmatprep.subr.mxu0 0.0
  %3526 = vmatpush1.msra.mxu0 0.0
  %3527 = vmatprep.subr.mxu0 0.0
  %3528 = vmatpush1.msra.mxu0 0.0
  %3529 = vmatprep.subr.mxu0 0.0
  %3530 = vmatpush1.msra.mxu0 0.0
  %3531 = vmatprep.subr.mxu0 0.0
  %3532 = vmatpush1.msra.mxu0 0.0
  %3533 = vmatprep.subr.mxu0 0.0
  %3534 = vmatpush1.msra.mxu0 0.0
  %3535 = vmatprep.subr.mxu0 0.0
  %3536 = vmatpush1.msra.mxu0 0.0
  %3537 = vmatprep.subr.mxu0 0.0
  %3538 = vmatpush1.msra.mxu0 0.0
  %3539 = vmatprep.subr.mxu0 0.0
  %3540 = vmatpush1.msra.mxu0 0.0
  %3541 = vmatprep.subr.mxu0 0.0
  %3542 = vmatpush1.msra.mxu0 0.0
  %3543 = vmatprep.subr.mxu0 0.0
  %3544 = vmatpush1.msra.mxu0 0.0
  %3545 = vmatprep.subr.mxu0 0.0
  %3546 = vmatpush1.msra.mxu0 0.0
  %3547 = vmatprep.subr.mxu0 0.0
  %3548 = vmatpush1.msra.mxu0 0.0
  %3549 = vmatprep.mubr.f32.mxu0 0.0
  %3550 = vmatmul.mubr.f32.gmra.mrb[0].mxu0 %v3483
  %v3551 = vpop.f32.mrb[0].mxu0
  %v3552 = vadd.f32 0.0, %v3551
  %v3553 = vpop.f32.mrb[0].mxu0
  %3554 = vdwg.mxu0
  %v3556 = vsel %vm1081, %v3109, 0
  %3558 = vmatprep.subr.mxu0 0.0
  %3559 = vmatpush1.msra.mxu0 %v1243
  %3560 = vmatprep.subr.mxu0 0.0
  %3561 = vmatpush1.msra.mxu0 %v1244
  %3562 = vmatprep.subr.mxu0 0.0
  %3563 = vmatpush1.msra.mxu0 0.0
  %3564 = vmatprep.subr.mxu0 0.0
  %3565 = vmatpush1.msra.mxu0 0.0
  %3566 = vmatprep.subr.mxu0 0.0
  %3567 = vmatpush1.msra.mxu0 0.0
  %3568 = vmatprep.subr.mxu0 0.0
  %3569 = vmatpush1.msra.mxu0 0.0
  %3570 = vmatprep.subr.mxu0 0.0
  %3571 = vmatpush1.msra.mxu0 0.0
  %3572 = vmatprep.subr.mxu0 0.0
  %3573 = vmatpush1.msra.mxu0 0.0
  %3574 = vmatprep.subr.mxu0 0.0
  %3575 = vmatpush1.msra.mxu0 0.0
  %3576 = vmatprep.subr.mxu0 0.0
  %3577 = vmatpush1.msra.mxu0 0.0
  %3578 = vmatprep.subr.mxu0 0.0
  %3579 = vmatpush1.msra.mxu0 0.0
  %3580 = vmatprep.subr.mxu0 0.0
  %3581 = vmatpush1.msra.mxu0 0.0
  %3582 = vmatprep.subr.mxu0 0.0
  %3583 = vmatpush1.msra.mxu0 0.0
  %3584 = vmatprep.subr.mxu0 0.0
  %3585 = vmatpush1.msra.mxu0 0.0
  %3586 = vmatprep.subr.mxu0 0.0
  %3587 = vmatpush1.msra.mxu0 0.0
  %3588 = vmatprep.subr.mxu0 0.0
  %3589 = vmatpush1.msra.mxu0 0.0
  %3590 = vmatprep.subr.mxu0 0.0
  %3591 = vmatpush1.msra.mxu0 0.0
  %3592 = vmatprep.subr.mxu0 0.0
  %3593 = vmatpush1.msra.mxu0 0.0
  %3594 = vmatprep.subr.mxu0 0.0
  %3595 = vmatpush1.msra.mxu0 0.0
  %3596 = vmatprep.subr.mxu0 0.0
  %3597 = vmatpush1.msra.mxu0 0.0
  %3598 = vmatprep.subr.mxu0 0.0
  %3599 = vmatpush1.msra.mxu0 0.0
  %3600 = vmatprep.subr.mxu0 0.0
  %3601 = vmatpush1.msra.mxu0 0.0
  %3602 = vmatprep.subr.mxu0 0.0
  %3603 = vmatpush1.msra.mxu0 0.0
  %3604 = vmatprep.subr.mxu0 0.0
  %3605 = vmatpush1.msra.mxu0 0.0
  %3606 = vmatprep.subr.mxu0 0.0
  %3607 = vmatpush1.msra.mxu0 0.0
  %3608 = vmatprep.subr.mxu0 0.0
  %3609 = vmatpush1.msra.mxu0 0.0
  %3610 = vmatprep.subr.mxu0 0.0
  %3611 = vmatpush1.msra.mxu0 0.0
  %3612 = vmatprep.subr.mxu0 0.0
  %3613 = vmatpush1.msra.mxu0 0.0
  %3614 = vmatprep.subr.mxu0 0.0
  %3615 = vmatpush1.msra.mxu0 0.0
  %3616 = vmatprep.subr.mxu0 0.0
  %3617 = vmatpush1.msra.mxu0 0.0
  %3618 = vmatprep.subr.mxu0 0.0
  %3619 = vmatpush1.msra.mxu0 0.0
  %3620 = vmatprep.subr.mxu0 0.0
  %3621 = vmatpush1.msra.mxu0 0.0
  %3622 = vmatprep.mubr.f32.mxu0 0.0
  %3623 = vmatmul.mubr.f32.gmra.mrb[0].mxu0 %v3556
  %v3624 = vpop.f32.mrb[0].mxu0
  %v3625 = vadd.f32 %v3552, %v3624
  %v3626 = vpop.f32.mrb[0].mxu0
  %3627 = vdwg.mxu0
  %3628 = vmatprep.subr.mxu0 0.0
  %3629 = vmatpush1.msra.mxu0 %v1792
  %3630 = vmatprep.subr.mxu0 0.0
  %3631 = vmatpush1.msra.mxu0 %v1793
  %3632 = vmatprep.subr.mxu0 0.0
  %3633 = vmatpush1.msra.mxu0 %v1794
  %3634 = vmatprep.subr.mxu0 0.0
  %3635 = vmatpush1.msra.mxu0 %v1795
  %3636 = vmatprep.subr.mxu0 0.0
  %3637 = vmatpush1.msra.mxu0 %v1796
  %3638 = vmatprep.subr.mxu0 0.0
  %3639 = vmatpush1.msra.mxu0 %v1797
  %3640 = vmatprep.subr.mxu0 0.0
  %3641 = vmatpush1.msra.mxu0 %v1798
  %3642 = vmatprep.subr.mxu0 0.0
  %3643 = vmatpush1.msra.mxu0 %v1799
  %3644 = vmatprep.subr.mxu0 0.0
  %3645 = vmatpush1.msra.mxu0 0.0
  %3646 = vmatprep.subr.mxu0 0.0
  %3647 = vmatpush1.msra.mxu0 0.0
  %3648 = vmatprep.subr.mxu0 0.0
  %3649 = vmatpush1.msra.mxu0 0.0
  %3650 = vmatprep.subr.mxu0 0.0
  %3651 = vmatpush1.msra.mxu0 0.0
  %3652 = vmatprep.subr.mxu0 0.0
  %3653 = vmatpush1.msra.mxu0 0.0
  %3654 = vmatprep.subr.mxu0 0.0
  %3655 = vmatpush1.msra.mxu0 0.0
  %3656 = vmatprep.subr.mxu0 0.0
  %3657 = vmatpush1.msra.mxu0 0.0
  %3658 = vmatprep.subr.mxu0 0.0
  %3659 = vmatpush1.msra.mxu0 0.0
  %3660 = vmatprep.subr.mxu0 0.0
  %3661 = vmatpush1.msra.mxu0 0.0
  %3662 = vmatprep.subr.mxu0 0.0
  %3663 = vmatpush1.msra.mxu0 0.0
  %3664 = vmatprep.subr.mxu0 0.0
  %3665 = vmatpush1.msra.mxu0 0.0
  %3666 = vmatprep.subr.mxu0 0.0
  %3667 = vmatpush1.msra.mxu0 0.0
  %3668 = vmatprep.subr.mxu0 0.0
  %3669 = vmatpush1.msra.mxu0 0.0
  %3670 = vmatprep.subr.mxu0 0.0
  %3671 = vmatpush1.msra.mxu0 0.0
  %3672 = vmatprep.subr.mxu0 0.0
  %3673 = vmatpush1.msra.mxu0 0.0
  %3674 = vmatprep.subr.mxu0 0.0
  %3675 = vmatpush1.msra.mxu0 0.0
  %3676 = vmatprep.subr.mxu0 0.0
  %3677 = vmatpush1.msra.mxu0 0.0
  %3678 = vmatprep.subr.mxu0 0.0
  %3679 = vmatpush1.msra.mxu0 0.0
  %3680 = vmatprep.subr.mxu0 0.0
  %3681 = vmatpush1.msra.mxu0 0.0
  %3682 = vmatprep.subr.mxu0 0.0
  %3683 = vmatpush1.msra.mxu0 0.0
  %3684 = vmatprep.subr.mxu0 0.0
  %3685 = vmatpush1.msra.mxu0 0.0
  %3686 = vmatprep.subr.mxu0 0.0
  %3687 = vmatpush1.msra.mxu0 0.0
  %3688 = vmatprep.subr.mxu0 0.0
  %3689 = vmatpush1.msra.mxu0 0.0
  %3690 = vmatprep.subr.mxu0 0.0
  %3691 = vmatpush1.msra.mxu0 0.0
  %3692 = vmatprep.mubr.f32.mxu0 0.0
  %3693 = vmatmul.mubr.f32.gmra.mrb[0].mxu0 %v2740
  %v3694 = vpop.f32.mrb[0].mxu0
  %v3695 = vadd.f32 0.0, %v3694
  %v3696 = vpop.f32.mrb[0].mxu0
  %3697 = vdwg.mxu0
  %3698 = vmatprep.subr.mxu0 0.0
  %3699 = vmatpush1.msra.mxu0 %v1871
  %3700 = vmatprep.subr.mxu0 0.0
  %3701 = vmatpush1.msra.mxu0 %v1872
  %3702 = vmatprep.subr.mxu0 0.0
  %3703 = vmatpush1.msra.mxu0 %v1873
  %3704 = vmatprep.subr.mxu0 0.0
  %3705 = vmatpush1.msra.mxu0 %v1874
  %3706 = vmatprep.subr.mxu0 0.0
  %3707 = vmatpush1.msra.mxu0 %v1875
  %3708 = vmatprep.subr.mxu0 0.0
  %3709 = vmatpush1.msra.mxu0 %v1876
  %3710 = vmatprep.subr.mxu0 0.0
  %3711 = vmatpush1.msra.mxu0 %v1877
  %3712 = vmatprep.subr.mxu0 0.0
  %3713 = vmatpush1.msra.mxu0 %v1878
  %3714 = vmatprep.subr.mxu0 0.0
  %3715 = vmatpush1.msra.mxu0 0.0
  %3716 = vmatprep.subr.mxu0 0.0
  %3717 = vmatpush1.msra.mxu0 0.0
  %3718 = vmatprep.subr.mxu0 0.0
  %3719 = vmatpush1.msra.mxu0 0.0
  %3720 = vmatprep.subr.mxu0 0.0
  %3721 = vmatpush1.msra.mxu0 0.0
  %3722 = vmatprep.subr.mxu0 0.0
  %3723 = vmatpush1.msra.mxu0 0.0
  %3724 = vmatprep.subr.mxu0 0.0
  %3725 = vmatpush1.msra.mxu0 0.0
  %3726 = vmatprep.subr.mxu0 0.0
  %3727 = vmatpush1.msra.mxu0 0.0
  %3728 = vmatprep.subr.mxu0 0.0
  %3729 = vmatpush1.msra.mxu0 0.0
  %3730 = vmatprep.subr.mxu0 0.0
  %3731 = vmatpush1.msra.mxu0 0.0
  %3732 = vmatprep.subr.mxu0 0.0
  %3733 = vmatpush1.msra.mxu0 0.0
  %3734 = vmatprep.subr.mxu0 0.0
  %3735 = vmatpush1.msra.mxu0 0.0
  %3736 = vmatprep.subr.mxu0 0.0
  %3737 = vmatpush1.msra.mxu0 0.0
  %3738 = vmatprep.subr.mxu0 0.0
  %3739 = vmatpush1.msra.mxu0 0.0
  %3740 = vmatprep.subr.mxu0 0.0
  %3741 = vmatpush1.msra.mxu0 0.0
  %3742 = vmatprep.subr.mxu0 0.0
  %3743 = vmatpush1.msra.mxu0 0.0
  %3744 = vmatprep.subr.mxu0 0.0
  %3745 = vmatpush1.msra.mxu0 0.0
  %3746 = vmatprep.subr.mxu0 0.0
  %3747 = vmatpush1.msra.mxu0 0.0
  %3748 = vmatprep.subr.mxu0 0.0
  %3749 = vmatpush1.msra.mxu0 0.0
  %3750 = vmatprep.subr.mxu0 0.0
  %3751 = vmatpush1.msra.mxu0 0.0
  %3752 = vmatprep.subr.mxu0 0.0
  %3753 = vmatpush1.msra.mxu0 0.0
  %3754 = vmatprep.subr.mxu0 0.0
  %3755 = vmatpush1.msra.mxu0 0.0
  %3756 = vmatprep.subr.mxu0 0.0
  %3757 = vmatpush1.msra.mxu0 0.0
  %3758 = vmatprep.subr.mxu0 0.0
  %3759 = vmatpush1.msra.mxu0 0.0
  %3760 = vmatprep.subr.mxu0 0.0
  %3761 = vmatpush1.msra.mxu0 0.0
  %3762 = vmatprep.mubr.f32.mxu0 0.0
  %3763 = vmatmul.mubr.f32.gmra.mrb[0].mxu0 %v2740
  %v3764 = vpop.f32.mrb[0].mxu0
  %v3765 = vadd.f32 0.0, %v3764
  %v3766 = vpop.f32.mrb[0].mxu0
  %3767 = vdwg.mxu0
  %3768 = vmatprep.subr.mxu0 0.0
  %3769 = vmatpush1.msra.mxu0 %v1950
  %3770 = vmatprep.subr.mxu0 0.0
  %3771 = vmatpush1.msra.mxu0 %v1951
  %3772 = vmatprep.subr.mxu0 0.0
  %3773 = vmatpush1.msra.mxu0 %v1952
  %3774 = vmatprep.subr.mxu0 0.0
  %3775 = vmatpush1.msra.mxu0 %v1953
  %3776 = vmatprep.subr.mxu0 0.0
  %3777 = vmatpush1.msra.mxu0 %v1954
  %3778 = vmatprep.subr.mxu0 0.0
  %3779 = vmatpush1.msra.mxu0 %v1955
  %3780 = vmatprep.subr.mxu0 0.0
  %3781 = vmatpush1.msra.mxu0 %v1956
  %3782 = vmatprep.subr.mxu0 0.0
  %3783 = vmatpush1.msra.mxu0 %v1957
  %3784 = vmatprep.subr.mxu0 0.0
  %3785 = vmatpush1.msra.mxu0 0.0
  %3786 = vmatprep.subr.mxu0 0.0
  %3787 = vmatpush1.msra.mxu0 0.0
  %3788 = vmatprep.subr.mxu0 0.0
  %3789 = vmatpush1.msra.mxu0 0.0
  %3790 = vmatprep.subr.mxu0 0.0
  %3791 = vmatpush1.msra.mxu0 0.0
  %3792 = vmatprep.subr.mxu0 0.0
  %3793 = vmatpush1.msra.mxu0 0.0
  %3794 = vmatprep.subr.mxu0 0.0
  %3795 = vmatpush1.msra.mxu0 0.0
  %3796 = vmatprep.subr.mxu0 0.0
  %3797 = vmatpush1.msra.mxu0 0.0
  %3798 = vmatprep.subr.mxu0 0.0
  %3799 = vmatpush1.msra.mxu0 0.0
  %3800 = vmatprep.subr.mxu0 0.0
  %3801 = vmatpush1.msra.mxu0 0.0
  %3802 = vmatprep.subr.mxu0 0.0
  %3803 = vmatpush1.msra.mxu0 0.0
  %3804 = vmatprep.subr.mxu0 0.0
  %3805 = vmatpush1.msra.mxu0 0.0
  %3806 = vmatprep.subr.mxu0 0.0
  %3807 = vmatpush1.msra.mxu0 0.0
  %3808 = vmatprep.subr.mxu0 0.0
  %3809 = vmatpush1.msra.mxu0 0.0
  %3810 = vmatprep.subr.mxu0 0.0
  %3811 = vmatpush1.msra.mxu0 0.0
  %3812 = vmatprep.subr.mxu0 0.0
  %3813 = vmatpush1.msra.mxu0 0.0
  %3814 = vmatprep.subr.mxu0 0.0
  %3815 = vmatpush1.msra.mxu0 0.0
  %3816 = vmatprep.subr.mxu0 0.0
  %3817 = vmatpush1.msra.mxu0 0.0
  %3818 = vmatprep.subr.mxu0 0.0
  %3819 = vmatpush1.msra.mxu0 0.0
  %3820 = vmatprep.subr.mxu0 0.0
  %3821 = vmatpush1.msra.mxu0 0.0
  %3822 = vmatprep.subr.mxu0 0.0
  %3823 = vmatpush1.msra.mxu0 0.0
  %3824 = vmatprep.subr.mxu0 0.0
  %3825 = vmatpush1.msra.mxu0 0.0
  %3826 = vmatprep.subr.mxu0 0.0
  %3827 = vmatpush1.msra.mxu0 0.0
  %3828 = vmatprep.subr.mxu0 0.0
  %3829 = vmatpush1.msra.mxu0 0.0
  %3830 = vmatprep.subr.mxu0 0.0
  %3831 = vmatpush1.msra.mxu0 0.0
  %3832 = vmatprep.mubr.f32.mxu0 0.0
  %3833 = vmatmul.mubr.f32.gmra.mrb[0].mxu0 %v2740
  %v3834 = vpop.f32.mrb[0].mxu0
  %v3835 = vadd.f32 0.0, %v3834
  %v3836 = vpop.f32.mrb[0].mxu0
  %3837 = vdwg.mxu0
  %v3839 = vsel %vm1081, %v3695, 0
  %v3842 = vsel %vm1081, %v3765, 0
  %3844 = vmatprep.subr.mxu0 0.0
  %3845 = vmatpush1.xpose.msra.mxu0 %v3842
  %3846 = vmatprep.subr.mxu0 0.0
  %3847 = vmatpush1.xpose.msra.mxu0 0.0
  %3848 = vmatprep.subr.mxu0 0.0
  %3849 = vmatpush1.xpose.msra.mxu0 0.0
  %3850 = vmatprep.subr.mxu0 0.0
  %3851 = vmatpush1.xpose.msra.mxu0 0.0
  %3852 = vmatprep.subr.mxu0 0.0
  %3853 = vmatpush1.xpose.msra.mxu0 0.0
  %3854 = vmatprep.subr.mxu0 0.0
  %3855 = vmatpush1.xpose.msra.mxu0 0.0
  %3856 = vmatprep.subr.mxu0 0.0
  %3857 = vmatpush1.xpose.msra.mxu0 0.0
  %3858 = vmatprep.subr.mxu0 0.0
  %3859 = vmatpush1.xpose.msra.mxu0 0.0
  %3860 = vmatprep.subr.mxu0 0.0
  %3861 = vmatpush1.xpose.msra.mxu0 0.0
  %3862 = vmatprep.subr.mxu0 0.0
  %3863 = vmatpush1.xpose.msra.mxu0 0.0
  %3864 = vmatprep.subr.mxu0 0.0
  %3865 = vmatpush1.xpose.msra.mxu0 0.0
  %3866 = vmatprep.subr.mxu0 0.0
  %3867 = vmatpush1.xpose.msra.mxu0 0.0
  %3868 = vmatprep.subr.mxu0 0.0
  %3869 = vmatpush1.xpose.msra.mxu0 0.0
  %3870 = vmatprep.subr.mxu0 0.0
  %3871 = vmatpush1.xpose.msra.mxu0 0.0
  %3872 = vmatprep.subr.mxu0 0.0
  %3873 = vmatpush1.xpose.msra.mxu0 0.0
  %3874 = vmatprep.subr.mxu0 0.0
  %3875 = vmatpush1.xpose.msra.mxu0 0.0
  %3876 = vmatprep.subr.mxu0 0.0
  %3877 = vmatpush1.xpose.msra.mxu0 0.0
  %3878 = vmatprep.subr.mxu0 0.0
  %3879 = vmatpush1.xpose.msra.mxu0 0.0
  %3880 = vmatprep.subr.mxu0 0.0
  %3881 = vmatpush1.xpose.msra.mxu0 0.0
  %3882 = vmatprep.subr.mxu0 0.0
  %3883 = vmatpush1.xpose.msra.mxu0 0.0
  %3884 = vmatprep.subr.mxu0 0.0
  %3885 = vmatpush1.xpose.msra.mxu0 0.0
  %3886 = vmatprep.subr.mxu0 0.0
  %3887 = vmatpush1.xpose.msra.mxu0 0.0
  %3888 = vmatprep.subr.mxu0 0.0
  %3889 = vmatpush1.xpose.msra.mxu0 0.0
  %3890 = vmatprep.subr.mxu0 0.0
  %3891 = vmatpush1.xpose.msra.mxu0 0.0
  %3892 = vmatprep.subr.mxu0 0.0
  %3893 = vmatpush1.xpose.msra.mxu0 0.0
  %3894 = vmatprep.subr.mxu0 0.0
  %3895 = vmatpush1.xpose.msra.mxu0 0.0
  %3896 = vmatprep.subr.mxu0 0.0
  %3897 = vmatpush1.xpose.msra.mxu0 0.0
  %3898 = vmatprep.subr.mxu0 0.0
  %3899 = vmatpush1.xpose.msra.mxu0 0.0
  %3900 = vmatprep.subr.mxu0 0.0
  %3901 = vmatpush1.xpose.msra.mxu0 0.0
  %3902 = vmatprep.subr.mxu0 0.0
  %3903 = vmatpush1.xpose.msra.mxu0 0.0
  %3904 = vmatprep.subr.mxu0 0.0
  %3905 = vmatpush1.xpose.msra.mxu0 0.0
  %3906 = vmatprep.subr.mxu0 0.0
  %3907 = vmatpush1.xpose.msra.mxu0 0.0
  %3908 = vmatprep.mubr.f32.mxu0 0.0
  %3909 = vmatmul.mubr.f32.gmra.mrb[0].mxu0 %v3839
  %v3910 = vpop.f32.mrb[0].mxu0
  %v3911 = vadd.f32 0.0, %v3910
  %v3912 = vpop.f32.mrb[0].mxu0
  %3913 = vdwg.mxu0
  %v3914 = vsel %vm1158, %v3911, -inf
  %3915 = vmax.xlane.f32.xlu0 %v3914
  %v3916 = vpop.xlane.xlu0 %3915
  %v3917 = vsub.f32 %v3911, %v3916
  %v3918 = vmul.f32 %v3917, 1.442695
  %v3919 = vpow.pop %v3918
  %v3920 = vsel %vm1158, %v3919, 0.0
  %3921 = vadd.xlane.f32.xlu0 %v3920
  %v3922 = vpop.xlane.xlu0 %3921
  %v3923 = vrcp.pop %v3922
  %v3924 = vmul.f32 %v3919, %v3923
  %v3926 = vsel %vm1158, %v3924, 0
  %3928 = vmatprep.subr.mxu0 0.0
  %3929 = vmatpush1.msra.mxu0 %v3835
  %3930 = vmatprep.subr.mxu0 0.0
  %3931 = vmatpush1.msra.mxu0 0.0
  %3932 = vmatprep.subr.mxu0 0.0
  %3933 = vmatpush1.msra.mxu0 0.0
  %3934 = vmatprep.subr.mxu0 0.0
  %3935 = vmatpush1.msra.mxu0 0.0
  %3936 = vmatprep.subr.mxu0 0.0
  %3937 = vmatpush1.msra.mxu0 0.0
  %3938 = vmatprep.subr.mxu0 0.0
  %3939 = vmatpush1.msra.mxu0 0.0
  %3940 = vmatprep.subr.mxu0 0.0
  %3941 = vmatpush1.msra.mxu0 0.0
  %3942 = vmatprep.subr.mxu0 0.0
  %3943 = vmatpush1.msra.mxu0 0.0
  %3944 = vmatprep.subr.mxu0 0.0
  %3945 = vmatpush1.msra.mxu0 0.0
  %3946 = vmatprep.subr.mxu0 0.0
  %3947 = vmatpush1.msra.mxu0 0.0
  %3948 = vmatprep.subr.mxu0 0.0
  %3949 = vmatpush1.msra.mxu0 0.0
  %3950 = vmatprep.subr.mxu0 0.0
  %3951 = vmatpush1.msra.mxu0 0.0
  %3952 = vmatprep.subr.mxu0 0.0
  %3953 = vmatpush1.msra.mxu0 0.0
  %3954 = vmatprep.subr.mxu0 0.0
  %3955 = vmatpush1.msra.mxu0 0.0
  %3956 = vmatprep.subr.mxu0 0.0
  %3957 = vmatpush1.msra.mxu0 0.0
  %3958 = vmatprep.subr.mxu0 0.0
  %3959 = vmatpush1.msra.mxu0 0.0
  %3960 = vmatprep.subr.mxu0 0.0
  %3961 = vmatpush1.msra.mxu0 0.0
  %3962 = vmatprep.subr.mxu0 0.0
  %3963 = vmatpush1.msra.mxu0 0.0
  %3964 = vmatprep.subr.mxu0 0.0
  %3965 = vmatpush1.msra.mxu0 0.0
  %3966 = vmatprep.subr.mxu0 0.0
  %3967 = vmatpush1.msra.mxu0 0.0
  %3968 = vmatprep.subr.mxu0 0.0
  %3969 = vmatpush1.msra.mxu0 0.0
  %3970 = vmatprep.subr.mxu0 0.0
  %3971 = vmatpush1.msra.mxu0 0.0
  %3972 = vmatprep.subr.mxu0 0.0
  %3973 = vmatpush1.msra.mxu0 0.0
  %3974 = vmatprep.subr.mxu0 0.0
  %3975 = vmatpush1.msra.mxu0 0.0
  %3976 = vmatprep.subr.mxu0 0.0
  %3977 = vmatpush1.msra.mxu0 0.0
  %3978 = vmatprep.subr.mxu0 0.0
  %3979 = vmatpush1.msra.mxu0 0.0
  %3980 = vmatprep.subr.mxu0 0.0
  %3981 = vmatpush1.msra.mxu0 0.0
  %3982 = vmatprep.subr.mxu0 0.0
  %3983 = vmatpush1.msra.mxu0 0.0
  %3984 = vmatprep.subr.mxu0 0.0
  %3985 = vmatpush1.msra.mxu0 0.0
  %3986 = vmatprep.subr.mxu0 0.0
  %3987 = vmatpush1.msra.mxu0 0.0
  %3988 = vmatprep.subr.mxu0 0.0
  %3989 = vmatpush1.msra.mxu0 0.0
  %3990 = vmatprep.subr.mxu0 0.0
  %3991 = vmatpush1.msra.mxu0 0.0
  %3992 = vmatprep.mubr.f32.mxu0 0.0
  %3993 = vmatmul.mubr.f32.gmra.mrb[0].mxu0 %v3926
  %v3994 = vpop.f32.mrb[0].mxu0
  %v3995 = vadd.f32 0.0, %v3994
  %v3996 = vpop.f32.mrb[0].mxu0
  %3997 = vdwg.mxu0
  %v3999 = vsel %vm1081, %v3995, 0
  %4001 = vmatprep.subr.mxu0 0.0
  %4002 = vmatpush1.msra.mxu0 %v2189
  %4003 = vmatprep.subr.mxu0 0.0
  %4004 = vmatpush1.msra.mxu0 %v2190
  %4005 = vmatprep.subr.mxu0 0.0
  %4006 = vmatpush1.msra.mxu0 0.0
  %4007 = vmatprep.subr.mxu0 0.0
  %4008 = vmatpush1.msra.mxu0 0.0
  %4009 = vmatprep.subr.mxu0 0.0
  %4010 = vmatpush1.msra.mxu0 0.0
  %4011 = vmatprep.subr.mxu0 0.0
  %4012 = vmatpush1.msra.mxu0 0.0
  %4013 = vmatprep.subr.mxu0 0.0
  %4014 = vmatpush1.msra.mxu0 0.0
  %4015 = vmatprep.subr.mxu0 0.0
  %4016 = vmatpush1.msra.mxu0 0.0
  %4017 = vmatprep.subr.mxu0 0.0
  %4018 = vmatpush1.msra.mxu0 0.0
  %4019 = vmatprep.subr.mxu0 0.0
  %4020 = vmatpush1.msra.mxu0 0.0
  %4021 = vmatprep.subr.mxu0 0.0
  %4022 = vmatpush1.msra.mxu0 0.0
  %4023 = vmatprep.subr.mxu0 0.0
  %4024 = vmatpush1.msra.mxu0 0.0
  %4025 = vmatprep.subr.mxu0 0.0
  %4026 = vmatpush1.msra.mxu0 0.0
  %4027 = vmatprep.subr.mxu0 0.0
  %4028 = vmatpush1.msra.mxu0 0.0
  %4029 = vmatprep.subr.mxu0 0.0
  %4030 = vmatpush1.msra.mxu0 0.0
  %4031 = vmatprep.subr.mxu0 0.0
  %4032 = vmatpush1.msra.mxu0 0.0
  %4033 = vmatprep.subr.mxu0 0.0
  %4034 = vmatpush1.msra.mxu0 0.0
  %4035 = vmatprep.subr.mxu0 0.0
  %4036 = vmatpush1.msra.mxu0 0.0
  %4037 = vmatprep.subr.mxu0 0.0
  %4038 = vmatpush1.msra.mxu0 0.0
  %4039 = vmatprep.subr.mxu0 0.0
  %4040 = vmatpush1.msra.mxu0 0.0
  %4041 = vmatprep.subr.mxu0 0.0
  %4042 = vmatpush1.msra.mxu0 0.0
  %4043 = vmatprep.subr.mxu0 0.0
  %4044 = vmatpush1.msra.mxu0 0.0
  %4045 = vmatprep.subr.mxu0 0.0
  %4046 = vmatpush1.msra.mxu0 0.0
  %4047 = vmatprep.subr.mxu0 0.0
  %4048 = vmatpush1.msra.mxu0 0.0
  %4049 = vmatprep.subr.mxu0 0.0
  %4050 = vmatpush1.msra.mxu0 0.0
  %4051 = vmatprep.subr.mxu0 0.0
  %4052 = vmatpush1.msra.mxu0 0.0
  %4053 = vmatprep.subr.mxu0 0.0
  %4054 = vmatpush1.msra.mxu0 0.0
  %4055 = vmatprep.subr.mxu0 0.0
  %4056 = vmatpush1.msra.mxu0 0.0
  %4057 = vmatprep.subr.mxu0 0.0
  %4058 = vmatpush1.msra.mxu0 0.0
  %4059 = vmatprep.subr.mxu0 0.0
  %4060 = vmatpush1.msra.mxu0 0.0
  %4061 = vmatprep.subr.mxu0 0.0
  %4062 = vmatpush1.msra.mxu0 0.0
  %4063 = vmatprep.subr.mxu0 0.0
  %4064 = vmatpush1.msra.mxu0 0.0
  %4065 = vmatprep.mubr.f32.mxu0 0.0
  %4066 = vmatmul.mubr.f32.gmra.mrb[0].mxu0 %v3999
  %v4067 = vpop.f32.mrb[0].mxu0
  %v4068 = vadd.f32 0.0, %v4067
  %v4069 = vpop.f32.mrb[0].mxu0
  %4070 = vdwg.mxu0
  %v4071 = vadd.f32 %v3625, %v4068
  %4072 = vmatprep.subr.mxu0 0.0
  %4073 = vmatpush1.msra.mxu0 %v2266
  %4074 = vmatprep.subr.mxu0 0.0
  %4075 = vmatpush1.msra.mxu0 %v2267
  %4076 = vmatprep.subr.mxu0 0.0
  %4077 = vmatpush1.msra.mxu0 %v2268
  %4078 = vmatprep.subr.mxu0 0.0
  %4079 = vmatpush1.msra.mxu0 %v2269
  %4080 = vmatprep.subr.mxu0 0.0
  %4081 = vmatpush1.msra.mxu0 %v2270
  %4082 = vmatprep.subr.mxu0 0.0
  %4083 = vmatpush1.msra.mxu0 %v2271
  %4084 = vmatprep.subr.mxu0 0.0
  %4085 = vmatpush1.msra.mxu0 %v2272
  %4086 = vmatprep.subr.mxu0 0.0
  %4087 = vmatpush1.msra.mxu0 %v2273
  %4088 = vmatprep.subr.mxu0 0.0
  %4089 = vmatpush1.msra.mxu0 0.0
  %4090 = vmatprep.subr.mxu0 0.0
  %4091 = vmatpush1.msra.mxu0 0.0
  %4092 = vmatprep.subr.mxu0 0.0
  %4093 = vmatpush1.msra.mxu0 0.0
  %4094 = vmatprep.subr.mxu0 0.0
  %4095 = vmatpush1.msra.mxu0 0.0
  %4096 = vmatprep.subr.mxu0 0.0
  %4097 = vmatpush1.msra.mxu0 0.0
  %4098 = vmatprep.subr.mxu0 0.0
  %4099 = vmatpush1.msra.mxu0 0.0
  %4100 = vmatprep.subr.mxu0 0.0
  %4101 = vmatpush1.msra.mxu0 0.0
  %4102 = vmatprep.subr.mxu0 0.0
  %4103 = vmatpush1.msra.mxu0 0.0
  %4104 = vmatprep.subr.mxu0 0.0
  %4105 = vmatpush1.msra.mxu0 0.0
  %4106 = vmatprep.subr.mxu0 0.0
  %4107 = vmatpush1.msra.mxu0 0.0
  %4108 = vmatprep.subr.mxu0 0.0
  %4109 = vmatpush1.msra.mxu0 0.0
  %4110 = vmatprep.subr.mxu0 0.0
  %4111 = vmatpush1.msra.mxu0 0.0
  %4112 = vmatprep.subr.mxu0 0.0
  %4113 = vmatpush1.msra.mxu0 0.0
  %4114 = vmatprep.subr.mxu0 0.0
  %4115 = vmatpush1.msra.mxu0 0.0
  %4116 = vmatprep.subr.mxu0 0.0
  %4117 = vmatpush1.msra.mxu0 0.0
  %4118 = vmatprep.subr.mxu0 0.0
  %4119 = vmatpush1.msra.mxu0 0.0
  %4120 = vmatprep.subr.mxu0 0.0
  %4121 = vmatpush1.msra.mxu0 0.0
  %4122 = vmatprep.subr.mxu0 0.0
  %4123 = vmatpush1.msra.mxu0 0.0
  %4124 = vmatprep.subr.mxu0 0.0
  %4125 = vmatpush1.msra.mxu0 0.0
  %4126 = vmatprep.subr.mxu0 0.0
  %4127 = vmatpush1.msra.mxu0 0.0
  %4128 = vmatprep.subr.mxu0 0.0
  %4129 = vmatpush1.msra.mxu0 0.0
  %4130 = vmatprep.subr.mxu0 0.0
  %4131 = vmatpush1.msra.mxu0 0.0
  %4132 = vmatprep.subr.mxu0 0.0
  %4133 = vmatpush1.msra.mxu0 0.0
  %4134 = vmatprep.subr.mxu0 0.0
  %4135 = vmatpush1.msra.mxu0 0.0
  %4136 = vmatprep.mubr.f32.mxu0 0.0
  %4137 = vmatmul.mubr.f32.gmra.mrb[0].mxu0 %v2740
  %v4138 = vpop.f32.mrb[0].mxu0
  %v4139 = vadd.f32 0.0, %v4138
  %v4140 = vpop.f32.mrb[0].mxu0
  %4141 = vdwg.mxu0
  %4142 = vmatprep.subr.mxu0 0.0
  %4143 = vmatpush1.msra.mxu0 %v2345
  %4144 = vmatprep.subr.mxu0 0.0
  %4145 = vmatpush1.msra.mxu0 %v2346
  %4146 = vmatprep.subr.mxu0 0.0
  %4147 = vmatpush1.msra.mxu0 %v2347
  %4148 = vmatprep.subr.mxu0 0.0
  %4149 = vmatpush1.msra.mxu0 %v2348
  %4150 = vmatprep.subr.mxu0 0.0
  %4151 = vmatpush1.msra.mxu0 %v2349
  %4152 = vmatprep.subr.mxu0 0.0
  %4153 = vmatpush1.msra.mxu0 %v2350
  %4154 = vmatprep.subr.mxu0 0.0
  %4155 = vmatpush1.msra.mxu0 %v2351
  %4156 = vmatprep.subr.mxu0 0.0
  %4157 = vmatpush1.msra.mxu0 %v2352
  %4158 = vmatprep.subr.mxu0 0.0
  %4159 = vmatpush1.msra.mxu0 0.0
  %4160 = vmatprep.subr.mxu0 0.0
  %4161 = vmatpush1.msra.mxu0 0.0
  %4162 = vmatprep.subr.mxu0 0.0
  %4163 = vmatpush1.msra.mxu0 0.0
  %4164 = vmatprep.subr.mxu0 0.0
  %4165 = vmatpush1.msra.mxu0 0.0
  %4166 = vmatprep.subr.mxu0 0.0
  %4167 = vmatpush1.msra.mxu0 0.0
  %4168 = vmatprep.subr.mxu0 0.0
  %4169 = vmatpush1.msra.mxu0 0.0
  %4170 = vmatprep.subr.mxu0 0.0
  %4171 = vmatpush1.msra.mxu0 0.0
  %4172 = vmatprep.subr.mxu0 0.0
  %4173 = vmatpush1.msra.mxu0 0.0
  %4174 = vmatprep.subr.mxu0 0.0
  %4175 = vmatpush1.msra.mxu0 0.0
  %4176 = vmatprep.subr.mxu0 0.0
  %4177 = vmatpush1.msra.mxu0 0.0
  %4178 = vmatprep.subr.mxu0 0.0
  %4179 = vmatpush1.msra.mxu0 0.0
  %4180 = vmatprep.subr.mxu0 0.0
  %4181 = vmatpush1.msra.mxu0 0.0
  %4182 = vmatprep.subr.mxu0 0.0
  %4183 = vmatpush1.msra.mxu0 0.0
  %4184 = vmatprep.subr.mxu0 0.0
  %4185 = vmatpush1.msra.mxu0 0.0
  %4186 = vmatprep.subr.mxu0 0.0
  %4187 = vmatpush1.msra.mxu0 0.0
  %4188 = vmatprep.subr.mxu0 0.0
  %4189 = vmatpush1.msra.mxu0 0.0
  %4190 = vmatprep.subr.mxu0 0.0
  %4191 = vmatpush1.msra.mxu0 0.0
  %4192 = vmatprep.subr.mxu0 0.0
  %4193 = vmatpush1.msra.mxu0 0.0
  %4194 = vmatprep.subr.mxu0 0.0
  %4195 = vmatpush1.msra.mxu0 0.0
  %4196 = vmatprep.subr.mxu0 0.0
  %4197 = vmatpush1.msra.mxu0 0.0
  %4198 = vmatprep.subr.mxu0 0.0
  %4199 = vmatpush1.msra.mxu0 0.0
  %4200 = vmatprep.subr.mxu0 0.0
  %4201 = vmatpush1.msra.mxu0 0.0
  %4202 = vmatprep.subr.mxu0 0.0
  %4203 = vmatpush1.msra.mxu0 0.0
  %4204 = vmatprep.subr.mxu0 0.0
  %4205 = vmatpush1.msra.mxu0 0.0
  %4206 = vmatprep.mubr.f32.mxu0 0.0
  %4207 = vmatmul.mubr.f32.gmra.mrb[0].mxu0 %v2740
  %v4208 = vpop.f32.mrb[0].mxu0
  %v4209 = vadd.f32 0.0, %v4208
  %v4210 = vpop.f32.mrb[0].mxu0
  %4211 = vdwg.mxu0
  %4212 = vmatprep.subr.mxu0 0.0
  %4213 = vmatpush1.msra.mxu0 %v2424
  %4214 = vmatprep.subr.mxu0 0.0
  %4215 = vmatpush1.msra.mxu0 %v2425
  %4216 = vmatprep.subr.mxu0 0.0
  %4217 = vmatpush1.msra.mxu0 %v2426
  %4218 = vmatprep.subr.mxu0 0.0
  %4219 = vmatpush1.msra.mxu0 %v2427
  %4220 = vmatprep.subr.mxu0 0.0
  %4221 = vmatpush1.msra.mxu0 %v2428
  %4222 = vmatprep.subr.mxu0 0.0
  %4223 = vmatpush1.msra.mxu0 %v2429
  %4224 = vmatprep.subr.mxu0 0.0
  %4225 = vmatpush1.msra.mxu0 %v2430
  %4226 = vmatprep.subr.mxu0 0.0
  %4227 = vmatpush1.msra.mxu0 %v2431
  %4228 = vmatprep.subr.mxu0 0.0
  %4229 = vmatpush1.msra.mxu0 0.0
  %4230 = vmatprep.subr.mxu0 0.0
  %4231 = vmatpush1.msra.mxu0 0.0
  %4232 = vmatprep.subr.mxu0 0.0
  %4233 = vmatpush1.msra.mxu0 0.0
  %4234 = vmatprep.subr.mxu0 0.0
  %4235 = vmatpush1.msra.mxu0 0.0
  %4236 = vmatprep.subr.mxu0 0.0
  %4237 = vmatpush1.msra.mxu0 0.0
  %4238 = vmatprep.subr.mxu0 0.0
  %4239 = vmatpush1.msra.mxu0 0.0
  %4240 = vmatprep.subr.mxu0 0.0
  %4241 = vmatpush1.msra.mxu0 0.0
  %4242 = vmatprep.subr.mxu0 0.0
  %4243 = vmatpush1.msra.mxu0 0.0
  %4244 = vmatprep.subr.mxu0 0.0
  %4245 = vmatpush1.msra.mxu0 0.0
  %4246 = vmatprep.subr.mxu0 0.0
  %4247 = vmatpush1.msra.mxu0 0.0
  %4248 = vmatprep.subr.mxu0 0.0
  %4249 = vmatpush1.msra.mxu0 0.0
  %4250 = vmatprep.subr.mxu0 0.0
  %4251 = vmatpush1.msra.mxu0 0.0
  %4252 = vmatprep.subr.mxu0 0.0
  %4253 = vmatpush1.msra.mxu0 0.0
  %4254 = vmatprep.subr.mxu0 0.0
  %4255 = vmatpush1.msra.mxu0 0.0
  %4256 = vmatprep.subr.mxu0 0.0
  %4257 = vmatpush1.msra.mxu0 0.0
  %4258 = vmatprep.subr.mxu0 0.0
  %4259 = vmatpush1.msra.mxu0 0.0
  %4260 = vmatprep.subr.mxu0 0.0
  %4261 = vmatpush1.msra.mxu0 0.0
  %4262 = vmatprep.subr.mxu0 0.0
  %4263 = vmatpush1.msra.mxu0 0.0
  %4264 = vmatprep.subr.mxu0 0.0
  %4265 = vmatpush1.msra.mxu0 0.0
  %4266 = vmatprep.subr.mxu0 0.0
  %4267 = vmatpush1.msra.mxu0 0.0
  %4268 = vmatprep.subr.mxu0 0.0
  %4269 = vmatpush1.msra.mxu0 0.0
  %4270 = vmatprep.subr.mxu0 0.0
  %4271 = vmatpush1.msra.mxu0 0.0
  %4272 = vmatprep.subr.mxu0 0.0
  %4273 = vmatpush1.msra.mxu0 0.0
  %4274 = vmatprep.subr.mxu0 0.0
  %4275 = vmatpush1.msra.mxu0 0.0
  %4276 = vmatprep.mubr.f32.mxu0 0.0
  %4277 = vmatmul.mubr.f32.gmra.mrb[0].mxu0 %v2740
  %v4278 = vpop.f32.mrb[0].mxu0
  %v4279 = vadd.f32 0.0, %v4278
  %v4280 = vpop.f32.mrb[0].mxu0
  %4281 = vdwg.mxu0
  %v4283 = vsel %vm1081, %v4139, 0
  %v4286 = vsel %vm1081, %v4209, 0
  %4288 = vmatprep.subr.mxu0 0.0
  %4289 = vmatpush1.xpose.msra.mxu0 %v4286
  %4290 = vmatprep.subr.mxu0 0.0
  %4291 = vmatpush1.xpose.msra.mxu0 0.0
  %4292 = vmatprep.subr.mxu0 0.0
  %4293 = vmatpush1.xpose.msra.mxu0 0.0
  %4294 = vmatprep.subr.mxu0 0.0
  %4295 = vmatpush1.xpose.msra.mxu0 0.0
  %4296 = vmatprep.subr.mxu0 0.0
  %4297 = vmatpush1.xpose.msra.mxu0 0.0
  %4298 = vmatprep.subr.mxu0 0.0
  %4299 = vmatpush1.xpose.msra.mxu0 0.0
  %4300 = vmatprep.subr.mxu0 0.0
  %4301 = vmatpush1.xpose.msra.mxu0 0.0
  %4302 = vmatprep.subr.mxu0 0.0
  %4303 = vmatpush1.xpose.msra.mxu0 0.0
  %4304 = vmatprep.subr.mxu0 0.0
  %4305 = vmatpush1.xpose.msra.mxu0 0.0
  %4306 = vmatprep.subr.mxu0 0.0
  %4307 = vmatpush1.xpose.msra.mxu0 0.0
  %4308 = vmatprep.subr.mxu0 0.0
  %4309 = vmatpush1.xpose.msra.mxu0 0.0
  %4310 = vmatprep.subr.mxu0 0.0
  %4311 = vmatpush1.xpose.msra.mxu0 0.0
  %4312 = vmatprep.subr.mxu0 0.0
  %4313 = vmatpush1.xpose.msra.mxu0 0.0
  %4314 = vmatprep.subr.mxu0 0.0
  %4315 = vmatpush1.xpose.msra.mxu0 0.0
  %4316 = vmatprep.subr.mxu0 0.0
  %4317 = vmatpush1.xpose.msra.mxu0 0.0
  %4318 = vmatprep.subr.mxu0 0.0
  %4319 = vmatpush1.xpose.msra.mxu0 0.0
  %4320 = vmatprep.subr.mxu0 0.0
  %4321 = vmatpush1.xpose.msra.mxu0 0.0
  %4322 = vmatprep.subr.mxu0 0.0
  %4323 = vmatpush1.xpose.msra.mxu0 0.0
  %4324 = vmatprep.subr.mxu0 0.0
  %4325 = vmatpush1.xpose.msra.mxu0 0.0
  %4326 = vmatprep.subr.mxu0 0.0
  %4327 = vmatpush1.xpose.msra.mxu0 0.0
  %4328 = vmatprep.subr.mxu0 0.0
  %4329 = vmatpush1.xpose.msra.mxu0 0.0
  %4330 = vmatprep.subr.mxu0 0.0
  %4331 = vmatpush1.xpose.msra.mxu0 0.0
  %4332 = vmatprep.subr.mxu0 0.0
  %4333 = vmatpush1.xpose.msra.mxu0 0.0
  %4334 = vmatprep.subr.mxu0 0.0
  %4335 = vmatpush1.xpose.msra.mxu0 0.0
  %4336 = vmatprep.subr.mxu0 0.0
  %4337 = vmatpush1.xpose.msra.mxu0 0.0
  %4338 = vmatprep.subr.mxu0 0.0
  %4339 = vmatpush1.xpose.msra.mxu0 0.0
  %4340 = vmatprep.subr.mxu0 0.0
  %4341 = vmatpush1.xpose.msra.mxu0 0.0
  %4342 = vmatprep.subr.mxu0 0.0
  %4343 = vmatpush1.xpose.msra.mxu0 0.0
  %4344 = vmatprep.subr.mxu0 0.0
  %4345 = vmatpush1.xpose.msra.mxu0 0.0
  %4346 = vmatprep.subr.mxu0 0.0
  %4347 = vmatpush1.xpose.msra.mxu0 0.0
  %4348 = vmatprep.subr.mxu0 0.0
  %4349 = vmatpush1.xpose.msra.mxu0 0.0
  %4350 = vmatprep.subr.mxu0 0.0
  %4351 = vmatpush1.xpose.msra.mxu0 0.0
  %4352 = vmatprep.mubr.f32.mxu0 0.0
  %4353 = vmatmul.mubr.f32.gmra.mrb[0].mxu0 %v4283
  %v4354 = vpop.f32.mrb[0].mxu0
  %v4355 = vadd.f32 0.0, %v4354
  %v4356 = vpop.f32.mrb[0].mxu0
  %4357 = vdwg.mxu0
  %v4358 = vsel %vm1158, %v4355, -inf
  %4359 = vmax.xlane.f32.xlu0 %v4358
  %v4360 = vpop.xlane.xlu0 %4359
  %v4361 = vsub.f32 %v4355, %v4360
  %v4362 = vmul.f32 %v4361, 1.442695
  %v4363 = vpow.pop %v4362
  %v4364 = vsel %vm1158, %v4363, 0.0
  %4365 = vadd.xlane.f32.xlu0 %v4364
  %v4366 = vpop.xlane.xlu0 %4365
  %v4367 = vrcp.pop %v4366
  %v4368 = vmul.f32 %v4363, %v4367
  %v4370 = vsel %vm1158, %v4368, 0
  %4372 = vmatprep.subr.mxu0 0.0
  %4373 = vmatpush1.msra.mxu0 %v4279
  %4374 = vmatprep.subr.mxu0 0.0
  %4375 = vmatpush1.msra.mxu0 0.0
  %4376 = vmatprep.subr.mxu0 0.0
  %4377 = vmatpush1.msra.mxu0 0.0
  %4378 = vmatprep.subr.mxu0 0.0
  %4379 = vmatpush1.msra.mxu0 0.0
  %4380 = vmatprep.subr.mxu0 0.0
  %4381 = vmatpush1.msra.mxu0 0.0
  %4382 = vmatprep.subr.mxu0 0.0
  %4383 = vmatpush1.msra.mxu0 0.0
  %4384 = vmatprep.subr.mxu0 0.0
  %4385 = vmatpush1.msra.mxu0 0.0
  %4386 = vmatprep.subr.mxu0 0.0
  %4387 = vmatpush1.msra.mxu0 0.0
  %4388 = vmatprep.subr.mxu0 0.0
  %4389 = vmatpush1.msra.mxu0 0.0
  %4390 = vmatprep.subr.mxu0 0.0
  %4391 = vmatpush1.msra.mxu0 0.0
  %4392 = vmatprep.subr.mxu0 0.0
  %4393 = vmatpush1.msra.mxu0 0.0
  %4394 = vmatprep.subr.mxu0 0.0
  %4395 = vmatpush1.msra.mxu0 0.0
  %4396 = vmatprep.subr.mxu0 0.0
  %4397 = vmatpush1.msra.mxu0 0.0
  %4398 = vmatprep.subr.mxu0 0.0
  %4399 = vmatpush1.msra.mxu0 0.0
  %4400 = vmatprep.subr.mxu0 0.0
  %4401 = vmatpush1.msra.mxu0 0.0
  %4402 = vmatprep.subr.mxu0 0.0
  %4403 = vmatpush1.msra.mxu0 0.0
  %4404 = vmatprep.subr.mxu0 0.0
  %4405 = vmatpush1.msra.mxu0 0.0
  %4406 = vmatprep.subr.mxu0 0.0
  %4407 = vmatpush1.msra.mxu0 0.0
  %4408 = vmatprep.subr.mxu0 0.0
  %4409 = vmatpush1.msra.mxu0 0.0
  %4410 = vmatprep.subr.mxu0 0.0
  %4411 = vmatpush1.msra.mxu0 0.0
  %4412 = vmatprep.subr.mxu0 0.0
  %4413 = vmatpush1.msra.mxu0 0.0
  %4414 = vmatprep.subr.mxu0 0.0
  %4415 = vmatpush1.msra.mxu0 0.0
  %4416 = vmatprep.subr.mxu0 0.0
  %4417 = vmatpush1.msra.mxu0 0.0
  %4418 = vmatprep.subr.mxu0 0.0
  %4419 = vmatpush1.msra.mxu0 0.0
  %4420 = vmatprep.subr.mxu0 0.0
  %4421 = vmatpush1.msra.mxu0 0.0
  %4422 = vmatprep.subr.mxu0 0.0
  %4423 = vmatpush1.msra.mxu0 0.0
  %4424 = vmatprep.subr.mxu0 0.0
  %4425 = vmatpush1.msra.mxu0 0.0
  %4426 = vmatprep.subr.mxu0 0.0
  %4427 = vmatpush1.msra.mxu0 0.0
  %4428 = vmatprep.subr.mxu0 0.0
  %4429 = vmatpush1.msra.mxu0 0.0
  %4430 = vmatprep.subr.mxu0 0.0
  %4431 = vmatpush1.msra.mxu0 0.0
  %4432 = vmatprep.subr.mxu0 0.0
  %4433 = vmatpush1.msra.mxu0 0.0
  %4434 = vmatprep.subr.mxu0 0.0
  %4435 = vmatpush1.msra.mxu0 0.0
  %4436 = vmatprep.mubr.f32.mxu0 0.0
  %4437 = vmatmul.mubr.f32.gmra.mrb[0].mxu0 %v4370
  %v4438 = vpop.f32.mrb[0].mxu0
  %v4439 = vadd.f32 0.0, %v4438
  %v4440 = vpop.f32.mrb[0].mxu0
  %4441 = vdwg.mxu0
  %v4443 = vsel %vm1081, %v4439, 0
  %4445 = vmatprep.subr.mxu0 0.0
  %4446 = vmatpush1.msra.mxu0 %v2663
  %4447 = vmatprep.subr.mxu0 0.0
  %4448 = vmatpush1.msra.mxu0 %v2664
  %4449 = vmatprep.subr.mxu0 0.0
  %4450 = vmatpush1.msra.mxu0 0.0
  %4451 = vmatprep.subr.mxu0 0.0
  %4452 = vmatpush1.msra.mxu0 0.0
  %4453 = vmatprep.subr.mxu0 0.0
  %4454 = vmatpush1.msra.mxu0 0.0
  %4455 = vmatprep.subr.mxu0 0.0
  %4456 = vmatpush1.msra.mxu0 0.0
  %4457 = vmatprep.subr.mxu0 0.0
  %4458 = vmatpush1.msra.mxu0 0.0
  %4459 = vmatprep.subr.mxu0 0.0
  %4460 = vmatpush1.msra.mxu0 0.0
  %4461 = vmatprep.subr.mxu0 0.0
  %4462 = vmatpush1.msra.mxu0 0.0
  %4463 = vmatprep.subr.mxu0 0.0
  %4464 = vmatpush1.msra.mxu0 0.0
  %4465 = vmatprep.subr.mxu0 0.0
  %4466 = vmatpush1.msra.mxu0 0.0
  %4467 = vmatprep.subr.mxu0 0.0
  %4468 = vmatpush1.msra.mxu0 0.0
  %4469 = vmatprep.subr.mxu0 0.0
  %4470 = vmatpush1.msra.mxu0 0.0
  %4471 = vmatprep.subr.mxu0 0.0
  %4472 = vmatpush1.msra.mxu0 0.0
  %4473 = vmatprep.subr.mxu0 0.0
  %4474 = vmatpush1.msra.mxu0 0.0
  %4475 = vmatprep.subr.mxu0 0.0
  %4476 = vmatpush1.msra.mxu0 0.0
  %4477 = vmatprep.subr.mxu0 0.0
  %4478 = vmatpush1.msra.mxu0 0.0
  %4479 = vmatprep.subr.mxu0 0.0
  %4480 = vmatpush1.msra.mxu0 0.0
  %4481 = vmatprep.subr.mxu0 0.0
  %4482 = vmatpush1.msra.mxu0 0.0
  %4483 = vmatprep.subr.mxu0 0.0
  %4484 = vmatpush1.msra.mxu0 0.0
  %4485 = vmatprep.subr.mxu0 0.0
  %4486 = vmatpush1.msra.mxu0 0.0
  %4487 = vmatprep.subr.mxu0 0.0
  %4488 = vmatpush1.msra.mxu0 0.0
  %4489 = vmatprep.subr.mxu0 0.0
  %4490 = vmatpush1.msra.mxu0 0.0
  %4491 = vmatprep.subr.mxu0 0.0
  %4492 = vmatpush1.msra.mxu0 0.0
  %4493 = vmatprep.subr.mxu0 0.0
  %4494 = vmatpush1.msra.mxu0 0.0
  %4495 = vmatprep.subr.mxu0 0.0
  %4496 = vmatpush1.msra.mxu0 0.0
  %4497 = vmatprep.subr.mxu0 0.0
  %4498 = vmatpush1.msra.mxu0 0.0
  %4499 = vmatprep.subr.mxu0 0.0
  %4500 = vmatpush1.msra.mxu0 0.0
  %4501 = vmatprep.subr.mxu0 0.0
  %4502 = vmatpush1.msra.mxu0 0.0
  %4503 = vmatprep.subr.mxu0 0.0
  %4504 = vmatpush1.msra.mxu0 0.0
  %4505 = vmatprep.subr.mxu0 0.0
  %4506 = vmatpush1.msra.mxu0 0.0
  %4507 = vmatprep.subr.mxu0 0.0
  %4508 = vmatpush1.msra.mxu0 0.0
  %4509 = vmatprep.mubr.f32.mxu0 0.0
  %4510 = vmatmul.mubr.f32.gmra.mrb[0].mxu0 %v4443
  %v4511 = vpop.f32.mrb[0].mxu0
  %v4512 = vadd.f32 0.0, %v4511
  %v4513 = vpop.f32.mrb[0].mxu0
  %4514 = vdwg.mxu0
  %v4515 = vadd.f32 %v4071, %v4512
  %v4516 = vadd.f32 %v796, %v2738
  %v4517 = vadd.f32 %v797, %v4515
  %v4518 = vld [vmem:[%s10] sm:$0x1]
  %v4520 = vlaneseq
  %v4521 = vshrl.u32 %v4520, 7
  %v4522 = vsub.s32 0, %v4521
  %v4523 = vrot.slane %v4518, %v4522
  %v4525 = vadd.f32 %v4516, %v4523
  %v4526 = vadd.f32 %v4517, %v4523
  %v4527 = vld [vmem:[%s11] sm:$0x1]
  %v4528 = vld [vmem:[%s12] sm:$0x1]
  %v4529 = vsel %vm800, %v4525, 0.0
  %4530 = vadd.xlane.f32.xlu0 %v4529
  %v4531 = vpop.xlane.xlu0 %4530
  %v4532 = vsel %vm800, %v4526, 0.0
  %4533 = vadd.xlane.f32.xlu0 %v4532
  %v4534 = vpop.xlane.xlu0 %4533
  %v4535 = vmul.f32 %v4531, %v807
  %v4536 = vmul.f32 %v4534, %v807
  %v4537 = vsub.f32 %v4525, %v4535
  %v4538 = vsub.f32 %v4526, %v4536
  %v4539 = vmul.f32 %v4537, %v4537
  %v4540 = vmul.f32 %v4538, %v4538
  %v4541 = vsel %vm800, %v4539, 0.0
  %4542 = vadd.xlane.f32.xlu0 %v4541
  %v4543 = vpop.xlane.xlu0 %4542
  %v4544 = vsel %vm800, %v4540, 0.0
  %4545 = vadd.xlane.f32.xlu0 %v4544
  %v4546 = vpop.xlane.xlu0 %4545
  %v4547 = vmul.f32 %v4543, %v807
  %v4548 = vmul.f32 %v4546, %v807
  %v4549 = vadd.f32 %v4547, 1e-05
  %v4550 = vadd.f32 %v4548, 1e-05
  %v4551 = vrsqrt.pop %v4549
  %v4552 = vrsqrt.pop %v4550
  %v4553 = vmul.f32 %v4537, %v4551
  %v4554 = vmul.f32 %v4538, %v4552
  %v4556 = vlaneseq
  %v4557 = vshrl.u32 %v4556, 7
  %v4558 = vsub.s32 0, %v4557
  %v4559 = vrot.slane %v4527, %v4558
  %v4561 = vmul.f32 %v4553, %v4559
  %v4562 = vmul.f32 %v4554, %v4559
  %v4564 = vlaneseq
  %v4565 = vshrl.u32 %v4564, 7
  %v4566 = vsub.s32 0, %v4565
  %v4567 = vrot.slane %v4528, %v4566
  %v4569 = vadd.f32 %v4561, %v4567
  %v4570 = vadd.f32 %v4562, %v4567
  %v4571 = vld [vmem:[%s13] sm:$0xff]
  %v4572 = vld [vmem:[%s13 + $0x8] sm:$0xff]
  %v4573 = vld [vmem:[%s13 + $0x10] sm:$0xff]
  %v4574 = vld [vmem:[%s13 + $0x18] sm:$0xff]
  %v4575 = vld [vmem:[%s13 + $0x20] sm:$0xff]
  %v4576 = vld [vmem:[%s13 + $0x28] sm:$0xff]
  %v4577 = vld [vmem:[%s13 + $0x30] sm:$0xff]
  %v4578 = vld [vmem:[%s13 + $0x38] sm:$0xff]
  %v4579 = vld [vmem:[%s14] sm:$0x1]
  %v4581 = vlaneseq
  %v4582 = vshrl.u32 %v4581, 7
  %v4583 = vsub.s32 0, %v4582
  %v4584 = vrot.slane %v4579, %v4583
  %v4587 = vsel %vm800, %v4569, 0
  %v4590 = vsel %vm800, %v4570, 0
  %4592 = vmatprep.subr.mxu0 0.0
  %4593 = vmatpush1.msra.mxu0 %v4571
  %4594 = vmatprep.subr.mxu0 0.0
  %4595 = vmatpush1.msra.mxu0 %v4572
  %4596 = vmatprep.subr.mxu0 0.0
  %4597 = vmatpush1.msra.mxu0 %v4573
  %4598 = vmatprep.subr.mxu0 0.0
  %4599 = vmatpush1.msra.mxu0 %v4574
  %4600 = vmatprep.subr.mxu0 0.0
  %4601 = vmatpush1.msra.mxu0 %v4575
  %4602 = vmatprep.subr.mxu0 0.0
  %4603 = vmatpush1.msra.mxu0 %v4576
  %4604 = vmatprep.subr.mxu0 0.0
  %4605 = vmatpush1.msra.mxu0 %v4577
  %4606 = vmatprep.subr.mxu0 0.0
  %4607 = vmatpush1.msra.mxu0 %v4578
  %4608 = vmatprep.subr.mxu0 0.0
  %4609 = vmatpush1.msra.mxu0 0.0
  %4610 = vmatprep.subr.mxu0 0.0
  %4611 = vmatpush1.msra.mxu0 0.0
  %4612 = vmatprep.subr.mxu0 0.0
  %4613 = vmatpush1.msra.mxu0 0.0
  %4614 = vmatprep.subr.mxu0 0.0
  %4615 = vmatpush1.msra.mxu0 0.0
  %4616 = vmatprep.subr.mxu0 0.0
  %4617 = vmatpush1.msra.mxu0 0.0
  %4618 = vmatprep.subr.mxu0 0.0
  %4619 = vmatpush1.msra.mxu0 0.0
  %4620 = vmatprep.subr.mxu0 0.0
  %4621 = vmatpush1.msra.mxu0 0.0
  %4622 = vmatprep.subr.mxu0 0.0
  %4623 = vmatpush1.msra.mxu0 0.0
  %4624 = vmatprep.subr.mxu0 0.0
  %4625 = vmatpush1.msra.mxu0 0.0
  %4626 = vmatprep.subr.mxu0 0.0
  %4627 = vmatpush1.msra.mxu0 0.0
  %4628 = vmatprep.subr.mxu0 0.0
  %4629 = vmatpush1.msra.mxu0 0.0
  %4630 = vmatprep.subr.mxu0 0.0
  %4631 = vmatpush1.msra.mxu0 0.0
  %4632 = vmatprep.subr.mxu0 0.0
  %4633 = vmatpush1.msra.mxu0 0.0
  %4634 = vmatprep.subr.mxu0 0.0
  %4635 = vmatpush1.msra.mxu0 0.0
  %4636 = vmatprep.subr.mxu0 0.0
  %4637 = vmatpush1.msra.mxu0 0.0
  %4638 = vmatprep.subr.mxu0 0.0
  %4639 = vmatpush1.msra.mxu0 0.0
  %4640 = vmatprep.subr.mxu0 0.0
  %4641 = vmatpush1.msra.mxu0 0.0
  %4642 = vmatprep.subr.mxu0 0.0
  %4643 = vmatpush1.msra.mxu0 0.0
  %4644 = vmatprep.subr.mxu0 0.0
  %4645 = vmatpush1.msra.mxu0 0.0
  %4646 = vmatprep.subr.mxu0 0.0
  %4647 = vmatpush1.msra.mxu0 0.0
  %4648 = vmatprep.subr.mxu0 0.0
  %4649 = vmatpush1.msra.mxu0 0.0
  %4650 = vmatprep.subr.mxu0 0.0
  %4651 = vmatpush1.msra.mxu0 0.0
  %4652 = vmatprep.subr.mxu0 0.0
  %4653 = vmatpush1.msra.mxu0 0.0
  %4654 = vmatprep.subr.mxu0 0.0
  %4655 = vmatpush1.msra.mxu0 0.0
  %4656 = vmatprep.mubr.f32.mxu0 0.0
  %4657 = vmatmul.mubr.f32.gmra.mrb[0].mxu0 %v4587
  %v4658 = vpop.f32.mrb[0].mxu0
  %v4659 = vadd.f32 %v4584, %v4658
  %v4660 = vpop.f32.mrb[0].mxu0
  %4661 = vmatprep.mubr.f32.mxu0 0.0
  %4662 = vmatmul.mubr.f32.gmra.mrb[0].mxu0 %v4590
  %v4663 = vpop.f32.mrb[0].mxu0
  %v4664 = vadd.f32 %v4584, %v4663
  %v4665 = vpop.f32.mrb[0].mxu0
  %4666 = vdwg.mxu0
  %v4667 = vmul.f32 %v4659, 0.5
  %v4668 = vmul.f32 %v4664, 0.5
  %v4669 = vmul.f32 %v4659, 0.70710677
  %v4670 = vmul.f32 %v4664, 0.70710677
  %v4671 = verf.f32.pop %v4669
  %v4672 = verf.f32.pop %v4670
  %v4673 = vadd.f32 %v4671, 1.0
  %v4674 = vadd.f32 %v4672, 1.0
  %v4675 = vmul.f32 %v4667, %v4673
  %v4676 = vmul.f32 %v4668, %v4674
  %v4677 = vld [vmem:[%s15] sm:$0xff]
  %v4678 = vld [vmem:[%s15 + $0x8] sm:$0xff]
  %v4679 = vld [vmem:[%s15 + $0x10] sm:$0xff]
  %v4680 = vld [vmem:[%s15 + $0x18] sm:$0xff]
  %v4681 = vld [vmem:[%s15 + $0x20] sm:$0xff]
  %v4682 = vld [vmem:[%s15 + $0x28] sm:$0xff]
  %v4683 = vld [vmem:[%s15 + $0x30] sm:$0xff]
  %v4684 = vld [vmem:[%s15 + $0x38] sm:$0xff]
  %v4685 = vld [vmem:[%s15 + $0x40] sm:$0xff]
  %v4686 = vld [vmem:[%s15 + $0x48] sm:$0xff]
  %v4687 = vld [vmem:[%s15 + $0x50] sm:$0xff]
  %v4688 = vld [vmem:[%s15 + $0x58] sm:$0xff]
  %v4689 = vld [vmem:[%s15 + $0x60] sm:$0xff]
  %v4690 = vld [vmem:[%s15 + $0x68] sm:$0xff]
  %v4691 = vld [vmem:[%s15 + $0x70] sm:$0xff]
  %v4692 = vld [vmem:[%s15 + $0x78] sm:$0xff]
  %v4693 = vld [vmem:[%s16] sm:$0x1]
  %v4695 = vlaneseq
  %v4696 = vshrl.u32 %v4695, 7
  %v4697 = vsub.s32 0, %v4696
  %v4698 = vrot.slane %v4693, %v4697
  %4700 = vmatprep.subr.mxu0 0.0
  %4701 = vmatpush1.msra.mxu0 %v4677
  %4702 = vmatprep.subr.mxu0 0.0
  %4703 = vmatpush1.msra.mxu0 %v4678
  %4704 = vmatprep.subr.mxu0 0.0
  %4705 = vmatpush1.msra.mxu0 %v4679
  %4706 = vmatprep.subr.mxu0 0.0
  %4707 = vmatpush1.msra.mxu0 %v4680
  %4708 = vmatprep.subr.mxu0 0.0
  %4709 = vmatpush1.msra.mxu0 %v4681
  %4710 = vmatprep.subr.mxu0 0.0
  %4711 = vmatpush1.msra.mxu0 %v4682
  %4712 = vmatprep.subr.mxu0 0.0
  %4713 = vmatpush1.msra.mxu0 %v4683
  %4714 = vmatprep.subr.mxu0 0.0
  %4715 = vmatpush1.msra.mxu0 %v4684
  %4716 = vmatprep.subr.mxu0 0.0
  %4717 = vmatpush1.msra.mxu0 %v4685
  %4718 = vmatprep.subr.mxu0 0.0
  %4719 = vmatpush1.msra.mxu0 %v4686
  %4720 = vmatprep.subr.mxu0 0.0
  %4721 = vmatpush1.msra.mxu0 %v4687
  %4722 = vmatprep.subr.mxu0 0.0
  %4723 = vmatpush1.msra.mxu0 %v4688
  %4724 = vmatprep.subr.mxu0 0.0
  %4725 = vmatpush1.msra.mxu0 %v4689
  %4726 = vmatprep.subr.mxu0 0.0
  %4727 = vmatpush1.msra.mxu0 %v4690
  %4728 = vmatprep.subr.mxu0 0.0
  %4729 = vmatpush1.msra.mxu0 %v4691
  %4730 = vmatprep.subr.mxu0 0.0
  %4731 = vmatpush1.msra.mxu0 %v4692
  %4732 = vmatprep.subr.mxu0 0.0
  %4733 = vmatpush1.msra.mxu0 0.0
  %4734 = vmatprep.subr.mxu0 0.0
  %4735 = vmatpush1.msra.mxu0 0.0
  %4736 = vmatprep.subr.mxu0 0.0
  %4737 = vmatpush1.msra.mxu0 0.0
  %4738 = vmatprep.subr.mxu0 0.0
  %4739 = vmatpush1.msra.mxu0 0.0
  %4740 = vmatprep.subr.mxu0 0.0
  %4741 = vmatpush1.msra.mxu0 0.0
  %4742 = vmatprep.subr.mxu0 0.0
  %4743 = vmatpush1.msra.mxu0 0.0
  %4744 = vmatprep.subr.mxu0 0.0
  %4745 = vmatpush1.msra.mxu0 0.0
  %4746 = vmatprep.subr.mxu0 0.0
  %4747 = vmatpush1.msra.mxu0 0.0
  %4748 = vmatprep.subr.mxu0 0.0
  %4749 = vmatpush1.msra.mxu0 0.0
  %4750 = vmatprep.subr.mxu0 0.0
  %4751 = vmatpush1.msra.mxu0 0.0
  %4752 = vmatprep.subr.mxu0 0.0
  %4753 = vmatpush1.msra.mxu0 0.0
  %4754 = vmatprep.subr.mxu0 0.0
  %4755 = vmatpush1.msra.mxu0 0.0
  %4756 = vmatprep.subr.mxu0 0.0
  %4757 = vmatpush1.msra.mxu0 0.0
  %4758 = vmatprep.subr.mxu0 0.0
  %4759 = vmatpush1.msra.mxu0 0.0
  %4760 = vmatprep.subr.mxu0 0.0
  %4761 = vmatpush1.msra.mxu0 0.0
  %4762 = vmatprep.subr.mxu0 0.0
  %4763 = vmatpush1.msra.mxu0 0.0
  %4764 = vmatprep.mubr.f32.mxu0 0.0
  %4765 = vmatmul.mubr.f32.gmra.mrb[0].mxu0 %v4675
  %v4766 = vpop.f32.mrb[0].mxu0
  %v4767 = vadd.f32 %v4698, %v4766
  %v4768 = vpop.f32.mrb[0].mxu0
  %4769 = vmatprep.mubr.f32.mxu0 0.0
  %4770 = vmatmul.mubr.f32.gmra.mrb[0].mxu0 %v4676
  %v4771 = vpop.f32.mrb[0].mxu0
  %v4772 = vadd.f32 %v4698, %v4771
  %v4773 = vpop.f32.mrb[0].mxu0
  %4774 = vdwg.mxu0
  %v4775 = vadd.f32 %v4525, %v4767
  %v4776 = vadd.f32 %v4526, %v4772
  %s4777 = scalar_lea.vmem %s4, 1
  %v4778 = vld [vmem:[%s4777] sm:$0x1]
  %s4779 = scalar_lea.vmem %s5, 1
  %v4780 = vld [vmem:[%s4779] sm:$0x1]
  %v4781 = vsel %vm800, %v4775, 0.0
  %4782 = vadd.xlane.f32.xlu0 %v4781
  %v4783 = vpop.xlane.xlu0 %4782
  %v4784 = vsel %vm800, %v4776, 0.0
  %4785 = vadd.xlane.f32.xlu0 %v4784
  %v4786 = vpop.xlane.xlu0 %4785
  %v4787 = vmul.f32 %v4783, %v807
  %v4788 = vmul.f32 %v4786, %v807
  %v4789 = vsub.f32 %v4775, %v4787
  %v4790 = vsub.f32 %v4776, %v4788
  %v4791 = vmul.f32 %v4789, %v4789
  %v4792 = vmul.f32 %v4790, %v4790
  %v4793 = vsel %vm800, %v4791, 0.0
  %4794 = vadd.xlane.f32.xlu0 %v4793
  %v4795 = vpop.xlane.xlu0 %4794
  %v4796 = vsel %vm800, %v4792, 0.0
  %4797 = vadd.xlane.f32.xlu0 %v4796
  %v4798 = vpop.xlane.xlu0 %4797
  %v4799 = vmul.f32 %v4795, %v807
  %v4800 = vmul.f32 %v4798, %v807
  %v4801 = vadd.f32 %v4799, 1e-05
  %v4802 = vadd.f32 %v4800, 1e-05
  %v4803 = vrsqrt.pop %v4801
  %v4804 = vrsqrt.pop %v4802
  %v4805 = vmul.f32 %v4789, %v4803
  %v4806 = vmul.f32 %v4790, %v4804
  %v4808 = vlaneseq
  %v4809 = vshrl.u32 %v4808, 7
  %v4810 = vsub.s32 0, %v4809
  %v4811 = vrot.slane %v4778, %v4810
  %v4813 = vmul.f32 %v4805, %v4811
  %v4814 = vmul.f32 %v4806, %v4811
  %v4816 = vlaneseq
  %v4817 = vshrl.u32 %v4816, 7
  %v4818 = vsub.s32 0, %v4817
  %v4819 = vrot.slane %v4780, %v4818
  %v4821 = vadd.f32 %v4813, %v4819
  %v4822 = vadd.f32 %v4814, %v4819
  %s4823 = scalar_lea.vmem %s6, 256
  %v4824 = vld [vmem:[%s4823] sm:$0xff]
  %v4825 = vld [vmem:[%s4823 + $0x8] sm:$0xff]
  %v4826 = vld [vmem:[%s4823 + $0x10] sm:$0xff]
  %v4827 = vld [vmem:[%s4823 + $0x18] sm:$0xff]
  %v4828 = vld [vmem:[%s4823 + $0x20] sm:$0xff]
  %v4829 = vld [vmem:[%s4823 + $0x28] sm:$0xff]
  %v4830 = vld [vmem:[%s4823 + $0x30] sm:$0xff]
  %v4831 = vld [vmem:[%s4823 + $0x38] sm:$0xff]
  %v4833 = vsel %vm800, %v4821, 0
  %4835 = vmatprep.subr.mxu0 0.0
  %4836 = vmatpush1.msra.mxu0 %v4824
  %4837 = vmatprep.subr.mxu0 0.0
  %4838 = vmatpush1.msra.mxu0 %v4825
  %4839 = vmatprep.subr.mxu0 0.0
  %4840 = vmatpush1.msra.mxu0 %v4826
  %4841 = vmatprep.subr.mxu0 0.0
  %4842 = vmatpush1.msra.mxu0 %v4827
  %4843 = vmatprep.subr.mxu0 0.0
  %4844 = vmatpush1.msra.mxu0 %v4828
  %4845 = vmatprep.subr.mxu0 0.0
  %4846 = vmatpush1.msra.mxu0 %v4829
  %4847 = vmatprep.subr.mxu0 0.0
  %4848 = vmatpush1.msra.mxu0 %v4830
  %4849 = vmatprep.subr.mxu0 0.0
  %4850 = vmatpush1.msra.mxu0 %v4831
  %4851 = vmatprep.subr.mxu0 0.0
  %4852 = vmatpush1.msra.mxu0 0.0
  %4853 = vmatprep.subr.mxu0 0.0
  %4854 = vmatpush1.msra.mxu0 0.0
  %4855 = vmatprep.subr.mxu0 0.0
  %4856 = vmatpush1.msra.mxu0 0.0
  %4857 = vmatprep.subr.mxu0 0.0
  %4858 = vmatpush1.msra.mxu0 0.0
  %4859 = vmatprep.subr.mxu0 0.0
  %4860 = vmatpush1.msra.mxu0 0.0
  %4861 = vmatprep.subr.mxu0 0.0
  %4862 = vmatpush1.msra.mxu0 0.0
  %4863 = vmatprep.subr.mxu0 0.0
  %4864 = vmatpush1.msra.mxu0 0.0
  %4865 = vmatprep.subr.mxu0 0.0
  %4866 = vmatpush1.msra.mxu0 0.0
  %4867 = vmatprep.subr.mxu0 0.0
  %4868 = vmatpush1.msra.mxu0 0.0
  %4869 = vmatprep.subr.mxu0 0.0
  %4870 = vmatpush1.msra.mxu0 0.0
  %4871 = vmatprep.subr.mxu0 0.0
  %4872 = vmatpush1.msra.mxu0 0.0
  %4873 = vmatprep.subr.mxu0 0.0
  %4874 = vmatpush1.msra.mxu0 0.0
  %4875 = vmatprep.subr.mxu0 0.0
  %4876 = vmatpush1.msra.mxu0 0.0
  %4877 = vmatprep.subr.mxu0 0.0
  %4878 = vmatpush1.msra.mxu0 0.0
  %4879 = vmatprep.subr.mxu0 0.0
  %4880 = vmatpush1.msra.mxu0 0.0
  %4881 = vmatprep.subr.mxu0 0.0
  %4882 = vmatpush1.msra.mxu0 0.0
  %4883 = vmatprep.subr.mxu0 0.0
  %4884 = vmatpush1.msra.mxu0 0.0
  %4885 = vmatprep.subr.mxu0 0.0
  %4886 = vmatpush1.msra.mxu0 0.0
  %4887 = vmatprep.subr.mxu0 0.0
  %4888 = vmatpush1.msra.mxu0 0.0
  %4889 = vmatprep.subr.mxu0 0.0
  %4890 = vmatpush1.msra.mxu0 0.0
  %4891 = vmatprep.subr.mxu0 0.0
  %4892 = vmatpush1.msra.mxu0 0.0
  %4893 = vmatprep.subr.mxu0 0.0
  %4894 = vmatpush1.msra.mxu0 0.0
  %4895 = vmatprep.subr.mxu0 0.0
  %4896 = vmatpush1.msra.mxu0 0.0
  %4897 = vmatprep.subr.mxu0 0.0
  %4898 = vmatpush1.msra.mxu0 0.0
  %4899 = vmatprep.mubr.f32.mxu0 0.0
  %4900 = vmatmul.mubr.f32.gmra.mrb[0].mxu0 %v4833
  %v4901 = vpop.f32.mrb[0].mxu0
  %v4902 = vadd.f32 0.0, %v4901
  %v4903 = vpop.f32.mrb[0].mxu0
  %4904 = vdwg.mxu0
  %s4905 = scalar_lea.vmem %s7, 256
  %v4906 = vld [vmem:[%s4905] sm:$0xff]
  %v4907 = vld [vmem:[%s4905 + $0x8] sm:$0xff]
  %v4908 = vld [vmem:[%s4905 + $0x10] sm:$0xff]
  %v4909 = vld [vmem:[%s4905 + $0x18] sm:$0xff]
  %v4910 = vld [vmem:[%s4905 + $0x20] sm:$0xff]
  %v4911 = vld [vmem:[%s4905 + $0x28] sm:$0xff]
  %v4912 = vld [vmem:[%s4905 + $0x30] sm:$0xff]
  %v4913 = vld [vmem:[%s4905 + $0x38] sm:$0xff]
  %4914 = vmatprep.subr.mxu0 0.0
  %4915 = vmatpush1.msra.mxu0 %v4906
  %4916 = vmatprep.subr.mxu0 0.0
  %4917 = vmatpush1.msra.mxu0 %v4907
  %4918 = vmatprep.subr.mxu0 0.0
  %4919 = vmatpush1.msra.mxu0 %v4908
  %4920 = vmatprep.subr.mxu0 0.0
  %4921 = vmatpush1.msra.mxu0 %v4909
  %4922 = vmatprep.subr.mxu0 0.0
  %4923 = vmatpush1.msra.mxu0 %v4910
  %4924 = vmatprep.subr.mxu0 0.0
  %4925 = vmatpush1.msra.mxu0 %v4911
  %4926 = vmatprep.subr.mxu0 0.0
  %4927 = vmatpush1.msra.mxu0 %v4912
  %4928 = vmatprep.subr.mxu0 0.0
  %4929 = vmatpush1.msra.mxu0 %v4913
  %4930 = vmatprep.subr.mxu0 0.0
  %4931 = vmatpush1.msra.mxu0 0.0
  %4932 = vmatprep.subr.mxu0 0.0
  %4933 = vmatpush1.msra.mxu0 0.0
  %4934 = vmatprep.subr.mxu0 0.0
  %4935 = vmatpush1.msra.mxu0 0.0
  %4936 = vmatprep.subr.mxu0 0.0
  %4937 = vmatpush1.msra.mxu0 0.0
  %4938 = vmatprep.subr.mxu0 0.0
  %4939 = vmatpush1.msra.mxu0 0.0
  %4940 = vmatprep.subr.mxu0 0.0
  %4941 = vmatpush1.msra.mxu0 0.0
  %4942 = vmatprep.subr.mxu0 0.0
  %4943 = vmatpush1.msra.mxu0 0.0
  %4944 = vmatprep.subr.mxu0 0.0
  %4945 = vmatpush1.msra.mxu0 0.0
  %4946 = vmatprep.subr.mxu0 0.0
  %4947 = vmatpush1.msra.mxu0 0.0
  %4948 = vmatprep.subr.mxu0 0.0
  %4949 = vmatpush1.msra.mxu0 0.0
  %4950 = vmatprep.subr.mxu0 0.0
  %4951 = vmatpush1.msra.mxu0 0.0
  %4952 = vmatprep.subr.mxu0 0.0
  %4953 = vmatpush1.msra.mxu0 0.0
  %4954 = vmatprep.subr.mxu0 0.0
  %4955 = vmatpush1.msra.mxu0 0.0
  %4956 = vmatprep.subr.mxu0 0.0
  %4957 = vmatpush1.msra.mxu0 0.0
  %4958 = vmatprep.subr.mxu0 0.0
  %4959 = vmatpush1.msra.mxu0 0.0
  %4960 = vmatprep.subr.mxu0 0.0
  %4961 = vmatpush1.msra.mxu0 0.0
  %4962 = vmatprep.subr.mxu0 0.0
  %4963 = vmatpush1.msra.mxu0 0.0
  %4964 = vmatprep.subr.mxu0 0.0
  %4965 = vmatpush1.msra.mxu0 0.0
  %4966 = vmatprep.subr.mxu0 0.0
  %4967 = vmatpush1.msra.mxu0 0.0
  %4968 = vmatprep.subr.mxu0 0.0
  %4969 = vmatpush1.msra.mxu0 0.0
  %4970 = vmatprep.subr.mxu0 0.0
  %4971 = vmatpush1.msra.mxu0 0.0
  %4972 = vmatprep.subr.mxu0 0.0
  %4973 = vmatpush1.msra.mxu0 0.0
  %4974 = vmatprep.subr.mxu0 0.0
  %4975 = vmatpush1.msra.mxu0 0.0
  %4976 = vmatprep.subr.mxu0 0.0
  %4977 = vmatpush1.msra.mxu0 0.0
  %4978 = vmatprep.mubr.f32.mxu0 0.0
  %4979 = vmatmul.mubr.f32.gmra.mrb[0].mxu0 %v4833
  %v4980 = vpop.f32.mrb[0].mxu0
  %v4981 = vadd.f32 0.0, %v4980
  %v4982 = vpop.f32.mrb[0].mxu0
  %4983 = vdwg.mxu0
  %s4984 = scalar_lea.vmem %s8, 256
  %v4985 = vld [vmem:[%s4984] sm:$0xff]
  %v4986 = vld [vmem:[%s4984 + $0x8] sm:$0xff]
  %v4987 = vld [vmem:[%s4984 + $0x10] sm:$0xff]
  %v4988 = vld [vmem:[%s4984 + $0x18] sm:$0xff]
  %v4989 = vld [vmem:[%s4984 + $0x20] sm:$0xff]
  %v4990 = vld [vmem:[%s4984 + $0x28] sm:$0xff]
  %v4991 = vld [vmem:[%s4984 + $0x30] sm:$0xff]
  %v4992 = vld [vmem:[%s4984 + $0x38] sm:$0xff]
  %4993 = vmatprep.subr.mxu0 0.0
  %4994 = vmatpush1.msra.mxu0 %v4985
  %4995 = vmatprep.subr.mxu0 0.0
  %4996 = vmatpush1.msra.mxu0 %v4986
  %4997 = vmatprep.subr.mxu0 0.0
  %4998 = vmatpush1.msra.mxu0 %v4987
  %4999 = vmatprep.subr.mxu0 0.0
  %5000 = vmatpush1.msra.mxu0 %v4988
  %5001 = vmatprep.subr.mxu0 0.0
  %5002 = vmatpush1.msra.mxu0 %v4989
  %5003 = vmatprep.subr.mxu0 0.0
  %5004 = vmatpush1.msra.mxu0 %v4990
  %5005 = vmatprep.subr.mxu0 0.0
  %5006 = vmatpush1.msra.mxu0 %v4991
  %5007 = vmatprep.subr.mxu0 0.0
  %5008 = vmatpush1.msra.mxu0 %v4992
  %5009 = vmatprep.subr.mxu0 0.0
  %5010 = vmatpush1.msra.mxu0 0.0
  %5011 = vmatprep.subr.mxu0 0.0
  %5012 = vmatpush1.msra.mxu0 0.0
  %5013 = vmatprep.subr.mxu0 0.0
  %5014 = vmatpush1.msra.mxu0 0.0
  %5015 = vmatprep.subr.mxu0 0.0
  %5016 = vmatpush1.msra.mxu0 0.0
  %5017 = vmatprep.subr.mxu0 0.0
  %5018 = vmatpush1.msra.mxu0 0.0
  %5019 = vmatprep.subr.mxu0 0.0
  %5020 = vmatpush1.msra.mxu0 0.0
  %5021 = vmatprep.subr.mxu0 0.0
  %5022 = vmatpush1.msra.mxu0 0.0
  %5023 = vmatprep.subr.mxu0 0.0
  %5024 = vmatpush1.msra.mxu0 0.0
  %5025 = vmatprep.subr.mxu0 0.0
  %5026 = vmatpush1.msra.mxu0 0.0
  %5027 = vmatprep.subr.mxu0 0.0
  %5028 = vmatpush1.msra.mxu0 0.0
  %5029 = vmatprep.subr.mxu0 0.0
  %5030 = vmatpush1.msra.mxu0 0.0
  %5031 = vmatprep.subr.mxu0 0.0
  %5032 = vmatpush1.msra.mxu0 0.0
  %5033 = vmatprep.subr.mxu0 0.0
  %5034 = vmatpush1.msra.mxu0 0.0
  %5035 = vmatprep.subr.mxu0 0.0
  %5036 = vmatpush1.msra.mxu0 0.0
  %5037 = vmatprep.subr.mxu0 0.0
  %5038 = vmatpush1.msra.mxu0 0.0
  %5039 = vmatprep.subr.mxu0 0.0
  %5040 = vmatpush1.msra.mxu0 0.0
  %5041 = vmatprep.subr.mxu0 0.0
  %5042 = vmatpush1.msra.mxu0 0.0
  %5043 = vmatprep.subr.mxu0 0.0
  %5044 = vmatpush1.msra.mxu0 0.0
  %5045 = vmatprep.subr.mxu0 0.0
  %5046 = vmatpush1.msra.mxu0 0.0
  %5047 = vmatprep.subr.mxu0 0.0
  %5048 = vmatpush1.msra.mxu0 0.0
  %5049 = vmatprep.subr.mxu0 0.0
  %5050 = vmatpush1.msra.mxu0 0.0
  %5051 = vmatprep.subr.mxu0 0.0
  %5052 = vmatpush1.msra.mxu0 0.0
  %5053 = vmatprep.subr.mxu0 0.0
  %5054 = vmatpush1.msra.mxu0 0.0
  %5055 = vmatprep.subr.mxu0 0.0
  %5056 = vmatpush1.msra.mxu0 0.0
  %5057 = vmatprep.mubr.f32.mxu0 0.0
  %5058 = vmatmul.mubr.f32.gmra.mrb[0].mxu0 %v4833
  %v5059 = vpop.f32.mrb[0].mxu0
  %v5060 = vadd.f32 0.0, %v5059
  %v5061 = vpop.f32.mrb[0].mxu0
  %5062 = vdwg.mxu0
  %v5064 = vsel %vm1081, %v4902, 0
  %v5067 = vsel %vm1081, %v4981, 0
  %5069 = vmatprep.subr.mxu0 0.0
  %5070 = vmatpush1.xpose.msra.mxu0 %v5067
  %5071 = vmatprep.subr.mxu0 0.0
  %5072 = vmatpush1.xpose.msra.mxu0 0.0
  %5073 = vmatprep.subr.mxu0 0.0
  %5074 = vmatpush1.xpose.msra.mxu0 0.0
  %5075 = vmatprep.subr.mxu0 0.0
  %5076 = vmatpush1.xpose.msra.mxu0 0.0
  %5077 = vmatprep.subr.mxu0 0.0
  %5078 = vmatpush1.xpose.msra.mxu0 0.0
  %5079 = vmatprep.subr.mxu0 0.0
  %5080 = vmatpush1.xpose.msra.mxu0 0.0
  %5081 = vmatprep.subr.mxu0 0.0
  %5082 = vmatpush1.xpose.msra.mxu0 0.0
  %5083 = vmatprep.subr.mxu0 0.0
  %5084 = vmatpush1.xpose.msra.mxu0 0.0
  %5085 = vmatprep.subr.mxu0 0.0
  %5086 = vmatpush1.xpose.msra.mxu0 0.0
  %5087 = vmatprep.subr.mxu0 0.0
  %5088 = vmatpush1.xpose.msra.mxu0 0.0
  %5089 = vmatprep.subr.mxu0 0.0
  %5090 = vmatpush1.xpose.msra.mxu0 0.0
  %5091 = vmatprep.subr.mxu0 0.0
  %5092 = vmatpush1.xpose.msra.mxu0 0.0
  %5093 = vmatprep.subr.mxu0 0.0
  %5094 = vmatpush1.xpose.msra.mxu0 0.0
  %5095 = vmatprep.subr.mxu0 0.0
  %5096 = vmatpush1.xpose.msra.mxu0 0.0
  %5097 = vmatprep.subr.mxu0 0.0
  %5098 = vmatpush1.xpose.msra.mxu0 0.0
  %5099 = vmatprep.subr.mxu0 0.0
  %5100 = vmatpush1.xpose.msra.mxu0 0.0
  %5101 = vmatprep.subr.mxu0 0.0
  %5102 = vmatpush1.xpose.msra.mxu0 0.0
  %5103 = vmatprep.subr.mxu0 0.0
  %5104 = vmatpush1.xpose.msra.mxu0 0.0
  %5105 = vmatprep.subr.mxu0 0.0
  %5106 = vmatpush1.xpose.msra.mxu0 0.0
  %5107 = vmatprep.subr.mxu0 0.0
  %5108 = vmatpush1.xpose.msra.mxu0 0.0
  %5109 = vmatprep.subr.mxu0 0.0
  %5110 = vmatpush1.xpose.msra.mxu0 0.0
  %5111 = vmatprep.subr.mxu0 0.0
  %5112 = vmatpush1.xpose.msra.mxu0 0.0
  %5113 = vmatprep.subr.mxu0 0.0
  %5114 = vmatpush1.xpose.msra.mxu0 0.0
  %5115 = vmatprep.subr.mxu0 0.0
  %5116 = vmatpush1.xpose.msra.mxu0 0.0
  %5117 = vmatprep.subr.mxu0 0.0
  %5118 = vmatpush1.xpose.msra.mxu0 0.0
  %5119 = vmatprep.subr.mxu0 0.0
  %5120 = vmatpush1.xpose.msra.mxu0 0.0
  %5121 = vmatprep.subr.mxu0 0.0
  %5122 = vmatpush1.xpose.msra.mxu0 0.0
  %5123 = vmatprep.subr.mxu0 0.0
  %5124 = vmatpush1.xpose.msra.mxu0 0.0
  %5125 = vmatprep.subr.mxu0 0.0
  %5126 = vmatpush1.xpose.msra.mxu0 0.0
  %5127 = vmatprep.subr.mxu0 0.0
  %5128 = vmatpush1.xpose.msra.mxu0 0.0
  %5129 = vmatprep.subr.mxu0 0.0
  %5130 = vmatpush1.xpose.msra.mxu0 0.0
  %5131 = vmatprep.subr.mxu0 0.0
  %5132 = vmatpush1.xpose.msra.mxu0 0.0
  %5133 = vmatprep.mubr.f32.mxu0 0.0
  %5134 = vmatmul.mubr.f32.gmra.mrb[0].mxu0 %v5064
  %v5135 = vpop.f32.mrb[0].mxu0
  %v5136 = vadd.f32 0.0, %v5135
  %v5137 = vpop.f32.mrb[0].mxu0
  %5138 = vdwg.mxu0
  %v5139 = vsel %vm1158, %v5136, -inf
  %5140 = vmax.xlane.f32.xlu0 %v5139
  %v5141 = vpop.xlane.xlu0 %5140
  %v5142 = vsub.f32 %v5136, %v5141
  %v5143 = vmul.f32 %v5142, 1.442695
  %v5144 = vpow.pop %v5143
  %v5145 = vsel %vm1158, %v5144, 0.0
  %5146 = vadd.xlane.f32.xlu0 %v5145
  %v5147 = vpop.xlane.xlu0 %5146
  %v5148 = vrcp.pop %v5147
  %v5149 = vmul.f32 %v5144, %v5148
  %v5151 = vsel %vm1158, %v5149, 0
  %5153 = vmatprep.subr.mxu0 0.0
  %5154 = vmatpush1.msra.mxu0 %v5060
  %5155 = vmatprep.subr.mxu0 0.0
  %5156 = vmatpush1.msra.mxu0 0.0
  %5157 = vmatprep.subr.mxu0 0.0
  %5158 = vmatpush1.msra.mxu0 0.0
  %5159 = vmatprep.subr.mxu0 0.0
  %5160 = vmatpush1.msra.mxu0 0.0
  %5161 = vmatprep.subr.mxu0 0.0
  %5162 = vmatpush1.msra.mxu0 0.0
  %5163 = vmatprep.subr.mxu0 0.0
  %5164 = vmatpush1.msra.mxu0 0.0
  %5165 = vmatprep.subr.mxu0 0.0
  %5166 = vmatpush1.msra.mxu0 0.0
  %5167 = vmatprep.subr.mxu0 0.0
  %5168 = vmatpush1.msra.mxu0 0.0
  %5169 = vmatprep.subr.mxu0 0.0
  %5170 = vmatpush1.msra.mxu0 0.0
  %5171 = vmatprep.subr.mxu0 0.0
  %5172 = vmatpush1.msra.mxu0 0.0
  %5173 = vmatprep.subr.mxu0 0.0
  %5174 = vmatpush1.msra.mxu0 0.0
  %5175 = vmatprep.subr.mxu0 0.0
  %5176 = vmatpush1.msra.mxu0 0.0
  %5177 = vmatprep.subr.mxu0 0.0
  %5178 = vmatpush1.msra.mxu0 0.0
  %5179 = vmatprep.subr.mxu0 0.0
  %5180 = vmatpush1.msra.mxu0 0.0
  %5181 = vmatprep.subr.mxu0 0.0
  %5182 = vmatpush1.msra.mxu0 0.0
  %5183 = vmatprep.subr.mxu0 0.0
  %5184 = vmatpush1.msra.mxu0 0.0
  %5185 = vmatprep.subr.mxu0 0.0
  %5186 = vmatpush1.msra.mxu0 0.0
  %5187 = vmatprep.subr.mxu0 0.0
  %5188 = vmatpush1.msra.mxu0 0.0
  %5189 = vmatprep.subr.mxu0 0.0
  %5190 = vmatpush1.msra.mxu0 0.0
  %5191 = vmatprep.subr.mxu0 0.0
  %5192 = vmatpush1.msra.mxu0 0.0
  %5193 = vmatprep.subr.mxu0 0.0
  %5194 = vmatpush1.msra.mxu0 0.0
  %5195 = vmatprep.subr.mxu0 0.0
  %5196 = vmatpush1.msra.mxu0 0.0
  %5197 = vmatprep.subr.mxu0 0.0
  %5198 = vmatpush1.msra.mxu0 0.0
  %5199 = vmatprep.subr.mxu0 0.0
  %5200 = vmatpush1.msra.mxu0 0.0
  %5201 = vmatprep.subr.mxu0 0.0
  %5202 = vmatpush1.msra.mxu0 0.0
  %5203 = vmatprep.subr.mxu0 0.0
  %5204 = vmatpush1.msra.mxu0 0.0
  %5205 = vmatprep.subr.mxu0 0.0
  %5206 = vmatpush1.msra.mxu0 0.0
  %5207 = vmatprep.subr.mxu0 0.0
  %5208 = vmatpush1.msra.mxu0 0.0
  %5209 = vmatprep.subr.mxu0 0.0
  %5210 = vmatpush1.msra.mxu0 0.0
  %5211 = vmatprep.subr.mxu0 0.0
  %5212 = vmatpush1.msra.mxu0 0.0
  %5213 = vmatprep.subr.mxu0 0.0
  %5214 = vmatpush1.msra.mxu0 0.0
  %5215 = vmatprep.subr.mxu0 0.0
  %5216 = vmatpush1.msra.mxu0 0.0
  %5217 = vmatprep.mubr.f32.mxu0 0.0
  %5218 = vmatmul.mubr.f32.gmra.mrb[0].mxu0 %v5151
  %v5219 = vpop.f32.mrb[0].mxu0
  %v5220 = vadd.f32 0.0, %v5219
  %v5221 = vpop.f32.mrb[0].mxu0
  %5222 = vdwg.mxu0
  %s5223 = scalar_lea.vmem %s9, 64
  %v5224 = vld [vmem:[%s5223] sm:$0xff]
  %v5225 = vld [vmem:[%s5223 + $0x8] sm:$0xff]
  %s5226 = scalar_lea.vmem %s6, 320
  %v5227 = vld [vmem:[%s5226] sm:$0xff]
  %v5228 = vld [vmem:[%s5226 + $0x8] sm:$0xff]
  %v5229 = vld [vmem:[%s5226 + $0x10] sm:$0xff]
  %v5230 = vld [vmem:[%s5226 + $0x18] sm:$0xff]
  %v5231 = vld [vmem:[%s5226 + $0x20] sm:$0xff]
  %v5232 = vld [vmem:[%s5226 + $0x28] sm:$0xff]
  %v5233 = vld [vmem:[%s5226 + $0x30] sm:$0xff]
  %v5234 = vld [vmem:[%s5226 + $0x38] sm:$0xff]
  %5235 = vmatprep.subr.mxu0 0.0
  %5236 = vmatpush1.msra.mxu0 %v5227
  %5237 = vmatprep.subr.mxu0 0.0
  %5238 = vmatpush1.msra.mxu0 %v5228
  %5239 = vmatprep.subr.mxu0 0.0
  %5240 = vmatpush1.msra.mxu0 %v5229
  %5241 = vmatprep.subr.mxu0 0.0
  %5242 = vmatpush1.msra.mxu0 %v5230
  %5243 = vmatprep.subr.mxu0 0.0
  %5244 = vmatpush1.msra.mxu0 %v5231
  %5245 = vmatprep.subr.mxu0 0.0
  %5246 = vmatpush1.msra.mxu0 %v5232
  %5247 = vmatprep.subr.mxu0 0.0
  %5248 = vmatpush1.msra.mxu0 %v5233
  %5249 = vmatprep.subr.mxu0 0.0
  %5250 = vmatpush1.msra.mxu0 %v5234
  %5251 = vmatprep.subr.mxu0 0.0
  %5252 = vmatpush1.msra.mxu0 0.0
  %5253 = vmatprep.subr.mxu0 0.0
  %5254 = vmatpush1.msra.mxu0 0.0
  %5255 = vmatprep.subr.mxu0 0.0
  %5256 = vmatpush1.msra.mxu0 0.0
  %5257 = vmatprep.subr.mxu0 0.0
  %5258 = vmatpush1.msra.mxu0 0.0
  %5259 = vmatprep.subr.mxu0 0.0
  %5260 = vmatpush1.msra.mxu0 0.0
  %5261 = vmatprep.subr.mxu0 0.0
  %5262 = vmatpush1.msra.mxu0 0.0
  %5263 = vmatprep.subr.mxu0 0.0
  %5264 = vmatpush1.msra.mxu0 0.0
  %5265 = vmatprep.subr.mxu0 0.0
  %5266 = vmatpush1.msra.mxu0 0.0
  %5267 = vmatprep.subr.mxu0 0.0
  %5268 = vmatpush1.msra.mxu0 0.0
  %5269 = vmatprep.subr.mxu0 0.0
  %5270 = vmatpush1.msra.mxu0 0.0
  %5271 = vmatprep.subr.mxu0 0.0
  %5272 = vmatpush1.msra.mxu0 0.0
  %5273 = vmatprep.subr.mxu0 0.0
  %5274 = vmatpush1.msra.mxu0 0.0
  %5275 = vmatprep.subr.mxu0 0.0
  %5276 = vmatpush1.msra.mxu0 0.0
  %5277 = vmatprep.subr.mxu0 0.0
  %5278 = vmatpush1.msra.mxu0 0.0
  %5279 = vmatprep.subr.mxu0 0.0
  %5280 = vmatpush1.msra.mxu0 0.0
  %5281 = vmatprep.subr.mxu0 0.0
  %5282 = vmatpush1.msra.mxu0 0.0
  %5283 = vmatprep.subr.mxu0 0.0
  %5284 = vmatpush1.msra.mxu0 0.0
  %5285 = vmatprep.subr.mxu0 0.0
  %5286 = vmatpush1.msra.mxu0 0.0
  %5287 = vmatprep.subr.mxu0 0.0
  %5288 = vmatpush1.msra.mxu0 0.0
  %5289 = vmatprep.subr.mxu0 0.0
  %5290 = vmatpush1.msra.mxu0 0.0
  %5291 = vmatprep.subr.mxu0 0.0
  %5292 = vmatpush1.msra.mxu0 0.0
  %5293 = vmatprep.subr.mxu0 0.0
  %5294 = vmatpush1.msra.mxu0 0.0
  %5295 = vmatprep.subr.mxu0 0.0
  %5296 = vmatpush1.msra.mxu0 0.0
  %5297 = vmatprep.subr.mxu0 0.0
  %5298 = vmatpush1.msra.mxu0 0.0
  %5299 = vmatprep.mubr.f32.mxu0 0.0
  %5300 = vmatmul.mubr.f32.gmra.mrb[0].mxu0 %v4833
  %v5301 = vpop.f32.mrb[0].mxu0
  %v5302 = vadd.f32 0.0, %v5301
  %v5303 = vpop.f32.mrb[0].mxu0
  %5304 = vdwg.mxu0
  %s5305 = scalar_lea.vmem %s7, 320
  %v5306 = vld [vmem:[%s5305] sm:$0xff]
  %v5307 = vld [vmem:[%s5305 + $0x8] sm:$0xff]
  %v5308 = vld [vmem:[%s5305 + $0x10] sm:$0xff]
  %v5309 = vld [vmem:[%s5305 + $0x18] sm:$0xff]
  %v5310 = vld [vmem:[%s5305 + $0x20] sm:$0xff]
  %v5311 = vld [vmem:[%s5305 + $0x28] sm:$0xff]
  %v5312 = vld [vmem:[%s5305 + $0x30] sm:$0xff]
  %v5313 = vld [vmem:[%s5305 + $0x38] sm:$0xff]
  %5314 = vmatprep.subr.mxu0 0.0
  %5315 = vmatpush1.msra.mxu0 %v5306
  %5316 = vmatprep.subr.mxu0 0.0
  %5317 = vmatpush1.msra.mxu0 %v5307
  %5318 = vmatprep.subr.mxu0 0.0
  %5319 = vmatpush1.msra.mxu0 %v5308
  %5320 = vmatprep.subr.mxu0 0.0
  %5321 = vmatpush1.msra.mxu0 %v5309
  %5322 = vmatprep.subr.mxu0 0.0
  %5323 = vmatpush1.msra.mxu0 %v5310
  %5324 = vmatprep.subr.mxu0 0.0
  %5325 = vmatpush1.msra.mxu0 %v5311
  %5326 = vmatprep.subr.mxu0 0.0
  %5327 = vmatpush1.msra.mxu0 %v5312
  %5328 = vmatprep.subr.mxu0 0.0
  %5329 = vmatpush1.msra.mxu0 %v5313
  %5330 = vmatprep.subr.mxu0 0.0
  %5331 = vmatpush1.msra.mxu0 0.0
  %5332 = vmatprep.subr.mxu0 0.0
  %5333 = vmatpush1.msra.mxu0 0.0
  %5334 = vmatprep.subr.mxu0 0.0
  %5335 = vmatpush1.msra.mxu0 0.0
  %5336 = vmatprep.subr.mxu0 0.0
  %5337 = vmatpush1.msra.mxu0 0.0
  %5338 = vmatprep.subr.mxu0 0.0
  %5339 = vmatpush1.msra.mxu0 0.0
  %5340 = vmatprep.subr.mxu0 0.0
  %5341 = vmatpush1.msra.mxu0 0.0
  %5342 = vmatprep.subr.mxu0 0.0
  %5343 = vmatpush1.msra.mxu0 0.0
  %5344 = vmatprep.subr.mxu0 0.0
  %5345 = vmatpush1.msra.mxu0 0.0
  %5346 = vmatprep.subr.mxu0 0.0
  %5347 = vmatpush1.msra.mxu0 0.0
  %5348 = vmatprep.subr.mxu0 0.0
  %5349 = vmatpush1.msra.mxu0 0.0
  %5350 = vmatprep.subr.mxu0 0.0
  %5351 = vmatpush1.msra.mxu0 0.0
  %5352 = vmatprep.subr.mxu0 0.0
  %5353 = vmatpush1.msra.mxu0 0.0
  %5354 = vmatprep.subr.mxu0 0.0
  %5355 = vmatpush1.msra.mxu0 0.0
  %5356 = vmatprep.subr.mxu0 0.0
  %5357 = vmatpush1.msra.mxu0 0.0
  %5358 = vmatprep.subr.mxu0 0.0
  %5359 = vmatpush1.msra.mxu0 0.0
  %5360 = vmatprep.subr.mxu0 0.0
  %5361 = vmatpush1.msra.mxu0 0.0
  %5362 = vmatprep.subr.mxu0 0.0
  %5363 = vmatpush1.msra.mxu0 0.0
  %5364 = vmatprep.subr.mxu0 0.0
  %5365 = vmatpush1.msra.mxu0 0.0
  %5366 = vmatprep.subr.mxu0 0.0
  %5367 = vmatpush1.msra.mxu0 0.0
  %5368 = vmatprep.subr.mxu0 0.0
  %5369 = vmatpush1.msra.mxu0 0.0
  %5370 = vmatprep.subr.mxu0 0.0
  %5371 = vmatpush1.msra.mxu0 0.0
  %5372 = vmatprep.subr.mxu0 0.0
  %5373 = vmatpush1.msra.mxu0 0.0
  %5374 = vmatprep.subr.mxu0 0.0
  %5375 = vmatpush1.msra.mxu0 0.0
  %5376 = vmatprep.subr.mxu0 0.0
  %5377 = vmatpush1.msra.mxu0 0.0
  %5378 = vmatprep.mubr.f32.mxu0 0.0
  %5379 = vmatmul.mubr.f32.gmra.mrb[0].mxu0 %v4833
  %v5380 = vpop.f32.mrb[0].mxu0
  %v5381 = vadd.f32 0.0, %v5380
  %v5382 = vpop.f32.mrb[0].mxu0
  %5383 = vdwg.mxu0
  %s5384 = scalar_lea.vmem %s8, 320
  %v5385 = vld [vmem:[%s5384] sm:$0xff]
  %v5386 = vld [vmem:[%s5384 + $0x8] sm:$0xff]
  %v5387 = vld [vmem:[%s5384 + $0x10] sm:$0xff]
  %v5388 = vld [vmem:[%s5384 + $0x18] sm:$0xff]
  %v5389 = vld [vmem:[%s5384 + $0x20] sm:$0xff]
  %v5390 = vld [vmem:[%s5384 + $0x28] sm:$0xff]
  %v5391 = vld [vmem:[%s5384 + $0x30] sm:$0xff]
  %v5392 = vld [vmem:[%s5384 + $0x38] sm:$0xff]
  %5393 = vmatprep.subr.mxu0 0.0
  %5394 = vmatpush1.msra.mxu0 %v5385
  %5395 = vmatprep.subr.mxu0 0.0
  %5396 = vmatpush1.msra.mxu0 %v5386
  %5397 = vmatprep.subr.mxu0 0.0
  %5398 = vmatpush1.msra.mxu0 %v5387
  %5399 = vmatprep.subr.mxu0 0.0
  %5400 = vmatpush1.msra.mxu0 %v5388
  %5401 = vmatprep.subr.mxu0 0.0
  %5402 = vmatpush1.msra.mxu0 %v5389
  %5403 = vmatprep.subr.mxu0 0.0
  %5404 = vmatpush1.msra.mxu0 %v5390
  %5405 = vmatprep.subr.mxu0 0.0
  %5406 = vmatpush1.msra.mxu0 %v5391
  %5407 = vmatprep.subr.mxu0 0.0
  %5408 = vmatpush1.msra.mxu0 %v5392
  %5409 = vmatprep.subr.mxu0 0.0
  %5410 = vmatpush1.msra.mxu0 0.0
  %5411 = vmatprep.subr.mxu0 0.0
  %5412 = vmatpush1.msra.mxu0 0.0
  %5413 = vmatprep.subr.mxu0 0.0
  %5414 = vmatpush1.msra.mxu0 0.0
  %5415 = vmatprep.subr.mxu0 0.0
  %5416 = vmatpush1.msra.mxu0 0.0
  %5417 = vmatprep.subr.mxu0 0.0
  %5418 = vmatpush1.msra.mxu0 0.0
  %5419 = vmatprep.subr.mxu0 0.0
  %5420 = vmatpush1.msra.mxu0 0.0
  %5421 = vmatprep.subr.mxu0 0.0
  %5422 = vmatpush1.msra.mxu0 0.0
  %5423 = vmatprep.subr.mxu0 0.0
  %5424 = vmatpush1.msra.mxu0 0.0
  %5425 = vmatprep.subr.mxu0 0.0
  %5426 = vmatpush1.msra.mxu0 0.0
  %5427 = vmatprep.subr.mxu0 0.0
  %5428 = vmatpush1.msra.mxu0 0.0
  %5429 = vmatprep.subr.mxu0 0.0
  %5430 = vmatpush1.msra.mxu0 0.0
  %5431 = vmatprep.subr.mxu0 0.0
  %5432 = vmatpush1.msra.mxu0 0.0
  %5433 = vmatprep.subr.mxu0 0.0
  %5434 = vmatpush1.msra.mxu0 0.0
  %5435 = vmatprep.subr.mxu0 0.0
  %5436 = vmatpush1.msra.mxu0 0.0
  %5437 = vmatprep.subr.mxu0 0.0
  %5438 = vmatpush1.msra.mxu0 0.0
  %5439 = vmatprep.subr.mxu0 0.0
  %5440 = vmatpush1.msra.mxu0 0.0
  %5441 = vmatprep.subr.mxu0 0.0
  %5442 = vmatpush1.msra.mxu0 0.0
  %5443 = vmatprep.subr.mxu0 0.0
  %5444 = vmatpush1.msra.mxu0 0.0
  %5445 = vmatprep.subr.mxu0 0.0
  %5446 = vmatpush1.msra.mxu0 0.0
  %5447 = vmatprep.subr.mxu0 0.0
  %5448 = vmatpush1.msra.mxu0 0.0
  %5449 = vmatprep.subr.mxu0 0.0
  %5450 = vmatpush1.msra.mxu0 0.0
  %5451 = vmatprep.subr.mxu0 0.0
  %5452 = vmatpush1.msra.mxu0 0.0
  %5453 = vmatprep.subr.mxu0 0.0
  %5454 = vmatpush1.msra.mxu0 0.0
  %5455 = vmatprep.subr.mxu0 0.0
  %5456 = vmatpush1.msra.mxu0 0.0
  %5457 = vmatprep.mubr.f32.mxu0 0.0
  %5458 = vmatmul.mubr.f32.gmra.mrb[0].mxu0 %v4833
  %v5459 = vpop.f32.mrb[0].mxu0
  %v5460 = vadd.f32 0.0, %v5459
  %v5461 = vpop.f32.mrb[0].mxu0
  %5462 = vdwg.mxu0
  %v5464 = vsel %vm1081, %v5302, 0
  %v5467 = vsel %vm1081, %v5381, 0
  %5469 = vmatprep.subr.mxu0 0.0
  %5470 = vmatpush1.xpose.msra.mxu0 %v5467
  %5471 = vmatprep.subr.mxu0 0.0
  %5472 = vmatpush1.xpose.msra.mxu0 0.0
  %5473 = vmatprep.subr.mxu0 0.0
  %5474 = vmatpush1.xpose.msra.mxu0 0.0
  %5475 = vmatprep.subr.mxu0 0.0
  %5476 = vmatpush1.xpose.msra.mxu0 0.0
  %5477 = vmatprep.subr.mxu0 0.0
  %5478 = vmatpush1.xpose.msra.mxu0 0.0
  %5479 = vmatprep.subr.mxu0 0.0
  %5480 = vmatpush1.xpose.msra.mxu0 0.0
  %5481 = vmatprep.subr.mxu0 0.0
  %5482 = vmatpush1.xpose.msra.mxu0 0.0
  %5483 = vmatprep.subr.mxu0 0.0
  %5484 = vmatpush1.xpose.msra.mxu0 0.0
  %5485 = vmatprep.subr.mxu0 0.0
  %5486 = vmatpush1.xpose.msra.mxu0 0.0
  %5487 = vmatprep.subr.mxu0 0.0
  %5488 = vmatpush1.xpose.msra.mxu0 0.0
  %5489 = vmatprep.subr.mxu0 0.0
  %5490 = vmatpush1.xpose.msra.mxu0 0.0
  %5491 = vmatprep.subr.mxu0 0.0
  %5492 = vmatpush1.xpose.msra.mxu0 0.0
  %5493 = vmatprep.subr.mxu0 0.0
  %5494 = vmatpush1.xpose.msra.mxu0 0.0
  %5495 = vmatprep.subr.mxu0 0.0
  %5496 = vmatpush1.xpose.msra.mxu0 0.0
  %5497 = vmatprep.subr.mxu0 0.0
  %5498 = vmatpush1.xpose.msra.mxu0 0.0
  %5499 = vmatprep.subr.mxu0 0.0
  %5500 = vmatpush1.xpose.msra.mxu0 0.0
  %5501 = vmatprep.subr.mxu0 0.0
  %5502 = vmatpush1.xpose.msra.mxu0 0.0
  %5503 = vmatprep.subr.mxu0 0.0
  %5504 = vmatpush1.xpose.msra.mxu0 0.0
  %5505 = vmatprep.subr.mxu0 0.0
  %5506 = vmatpush1.xpose.msra.mxu0 0.0
  %5507 = vmatprep.subr.mxu0 0.0
  %5508 = vmatpush1.xpose.msra.mxu0 0.0
  %5509 = vmatprep.subr.mxu0 0.0
  %5510 = vmatpush1.xpose.msra.mxu0 0.0
  %5511 = vmatprep.subr.mxu0 0.0
  %5512 = vmatpush1.xpose.msra.mxu0 0.0
  %5513 = vmatprep.subr.mxu0 0.0
  %5514 = vmatpush1.xpose.msra.mxu0 0.0
  %5515 = vmatprep.subr.mxu0 0.0
  %5516 = vmatpush1.xpose.msra.mxu0 0.0
  %5517 = vmatprep.subr.mxu0 0.0
  %5518 = vmatpush1.xpose.msra.mxu0 0.0
  %5519 = vmatprep.subr.mxu0 0.0
  %5520 = vmatpush1.xpose.msra.mxu0 0.0
  %5521 = vmatprep.subr.mxu0 0.0
  %5522 = vmatpush1.xpose.msra.mxu0 0.0
  %5523 = vmatprep.subr.mxu0 0.0
  %5524 = vmatpush1.xpose.msra.mxu0 0.0
  %5525 = vmatprep.subr.mxu0 0.0
  %5526 = vmatpush1.xpose.msra.mxu0 0.0
  %5527 = vmatprep.subr.mxu0 0.0
  %5528 = vmatpush1.xpose.msra.mxu0 0.0
  %5529 = vmatprep.subr.mxu0 0.0
  %5530 = vmatpush1.xpose.msra.mxu0 0.0
  %5531 = vmatprep.subr.mxu0 0.0
  %5532 = vmatpush1.xpose.msra.mxu0 0.0
  %5533 = vmatprep.mubr.f32.mxu0 0.0
  %5534 = vmatmul.mubr.f32.gmra.mrb[0].mxu0 %v5464
  %v5535 = vpop.f32.mrb[0].mxu0
  %v5536 = vadd.f32 0.0, %v5535
  %v5537 = vpop.f32.mrb[0].mxu0
  %5538 = vdwg.mxu0
  %v5539 = vsel %vm1158, %v5536, -inf
  %5540 = vmax.xlane.f32.xlu0 %v5539
  %v5541 = vpop.xlane.xlu0 %5540
  %v5542 = vsub.f32 %v5536, %v5541
  %v5543 = vmul.f32 %v5542, 1.442695
  %v5544 = vpow.pop %v5543
  %v5545 = vsel %vm1158, %v5544, 0.0
  %5546 = vadd.xlane.f32.xlu0 %v5545
  %v5547 = vpop.xlane.xlu0 %5546
  %v5548 = vrcp.pop %v5547
  %v5549 = vmul.f32 %v5544, %v5548
  %v5551 = vsel %vm1158, %v5549, 0
  %5553 = vmatprep.subr.mxu0 0.0
  %5554 = vmatpush1.msra.mxu0 %v5460
  %5555 = vmatprep.subr.mxu0 0.0
  %5556 = vmatpush1.msra.mxu0 0.0
  %5557 = vmatprep.subr.mxu0 0.0
  %5558 = vmatpush1.msra.mxu0 0.0
  %5559 = vmatprep.subr.mxu0 0.0
  %5560 = vmatpush1.msra.mxu0 0.0
  %5561 = vmatprep.subr.mxu0 0.0
  %5562 = vmatpush1.msra.mxu0 0.0
  %5563 = vmatprep.subr.mxu0 0.0
  %5564 = vmatpush1.msra.mxu0 0.0
  %5565 = vmatprep.subr.mxu0 0.0
  %5566 = vmatpush1.msra.mxu0 0.0
  %5567 = vmatprep.subr.mxu0 0.0
  %5568 = vmatpush1.msra.mxu0 0.0
  %5569 = vmatprep.subr.mxu0 0.0
  %5570 = vmatpush1.msra.mxu0 0.0
  %5571 = vmatprep.subr.mxu0 0.0
  %5572 = vmatpush1.msra.mxu0 0.0
  %5573 = vmatprep.subr.mxu0 0.0
  %5574 = vmatpush1.msra.mxu0 0.0
  %5575 = vmatprep.subr.mxu0 0.0
  %5576 = vmatpush1.msra.mxu0 0.0
  %5577 = vmatprep.subr.mxu0 0.0
  %5578 = vmatpush1.msra.mxu0 0.0
  %5579 = vmatprep.subr.mxu0 0.0
  %5580 = vmatpush1.msra.mxu0 0.0
  %5581 = vmatprep.subr.mxu0 0.0
  %5582 = vmatpush1.msra.mxu0 0.0
  %5583 = vmatprep.subr.mxu0 0.0
  %5584 = vmatpush1.msra.mxu0 0.0
  %5585 = vmatprep.subr.mxu0 0.0
  %5586 = vmatpush1.msra.mxu0 0.0
  %5587 = vmatprep.subr.mxu0 0.0
  %5588 = vmatpush1.msra.mxu0 0.0
  %5589 = vmatprep.subr.mxu0 0.0
  %5590 = vmatpush1.msra.mxu0 0.0
  %5591 = vmatprep.subr.mxu0 0.0
  %5592 = vmatpush1.msra.mxu0 0.0
  %5593 = vmatprep.subr.mxu0 0.0
  %5594 = vmatpush1.msra.mxu0 0.0
  %5595 = vmatprep.subr.mxu0 0.0
  %5596 = vmatpush1.msra.mxu0 0.0
  %5597 = vmatprep.subr.mxu0 0.0
  %5598 = vmatpush1.msra.mxu0 0.0
  %5599 = vmatprep.subr.mxu0 0.0
  %5600 = vmatpush1.msra.mxu0 0.0
  %5601 = vmatprep.subr.mxu0 0.0
  %5602 = vmatpush1.msra.mxu0 0.0
  %5603 = vmatprep.subr.mxu0 0.0
  %5604 = vmatpush1.msra.mxu0 0.0
  %5605 = vmatprep.subr.mxu0 0.0
  %5606 = vmatpush1.msra.mxu0 0.0
  %5607 = vmatprep.subr.mxu0 0.0
  %5608 = vmatpush1.msra.mxu0 0.0
  %5609 = vmatprep.subr.mxu0 0.0
  %5610 = vmatpush1.msra.mxu0 0.0
  %5611 = vmatprep.subr.mxu0 0.0
  %5612 = vmatpush1.msra.mxu0 0.0
  %5613 = vmatprep.subr.mxu0 0.0
  %5614 = vmatpush1.msra.mxu0 0.0
  %5615 = vmatprep.subr.mxu0 0.0
  %5616 = vmatpush1.msra.mxu0 0.0
  %5617 = vmatprep.mubr.f32.mxu0 0.0
  %5618 = vmatmul.mubr.f32.gmra.mrb[0].mxu0 %v5551
  %v5619 = vpop.f32.mrb[0].mxu0
  %v5620 = vadd.f32 0.0, %v5619
  %v5621 = vpop.f32.mrb[0].mxu0
  %5622 = vdwg.mxu0
  %s5623 = scalar_lea.vmem %s9, 80
  %v5624 = vld [vmem:[%s5623] sm:$0xff]
  %v5625 = vld [vmem:[%s5623 + $0x8] sm:$0xff]
  %v5627 = vsel %vm1081, %v5620, 0
  %5629 = vmatprep.subr.mxu0 0.0
  %5630 = vmatpush1.msra.mxu0 %v5624
  %5631 = vmatprep.subr.mxu0 0.0
  %5632 = vmatpush1.msra.mxu0 %v5625
  %5633 = vmatprep.subr.mxu0 0.0
  %5634 = vmatpush1.msra.mxu0 0.0
  %5635 = vmatprep.subr.mxu0 0.0
  %5636 = vmatpush1.msra.mxu0 0.0
  %5637 = vmatprep.subr.mxu0 0.0
  %5638 = vmatpush1.msra.mxu0 0.0
  %5639 = vmatprep.subr.mxu0 0.0
  %5640 = vmatpush1.msra.mxu0 0.0
  %5641 = vmatprep.subr.mxu0 0.0
  %5642 = vmatpush1.msra.mxu0 0.0
  %5643 = vmatprep.subr.mxu0 0.0
  %5644 = vmatpush1.msra.mxu0 0.0
  %5645 = vmatprep.subr.mxu0 0.0
  %5646 = vmatpush1.msra.mxu0 0.0
  %5647 = vmatprep.subr.mxu0 0.0
  %5648 = vmatpush1.msra.mxu0 0.0
  %5649 = vmatprep.subr.mxu0 0.0
  %5650 = vmatpush1.msra.mxu0 0.0
  %5651 = vmatprep.subr.mxu0 0.0
  %5652 = vmatpush1.msra.mxu0 0.0
  %5653 = vmatprep.subr.mxu0 0.0
  %5654 = vmatpush1.msra.mxu0 0.0
  %5655 = vmatprep.subr.mxu0 0.0
  %5656 = vmatpush1.msra.mxu0 0.0
  %5657 = vmatprep.subr.mxu0 0.0
  %5658 = vmatpush1.msra.mxu0 0.0
  %5659 = vmatprep.subr.mxu0 0.0
  %5660 = vmatpush1.msra.mxu0 0.0
  %5661 = vmatprep.subr.mxu0 0.0
  %5662 = vmatpush1.msra.mxu0 0.0
  %5663 = vmatprep.subr.mxu0 0.0
  %5664 = vmatpush1.msra.mxu0 0.0
  %5665 = vmatprep.subr.mxu0 0.0
  %5666 = vmatpush1.msra.mxu0 0.0
  %5667 = vmatprep.subr.mxu0 0.0
  %5668 = vmatpush1.msra.mxu0 0.0
  %5669 = vmatprep.subr.mxu0 0.0
  %5670 = vmatpush1.msra.mxu0 0.0
  %5671 = vmatprep.subr.mxu0 0.0
  %5672 = vmatpush1.msra.mxu0 0.0
  %5673 = vmatprep.subr.mxu0 0.0
  %5674 = vmatpush1.msra.mxu0 0.0
  %5675 = vmatprep.subr.mxu0 0.0
  %5676 = vmatpush1.msra.mxu0 0.0
  %5677 = vmatprep.subr.mxu0 0.0
  %5678 = vmatpush1.msra.mxu0 0.0
  %5679 = vmatprep.subr.mxu0 0.0
  %5680 = vmatpush1.msra.mxu0 0.0
  %5681 = vmatprep.subr.mxu0 0.0
  %5682 = vmatpush1.msra.mxu0 0.0
  %5683 = vmatprep.subr.mxu0 0.0
  %5684 = vmatpush1.msra.mxu0 0.0
  %5685 = vmatprep.subr.mxu0 0.0
  %5686 = vmatpush1.msra.mxu0 0.0
  %5687 = vmatprep.subr.mxu0 0.0
  %5688 = vmatpush1.msra.mxu0 0.0
  %5689 = vmatprep.subr.mxu0 0.0
  %5690 = vmatpush1.msra.mxu0 0.0
  %5691 = vmatprep.subr.mxu0 0.0
  %5692 = vmatpush1.msra.mxu0 0.0
  %5693 = vmatprep.mubr.f32.mxu0 0.0
  %5694 = vmatmul.mubr.f32.gmra.mrb[0].mxu0 %v5627
  %v5695 = vpop.f32.mrb[0].mxu0
  %v5696 = vadd.f32 0.0, %v5695
  %v5697 = vpop.f32.mrb[0].mxu0
  %5698 = vdwg.mxu0
  %v5700 = vsel %vm1081, %v5220, 0
  %5702 = vmatprep.subr.mxu0 0.0
  %5703 = vmatpush1.msra.mxu0 %v5224
  %5704 = vmatprep.subr.mxu0 0.0
  %5705 = vmatpush1.msra.mxu0 %v5225
  %5706 = vmatprep.subr.mxu0 0.0
  %5707 = vmatpush1.msra.mxu0 0.0
  %5708 = vmatprep.subr.mxu0 0.0
  %5709 = vmatpush1.msra.mxu0 0.0
  %5710 = vmatprep.subr.mxu0 0.0
  %5711 = vmatpush1.msra.mxu0 0.0
  %5712 = vmatprep.subr.mxu0 0.0
  %5713 = vmatpush1.msra.mxu0 0.0
  %5714 = vmatprep.subr.mxu0 0.0
  %5715 = vmatpush1.msra.mxu0 0.0
  %5716 = vmatprep.subr.mxu0 0.0
  %5717 = vmatpush1.msra.mxu0 0.0
  %5718 = vmatprep.subr.mxu0 0.0
  %5719 = vmatpush1.msra.mxu0 0.0
  %5720 = vmatprep.subr.mxu0 0.0
  %5721 = vmatpush1.msra.mxu0 0.0
  %5722 = vmatprep.subr.mxu0 0.0
  %5723 = vmatpush1.msra.mxu0 0.0
  %5724 = vmatprep.subr.mxu0 0.0
  %5725 = vmatpush1.msra.mxu0 0.0
  %5726 = vmatprep.subr.mxu0 0.0
  %5727 = vmatpush1.msra.mxu0 0.0
  %5728 = vmatprep.subr.mxu0 0.0
  %5729 = vmatpush1.msra.mxu0 0.0
  %5730 = vmatprep.subr.mxu0 0.0
  %5731 = vmatpush1.msra.mxu0 0.0
  %5732 = vmatprep.subr.mxu0 0.0
  %5733 = vmatpush1.msra.mxu0 0.0
  %5734 = vmatprep.subr.mxu0 0.0
  %5735 = vmatpush1.msra.mxu0 0.0
  %5736 = vmatprep.subr.mxu0 0.0
  %5737 = vmatpush1.msra.mxu0 0.0
  %5738 = vmatprep.subr.mxu0 0.0
  %5739 = vmatpush1.msra.mxu0 0.0
  %5740 = vmatprep.subr.mxu0 0.0
  %5741 = vmatpush1.msra.mxu0 0.0
  %5742 = vmatprep.subr.mxu0 0.0
  %5743 = vmatpush1.msra.mxu0 0.0
  %5744 = vmatprep.subr.mxu0 0.0
  %5745 = vmatpush1.msra.mxu0 0.0
  %5746 = vmatprep.subr.mxu0 0.0
  %5747 = vmatpush1.msra.mxu0 0.0
  %5748 = vmatprep.subr.mxu0 0.0
  %5749 = vmatpush1.msra.mxu0 0.0
  %5750 = vmatprep.subr.mxu0 0.0
  %5751 = vmatpush1.msra.mxu0 0.0
  %5752 = vmatprep.subr.mxu0 0.0
  %5753 = vmatpush1.msra.mxu0 0.0
  %5754 = vmatprep.subr.mxu0 0.0
  %5755 = vmatpush1.msra.mxu0 0.0
  %5756 = vmatprep.subr.mxu0 0.0
  %5757 = vmatpush1.msra.mxu0 0.0
  %5758 = vmatprep.subr.mxu0 0.0
  %5759 = vmatpush1.msra.mxu0 0.0
  %5760 = vmatprep.subr.mxu0 0.0
  %5761 = vmatpush1.msra.mxu0 0.0
  %5762 = vmatprep.subr.mxu0 0.0
  %5763 = vmatpush1.msra.mxu0 0.0
  %5764 = vmatprep.subr.mxu0 0.0
  %5765 = vmatpush1.msra.mxu0 0.0
  %5766 = vmatprep.mubr.f32.mxu0 0.0
  %5767 = vmatmul.mubr.f32.gmra.mrb[0].mxu0 %v5700
  %v5768 = vpop.f32.mrb[0].mxu0
  %v5769 = vadd.f32 %v5696, %v5768
  %v5770 = vpop.f32.mrb[0].mxu0
  %5771 = vdwg.mxu0
  %s5772 = scalar_lea.vmem %s6, 384
  %v5773 = vld [vmem:[%s5772] sm:$0xff]
  %v5774 = vld [vmem:[%s5772 + $0x8] sm:$0xff]
  %v5775 = vld [vmem:[%s5772 + $0x10] sm:$0xff]
  %v5776 = vld [vmem:[%s5772 + $0x18] sm:$0xff]
  %v5777 = vld [vmem:[%s5772 + $0x20] sm:$0xff]
  %v5778 = vld [vmem:[%s5772 + $0x28] sm:$0xff]
  %v5779 = vld [vmem:[%s5772 + $0x30] sm:$0xff]
  %v5780 = vld [vmem:[%s5772 + $0x38] sm:$0xff]
  %5781 = vmatprep.subr.mxu0 0.0
  %5782 = vmatpush1.msra.mxu0 %v5773
  %5783 = vmatprep.subr.mxu0 0.0
  %5784 = vmatpush1.msra.mxu0 %v5774
  %5785 = vmatprep.subr.mxu0 0.0
  %5786 = vmatpush1.msra.mxu0 %v5775
  %5787 = vmatprep.subr.mxu0 0.0
  %5788 = vmatpush1.msra.mxu0 %v5776
  %5789 = vmatprep.subr.mxu0 0.0
  %5790 = vmatpush1.msra.mxu0 %v5777
  %5791 = vmatprep.subr.mxu0 0.0
  %5792 = vmatpush1.msra.mxu0 %v5778
  %5793 = vmatprep.subr.mxu0 0.0
  %5794 = vmatpush1.msra.mxu0 %v5779
  %5795 = vmatprep.subr.mxu0 0.0
  %5796 = vmatpush1.msra.mxu0 %v5780
  %5797 = vmatprep.subr.mxu0 0.0
  %5798 = vmatpush1.msra.mxu0 0.0
  %5799 = vmatprep.subr.mxu0 0.0
  %5800 = vmatpush1.msra.mxu0 0.0
  %5801 = vmatprep.subr.mxu0 0.0
  %5802 = vmatpush1.msra.mxu0 0.0
  %5803 = vmatprep.subr.mxu0 0.0
  %5804 = vmatpush1.msra.mxu0 0.0
  %5805 = vmatprep.subr.mxu0 0.0
  %5806 = vmatpush1.msra.mxu0 0.0
  %5807 = vmatprep.subr.mxu0 0.0
  %5808 = vmatpush1.msra.mxu0 0.0
  %5809 = vmatprep.subr.mxu0 0.0
  %5810 = vmatpush1.msra.mxu0 0.0
  %5811 = vmatprep.subr.mxu0 0.0
  %5812 = vmatpush1.msra.mxu0 0.0
  %5813 = vmatprep.subr.mxu0 0.0
  %5814 = vmatpush1.msra.mxu0 0.0
  %5815 = vmatprep.subr.mxu0 0.0
  %5816 = vmatpush1.msra.mxu0 0.0
  %5817 = vmatprep.subr.mxu0 0.0
  %5818 = vmatpush1.msra.mxu0 0.0
  %5819 = vmatprep.subr.mxu0 0.0
  %5820 = vmatpush1.msra.mxu0 0.0
  %5821 = vmatprep.subr.mxu0 0.0
  %5822 = vmatpush1.msra.mxu0 0.0
  %5823 = vmatprep.subr.mxu0 0.0
  %5824 = vmatpush1.msra.mxu0 0.0
  %5825 = vmatprep.subr.mxu0 0.0
  %5826 = vmatpush1.msra.mxu0 0.0
  %5827 = vmatprep.subr.mxu0 0.0
  %5828 = vmatpush1.msra.mxu0 0.0
  %5829 = vmatprep.subr.mxu0 0.0
  %5830 = vmatpush1.msra.mxu0 0.0
  %5831 = vmatprep.subr.mxu0 0.0
  %5832 = vmatpush1.msra.mxu0 0.0
  %5833 = vmatprep.subr.mxu0 0.0
  %5834 = vmatpush1.msra.mxu0 0.0
  %5835 = vmatprep.subr.mxu0 0.0
  %5836 = vmatpush1.msra.mxu0 0.0
  %5837 = vmatprep.subr.mxu0 0.0
  %5838 = vmatpush1.msra.mxu0 0.0
  %5839 = vmatprep.subr.mxu0 0.0
  %5840 = vmatpush1.msra.mxu0 0.0
  %5841 = vmatprep.subr.mxu0 0.0
  %5842 = vmatpush1.msra.mxu0 0.0
  %5843 = vmatprep.subr.mxu0 0.0
  %5844 = vmatpush1.msra.mxu0 0.0
  %5845 = vmatprep.mubr.f32.mxu0 0.0
  %5846 = vmatmul.mubr.f32.gmra.mrb[0].mxu0 %v4833
  %v5847 = vpop.f32.mrb[0].mxu0
  %v5848 = vadd.f32 0.0, %v5847
  %v5849 = vpop.f32.mrb[0].mxu0
  %5850 = vdwg.mxu0
  %s5851 = scalar_lea.vmem %s7, 384
  %v5852 = vld [vmem:[%s5851] sm:$0xff]
  %v5853 = vld [vmem:[%s5851 + $0x8] sm:$0xff]
  %v5854 = vld [vmem:[%s5851 + $0x10] sm:$0xff]
  %v5855 = vld [vmem:[%s5851 + $0x18] sm:$0xff]
  %v5856 = vld [vmem:[%s5851 + $0x20] sm:$0xff]
  %v5857 = vld [vmem:[%s5851 + $0x28] sm:$0xff]
  %v5858 = vld [vmem:[%s5851 + $0x30] sm:$0xff]
  %v5859 = vld [vmem:[%s5851 + $0x38] sm:$0xff]
  %5860 = vmatprep.subr.mxu0 0.0
  %5861 = vmatpush1.msra.mxu0 %v5852
  %5862 = vmatprep.subr.mxu0 0.0
  %5863 = vmatpush1.msra.mxu0 %v5853
  %5864 = vmatprep.subr.mxu0 0.0
  %5865 = vmatpush1.msra.mxu0 %v5854
  %5866 = vmatprep.subr.mxu0 0.0
  %5867 = vmatpush1.msra.mxu0 %v5855
  %5868 = vmatprep.subr.mxu0 0.0
  %5869 = vmatpush1.msra.mxu0 %v5856
  %5870 = vmatprep.subr.mxu0 0.0
  %5871 = vmatpush1.msra.mxu0 %v5857
  %5872 = vmatprep.subr.mxu0 0.0
  %5873 = vmatpush1.msra.mxu0 %v5858
  %5874 = vmatprep.subr.mxu0 0.0
  %5875 = vmatpush1.msra.mxu0 %v5859
  %5876 = vmatprep.subr.mxu0 0.0
  %5877 = vmatpush1.msra.mxu0 0.0
  %5878 = vmatprep.subr.mxu0 0.0
  %5879 = vmatpush1.msra.mxu0 0.0
  %5880 = vmatprep.subr.mxu0 0.0
  %5881 = vmatpush1.msra.mxu0 0.0
  %5882 = vmatprep.subr.mxu0 0.0
  %5883 = vmatpush1.msra.mxu0 0.0
  %5884 = vmatprep.subr.mxu0 0.0
  %5885 = vmatpush1.msra.mxu0 0.0
  %5886 = vmatprep.subr.mxu0 0.0
  %5887 = vmatpush1.msra.mxu0 0.0
  %5888 = vmatprep.subr.mxu0 0.0
  %5889 = vmatpush1.msra.mxu0 0.0
  %5890 = vmatprep.subr.mxu0 0.0
  %5891 = vmatpush1.msra.mxu0 0.0
  %5892 = vmatprep.subr.mxu0 0.0
  %5893 = vmatpush1.msra.mxu0 0.0
  %5894 = vmatprep.subr.mxu0 0.0
  %5895 = vmatpush1.msra.mxu0 0.0
  %5896 = vmatprep.subr.mxu0 0.0
  %5897 = vmatpush1.msra.mxu0 0.0
  %5898 = vmatprep.subr.mxu0 0.0
  %5899 = vmatpush1.msra.mxu0 0.0
  %5900 = vmatprep.subr.mxu0 0.0
  %5901 = vmatpush1.msra.mxu0 0.0
  %5902 = vmatprep.subr.mxu0 0.0
  %5903 = vmatpush1.msra.mxu0 0.0
  %5904 = vmatprep.subr.mxu0 0.0
  %5905 = vmatpush1.msra.mxu0 0.0
  %5906 = vmatprep.subr.mxu0 0.0
  %5907 = vmatpush1.msra.mxu0 0.0
  %5908 = vmatprep.subr.mxu0 0.0
  %5909 = vmatpush1.msra.mxu0 0.0
  %5910 = vmatprep.subr.mxu0 0.0
  %5911 = vmatpush1.msra.mxu0 0.0
  %5912 = vmatprep.subr.mxu0 0.0
  %5913 = vmatpush1.msra.mxu0 0.0
  %5914 = vmatprep.subr.mxu0 0.0
  %5915 = vmatpush1.msra.mxu0 0.0
  %5916 = vmatprep.subr.mxu0 0.0
  %5917 = vmatpush1.msra.mxu0 0.0
  %5918 = vmatprep.subr.mxu0 0.0
  %5919 = vmatpush1.msra.mxu0 0.0
  %5920 = vmatprep.subr.mxu0 0.0
  %5921 = vmatpush1.msra.mxu0 0.0
  %5922 = vmatprep.subr.mxu0 0.0
  %5923 = vmatpush1.msra.mxu0 0.0
  %5924 = vmatprep.mubr.f32.mxu0 0.0
  %5925 = vmatmul.mubr.f32.gmra.mrb[0].mxu0 %v4833
  %v5926 = vpop.f32.mrb[0].mxu0
  %v5927 = vadd.f32 0.0, %v5926
  %v5928 = vpop.f32.mrb[0].mxu0
  %5929 = vdwg.mxu0
  %s5930 = scalar_lea.vmem %s8, 384
  %v5931 = vld [vmem:[%s5930] sm:$0xff]
  %v5932 = vld [vmem:[%s5930 + $0x8] sm:$0xff]
  %v5933 = vld [vmem:[%s5930 + $0x10] sm:$0xff]
  %v5934 = vld [vmem:[%s5930 + $0x18] sm:$0xff]
  %v5935 = vld [vmem:[%s5930 + $0x20] sm:$0xff]
  %v5936 = vld [vmem:[%s5930 + $0x28] sm:$0xff]
  %v5937 = vld [vmem:[%s5930 + $0x30] sm:$0xff]
  %v5938 = vld [vmem:[%s5930 + $0x38] sm:$0xff]
  %5939 = vmatprep.subr.mxu0 0.0
  %5940 = vmatpush1.msra.mxu0 %v5931
  %5941 = vmatprep.subr.mxu0 0.0
  %5942 = vmatpush1.msra.mxu0 %v5932
  %5943 = vmatprep.subr.mxu0 0.0
  %5944 = vmatpush1.msra.mxu0 %v5933
  %5945 = vmatprep.subr.mxu0 0.0
  %5946 = vmatpush1.msra.mxu0 %v5934
  %5947 = vmatprep.subr.mxu0 0.0
  %5948 = vmatpush1.msra.mxu0 %v5935
  %5949 = vmatprep.subr.mxu0 0.0
  %5950 = vmatpush1.msra.mxu0 %v5936
  %5951 = vmatprep.subr.mxu0 0.0
  %5952 = vmatpush1.msra.mxu0 %v5937
  %5953 = vmatprep.subr.mxu0 0.0
  %5954 = vmatpush1.msra.mxu0 %v5938
  %5955 = vmatprep.subr.mxu0 0.0
  %5956 = vmatpush1.msra.mxu0 0.0
  %5957 = vmatprep.subr.mxu0 0.0
  %5958 = vmatpush1.msra.mxu0 0.0
  %5959 = vmatprep.subr.mxu0 0.0
  %5960 = vmatpush1.msra.mxu0 0.0
  %5961 = vmatprep.subr.mxu0 0.0
  %5962 = vmatpush1.msra.mxu0 0.0
  %5963 = vmatprep.subr.mxu0 0.0
  %5964 = vmatpush1.msra.mxu0 0.0
  %5965 = vmatprep.subr.mxu0 0.0
  %5966 = vmatpush1.msra.mxu0 0.0
  %5967 = vmatprep.subr.mxu0 0.0
  %5968 = vmatpush1.msra.mxu0 0.0
  %5969 = vmatprep.subr.mxu0 0.0
  %5970 = vmatpush1.msra.mxu0 0.0
  %5971 = vmatprep.subr.mxu0 0.0
  %5972 = vmatpush1.msra.mxu0 0.0
  %5973 = vmatprep.subr.mxu0 0.0
  %5974 = vmatpush1.msra.mxu0 0.0
  %5975 = vmatprep.subr.mxu0 0.0
  %5976 = vmatpush1.msra.mxu0 0.0
  %5977 = vmatprep.subr.mxu0 0.0
  %5978 = vmatpush1.msra.mxu0 0.0
  %5979 = vmatprep.subr.mxu0 0.0
  %5980 = vmatpush1.msra.mxu0 0.0
  %5981 = vmatprep.subr.mxu0 0.0
  %5982 = vmatpush1.msra.mxu0 0.0
  %5983 = vmatprep.subr.mxu0 0.0
  %5984 = vmatpush1.msra.mxu0 0.0
  %5985 = vmatprep.subr.mxu0 0.0
  %5986 = vmatpush1.msra.mxu0 0.0
  %5987 = vmatprep.subr.mxu0 0.0
  %5988 = vmatpush1.msra.mxu0 0.0
  %5989 = vmatprep.subr.mxu0 0.0
  %5990 = vmatpush1.msra.mxu0 0.0
  %5991 = vmatprep.subr.mxu0 0.0
  %5992 = vmatpush1.msra.mxu0 0.0
  %5993 = vmatprep.subr.mxu0 0.0
  %5994 = vmatpush1.msra.mxu0 0.0
  %5995 = vmatprep.subr.mxu0 0.0
  %5996 = vmatpush1.msra.mxu0 0.0
  %5997 = vmatprep.subr.mxu0 0.0
  %5998 = vmatpush1.msra.mxu0 0.0
  %5999 = vmatprep.subr.mxu0 0.0
  %6000 = vmatpush1.msra.mxu0 0.0
  %6001 = vmatprep.subr.mxu0 0.0
  %6002 = vmatpush1.msra.mxu0 0.0
  %6003 = vmatprep.mubr.f32.mxu0 0.0
  %6004 = vmatmul.mubr.f32.gmra.mrb[0].mxu0 %v4833
  %v6005 = vpop.f32.mrb[0].mxu0
  %v6006 = vadd.f32 0.0, %v6005
  %v6007 = vpop.f32.mrb[0].mxu0
  %6008 = vdwg.mxu0
  %v6010 = vsel %vm1081, %v5848, 0
  %v6013 = vsel %vm1081, %v5927, 0
  %6015 = vmatprep.subr.mxu0 0.0
  %6016 = vmatpush1.xpose.msra.mxu0 %v6013
  %6017 = vmatprep.subr.mxu0 0.0
  %6018 = vmatpush1.xpose.msra.mxu0 0.0
  %6019 = vmatprep.subr.mxu0 0.0
  %6020 = vmatpush1.xpose.msra.mxu0 0.0
  %6021 = vmatprep.subr.mxu0 0.0
  %6022 = vmatpush1.xpose.msra.mxu0 0.0
  %6023 = vmatprep.subr.mxu0 0.0
  %6024 = vmatpush1.xpose.msra.mxu0 0.0
  %6025 = vmatprep.subr.mxu0 0.0
  %6026 = vmatpush1.xpose.msra.mxu0 0.0
  %6027 = vmatprep.subr.mxu0 0.0
  %6028 = vmatpush1.xpose.msra.mxu0 0.0
  %6029 = vmatprep.subr.mxu0 0.0
  %6030 = vmatpush1.xpose.msra.mxu0 0.0
  %6031 = vmatprep.subr.mxu0 0.0
  %6032 = vmatpush1.xpose.msra.mxu0 0.0
  %6033 = vmatprep.subr.mxu0 0.0
  %6034 = vmatpush1.xpose.msra.mxu0 0.0
  %6035 = vmatprep.subr.mxu0 0.0
  %6036 = vmatpush1.xpose.msra.mxu0 0.0
  %6037 = vmatprep.subr.mxu0 0.0
  %6038 = vmatpush1.xpose.msra.mxu0 0.0
  %6039 = vmatprep.subr.mxu0 0.0
  %6040 = vmatpush1.xpose.msra.mxu0 0.0
  %6041 = vmatprep.subr.mxu0 0.0
  %6042 = vmatpush1.xpose.msra.mxu0 0.0
  %6043 = vmatprep.subr.mxu0 0.0
  %6044 = vmatpush1.xpose.msra.mxu0 0.0
  %6045 = vmatprep.subr.mxu0 0.0
  %6046 = vmatpush1.xpose.msra.mxu0 0.0
  %6047 = vmatprep.subr.mxu0 0.0
  %6048 = vmatpush1.xpose.msra.mxu0 0.0
  %6049 = vmatprep.subr.mxu0 0.0
  %6050 = vmatpush1.xpose.msra.mxu0 0.0
  %6051 = vmatprep.subr.mxu0 0.0
  %6052 = vmatpush1.xpose.msra.mxu0 0.0
  %6053 = vmatprep.subr.mxu0 0.0
  %6054 = vmatpush1.xpose.msra.mxu0 0.0
  %6055 = vmatprep.subr.mxu0 0.0
  %6056 = vmatpush1.xpose.msra.mxu0 0.0
  %6057 = vmatprep.subr.mxu0 0.0
  %6058 = vmatpush1.xpose.msra.mxu0 0.0
  %6059 = vmatprep.subr.mxu0 0.0
  %6060 = vmatpush1.xpose.msra.mxu0 0.0
  %6061 = vmatprep.subr.mxu0 0.0
  %6062 = vmatpush1.xpose.msra.mxu0 0.0
  %6063 = vmatprep.subr.mxu0 0.0
  %6064 = vmatpush1.xpose.msra.mxu0 0.0
  %6065 = vmatprep.subr.mxu0 0.0
  %6066 = vmatpush1.xpose.msra.mxu0 0.0
  %6067 = vmatprep.subr.mxu0 0.0
  %6068 = vmatpush1.xpose.msra.mxu0 0.0
  %6069 = vmatprep.subr.mxu0 0.0
  %6070 = vmatpush1.xpose.msra.mxu0 0.0
  %6071 = vmatprep.subr.mxu0 0.0
  %6072 = vmatpush1.xpose.msra.mxu0 0.0
  %6073 = vmatprep.subr.mxu0 0.0
  %6074 = vmatpush1.xpose.msra.mxu0 0.0
  %6075 = vmatprep.subr.mxu0 0.0
  %6076 = vmatpush1.xpose.msra.mxu0 0.0
  %6077 = vmatprep.subr.mxu0 0.0
  %6078 = vmatpush1.xpose.msra.mxu0 0.0
  %6079 = vmatprep.mubr.f32.mxu0 0.0
  %6080 = vmatmul.mubr.f32.gmra.mrb[0].mxu0 %v6010
  %v6081 = vpop.f32.mrb[0].mxu0
  %v6082 = vadd.f32 0.0, %v6081
  %v6083 = vpop.f32.mrb[0].mxu0
  %6084 = vdwg.mxu0
  %v6085 = vsel %vm1158, %v6082, -inf
  %6086 = vmax.xlane.f32.xlu0 %v6085
  %v6087 = vpop.xlane.xlu0 %6086
  %v6088 = vsub.f32 %v6082, %v6087
  %v6089 = vmul.f32 %v6088, 1.442695
  %v6090 = vpow.pop %v6089
  %v6091 = vsel %vm1158, %v6090, 0.0
  %6092 = vadd.xlane.f32.xlu0 %v6091
  %v6093 = vpop.xlane.xlu0 %6092
  %v6094 = vrcp.pop %v6093
  %v6095 = vmul.f32 %v6090, %v6094
  %v6097 = vsel %vm1158, %v6095, 0
  %6099 = vmatprep.subr.mxu0 0.0
  %6100 = vmatpush1.msra.mxu0 %v6006
  %6101 = vmatprep.subr.mxu0 0.0
  %6102 = vmatpush1.msra.mxu0 0.0
  %6103 = vmatprep.subr.mxu0 0.0
  %6104 = vmatpush1.msra.mxu0 0.0
  %6105 = vmatprep.subr.mxu0 0.0
  %6106 = vmatpush1.msra.mxu0 0.0
  %6107 = vmatprep.subr.mxu0 0.0
  %6108 = vmatpush1.msra.mxu0 0.0
  %6109 = vmatprep.subr.mxu0 0.0
  %6110 = vmatpush1.msra.mxu0 0.0
  %6111 = vmatprep.subr.mxu0 0.0
  %6112 = vmatpush1.msra.mxu0 0.0
  %6113 = vmatprep.subr.mxu0 0.0
  %6114 = vmatpush1.msra.mxu0 0.0
  %6115 = vmatprep.subr.mxu0 0.0
  %6116 = vmatpush1.msra.mxu0 0.0
  %6117 = vmatprep.subr.mxu0 0.0
  %6118 = vmatpush1.msra.mxu0 0.0
  %6119 = vmatprep.subr.mxu0 0.0
  %6120 = vmatpush1.msra.mxu0 0.0
  %6121 = vmatprep.subr.mxu0 0.0
  %6122 = vmatpush1.msra.mxu0 0.0
  %6123 = vmatprep.subr.mxu0 0.0
  %6124 = vmatpush1.msra.mxu0 0.0
  %6125 = vmatprep.subr.mxu0 0.0
  %6126 = vmatpush1.msra.mxu0 0.0
  %6127 = vmatprep.subr.mxu0 0.0
  %6128 = vmatpush1.msra.mxu0 0.0
  %6129 = vmatprep.subr.mxu0 0.0
  %6130 = vmatpush1.msra.mxu0 0.0
  %6131 = vmatprep.subr.mxu0 0.0
  %6132 = vmatpush1.msra.mxu0 0.0
  %6133 = vmatprep.subr.mxu0 0.0
  %6134 = vmatpush1.msra.mxu0 0.0
  %6135 = vmatprep.subr.mxu0 0.0
  %6136 = vmatpush1.msra.mxu0 0.0
  %6137 = vmatprep.subr.mxu0 0.0
  %6138 = vmatpush1.msra.mxu0 0.0
  %6139 = vmatprep.subr.mxu0 0.0
  %6140 = vmatpush1.msra.mxu0 0.0
  %6141 = vmatprep.subr.mxu0 0.0
  %6142 = vmatpush1.msra.mxu0 0.0
  %6143 = vmatprep.subr.mxu0 0.0
  %6144 = vmatpush1.msra.mxu0 0.0
  %6145 = vmatprep.subr.mxu0 0.0
  %6146 = vmatpush1.msra.mxu0 0.0
  %6147 = vmatprep.subr.mxu0 0.0
  %6148 = vmatpush1.msra.mxu0 0.0
  %6149 = vmatprep.subr.mxu0 0.0
  %6150 = vmatpush1.msra.mxu0 0.0
  %6151 = vmatprep.subr.mxu0 0.0
  %6152 = vmatpush1.msra.mxu0 0.0
  %6153 = vmatprep.subr.mxu0 0.0
  %6154 = vmatpush1.msra.mxu0 0.0
  %6155 = vmatprep.subr.mxu0 0.0
  %6156 = vmatpush1.msra.mxu0 0.0
  %6157 = vmatprep.subr.mxu0 0.0
  %6158 = vmatpush1.msra.mxu0 0.0
  %6159 = vmatprep.subr.mxu0 0.0
  %6160 = vmatpush1.msra.mxu0 0.0
  %6161 = vmatprep.subr.mxu0 0.0
  %6162 = vmatpush1.msra.mxu0 0.0
  %6163 = vmatprep.mubr.f32.mxu0 0.0
  %6164 = vmatmul.mubr.f32.gmra.mrb[0].mxu0 %v6097
  %v6165 = vpop.f32.mrb[0].mxu0
  %v6166 = vadd.f32 0.0, %v6165
  %v6167 = vpop.f32.mrb[0].mxu0
  %6168 = vdwg.mxu0
  %s6169 = scalar_lea.vmem %s9, 96
  %v6170 = vld [vmem:[%s6169] sm:$0xff]
  %v6171 = vld [vmem:[%s6169 + $0x8] sm:$0xff]
  %v6173 = vsel %vm1081, %v6166, 0
  %6175 = vmatprep.subr.mxu0 0.0
  %6176 = vmatpush1.msra.mxu0 %v6170
  %6177 = vmatprep.subr.mxu0 0.0
  %6178 = vmatpush1.msra.mxu0 %v6171
  %6179 = vmatprep.subr.mxu0 0.0
  %6180 = vmatpush1.msra.mxu0 0.0
  %6181 = vmatprep.subr.mxu0 0.0
  %6182 = vmatpush1.msra.mxu0 0.0
  %6183 = vmatprep.subr.mxu0 0.0
  %6184 = vmatpush1.msra.mxu0 0.0
  %6185 = vmatprep.subr.mxu0 0.0
  %6186 = vmatpush1.msra.mxu0 0.0
  %6187 = vmatprep.subr.mxu0 0.0
  %6188 = vmatpush1.msra.mxu0 0.0
  %6189 = vmatprep.subr.mxu0 0.0
  %6190 = vmatpush1.msra.mxu0 0.0
  %6191 = vmatprep.subr.mxu0 0.0
  %6192 = vmatpush1.msra.mxu0 0.0
  %6193 = vmatprep.subr.mxu0 0.0
  %6194 = vmatpush1.msra.mxu0 0.0
  %6195 = vmatprep.subr.mxu0 0.0
  %6196 = vmatpush1.msra.mxu0 0.0
  %6197 = vmatprep.subr.mxu0 0.0
  %6198 = vmatpush1.msra.mxu0 0.0
  %6199 = vmatprep.subr.mxu0 0.0
  %6200 = vmatpush1.msra.mxu0 0.0
  %6201 = vmatprep.subr.mxu0 0.0
  %6202 = vmatpush1.msra.mxu0 0.0
  %6203 = vmatprep.subr.mxu0 0.0
  %6204 = vmatpush1.msra.mxu0 0.0
  %6205 = vmatprep.subr.mxu0 0.0
  %6206 = vmatpush1.msra.mxu0 0.0
  %6207 = vmatprep.subr.mxu0 0.0
  %6208 = vmatpush1.msra.mxu0 0.0
  %6209 = vmatprep.subr.mxu0 0.0
  %6210 = vmatpush1.msra.mxu0 0.0
  %6211 = vmatprep.subr.mxu0 0.0
  %6212 = vmatpush1.msra.mxu0 0.0
  %6213 = vmatprep.subr.mxu0 0.0
  %6214 = vmatpush1.msra.mxu0 0.0
  %6215 = vmatprep.subr.mxu0 0.0
  %6216 = vmatpush1.msra.mxu0 0.0
  %6217 = vmatprep.subr.mxu0 0.0
  %6218 = vmatpush1.msra.mxu0 0.0
  %6219 = vmatprep.subr.mxu0 0.0
  %6220 = vmatpush1.msra.mxu0 0.0
  %6221 = vmatprep.subr.mxu0 0.0
  %6222 = vmatpush1.msra.mxu0 0.0
  %6223 = vmatprep.subr.mxu0 0.0
  %6224 = vmatpush1.msra.mxu0 0.0
  %6225 = vmatprep.subr.mxu0 0.0
  %6226 = vmatpush1.msra.mxu0 0.0
  %6227 = vmatprep.subr.mxu0 0.0
  %6228 = vmatpush1.msra.mxu0 0.0
  %6229 = vmatprep.subr.mxu0 0.0
  %6230 = vmatpush1.msra.mxu0 0.0
  %6231 = vmatprep.subr.mxu0 0.0
  %6232 = vmatpush1.msra.mxu0 0.0
  %6233 = vmatprep.subr.mxu0 0.0
  %6234 = vmatpush1.msra.mxu0 0.0
  %6235 = vmatprep.subr.mxu0 0.0
  %6236 = vmatpush1.msra.mxu0 0.0
  %6237 = vmatprep.subr.mxu0 0.0
  %6238 = vmatpush1.msra.mxu0 0.0
  %6239 = vmatprep.mubr.f32.mxu0 0.0
  %6240 = vmatmul.mubr.f32.gmra.mrb[0].mxu0 %v6173
  %v6241 = vpop.f32.mrb[0].mxu0
  %v6242 = vadd.f32 0.0, %v6241
  %v6243 = vpop.f32.mrb[0].mxu0
  %6244 = vdwg.mxu0
  %v6245 = vadd.f32 %v5769, %v6242
  %s6246 = scalar_lea.vmem %s6, 448
  %v6247 = vld [vmem:[%s6246] sm:$0xff]
  %v6248 = vld [vmem:[%s6246 + $0x8] sm:$0xff]
  %v6249 = vld [vmem:[%s6246 + $0x10] sm:$0xff]
  %v6250 = vld [vmem:[%s6246 + $0x18] sm:$0xff]
  %v6251 = vld [vmem:[%s6246 + $0x20] sm:$0xff]
  %v6252 = vld [vmem:[%s6246 + $0x28] sm:$0xff]
  %v6253 = vld [vmem:[%s6246 + $0x30] sm:$0xff]
  %v6254 = vld [vmem:[%s6246 + $0x38] sm:$0xff]
  %6255 = vmatprep.subr.mxu0 0.0
  %6256 = vmatpush1.msra.mxu0 %v6247
  %6257 = vmatprep.subr.mxu0 0.0
  %6258 = vmatpush1.msra.mxu0 %v6248
  %6259 = vmatprep.subr.mxu0 0.0
  %6260 = vmatpush1.msra.mxu0 %v6249
  %6261 = vmatprep.subr.mxu0 0.0
  %6262 = vmatpush1.msra.mxu0 %v6250
  %6263 = vmatprep.subr.mxu0 0.0
  %6264 = vmatpush1.msra.mxu0 %v6251
  %6265 = vmatprep.subr.mxu0 0.0
  %6266 = vmatpush1.msra.mxu0 %v6252
  %6267 = vmatprep.subr.mxu0 0.0
  %6268 = vmatpush1.msra.mxu0 %v6253
  %6269 = vmatprep.subr.mxu0 0.0
  %6270 = vmatpush1.msra.mxu0 %v6254
  %6271 = vmatprep.subr.mxu0 0.0
  %6272 = vmatpush1.msra.mxu0 0.0
  %6273 = vmatprep.subr.mxu0 0.0
  %6274 = vmatpush1.msra.mxu0 0.0
  %6275 = vmatprep.subr.mxu0 0.0
  %6276 = vmatpush1.msra.mxu0 0.0
  %6277 = vmatprep.subr.mxu0 0.0
  %6278 = vmatpush1.msra.mxu0 0.0
  %6279 = vmatprep.subr.mxu0 0.0
  %6280 = vmatpush1.msra.mxu0 0.0
  %6281 = vmatprep.subr.mxu0 0.0
  %6282 = vmatpush1.msra.mxu0 0.0
  %6283 = vmatprep.subr.mxu0 0.0
  %6284 = vmatpush1.msra.mxu0 0.0
  %6285 = vmatprep.subr.mxu0 0.0
  %6286 = vmatpush1.msra.mxu0 0.0
  %6287 = vmatprep.subr.mxu0 0.0
  %6288 = vmatpush1.msra.mxu0 0.0
  %6289 = vmatprep.subr.mxu0 0.0
  %6290 = vmatpush1.msra.mxu0 0.0
  %6291 = vmatprep.subr.mxu0 0.0
  %6292 = vmatpush1.msra.mxu0 0.0
  %6293 = vmatprep.subr.mxu0 0.0
  %6294 = vmatpush1.msra.mxu0 0.0
  %6295 = vmatprep.subr.mxu0 0.0
  %6296 = vmatpush1.msra.mxu0 0.0
  %6297 = vmatprep.subr.mxu0 0.0
  %6298 = vmatpush1.msra.mxu0 0.0
  %6299 = vmatprep.subr.mxu0 0.0
  %6300 = vmatpush1.msra.mxu0 0.0
  %6301 = vmatprep.subr.mxu0 0.0
  %6302 = vmatpush1.msra.mxu0 0.0
  %6303 = vmatprep.subr.mxu0 0.0
  %6304 = vmatpush1.msra.mxu0 0.0
  %6305 = vmatprep.subr.mxu0 0.0
  %6306 = vmatpush1.msra.mxu0 0.0
  %6307 = vmatprep.subr.mxu0 0.0
  %6308 = vmatpush1.msra.mxu0 0.0
  %6309 = vmatprep.subr.mxu0 0.0
  %6310 = vmatpush1.msra.mxu0 0.0
  %6311 = vmatprep.subr.mxu0 0.0
  %6312 = vmatpush1.msra.mxu0 0.0
  %6313 = vmatprep.subr.mxu0 0.0
  %6314 = vmatpush1.msra.mxu0 0.0
  %6315 = vmatprep.subr.mxu0 0.0
  %6316 = vmatpush1.msra.mxu0 0.0
  %6317 = vmatprep.subr.mxu0 0.0
  %6318 = vmatpush1.msra.mxu0 0.0
  %6319 = vmatprep.mubr.f32.mxu0 0.0
  %6320 = vmatmul.mubr.f32.gmra.mrb[0].mxu0 %v4833
  %v6321 = vpop.f32.mrb[0].mxu0
  %v6322 = vadd.f32 0.0, %v6321
  %v6323 = vpop.f32.mrb[0].mxu0
  %6324 = vdwg.mxu0
  %s6325 = scalar_lea.vmem %s7, 448
  %v6326 = vld [vmem:[%s6325] sm:$0xff]
  %v6327 = vld [vmem:[%s6325 + $0x8] sm:$0xff]
  %v6328 = vld [vmem:[%s6325 + $0x10] sm:$0xff]
  %v6329 = vld [vmem:[%s6325 + $0x18] sm:$0xff]
  %v6330 = vld [vmem:[%s6325 + $0x20] sm:$0xff]
  %v6331 = vld [vmem:[%s6325 + $0x28] sm:$0xff]
  %v6332 = vld [vmem:[%s6325 + $0x30] sm:$0xff]
  %v6333 = vld [vmem:[%s6325 + $0x38] sm:$0xff]
  %6334 = vmatprep.subr.mxu0 0.0
  %6335 = vmatpush1.msra.mxu0 %v6326
  %6336 = vmatprep.subr.mxu0 0.0
  %6337 = vmatpush1.msra.mxu0 %v6327
  %6338 = vmatprep.subr.mxu0 0.0
  %6339 = vmatpush1.msra.mxu0 %v6328
  %6340 = vmatprep.subr.mxu0 0.0
  %6341 = vmatpush1.msra.mxu0 %v6329
  %6342 = vmatprep.subr.mxu0 0.0
  %6343 = vmatpush1.msra.mxu0 %v6330
  %6344 = vmatprep.subr.mxu0 0.0
  %6345 = vmatpush1.msra.mxu0 %v6331
  %6346 = vmatprep.subr.mxu0 0.0
  %6347 = vmatpush1.msra.mxu0 %v6332
  %6348 = vmatprep.subr.mxu0 0.0
  %6349 = vmatpush1.msra.mxu0 %v6333
  %6350 = vmatprep.subr.mxu0 0.0
  %6351 = vmatpush1.msra.mxu0 0.0
  %6352 = vmatprep.subr.mxu0 0.0
  %6353 = vmatpush1.msra.mxu0 0.0
  %6354 = vmatprep.subr.mxu0 0.0
  %6355 = vmatpush1.msra.mxu0 0.0
  %6356 = vmatprep.subr.mxu0 0.0
  %6357 = vmatpush1.msra.mxu0 0.0
  %6358 = vmatprep.subr.mxu0 0.0
  %6359 = vmatpush1.msra.mxu0 0.0
  %6360 = vmatprep.subr.mxu0 0.0
  %6361 = vmatpush1.msra.mxu0 0.0
  %6362 = vmatprep.subr.mxu0 0.0
  %6363 = vmatpush1.msra.mxu0 0.0
  %6364 = vmatprep.subr.mxu0 0.0
  %6365 = vmatpush1.msra.mxu0 0.0
  %6366 = vmatprep.subr.mxu0 0.0
  %6367 = vmatpush1.msra.mxu0 0.0
  %6368 = vmatprep.subr.mxu0 0.0
  %6369 = vmatpush1.msra.mxu0 0.0
  %6370 = vmatprep.subr.mxu0 0.0
  %6371 = vmatpush1.msra.mxu0 0.0
  %6372 = vmatprep.subr.mxu0 0.0
  %6373 = vmatpush1.msra.mxu0 0.0
  %6374 = vmatprep.subr.mxu0 0.0
  %6375 = vmatpush1.msra.mxu0 0.0
  %6376 = vmatprep.subr.mxu0 0.0
  %6377 = vmatpush1.msra.mxu0 0.0
  %6378 = vmatprep.subr.mxu0 0.0
  %6379 = vmatpush1.msra.mxu0 0.0
  %6380 = vmatprep.subr.mxu0 0.0
  %6381 = vmatpush1.msra.mxu0 0.0
  %6382 = vmatprep.subr.mxu0 0.0
  %6383 = vmatpush1.msra.mxu0 0.0
  %6384 = vmatprep.subr.mxu0 0.0
  %6385 = vmatpush1.msra.mxu0 0.0
  %6386 = vmatprep.subr.mxu0 0.0
  %6387 = vmatpush1.msra.mxu0 0.0
  %6388 = vmatprep.subr.mxu0 0.0
  %6389 = vmatpush1.msra.mxu0 0.0
  %6390 = vmatprep.subr.mxu0 0.0
  %6391 = vmatpush1.msra.mxu0 0.0
  %6392 = vmatprep.subr.mxu0 0.0
  %6393 = vmatpush1.msra.mxu0 0.0
  %6394 = vmatprep.subr.mxu0 0.0
  %6395 = vmatpush1.msra.mxu0 0.0
  %6396 = vmatprep.subr.mxu0 0.0
  %6397 = vmatpush1.msra.mxu0 0.0
  %6398 = vmatprep.mubr.f32.mxu0 0.0
  %6399 = vmatmul.mubr.f32.gmra.mrb[0].mxu0 %v4833
  %v6400 = vpop.f32.mrb[0].mxu0
  %v6401 = vadd.f32 0.0, %v6400
  %v6402 = vpop.f32.mrb[0].mxu0
  %6403 = vdwg.mxu0
  %s6404 = scalar_lea.vmem %s8, 448
  %v6405 = vld [vmem:[%s6404] sm:$0xff]
  %v6406 = vld [vmem:[%s6404 + $0x8] sm:$0xff]
  %v6407 = vld [vmem:[%s6404 + $0x10] sm:$0xff]
  %v6408 = vld [vmem:[%s6404 + $0x18] sm:$0xff]
  %v6409 = vld [vmem:[%s6404 + $0x20] sm:$0xff]
  %v6410 = vld [vmem:[%s6404 + $0x28] sm:$0xff]
  %v6411 = vld [vmem:[%s6404 + $0x30] sm:$0xff]
  %v6412 = vld [vmem:[%s6404 + $0x38] sm:$0xff]
  %6413 = vmatprep.subr.mxu0 0.0
  %6414 = vmatpush1.msra.mxu0 %v6405
  %6415 = vmatprep.subr.mxu0 0.0
  %6416 = vmatpush1.msra.mxu0 %v6406
  %6417 = vmatprep.subr.mxu0 0.0
  %6418 = vmatpush1.msra.mxu0 %v6407
  %6419 = vmatprep.subr.mxu0 0.0
  %6420 = vmatpush1.msra.mxu0 %v6408
  %6421 = vmatprep.subr.mxu0 0.0
  %6422 = vmatpush1.msra.mxu0 %v6409
  %6423 = vmatprep.subr.mxu0 0.0
  %6424 = vmatpush1.msra.mxu0 %v6410
  %6425 = vmatprep.subr.mxu0 0.0
  %6426 = vmatpush1.msra.mxu0 %v6411
  %6427 = vmatprep.subr.mxu0 0.0
  %6428 = vmatpush1.msra.mxu0 %v6412
  %6429 = vmatprep.subr.mxu0 0.0
  %6430 = vmatpush1.msra.mxu0 0.0
  %6431 = vmatprep.subr.mxu0 0.0
  %6432 = vmatpush1.msra.mxu0 0.0
  %6433 = vmatprep.subr.mxu0 0.0
  %6434 = vmatpush1.msra.mxu0 0.0
  %6435 = vmatprep.subr.mxu0 0.0
  %6436 = vmatpush1.msra.mxu0 0.0
  %6437 = vmatprep.subr.mxu0 0.0
  %6438 = vmatpush1.msra.mxu0 0.0
  %6439 = vmatprep.subr.mxu0 0.0
  %6440 = vmatpush1.msra.mxu0 0.0
  %6441 = vmatprep.subr.mxu0 0.0
  %6442 = vmatpush1.msra.mxu0 0.0
  %6443 = vmatprep.subr.mxu0 0.0
  %6444 = vmatpush1.msra.mxu0 0.0
  %6445 = vmatprep.subr.mxu0 0.0
  %6446 = vmatpush1.msra.mxu0 0.0
  %6447 = vmatprep.subr.mxu0 0.0
  %6448 = vmatpush1.msra.mxu0 0.0
  %6449 = vmatprep.subr.mxu0 0.0
  %6450 = vmatpush1.msra.mxu0 0.0
  %6451 = vmatprep.subr.mxu0 0.0
  %6452 = vmatpush1.msra.mxu0 0.0
  %6453 = vmatprep.subr.mxu0 0.0
  %6454 = vmatpush1.msra.mxu0 0.0
  %6455 = vmatprep.subr.mxu0 0.0
  %6456 = vmatpush1.msra.mxu0 0.0
  %6457 = vmatprep.subr.mxu0 0.0
  %6458 = vmatpush1.msra.mxu0 0.0
  %6459 = vmatprep.subr.mxu0 0.0
  %6460 = vmatpush1.msra.mxu0 0.0
  %6461 = vmatprep.subr.mxu0 0.0
  %6462 = vmatpush1.msra.mxu0 0.0
  %6463 = vmatprep.subr.mxu0 0.0
  %6464 = vmatpush1.msra.mxu0 0.0
  %6465 = vmatprep.subr.mxu0 0.0
  %6466 = vmatpush1.msra.mxu0 0.0
  %6467 = vmatprep.subr.mxu0 0.0
  %6468 = vmatpush1.msra.mxu0 0.0
  %6469 = vmatprep.subr.mxu0 0.0
  %6470 = vmatpush1.msra.mxu0 0.0
  %6471 = vmatprep.subr.mxu0 0.0
  %6472 = vmatpush1.msra.mxu0 0.0
  %6473 = vmatprep.subr.mxu0 0.0
  %6474 = vmatpush1.msra.mxu0 0.0
  %6475 = vmatprep.subr.mxu0 0.0
  %6476 = vmatpush1.msra.mxu0 0.0
  %6477 = vmatprep.mubr.f32.mxu0 0.0
  %6478 = vmatmul.mubr.f32.gmra.mrb[0].mxu0 %v4833
  %v6479 = vpop.f32.mrb[0].mxu0
  %v6480 = vadd.f32 0.0, %v6479
  %v6481 = vpop.f32.mrb[0].mxu0
  %6482 = vdwg.mxu0
  %v6484 = vsel %vm1081, %v6322, 0
  %v6487 = vsel %vm1081, %v6401, 0
  %6489 = vmatprep.subr.mxu0 0.0
  %6490 = vmatpush1.xpose.msra.mxu0 %v6487
  %6491 = vmatprep.subr.mxu0 0.0
  %6492 = vmatpush1.xpose.msra.mxu0 0.0
  %6493 = vmatprep.subr.mxu0 0.0
  %6494 = vmatpush1.xpose.msra.mxu0 0.0
  %6495 = vmatprep.subr.mxu0 0.0
  %6496 = vmatpush1.xpose.msra.mxu0 0.0
  %6497 = vmatprep.subr.mxu0 0.0
  %6498 = vmatpush1.xpose.msra.mxu0 0.0
  %6499 = vmatprep.subr.mxu0 0.0
  %6500 = vmatpush1.xpose.msra.mxu0 0.0
  %6501 = vmatprep.subr.mxu0 0.0
  %6502 = vmatpush1.xpose.msra.mxu0 0.0
  %6503 = vmatprep.subr.mxu0 0.0
  %6504 = vmatpush1.xpose.msra.mxu0 0.0
  %6505 = vmatprep.subr.mxu0 0.0
  %6506 = vmatpush1.xpose.msra.mxu0 0.0
  %6507 = vmatprep.subr.mxu0 0.0
  %6508 = vmatpush1.xpose.msra.mxu0 0.0
  %6509 = vmatprep.subr.mxu0 0.0
  %6510 = vmatpush1.xpose.msra.mxu0 0.0
  %6511 = vmatprep.subr.mxu0 0.0
  %6512 = vmatpush1.xpose.msra.mxu0 0.0
  %6513 = vmatprep.subr.mxu0 0.0
  %6514 = vmatpush1.xpose.msra.mxu0 0.0
  %6515 = vmatprep.subr.mxu0 0.0
  %6516 = vmatpush1.xpose.msra.mxu0 0.0
  %6517 = vmatprep.subr.mxu0 0.0
  %6518 = vmatpush1.xpose.msra.mxu0 0.0
  %6519 = vmatprep.subr.mxu0 0.0
  %6520 = vmatpush1.xpose.msra.mxu0 0.0
  %6521 = vmatprep.subr.mxu0 0.0
  %6522 = vmatpush1.xpose.msra.mxu0 0.0
  %6523 = vmatprep.subr.mxu0 0.0
  %6524 = vmatpush1.xpose.msra.mxu0 0.0
  %6525 = vmatprep.subr.mxu0 0.0
  %6526 = vmatpush1.xpose.msra.mxu0 0.0
  %6527 = vmatprep.subr.mxu0 0.0
  %6528 = vmatpush1.xpose.msra.mxu0 0.0
  %6529 = vmatprep.subr.mxu0 0.0
  %6530 = vmatpush1.xpose.msra.mxu0 0.0
  %6531 = vmatprep.subr.mxu0 0.0
  %6532 = vmatpush1.xpose.msra.mxu0 0.0
  %6533 = vmatprep.subr.mxu0 0.0
  %6534 = vmatpush1.xpose.msra.mxu0 0.0
  %6535 = vmatprep.subr.mxu0 0.0
  %6536 = vmatpush1.xpose.msra.mxu0 0.0
  %6537 = vmatprep.subr.mxu0 0.0
  %6538 = vmatpush1.xpose.msra.mxu0 0.0
  %6539 = vmatprep.subr.mxu0 0.0
  %6540 = vmatpush1.xpose.msra.mxu0 0.0
  %6541 = vmatprep.subr.mxu0 0.0
  %6542 = vmatpush1.xpose.msra.mxu0 0.0
  %6543 = vmatprep.subr.mxu0 0.0
  %6544 = vmatpush1.xpose.msra.mxu0 0.0
  %6545 = vmatprep.subr.mxu0 0.0
  %6546 = vmatpush1.xpose.msra.mxu0 0.0
  %6547 = vmatprep.subr.mxu0 0.0
  %6548 = vmatpush1.xpose.msra.mxu0 0.0
  %6549 = vmatprep.subr.mxu0 0.0
  %6550 = vmatpush1.xpose.msra.mxu0 0.0
  %6551 = vmatprep.subr.mxu0 0.0
  %6552 = vmatpush1.xpose.msra.mxu0 0.0
  %6553 = vmatprep.mubr.f32.mxu0 0.0
  %6554 = vmatmul.mubr.f32.gmra.mrb[0].mxu0 %v6484
  %v6555 = vpop.f32.mrb[0].mxu0
  %v6556 = vadd.f32 0.0, %v6555
  %v6557 = vpop.f32.mrb[0].mxu0
  %6558 = vdwg.mxu0
  %v6559 = vsel %vm1158, %v6556, -inf
  %6560 = vmax.xlane.f32.xlu0 %v6559
  %v6561 = vpop.xlane.xlu0 %6560
  %v6562 = vsub.f32 %v6556, %v6561
  %v6563 = vmul.f32 %v6562, 1.442695
  %v6564 = vpow.pop %v6563
  %v6565 = vsel %vm1158, %v6564, 0.0
  %6566 = vadd.xlane.f32.xlu0 %v6565
  %v6567 = vpop.xlane.xlu0 %6566
  %v6568 = vrcp.pop %v6567
  %v6569 = vmul.f32 %v6564, %v6568
  %v6571 = vsel %vm1158, %v6569, 0
  %6573 = vmatprep.subr.mxu0 0.0
  %6574 = vmatpush1.msra.mxu0 %v6480
  %6575 = vmatprep.subr.mxu0 0.0
  %6576 = vmatpush1.msra.mxu0 0.0
  %6577 = vmatprep.subr.mxu0 0.0
  %6578 = vmatpush1.msra.mxu0 0.0
  %6579 = vmatprep.subr.mxu0 0.0
  %6580 = vmatpush1.msra.mxu0 0.0
  %6581 = vmatprep.subr.mxu0 0.0
  %6582 = vmatpush1.msra.mxu0 0.0
  %6583 = vmatprep.subr.mxu0 0.0
  %6584 = vmatpush1.msra.mxu0 0.0
  %6585 = vmatprep.subr.mxu0 0.0
  %6586 = vmatpush1.msra.mxu0 0.0
  %6587 = vmatprep.subr.mxu0 0.0
  %6588 = vmatpush1.msra.mxu0 0.0
  %6589 = vmatprep.subr.mxu0 0.0
  %6590 = vmatpush1.msra.mxu0 0.0
  %6591 = vmatprep.subr.mxu0 0.0
  %6592 = vmatpush1.msra.mxu0 0.0
  %6593 = vmatprep.subr.mxu0 0.0
  %6594 = vmatpush1.msra.mxu0 0.0
  %6595 = vmatprep.subr.mxu0 0.0
  %6596 = vmatpush1.msra.mxu0 0.0
  %6597 = vmatprep.subr.mxu0 0.0
  %6598 = vmatpush1.msra.mxu0 0.0
  %6599 = vmatprep.subr.mxu0 0.0
  %6600 = vmatpush1.msra.mxu0 0.0
  %6601 = vmatprep.subr.mxu0 0.0
  %6602 = vmatpush1.msra.mxu0 0.0
  %6603 = vmatprep.subr.mxu0 0.0
  %6604 = vmatpush1.msra.mxu0 0.0
  %6605 = vmatprep.subr.mxu0 0.0
  %6606 = vmatpush1.msra.mxu0 0.0
  %6607 = vmatprep.subr.mxu0 0.0
  %6608 = vmatpush1.msra.mxu0 0.0
  %6609 = vmatprep.subr.mxu0 0.0
  %6610 = vmatpush1.msra.mxu0 0.0
  %6611 = vmatprep.subr.mxu0 0.0
  %6612 = vmatpush1.msra.mxu0 0.0
  %6613 = vmatprep.subr.mxu0 0.0
  %6614 = vmatpush1.msra.mxu0 0.0
  %6615 = vmatprep.subr.mxu0 0.0
  %6616 = vmatpush1.msra.mxu0 0.0
  %6617 = vmatprep.subr.mxu0 0.0
  %6618 = vmatpush1.msra.mxu0 0.0
  %6619 = vmatprep.subr.mxu0 0.0
  %6620 = vmatpush1.msra.mxu0 0.0
  %6621 = vmatprep.subr.mxu0 0.0
  %6622 = vmatpush1.msra.mxu0 0.0
  %6623 = vmatprep.subr.mxu0 0.0
  %6624 = vmatpush1.msra.mxu0 0.0
  %6625 = vmatprep.subr.mxu0 0.0
  %6626 = vmatpush1.msra.mxu0 0.0
  %6627 = vmatprep.subr.mxu0 0.0
  %6628 = vmatpush1.msra.mxu0 0.0
  %6629 = vmatprep.subr.mxu0 0.0
  %6630 = vmatpush1.msra.mxu0 0.0
  %6631 = vmatprep.subr.mxu0 0.0
  %6632 = vmatpush1.msra.mxu0 0.0
  %6633 = vmatprep.subr.mxu0 0.0
  %6634 = vmatpush1.msra.mxu0 0.0
  %6635 = vmatprep.subr.mxu0 0.0
  %6636 = vmatpush1.msra.mxu0 0.0
  %6637 = vmatprep.mubr.f32.mxu0 0.0
  %6638 = vmatmul.mubr.f32.gmra.mrb[0].mxu0 %v6571
  %v6639 = vpop.f32.mrb[0].mxu0
  %v6640 = vadd.f32 0.0, %v6639
  %v6641 = vpop.f32.mrb[0].mxu0
  %6642 = vdwg.mxu0
  %s6643 = scalar_lea.vmem %s9, 112
  %v6644 = vld [vmem:[%s6643] sm:$0xff]
  %v6645 = vld [vmem:[%s6643 + $0x8] sm:$0xff]
  %v6647 = vsel %vm1081, %v6640, 0
  %6649 = vmatprep.subr.mxu0 0.0
  %6650 = vmatpush1.msra.mxu0 %v6644
  %6651 = vmatprep.subr.mxu0 0.0
  %6652 = vmatpush1.msra.mxu0 %v6645
  %6653 = vmatprep.subr.mxu0 0.0
  %6654 = vmatpush1.msra.mxu0 0.0
  %6655 = vmatprep.subr.mxu0 0.0
  %6656 = vmatpush1.msra.mxu0 0.0
  %6657 = vmatprep.subr.mxu0 0.0
  %6658 = vmatpush1.msra.mxu0 0.0
  %6659 = vmatprep.subr.mxu0 0.0
  %6660 = vmatpush1.msra.mxu0 0.0
  %6661 = vmatprep.subr.mxu0 0.0
  %6662 = vmatpush1.msra.mxu0 0.0
  %6663 = vmatprep.subr.mxu0 0.0
  %6664 = vmatpush1.msra.mxu0 0.0
  %6665 = vmatprep.subr.mxu0 0.0
  %6666 = vmatpush1.msra.mxu0 0.0
  %6667 = vmatprep.subr.mxu0 0.0
  %6668 = vmatpush1.msra.mxu0 0.0
  %6669 = vmatprep.subr.mxu0 0.0
  %6670 = vmatpush1.msra.mxu0 0.0
  %6671 = vmatprep.subr.mxu0 0.0
  %6672 = vmatpush1.msra.mxu0 0.0
  %6673 = vmatprep.subr.mxu0 0.0
  %6674 = vmatpush1.msra.mxu0 0.0
  %6675 = vmatprep.subr.mxu0 0.0
  %6676 = vmatpush1.msra.mxu0 0.0
  %6677 = vmatprep.subr.mxu0 0.0
  %6678 = vmatpush1.msra.mxu0 0.0
  %6679 = vmatprep.subr.mxu0 0.0
  %6680 = vmatpush1.msra.mxu0 0.0
  %6681 = vmatprep.subr.mxu0 0.0
  %6682 = vmatpush1.msra.mxu0 0.0
  %6683 = vmatprep.subr.mxu0 0.0
  %6684 = vmatpush1.msra.mxu0 0.0
  %6685 = vmatprep.subr.mxu0 0.0
  %6686 = vmatpush1.msra.mxu0 0.0
  %6687 = vmatprep.subr.mxu0 0.0
  %6688 = vmatpush1.msra.mxu0 0.0
  %6689 = vmatprep.subr.mxu0 0.0
  %6690 = vmatpush1.msra.mxu0 0.0
  %6691 = vmatprep.subr.mxu0 0.0
  %6692 = vmatpush1.msra.mxu0 0.0
  %6693 = vmatprep.subr.mxu0 0.0
  %6694 = vmatpush1.msra.mxu0 0.0
  %6695 = vmatprep.subr.mxu0 0.0
  %6696 = vmatpush1.msra.mxu0 0.0
  %6697 = vmatprep.subr.mxu0 0.0
  %6698 = vmatpush1.msra.mxu0 0.0
  %6699 = vmatprep.subr.mxu0 0.0
  %6700 = vmatpush1.msra.mxu0 0.0
  %6701 = vmatprep.subr.mxu0 0.0
  %6702 = vmatpush1.msra.mxu0 0.0
  %6703 = vmatprep.subr.mxu0 0.0
  %6704 = vmatpush1.msra.mxu0 0.0
  %6705 = vmatprep.subr.mxu0 0.0
  %6706 = vmatpush1.msra.mxu0 0.0
  %6707 = vmatprep.subr.mxu0 0.0
  %6708 = vmatpush1.msra.mxu0 0.0
  %6709 = vmatprep.subr.mxu0 0.0
  %6710 = vmatpush1.msra.mxu0 0.0
  %6711 = vmatprep.subr.mxu0 0.0
  %6712 = vmatpush1.msra.mxu0 0.0
  %6713 = vmatprep.mubr.f32.mxu0 0.0
  %6714 = vmatmul.mubr.f32.gmra.mrb[0].mxu0 %v6647
  %v6715 = vpop.f32.mrb[0].mxu0
  %v6716 = vadd.f32 0.0, %v6715
  %v6717 = vpop.f32.mrb[0].mxu0
  %6718 = vdwg.mxu0
  %v6719 = vadd.f32 %v6245, %v6716
  %v6721 = vsel %vm800, %v4822, 0
  %6723 = vmatprep.subr.mxu0 0.0
  %6724 = vmatpush1.msra.mxu0 %v4824
  %6725 = vmatprep.subr.mxu0 0.0
  %6726 = vmatpush1.msra.mxu0 %v4825
  %6727 = vmatprep.subr.mxu0 0.0
  %6728 = vmatpush1.msra.mxu0 %v4826
  %6729 = vmatprep.subr.mxu0 0.0
  %6730 = vmatpush1.msra.mxu0 %v4827
  %6731 = vmatprep.subr.mxu0 0.0
  %6732 = vmatpush1.msra.mxu0 %v4828
  %6733 = vmatprep.subr.mxu0 0.0
  %6734 = vmatpush1.msra.mxu0 %v4829
  %6735 = vmatprep.subr.mxu0 0.0
  %6736 = vmatpush1.msra.mxu0 %v4830
  %6737 = vmatprep.subr.mxu0 0.0
  %6738 = vmatpush1.msra.mxu0 %v4831
  %6739 = vmatprep.subr.mxu0 0.0
  %6740 = vmatpush1.msra.mxu0 0.0
  %6741 = vmatprep.subr.mxu0 0.0
  %6742 = vmatpush1.msra.mxu0 0.0
  %6743 = vmatprep.subr.mxu0 0.0
  %6744 = vmatpush1.msra.mxu0 0.0
  %6745 = vmatprep.subr.mxu0 0.0
  %6746 = vmatpush1.msra.mxu0 0.0
  %6747 = vmatprep.subr.mxu0 0.0
  %6748 = vmatpush1.msra.mxu0 0.0
  %6749 = vmatprep.subr.mxu0 0.0
  %6750 = vmatpush1.msra.mxu0 0.0
  %6751 = vmatprep.subr.mxu0 0.0
  %6752 = vmatpush1.msra.mxu0 0.0
  %6753 = vmatprep.subr.mxu0 0.0
  %6754 = vmatpush1.msra.mxu0 0.0
  %6755 = vmatprep.subr.mxu0 0.0
  %6756 = vmatpush1.msra.mxu0 0.0
  %6757 = vmatprep.subr.mxu0 0.0
  %6758 = vmatpush1.msra.mxu0 0.0
  %6759 = vmatprep.subr.mxu0 0.0
  %6760 = vmatpush1.msra.mxu0 0.0
  %6761 = vmatprep.subr.mxu0 0.0
  %6762 = vmatpush1.msra.mxu0 0.0
  %6763 = vmatprep.subr.mxu0 0.0
  %6764 = vmatpush1.msra.mxu0 0.0
  %6765 = vmatprep.subr.mxu0 0.0
  %6766 = vmatpush1.msra.mxu0 0.0
  %6767 = vmatprep.subr.mxu0 0.0
  %6768 = vmatpush1.msra.mxu0 0.0
  %6769 = vmatprep.subr.mxu0 0.0
  %6770 = vmatpush1.msra.mxu0 0.0
  %6771 = vmatprep.subr.mxu0 0.0
  %6772 = vmatpush1.msra.mxu0 0.0
  %6773 = vmatprep.subr.mxu0 0.0
  %6774 = vmatpush1.msra.mxu0 0.0
  %6775 = vmatprep.subr.mxu0 0.0
  %6776 = vmatpush1.msra.mxu0 0.0
  %6777 = vmatprep.subr.mxu0 0.0
  %6778 = vmatpush1.msra.mxu0 0.0
  %6779 = vmatprep.subr.mxu0 0.0
  %6780 = vmatpush1.msra.mxu0 0.0
  %6781 = vmatprep.subr.mxu0 0.0
  %6782 = vmatpush1.msra.mxu0 0.0
  %6783 = vmatprep.subr.mxu0 0.0
  %6784 = vmatpush1.msra.mxu0 0.0
  %6785 = vmatprep.subr.mxu0 0.0
  %6786 = vmatpush1.msra.mxu0 0.0
  %6787 = vmatprep.mubr.f32.mxu0 0.0
  %6788 = vmatmul.mubr.f32.gmra.mrb[0].mxu0 %v6721
  %v6789 = vpop.f32.mrb[0].mxu0
  %v6790 = vadd.f32 0.0, %v6789
  %v6791 = vpop.f32.mrb[0].mxu0
  %6792 = vdwg.mxu0
  %6793 = vmatprep.subr.mxu0 0.0
  %6794 = vmatpush1.msra.mxu0 %v4906
  %6795 = vmatprep.subr.mxu0 0.0
  %6796 = vmatpush1.msra.mxu0 %v4907
  %6797 = vmatprep.subr.mxu0 0.0
  %6798 = vmatpush1.msra.mxu0 %v4908
  %6799 = vmatprep.subr.mxu0 0.0
  %6800 = vmatpush1.msra.mxu0 %v4909
  %6801 = vmatprep.subr.mxu0 0.0
  %6802 = vmatpush1.msra.mxu0 %v4910
  %6803 = vmatprep.subr.mxu0 0.0
  %6804 = vmatpush1.msra.mxu0 %v4911
  %6805 = vmatprep.subr.mxu0 0.0
  %6806 = vmatpush1.msra.mxu0 %v4912
  %6807 = vmatprep.subr.mxu0 0.0
  %6808 = vmatpush1.msra.mxu0 %v4913
  %6809 = vmatprep.subr.mxu0 0.0
  %6810 = vmatpush1.msra.mxu0 0.0
  %6811 = vmatprep.subr.mxu0 0.0
  %6812 = vmatpush1.msra.mxu0 0.0
  %6813 = vmatprep.subr.mxu0 0.0
  %6814 = vmatpush1.msra.mxu0 0.0
  %6815 = vmatprep.subr.mxu0 0.0
  %6816 = vmatpush1.msra.mxu0 0.0
  %6817 = vmatprep.subr.mxu0 0.0
  %6818 = vmatpush1.msra.mxu0 0.0
  %6819 = vmatprep.subr.mxu0 0.0
  %6820 = vmatpush1.msra.mxu0 0.0
  %6821 = vmatprep.subr.mxu0 0.0
  %6822 = vmatpush1.msra.mxu0 0.0
  %6823 = vmatprep.subr.mxu0 0.0
  %6824 = vmatpush1.msra.mxu0 0.0
  %6825 = vmatprep.subr.mxu0 0.0
  %6826 = vmatpush1.msra.mxu0 0.0
  %6827 = vmatprep.subr.mxu0 0.0
  %6828 = vmatpush1.msra.mxu0 0.0
  %6829 = vmatprep.subr.mxu0 0.0
  %6830 = vmatpush1.msra.mxu0 0.0
  %6831 = vmatprep.subr.mxu0 0.0
  %6832 = vmatpush1.msra.mxu0 0.0
  %6833 = vmatprep.subr.mxu0 0.0
  %6834 = vmatpush1.msra.mxu0 0.0
  %6835 = vmatprep.subr.mxu0 0.0
  %6836 = vmatpush1.msra.mxu0 0.0
  %6837 = vmatprep.subr.mxu0 0.0
  %6838 = vmatpush1.msra.mxu0 0.0
  %6839 = vmatprep.subr.mxu0 0.0
  %6840 = vmatpush1.msra.mxu0 0.0
  %6841 = vmatprep.subr.mxu0 0.0
  %6842 = vmatpush1.msra.mxu0 0.0
  %6843 = vmatprep.subr.mxu0 0.0
  %6844 = vmatpush1.msra.mxu0 0.0
  %6845 = vmatprep.subr.mxu0 0.0
  %6846 = vmatpush1.msra.mxu0 0.0
  %6847 = vmatprep.subr.mxu0 0.0
  %6848 = vmatpush1.msra.mxu0 0.0
  %6849 = vmatprep.subr.mxu0 0.0
  %6850 = vmatpush1.msra.mxu0 0.0
  %6851 = vmatprep.subr.mxu0 0.0
  %6852 = vmatpush1.msra.mxu0 0.0
  %6853 = vmatprep.subr.mxu0 0.0
  %6854 = vmatpush1.msra.mxu0 0.0
  %6855 = vmatprep.subr.mxu0 0.0
  %6856 = vmatpush1.msra.mxu0 0.0
  %6857 = vmatprep.mubr.f32.mxu0 0.0
  %6858 = vmatmul.mubr.f32.gmra.mrb[0].mxu0 %v6721
  %v6859 = vpop.f32.mrb[0].mxu0
  %v6860 = vadd.f32 0.0, %v6859
  %v6861 = vpop.f32.mrb[0].mxu0
  %6862 = vdwg.mxu0
  %6863 = vmatprep.subr.mxu0 0.0
  %6864 = vmatpush1.msra.mxu0 %v4985
  %6865 = vmatprep.subr.mxu0 0.0
  %6866 = vmatpush1.msra.mxu0 %v4986
  %6867 = vmatprep.subr.mxu0 0.0
  %6868 = vmatpush1.msra.mxu0 %v4987
  %6869 = vmatprep.subr.mxu0 0.0
  %6870 = vmatpush1.msra.mxu0 %v4988
  %6871 = vmatprep.subr.mxu0 0.0
  %6872 = vmatpush1.msra.mxu0 %v4989
  %6873 = vmatprep.subr.mxu0 0.0
  %6874 = vmatpush1.msra.mxu0 %v4990
  %6875 = vmatprep.subr.mxu0 0.0
  %6876 = vmatpush1.msra.mxu0 %v4991
  %6877 = vmatprep.subr.mxu0 0.0
  %6878 = vmatpush1.msra.mxu0 %v4992
  %6879 = vmatprep.subr.mxu0 0.0
  %6880 = vmatpush1.msra.mxu0 0.0
  %6881 = vmatprep.subr.mxu0 0.0
  %6882 = vmatpush1.msra.mxu0 0.0
  %6883 = vmatprep.subr.mxu0 0.0
  %6884 = vmatpush1.msra.mxu0 0.0
  %6885 = vmatprep.subr.mxu0 0.0
  %6886 = vmatpush1.msra.mxu0 0.0
  %6887 = vmatprep.subr.mxu0 0.0
  %6888 = vmatpush1.msra.mxu0 0.0
  %6889 = vmatprep.subr.mxu0 0.0
  %6890 = vmatpush1.msra.mxu0 0.0
  %6891 = vmatprep.subr.mxu0 0.0
  %6892 = vmatpush1.msra.mxu0 0.0
  %6893 = vmatprep.subr.mxu0 0.0
  %6894 = vmatpush1.msra.mxu0 0.0
  %6895 = vmatprep.subr.mxu0 0.0
  %6896 = vmatpush1.msra.mxu0 0.0
  %6897 = vmatprep.subr.mxu0 0.0
  %6898 = vmatpush1.msra.mxu0 0.0
  %6899 = vmatprep.subr.mxu0 0.0
  %6900 = vmatpush1.msra.mxu0 0.0
  %6901 = vmatprep.subr.mxu0 0.0
  %6902 = vmatpush1.msra.mxu0 0.0
  %6903 = vmatprep.subr.mxu0 0.0
  %6904 = vmatpush1.msra.mxu0 0.0
  %6905 = vmatprep.subr.mxu0 0.0
  %6906 = vmatpush1.msra.mxu0 0.0
  %6907 = vmatprep.subr.mxu0 0.0
  %6908 = vmatpush1.msra.mxu0 0.0
  %6909 = vmatprep.subr.mxu0 0.0
  %6910 = vmatpush1.msra.mxu0 0.0
  %6911 = vmatprep.subr.mxu0 0.0
  %6912 = vmatpush1.msra.mxu0 0.0
  %6913 = vmatprep.subr.mxu0 0.0
  %6914 = vmatpush1.msra.mxu0 0.0
  %6915 = vmatprep.subr.mxu0 0.0
  %6916 = vmatpush1.msra.mxu0 0.0
  %6917 = vmatprep.subr.mxu0 0.0
  %6918 = vmatpush1.msra.mxu0 0.0
  %6919 = vmatprep.subr.mxu0 0.0
  %6920 = vmatpush1.msra.mxu0 0.0
  %6921 = vmatprep.subr.mxu0 0.0
  %6922 = vmatpush1.msra.mxu0 0.0
  %6923 = vmatprep.subr.mxu0 0.0
  %6924 = vmatpush1.msra.mxu0 0.0
  %6925 = vmatprep.subr.mxu0 0.0
  %6926 = vmatpush1.msra.mxu0 0.0
  %6927 = vmatprep.mubr.f32.mxu0 0.0
  %6928 = vmatmul.mubr.f32.gmra.mrb[0].mxu0 %v6721
  %v6929 = vpop.f32.mrb[0].mxu0
  %v6930 = vadd.f32 0.0, %v6929
  %v6931 = vpop.f32.mrb[0].mxu0
  %6932 = vdwg.mxu0
  %v6934 = vsel %vm1081, %v6790, 0
  %v6937 = vsel %vm1081, %v6860, 0
  %6939 = vmatprep.subr.mxu0 0.0
  %6940 = vmatpush1.xpose.msra.mxu0 %v6937
  %6941 = vmatprep.subr.mxu0 0.0
  %6942 = vmatpush1.xpose.msra.mxu0 0.0
  %6943 = vmatprep.subr.mxu0 0.0
  %6944 = vmatpush1.xpose.msra.mxu0 0.0
  %6945 = vmatprep.subr.mxu0 0.0
  %6946 = vmatpush1.xpose.msra.mxu0 0.0
  %6947 = vmatprep.subr.mxu0 0.0
  %6948 = vmatpush1.xpose.msra.mxu0 0.0
  %6949 = vmatprep.subr.mxu0 0.0
  %6950 = vmatpush1.xpose.msra.mxu0 0.0
  %6951 = vmatprep.subr.mxu0 0.0
  %6952 = vmatpush1.xpose.msra.mxu0 0.0
  %6953 = vmatprep.subr.mxu0 0.0
  %6954 = vmatpush1.xpose.msra.mxu0 0.0
  %6955 = vmatprep.subr.mxu0 0.0
  %6956 = vmatpush1.xpose.msra.mxu0 0.0
  %6957 = vmatprep.subr.mxu0 0.0
  %6958 = vmatpush1.xpose.msra.mxu0 0.0
  %6959 = vmatprep.subr.mxu0 0.0
  %6960 = vmatpush1.xpose.msra.mxu0 0.0
  %6961 = vmatprep.subr.mxu0 0.0
  %6962 = vmatpush1.xpose.msra.mxu0 0.0
  %6963 = vmatprep.subr.mxu0 0.0
  %6964 = vmatpush1.xpose.msra.mxu0 0.0
  %6965 = vmatprep.subr.mxu0 0.0
  %6966 = vmatpush1.xpose.msra.mxu0 0.0
  %6967 = vmatprep.subr.mxu0 0.0
  %6968 = vmatpush1.xpose.msra.mxu0 0.0
  %6969 = vmatprep.subr.mxu0 0.0
  %6970 = vmatpush1.xpose.msra.mxu0 0.0
  %6971 = vmatprep.subr.mxu0 0.0
  %6972 = vmatpush1.xpose.msra.mxu0 0.0
  %6973 = vmatprep.subr.mxu0 0.0
  %6974 = vmatpush1.xpose.msra.mxu0 0.0
  %6975 = vmatprep.subr.mxu0 0.0
  %6976 = vmatpush1.xpose.msra.mxu0 0.0
  %6977 = vmatprep.subr.mxu0 0.0
  %6978 = vmatpush1.xpose.msra.mxu0 0.0
  %6979 = vmatprep.subr.mxu0 0.0
  %6980 = vmatpush1.xpose.msra.mxu0 0.0
  %6981 = vmatprep.subr.mxu0 0.0
  %6982 = vmatpush1.xpose.msra.mxu0 0.0
  %6983 = vmatprep.subr.mxu0 0.0
  %6984 = vmatpush1.xpose.msra.mxu0 0.0
  %6985 = vmatprep.subr.mxu0 0.0
  %6986 = vmatpush1.xpose.msra.mxu0 0.0
  %6987 = vmatprep.subr.mxu0 0.0
  %6988 = vmatpush1.xpose.msra.mxu0 0.0
  %6989 = vmatprep.subr.mxu0 0.0
  %6990 = vmatpush1.xpose.msra.mxu0 0.0
  %6991 = vmatprep.subr.mxu0 0.0
  %6992 = vmatpush1.xpose.msra.mxu0 0.0
  %6993 = vmatprep.subr.mxu0 0.0
  %6994 = vmatpush1.xpose.msra.mxu0 0.0
  %6995 = vmatprep.subr.mxu0 0.0
  %6996 = vmatpush1.xpose.msra.mxu0 0.0
  %6997 = vmatprep.subr.mxu0 0.0
  %6998 = vmatpush1.xpose.msra.mxu0 0.0
  %6999 = vmatprep.subr.mxu0 0.0
  %7000 = vmatpush1.xpose.msra.mxu0 0.0
  %7001 = vmatprep.subr.mxu0 0.0
  %7002 = vmatpush1.xpose.msra.mxu0 0.0
  %7003 = vmatprep.mubr.f32.mxu0 0.0
  %7004 = vmatmul.mubr.f32.gmra.mrb[0].mxu0 %v6934
  %v7005 = vpop.f32.mrb[0].mxu0
  %v7006 = vadd.f32 0.0, %v7005
  %v7007 = vpop.f32.mrb[0].mxu0
  %7008 = vdwg.mxu0
  %v7009 = vsel %vm1158, %v7006, -inf
  %7010 = vmax.xlane.f32.xlu0 %v7009
  %v7011 = vpop.xlane.xlu0 %7010
  %v7012 = vsub.f32 %v7006, %v7011
  %v7013 = vmul.f32 %v7012, 1.442695
  %v7014 = vpow.pop %v7013
  %v7015 = vsel %vm1158, %v7014, 0.0
  %7016 = vadd.xlane.f32.xlu0 %v7015
  %v7017 = vpop.xlane.xlu0 %7016
  %v7018 = vrcp.pop %v7017
  %v7019 = vmul.f32 %v7014, %v7018
  %v7021 = vsel %vm1158, %v7019, 0
  %7023 = vmatprep.subr.mxu0 0.0
  %7024 = vmatpush1.msra.mxu0 %v6930
  %7025 = vmatprep.subr.mxu0 0.0
  %7026 = vmatpush1.msra.mxu0 0.0
  %7027 = vmatprep.subr.mxu0 0.0
  %7028 = vmatpush1.msra.mxu0 0.0
  %7029 = vmatprep.subr.mxu0 0.0
  %7030 = vmatpush1.msra.mxu0 0.0
  %7031 = vmatprep.subr.mxu0 0.0
  %7032 = vmatpush1.msra.mxu0 0.0
  %7033 = vmatprep.subr.mxu0 0.0
  %7034 = vmatpush1.msra.mxu0 0.0
  %7035 = vmatprep.subr.mxu0 0.0
  %7036 = vmatpush1.msra.mxu0 0.0
  %7037 = vmatprep.subr.mxu0 0.0
  %7038 = vmatpush1.msra.mxu0 0.0
  %7039 = vmatprep.subr.mxu0 0.0
  %7040 = vmatpush1.msra.mxu0 0.0
  %7041 = vmatprep.subr.mxu0 0.0
  %7042 = vmatpush1.msra.mxu0 0.0
  %7043 = vmatprep.subr.mxu0 0.0
  %7044 = vmatpush1.msra.mxu0 0.0
  %7045 = vmatprep.subr.mxu0 0.0
  %7046 = vmatpush1.msra.mxu0 0.0
  %7047 = vmatprep.subr.mxu0 0.0
  %7048 = vmatpush1.msra.mxu0 0.0
  %7049 = vmatprep.subr.mxu0 0.0
  %7050 = vmatpush1.msra.mxu0 0.0
  %7051 = vmatprep.subr.mxu0 0.0
  %7052 = vmatpush1.msra.mxu0 0.0
  %7053 = vmatprep.subr.mxu0 0.0
  %7054 = vmatpush1.msra.mxu0 0.0
  %7055 = vmatprep.subr.mxu0 0.0
  %7056 = vmatpush1.msra.mxu0 0.0
  %7057 = vmatprep.subr.mxu0 0.0
  %7058 = vmatpush1.msra.mxu0 0.0
  %7059 = vmatprep.subr.mxu0 0.0
  %7060 = vmatpush1.msra.mxu0 0.0
  %7061 = vmatprep.subr.mxu0 0.0
  %7062 = vmatpush1.msra.mxu0 0.0
  %7063 = vmatprep.subr.mxu0 0.0
  %7064 = vmatpush1.msra.mxu0 0.0
  %7065 = vmatprep.subr.mxu0 0.0
  %7066 = vmatpush1.msra.mxu0 0.0
  %7067 = vmatprep.subr.mxu0 0.0
  %7068 = vmatpush1.msra.mxu0 0.0
  %7069 = vmatprep.subr.mxu0 0.0
  %7070 = vmatpush1.msra.mxu0 0.0
  %7071 = vmatprep.subr.mxu0 0.0
  %7072 = vmatpush1.msra.mxu0 0.0
  %7073 = vmatprep.subr.mxu0 0.0
  %7074 = vmatpush1.msra.mxu0 0.0
  %7075 = vmatprep.subr.mxu0 0.0
  %7076 = vmatpush1.msra.mxu0 0.0
  %7077 = vmatprep.subr.mxu0 0.0
  %7078 = vmatpush1.msra.mxu0 0.0
  %7079 = vmatprep.subr.mxu0 0.0
  %7080 = vmatpush1.msra.mxu0 0.0
  %7081 = vmatprep.subr.mxu0 0.0
  %7082 = vmatpush1.msra.mxu0 0.0
  %7083 = vmatprep.subr.mxu0 0.0
  %7084 = vmatpush1.msra.mxu0 0.0
  %7085 = vmatprep.subr.mxu0 0.0
  %7086 = vmatpush1.msra.mxu0 0.0
  %7087 = vmatprep.mubr.f32.mxu0 0.0
  %7088 = vmatmul.mubr.f32.gmra.mrb[0].mxu0 %v7021
  %v7089 = vpop.f32.mrb[0].mxu0
  %v7090 = vadd.f32 0.0, %v7089
  %v7091 = vpop.f32.mrb[0].mxu0
  %7092 = vdwg.mxu0
  %7093 = vmatprep.subr.mxu0 0.0
  %7094 = vmatpush1.msra.mxu0 %v5227
  %7095 = vmatprep.subr.mxu0 0.0
  %7096 = vmatpush1.msra.mxu0 %v5228
  %7097 = vmatprep.subr.mxu0 0.0
  %7098 = vmatpush1.msra.mxu0 %v5229
  %7099 = vmatprep.subr.mxu0 0.0
  %7100 = vmatpush1.msra.mxu0 %v5230
  %7101 = vmatprep.subr.mxu0 0.0
  %7102 = vmatpush1.msra.mxu0 %v5231
  %7103 = vmatprep.subr.mxu0 0.0
  %7104 = vmatpush1.msra.mxu0 %v5232
  %7105 = vmatprep.subr.mxu0 0.0
  %7106 = vmatpush1.msra.mxu0 %v5233
  %7107 = vmatprep.subr.mxu0 0.0
  %7108 = vmatpush1.msra.mxu0 %v5234
  %7109 = vmatprep.subr.mxu0 0.0
  %7110 = vmatpush1.msra.mxu0 0.0
  %7111 = vmatprep.subr.mxu0 0.0
  %7112 = vmatpush1.msra.mxu0 0.0
  %7113 = vmatprep.subr.mxu0 0.0
  %7114 = vmatpush1.msra.mxu0 0.0
  %7115 = vmatprep.subr.mxu0 0.0
  %7116 = vmatpush1.msra.mxu0 0.0
  %7117 = vmatprep.subr.mxu0 0.0
  %7118 = vmatpush1.msra.mxu0 0.0
  %7119 = vmatprep.subr.mxu0 0.0
  %7120 = vmatpush1.msra.mxu0 0.0
  %7121 = vmatprep.subr.mxu0 0.0
  %7122 = vmatpush1.msra.mxu0 0.0
  %7123 = vmatprep.subr.mxu0 0.0
  %7124 = vmatpush1.msra.mxu0 0.0
  %7125 = vmatprep.subr.mxu0 0.0
  %7126 = vmatpush1.msra.mxu0 0.0
  %7127 = vmatprep.subr.mxu0 0.0
  %7128 = vmatpush1.msra.mxu0 0.0
  %7129 = vmatprep.subr.mxu0 0.0
  %7130 = vmatpush1.msra.mxu0 0.0
  %7131 = vmatprep.subr.mxu0 0.0
  %7132 = vmatpush1.msra.mxu0 0.0
  %7133 = vmatprep.subr.mxu0 0.0
  %7134 = vmatpush1.msra.mxu0 0.0
  %7135 = vmatprep.subr.mxu0 0.0
  %7136 = vmatpush1.msra.mxu0 0.0
  %7137 = vmatprep.subr.mxu0 0.0
  %7138 = vmatpush1.msra.mxu0 0.0
  %7139 = vmatprep.subr.mxu0 0.0
  %7140 = vmatpush1.msra.mxu0 0.0
  %7141 = vmatprep.subr.mxu0 0.0
  %7142 = vmatpush1.msra.mxu0 0.0
  %7143 = vmatprep.subr.mxu0 0.0
  %7144 = vmatpush1.msra.mxu0 0.0
  %7145 = vmatprep.subr.mxu0 0.0
  %7146 = vmatpush1.msra.mxu0 0.0
  %7147 = vmatprep.subr.mxu0 0.0
  %7148 = vmatpush1.msra.mxu0 0.0
  %7149 = vmatprep.subr.mxu0 0.0
  %7150 = vmatpush1.msra.mxu0 0.0
  %7151 = vmatprep.subr.mxu0 0.0
  %7152 = vmatpush1.msra.mxu0 0.0
  %7153 = vmatprep.subr.mxu0 0.0
  %7154 = vmatpush1.msra.mxu0 0.0
  %7155 = vmatprep.subr.mxu0 0.0
  %7156 = vmatpush1.msra.mxu0 0.0
  %7157 = vmatprep.mubr.f32.mxu0 0.0
  %7158 = vmatmul.mubr.f32.gmra.mrb[0].mxu0 %v6721
  %v7159 = vpop.f32.mrb[0].mxu0
  %v7160 = vadd.f32 0.0, %v7159
  %v7161 = vpop.f32.mrb[0].mxu0
  %7162 = vdwg.mxu0
  %7163 = vmatprep.subr.mxu0 0.0
  %7164 = vmatpush1.msra.mxu0 %v5306
  %7165 = vmatprep.subr.mxu0 0.0
  %7166 = vmatpush1.msra.mxu0 %v5307
  %7167 = vmatprep.subr.mxu0 0.0
  %7168 = vmatpush1.msra.mxu0 %v5308
  %7169 = vmatprep.subr.mxu0 0.0
  %7170 = vmatpush1.msra.mxu0 %v5309
  %7171 = vmatprep.subr.mxu0 0.0
  %7172 = vmatpush1.msra.mxu0 %v5310
  %7173 = vmatprep.subr.mxu0 0.0
  %7174 = vmatpush1.msra.mxu0 %v5311
  %7175 = vmatprep.subr.mxu0 0.0
  %7176 = vmatpush1.msra.mxu0 %v5312
  %7177 = vmatprep.subr.mxu0 0.0
  %7178 = vmatpush1.msra.mxu0 %v5313
  %7179 = vmatprep.subr.mxu0 0.0
  %7180 = vmatpush1.msra.mxu0 0.0
  %7181 = vmatprep.subr.mxu0 0.0
  %7182 = vmatpush1.msra.mxu0 0.0
  %7183 = vmatprep.subr.mxu0 0.0
  %7184 = vmatpush1.msra.mxu0 0.0
  %7185 = vmatprep.subr.mxu0 0.0
  %7186 = vmatpush1.msra.mxu0 0.0
  %7187 = vmatprep.subr.mxu0 0.0
  %7188 = vmatpush1.msra.mxu0 0.0
  %7189 = vmatprep.subr.mxu0 0.0
  %7190 = vmatpush1.msra.mxu0 0.0
  %7191 = vmatprep.subr.mxu0 0.0
  %7192 = vmatpush1.msra.mxu0 0.0
  %7193 = vmatprep.subr.mxu0 0.0
  %7194 = vmatpush1.msra.mxu0 0.0
  %7195 = vmatprep.subr.mxu0 0.0
  %7196 = vmatpush1.msra.mxu0 0.0
  %7197 = vmatprep.subr.mxu0 0.0
  %7198 = vmatpush1.msra.mxu0 0.0
  %7199 = vmatprep.subr.mxu0 0.0
  %7200 = vmatpush1.msra.mxu0 0.0
  %7201 = vmatprep.subr.mxu0 0.0
  %7202 = vmatpush1.msra.mxu0 0.0
  %7203 = vmatprep.subr.mxu0 0.0
  %7204 = vmatpush1.msra.mxu0 0.0
  %7205 = vmatprep.subr.mxu0 0.0
  %7206 = vmatpush1.msra.mxu0 0.0
  %7207 = vmatprep.subr.mxu0 0.0
  %7208 = vmatpush1.msra.mxu0 0.0
  %7209 = vmatprep.subr.mxu0 0.0
  %7210 = vmatpush1.msra.mxu0 0.0
  %7211 = vmatprep.subr.mxu0 0.0
  %7212 = vmatpush1.msra.mxu0 0.0
  %7213 = vmatprep.subr.mxu0 0.0
  %7214 = vmatpush1.msra.mxu0 0.0
  %7215 = vmatprep.subr.mxu0 0.0
  %7216 = vmatpush1.msra.mxu0 0.0
  %7217 = vmatprep.subr.mxu0 0.0
  %7218 = vmatpush1.msra.mxu0 0.0
  %7219 = vmatprep.subr.mxu0 0.0
  %7220 = vmatpush1.msra.mxu0 0.0
  %7221 = vmatprep.subr.mxu0 0.0
  %7222 = vmatpush1.msra.mxu0 0.0
  %7223 = vmatprep.subr.mxu0 0.0
  %7224 = vmatpush1.msra.mxu0 0.0
  %7225 = vmatprep.subr.mxu0 0.0
  %7226 = vmatpush1.msra.mxu0 0.0
  %7227 = vmatprep.mubr.f32.mxu0 0.0
  %7228 = vmatmul.mubr.f32.gmra.mrb[0].mxu0 %v6721
  %v7229 = vpop.f32.mrb[0].mxu0
  %v7230 = vadd.f32 0.0, %v7229
  %v7231 = vpop.f32.mrb[0].mxu0
  %7232 = vdwg.mxu0
  %7233 = vmatprep.subr.mxu0 0.0
  %7234 = vmatpush1.msra.mxu0 %v5385
  %7235 = vmatprep.subr.mxu0 0.0
  %7236 = vmatpush1.msra.mxu0 %v5386
  %7237 = vmatprep.subr.mxu0 0.0
  %7238 = vmatpush1.msra.mxu0 %v5387
  %7239 = vmatprep.subr.mxu0 0.0
  %7240 = vmatpush1.msra.mxu0 %v5388
  %7241 = vmatprep.subr.mxu0 0.0
  %7242 = vmatpush1.msra.mxu0 %v5389
  %7243 = vmatprep.subr.mxu0 0.0
  %7244 = vmatpush1.msra.mxu0 %v5390
  %7245 = vmatprep.subr.mxu0 0.0
  %7246 = vmatpush1.msra.mxu0 %v5391
  %7247 = vmatprep.subr.mxu0 0.0
  %7248 = vmatpush1.msra.mxu0 %v5392
  %7249 = vmatprep.subr.mxu0 0.0
  %7250 = vmatpush1.msra.mxu0 0.0
  %7251 = vmatprep.subr.mxu0 0.0
  %7252 = vmatpush1.msra.mxu0 0.0
  %7253 = vmatprep.subr.mxu0 0.0
  %7254 = vmatpush1.msra.mxu0 0.0
  %7255 = vmatprep.subr.mxu0 0.0
  %7256 = vmatpush1.msra.mxu0 0.0
  %7257 = vmatprep.subr.mxu0 0.0
  %7258 = vmatpush1.msra.mxu0 0.0
  %7259 = vmatprep.subr.mxu0 0.0
  %7260 = vmatpush1.msra.mxu0 0.0
  %7261 = vmatprep.subr.mxu0 0.0
  %7262 = vmatpush1.msra.mxu0 0.0
  %7263 = vmatprep.subr.mxu0 0.0
  %7264 = vmatpush1.msra.mxu0 0.0
  %7265 = vmatprep.subr.mxu0 0.0
  %7266 = vmatpush1.msra.mxu0 0.0
  %7267 = vmatprep.subr.mxu0 0.0
  %7268 = vmatpush1.msra.mxu0 0.0
  %7269 = vmatprep.subr.mxu0 0.0
  %7270 = vmatpush1.msra.mxu0 0.0
  %7271 = vmatprep.subr.mxu0 0.0
  %7272 = vmatpush1.msra.mxu0 0.0
  %7273 = vmatprep.subr.mxu0 0.0
  %7274 = vmatpush1.msra.mxu0 0.0
  %7275 = vmatprep.subr.mxu0 0.0
  %7276 = vmatpush1.msra.mxu0 0.0
  %7277 = vmatprep.subr.mxu0 0.0
  %7278 = vmatpush1.msra.mxu0 0.0
  %7279 = vmatprep.subr.mxu0 0.0
  %7280 = vmatpush1.msra.mxu0 0.0
  %7281 = vmatprep.subr.mxu0 0.0
  %7282 = vmatpush1.msra.mxu0 0.0
  %7283 = vmatprep.subr.mxu0 0.0
  %7284 = vmatpush1.msra.mxu0 0.0
  %7285 = vmatprep.subr.mxu0 0.0
  %7286 = vmatpush1.msra.mxu0 0.0
  %7287 = vmatprep.subr.mxu0 0.0
  %7288 = vmatpush1.msra.mxu0 0.0
  %7289 = vmatprep.subr.mxu0 0.0
  %7290 = vmatpush1.msra.mxu0 0.0
  %7291 = vmatprep.subr.mxu0 0.0
  %7292 = vmatpush1.msra.mxu0 0.0
  %7293 = vmatprep.subr.mxu0 0.0
  %7294 = vmatpush1.msra.mxu0 0.0
  %7295 = vmatprep.subr.mxu0 0.0
  %7296 = vmatpush1.msra.mxu0 0.0
  %7297 = vmatprep.mubr.f32.mxu0 0.0
  %7298 = vmatmul.mubr.f32.gmra.mrb[0].mxu0 %v6721
  %v7299 = vpop.f32.mrb[0].mxu0
  %v7300 = vadd.f32 0.0, %v7299
  %v7301 = vpop.f32.mrb[0].mxu0
  %7302 = vdwg.mxu0
  %v7304 = vsel %vm1081, %v7160, 0
  %v7307 = vsel %vm1081, %v7230, 0
  %7309 = vmatprep.subr.mxu0 0.0
  %7310 = vmatpush1.xpose.msra.mxu0 %v7307
  %7311 = vmatprep.subr.mxu0 0.0
  %7312 = vmatpush1.xpose.msra.mxu0 0.0
  %7313 = vmatprep.subr.mxu0 0.0
  %7314 = vmatpush1.xpose.msra.mxu0 0.0
  %7315 = vmatprep.subr.mxu0 0.0
  %7316 = vmatpush1.xpose.msra.mxu0 0.0
  %7317 = vmatprep.subr.mxu0 0.0
  %7318 = vmatpush1.xpose.msra.mxu0 0.0
  %7319 = vmatprep.subr.mxu0 0.0
  %7320 = vmatpush1.xpose.msra.mxu0 0.0
  %7321 = vmatprep.subr.mxu0 0.0
  %7322 = vmatpush1.xpose.msra.mxu0 0.0
  %7323 = vmatprep.subr.mxu0 0.0
  %7324 = vmatpush1.xpose.msra.mxu0 0.0
  %7325 = vmatprep.subr.mxu0 0.0
  %7326 = vmatpush1.xpose.msra.mxu0 0.0
  %7327 = vmatprep.subr.mxu0 0.0
  %7328 = vmatpush1.xpose.msra.mxu0 0.0
  %7329 = vmatprep.subr.mxu0 0.0
  %7330 = vmatpush1.xpose.msra.mxu0 0.0
  %7331 = vmatprep.subr.mxu0 0.0
  %7332 = vmatpush1.xpose.msra.mxu0 0.0
  %7333 = vmatprep.subr.mxu0 0.0
  %7334 = vmatpush1.xpose.msra.mxu0 0.0
  %7335 = vmatprep.subr.mxu0 0.0
  %7336 = vmatpush1.xpose.msra.mxu0 0.0
  %7337 = vmatprep.subr.mxu0 0.0
  %7338 = vmatpush1.xpose.msra.mxu0 0.0
  %7339 = vmatprep.subr.mxu0 0.0
  %7340 = vmatpush1.xpose.msra.mxu0 0.0
  %7341 = vmatprep.subr.mxu0 0.0
  %7342 = vmatpush1.xpose.msra.mxu0 0.0
  %7343 = vmatprep.subr.mxu0 0.0
  %7344 = vmatpush1.xpose.msra.mxu0 0.0
  %7345 = vmatprep.subr.mxu0 0.0
  %7346 = vmatpush1.xpose.msra.mxu0 0.0
  %7347 = vmatprep.subr.mxu0 0.0
  %7348 = vmatpush1.xpose.msra.mxu0 0.0
  %7349 = vmatprep.subr.mxu0 0.0
  %7350 = vmatpush1.xpose.msra.mxu0 0.0
  %7351 = vmatprep.subr.mxu0 0.0
  %7352 = vmatpush1.xpose.msra.mxu0 0.0
  %7353 = vmatprep.subr.mxu0 0.0
  %7354 = vmatpush1.xpose.msra.mxu0 0.0
  %7355 = vmatprep.subr.mxu0 0.0
  %7356 = vmatpush1.xpose.msra.mxu0 0.0
  %7357 = vmatprep.subr.mxu0 0.0
  %7358 = vmatpush1.xpose.msra.mxu0 0.0
  %7359 = vmatprep.subr.mxu0 0.0
  %7360 = vmatpush1.xpose.msra.mxu0 0.0
  %7361 = vmatprep.subr.mxu0 0.0
  %7362 = vmatpush1.xpose.msra.mxu0 0.0
  %7363 = vmatprep.subr.mxu0 0.0
  %7364 = vmatpush1.xpose.msra.mxu0 0.0
  %7365 = vmatprep.subr.mxu0 0.0
  %7366 = vmatpush1.xpose.msra.mxu0 0.0
  %7367 = vmatprep.subr.mxu0 0.0
  %7368 = vmatpush1.xpose.msra.mxu0 0.0
  %7369 = vmatprep.subr.mxu0 0.0
  %7370 = vmatpush1.xpose.msra.mxu0 0.0
  %7371 = vmatprep.subr.mxu0 0.0
  %7372 = vmatpush1.xpose.msra.mxu0 0.0
  %7373 = vmatprep.mubr.f32.mxu0 0.0
  %7374 = vmatmul.mubr.f32.gmra.mrb[0].mxu0 %v7304
  %v7375 = vpop.f32.mrb[0].mxu0
  %v7376 = vadd.f32 0.0, %v7375
  %v7377 = vpop.f32.mrb[0].mxu0
  %7378 = vdwg.mxu0
  %v7379 = vsel %vm1158, %v7376, -inf
  %7380 = vmax.xlane.f32.xlu0 %v7379
  %v7381 = vpop.xlane.xlu0 %7380
  %v7382 = vsub.f32 %v7376, %v7381
  %v7383 = vmul.f32 %v7382, 1.442695
  %v7384 = vpow.pop %v7383
  %v7385 = vsel %vm1158, %v7384, 0.0
  %7386 = vadd.xlane.f32.xlu0 %v7385
  %v7387 = vpop.xlane.xlu0 %7386
  %v7388 = vrcp.pop %v7387
  %v7389 = vmul.f32 %v7384, %v7388
  %v7391 = vsel %vm1158, %v7389, 0
  %7393 = vmatprep.subr.mxu0 0.0
  %7394 = vmatpush1.msra.mxu0 %v7300
  %7395 = vmatprep.subr.mxu0 0.0
  %7396 = vmatpush1.msra.mxu0 0.0
  %7397 = vmatprep.subr.mxu0 0.0
  %7398 = vmatpush1.msra.mxu0 0.0
  %7399 = vmatprep.subr.mxu0 0.0
  %7400 = vmatpush1.msra.mxu0 0.0
  %7401 = vmatprep.subr.mxu0 0.0
  %7402 = vmatpush1.msra.mxu0 0.0
  %7403 = vmatprep.subr.mxu0 0.0
  %7404 = vmatpush1.msra.mxu0 0.0
  %7405 = vmatprep.subr.mxu0 0.0
  %7406 = vmatpush1.msra.mxu0 0.0
  %7407 = vmatprep.subr.mxu0 0.0
  %7408 = vmatpush1.msra.mxu0 0.0
  %7409 = vmatprep.subr.mxu0 0.0
  %7410 = vmatpush1.msra.mxu0 0.0
  %7411 = vmatprep.subr.mxu0 0.0
  %7412 = vmatpush1.msra.mxu0 0.0
  %7413 = vmatprep.subr.mxu0 0.0
  %7414 = vmatpush1.msra.mxu0 0.0
  %7415 = vmatprep.subr.mxu0 0.0
  %7416 = vmatpush1.msra.mxu0 0.0
  %7417 = vmatprep.subr.mxu0 0.0
  %7418 = vmatpush1.msra.mxu0 0.0
  %7419 = vmatprep.subr.mxu0 0.0
  %7420 = vmatpush1.msra.mxu0 0.0
  %7421 = vmatprep.subr.mxu0 0.0
  %7422 = vmatpush1.msra.mxu0 0.0
  %7423 = vmatprep.subr.mxu0 0.0
  %7424 = vmatpush1.msra.mxu0 0.0
  %7425 = vmatprep.subr.mxu0 0.0
  %7426 = vmatpush1.msra.mxu0 0.0
  %7427 = vmatprep.subr.mxu0 0.0
  %7428 = vmatpush1.msra.mxu0 0.0
  %7429 = vmatprep.subr.mxu0 0.0
  %7430 = vmatpush1.msra.mxu0 0.0
  %7431 = vmatprep.subr.mxu0 0.0
  %7432 = vmatpush1.msra.mxu0 0.0
  %7433 = vmatprep.subr.mxu0 0.0
  %7434 = vmatpush1.msra.mxu0 0.0
  %7435 = vmatprep.subr.mxu0 0.0
  %7436 = vmatpush1.msra.mxu0 0.0
  %7437 = vmatprep.subr.mxu0 0.0
  %7438 = vmatpush1.msra.mxu0 0.0
  %7439 = vmatprep.subr.mxu0 0.0
  %7440 = vmatpush1.msra.mxu0 0.0
  %7441 = vmatprep.subr.mxu0 0.0
  %7442 = vmatpush1.msra.mxu0 0.0
  %7443 = vmatprep.subr.mxu0 0.0
  %7444 = vmatpush1.msra.mxu0 0.0
  %7445 = vmatprep.subr.mxu0 0.0
  %7446 = vmatpush1.msra.mxu0 0.0
  %7447 = vmatprep.subr.mxu0 0.0
  %7448 = vmatpush1.msra.mxu0 0.0
  %7449 = vmatprep.subr.mxu0 0.0
  %7450 = vmatpush1.msra.mxu0 0.0
  %7451 = vmatprep.subr.mxu0 0.0
  %7452 = vmatpush1.msra.mxu0 0.0
  %7453 = vmatprep.subr.mxu0 0.0
  %7454 = vmatpush1.msra.mxu0 0.0
  %7455 = vmatprep.subr.mxu0 0.0
  %7456 = vmatpush1.msra.mxu0 0.0
  %7457 = vmatprep.mubr.f32.mxu0 0.0
  %7458 = vmatmul.mubr.f32.gmra.mrb[0].mxu0 %v7391
  %v7459 = vpop.f32.mrb[0].mxu0
  %v7460 = vadd.f32 0.0, %v7459
  %v7461 = vpop.f32.mrb[0].mxu0
  %7462 = vdwg.mxu0
  %v7464 = vsel %vm1081, %v7460, 0
  %7466 = vmatprep.subr.mxu0 0.0
  %7467 = vmatpush1.msra.mxu0 %v5624
  %7468 = vmatprep.subr.mxu0 0.0
  %7469 = vmatpush1.msra.mxu0 %v5625
  %7470 = vmatprep.subr.mxu0 0.0
  %7471 = vmatpush1.msra.mxu0 0.0
  %7472 = vmatprep.subr.mxu0 0.0
  %7473 = vmatpush1.msra.mxu0 0.0
  %7474 = vmatprep.subr.mxu0 0.0
  %7475 = vmatpush1.msra.mxu0 0.0
  %7476 = vmatprep.subr.mxu0 0.0
  %7477 = vmatpush1.msra.mxu0 0.0
  %7478 = vmatprep.subr.mxu0 0.0
  %7479 = vmatpush1.msra.mxu0 0.0
  %7480 = vmatprep.subr.mxu0 0.0
  %7481 = vmatpush1.msra.mxu0 0.0
  %7482 = vmatprep.subr.mxu0 0.0
  %7483 = vmatpush1.msra.mxu0 0.0
  %7484 = vmatprep.subr.mxu0 0.0
  %7485 = vmatpush1.msra.mxu0 0.0
  %7486 = vmatprep.subr.mxu0 0.0
  %7487 = vmatpush1.msra.mxu0 0.0
  %7488 = vmatprep.subr.mxu0 0.0
  %7489 = vmatpush1.msra.mxu0 0.0
  %7490 = vmatprep.subr.mxu0 0.0
  %7491 = vmatpush1.msra.mxu0 0.0
  %7492 = vmatprep.subr.mxu0 0.0
  %7493 = vmatpush1.msra.mxu0 0.0
  %7494 = vmatprep.subr.mxu0 0.0
  %7495 = vmatpush1.msra.mxu0 0.0
  %7496 = vmatprep.subr.mxu0 0.0
  %7497 = vmatpush1.msra.mxu0 0.0
  %7498 = vmatprep.subr.mxu0 0.0
  %7499 = vmatpush1.msra.mxu0 0.0
  %7500 = vmatprep.subr.mxu0 0.0
  %7501 = vmatpush1.msra.mxu0 0.0
  %7502 = vmatprep.subr.mxu0 0.0
  %7503 = vmatpush1.msra.mxu0 0.0
  %7504 = vmatprep.subr.mxu0 0.0
  %7505 = vmatpush1.msra.mxu0 0.0
  %7506 = vmatprep.subr.mxu0 0.0
  %7507 = vmatpush1.msra.mxu0 0.0
  %7508 = vmatprep.subr.mxu0 0.0
  %7509 = vmatpush1.msra.mxu0 0.0
  %7510 = vmatprep.subr.mxu0 0.0
  %7511 = vmatpush1.msra.mxu0 0.0
  %7512 = vmatprep.subr.mxu0 0.0
  %7513 = vmatpush1.msra.mxu0 0.0
  %7514 = vmatprep.subr.mxu0 0.0
  %7515 = vmatpush1.msra.mxu0 0.0
  %7516 = vmatprep.subr.mxu0 0.0
  %7517 = vmatpush1.msra.mxu0 0.0
  %7518 = vmatprep.subr.mxu0 0.0
  %7519 = vmatpush1.msra.mxu0 0.0
  %7520 = vmatprep.subr.mxu0 0.0
  %7521 = vmatpush1.msra.mxu0 0.0
  %7522 = vmatprep.subr.mxu0 0.0
  %7523 = vmatpush1.msra.mxu0 0.0
  %7524 = vmatprep.subr.mxu0 0.0
  %7525 = vmatpush1.msra.mxu0 0.0
  %7526 = vmatprep.subr.mxu0 0.0
  %7527 = vmatpush1.msra.mxu0 0.0
  %7528 = vmatprep.subr.mxu0 0.0
  %7529 = vmatpush1.msra.mxu0 0.0
  %7530 = vmatprep.mubr.f32.mxu0 0.0
  %7531 = vmatmul.mubr.f32.gmra.mrb[0].mxu0 %v7464
  %v7532 = vpop.f32.mrb[0].mxu0
  %v7533 = vadd.f32 0.0, %v7532
  %v7534 = vpop.f32.mrb[0].mxu0
  %7535 = vdwg.mxu0
  %v7537 = vsel %vm1081, %v7090, 0
  %7539 = vmatprep.subr.mxu0 0.0
  %7540 = vmatpush1.msra.mxu0 %v5224
  %7541 = vmatprep.subr.mxu0 0.0
  %7542 = vmatpush1.msra.mxu0 %v5225
  %7543 = vmatprep.subr.mxu0 0.0
  %7544 = vmatpush1.msra.mxu0 0.0
  %7545 = vmatprep.subr.mxu0 0.0
  %7546 = vmatpush1.msra.mxu0 0.0
  %7547 = vmatprep.subr.mxu0 0.0
  %7548 = vmatpush1.msra.mxu0 0.0
  %7549 = vmatprep.subr.mxu0 0.0
  %7550 = vmatpush1.msra.mxu0 0.0
  %7551 = vmatprep.subr.mxu0 0.0
  %7552 = vmatpush1.msra.mxu0 0.0
  %7553 = vmatprep.subr.mxu0 0.0
  %7554 = vmatpush1.msra.mxu0 0.0
  %7555 = vmatprep.subr.mxu0 0.0
  %7556 = vmatpush1.msra.mxu0 0.0
  %7557 = vmatprep.subr.mxu0 0.0
  %7558 = vmatpush1.msra.mxu0 0.0
  %7559 = vmatprep.subr.mxu0 0.0
  %7560 = vmatpush1.msra.mxu0 0.0
  %7561 = vmatprep.subr.mxu0 0.0
  %7562 = vmatpush1.msra.mxu0 0.0
  %7563 = vmatprep.subr.mxu0 0.0
  %7564 = vmatpush1.msra.mxu0 0.0
  %7565 = vmatprep.subr.mxu0 0.0
  %7566 = vmatpush1.msra.mxu0 0.0
  %7567 = vmatprep.subr.mxu0 0.0
  %7568 = vmatpush1.msra.mxu0 0.0
  %7569 = vmatprep.subr.mxu0 0.0
  %7570 = vmatpush1.msra.mxu0 0.0
  %7571 = vmatprep.subr.mxu0 0.0
  %7572 = vmatpush1.msra.mxu0 0.0
  %7573 = vmatprep.subr.mxu0 0.0
  %7574 = vmatpush1.msra.mxu0 0.0
  %7575 = vmatprep.subr.mxu0 0.0
  %7576 = vmatpush1.msra.mxu0 0.0
  %7577 = vmatprep.subr.mxu0 0.0
  %7578 = vmatpush1.msra.mxu0 0.0
  %7579 = vmatprep.subr.mxu0 0.0
  %7580 = vmatpush1.msra.mxu0 0.0
  %7581 = vmatprep.subr.mxu0 0.0
  %7582 = vmatpush1.msra.mxu0 0.0
  %7583 = vmatprep.subr.mxu0 0.0
  %7584 = vmatpush1.msra.mxu0 0.0
  %7585 = vmatprep.subr.mxu0 0.0
  %7586 = vmatpush1.msra.mxu0 0.0
  %7587 = vmatprep.subr.mxu0 0.0
  %7588 = vmatpush1.msra.mxu0 0.0
  %7589 = vmatprep.subr.mxu0 0.0
  %7590 = vmatpush1.msra.mxu0 0.0
  %7591 = vmatprep.subr.mxu0 0.0
  %7592 = vmatpush1.msra.mxu0 0.0
  %7593 = vmatprep.subr.mxu0 0.0
  %7594 = vmatpush1.msra.mxu0 0.0
  %7595 = vmatprep.subr.mxu0 0.0
  %7596 = vmatpush1.msra.mxu0 0.0
  %7597 = vmatprep.subr.mxu0 0.0
  %7598 = vmatpush1.msra.mxu0 0.0
  %7599 = vmatprep.subr.mxu0 0.0
  %7600 = vmatpush1.msra.mxu0 0.0
  %7601 = vmatprep.subr.mxu0 0.0
  %7602 = vmatpush1.msra.mxu0 0.0
  %7603 = vmatprep.mubr.f32.mxu0 0.0
  %7604 = vmatmul.mubr.f32.gmra.mrb[0].mxu0 %v7537
  %v7605 = vpop.f32.mrb[0].mxu0
  %v7606 = vadd.f32 %v7533, %v7605
  %v7607 = vpop.f32.mrb[0].mxu0
  %7608 = vdwg.mxu0
  %7609 = vmatprep.subr.mxu0 0.0
  %7610 = vmatpush1.msra.mxu0 %v5773
  %7611 = vmatprep.subr.mxu0 0.0
  %7612 = vmatpush1.msra.mxu0 %v5774
  %7613 = vmatprep.subr.mxu0 0.0
  %7614 = vmatpush1.msra.mxu0 %v5775
  %7615 = vmatprep.subr.mxu0 0.0
  %7616 = vmatpush1.msra.mxu0 %v5776
  %7617 = vmatprep.subr.mxu0 0.0
  %7618 = vmatpush1.msra.mxu0 %v5777
  %7619 = vmatprep.subr.mxu0 0.0
  %7620 = vmatpush1.msra.mxu0 %v5778
  %7621 = vmatprep.subr.mxu0 0.0
  %7622 = vmatpush1.msra.mxu0 %v5779
  %7623 = vmatprep.subr.mxu0 0.0
  %7624 = vmatpush1.msra.mxu0 %v5780
  %7625 = vmatprep.subr.mxu0 0.0
  %7626 = vmatpush1.msra.mxu0 0.0
  %7627 = vmatprep.subr.mxu0 0.0
  %7628 = vmatpush1.msra.mxu0 0.0
  %7629 = vmatprep.subr.mxu0 0.0
  %7630 = vmatpush1.msra.mxu0 0.0
  %7631 = vmatprep.subr.mxu0 0.0
  %7632 = vmatpush1.msra.mxu0 0.0
  %7633 = vmatprep.subr.mxu0 0.0
  %7634 = vmatpush1.msra.mxu0 0.0
  %7635 = vmatprep.subr.mxu0 0.0
  %7636 = vmatpush1.msra.mxu0 0.0
  %7637 = vmatprep.subr.mxu0 0.0
  %7638 = vmatpush1.msra.mxu0 0.0
  %7639 = vmatprep.subr.mxu0 0.0
  %7640 = vmatpush1.msra.mxu0 0.0
  %7641 = vmatprep.subr.mxu0 0.0
  %7642 = vmatpush1.msra.mxu0 0.0
  %7643 = vmatprep.subr.mxu0 0.0
  %7644 = vmatpush1.msra.mxu0 0.0
  %7645 = vmatprep.subr.mxu0 0.0
  %7646 = vmatpush1.msra.mxu0 0.0
  %7647 = vmatprep.subr.mxu0 0.0
  %7648 = vmatpush1.msra.mxu0 0.0
  %7649 = vmatprep.subr.mxu0 0.0
  %7650 = vmatpush1.msra.mxu0 0.0
  %7651 = vmatprep.subr.mxu0 0.0
  %7652 = vmatpush1.msra.mxu0 0.0
  %7653 = vmatprep.subr.mxu0 0.0
  %7654 = vmatpush1.msra.mxu0 0.0
  %7655 = vmatprep.subr.mxu0 0.0
  %7656 = vmatpush1.msra.mxu0 0.0
  %7657 = vmatprep.subr.mxu0 0.0
  %7658 = vmatpush1.msra.mxu0 0.0
  %7659 = vmatprep.subr.mxu0 0.0
  %7660 = vmatpush1.msra.mxu0 0.0
  %7661 = vmatprep.subr.mxu0 0.0
  %7662 = vmatpush1.msra.mxu0 0.0
  %7663 = vmatprep.subr.mxu0 0.0
  %7664 = vmatpush1.msra.mxu0 0.0
  %7665 = vmatprep.subr.mxu0 0.0
  %7666 = vmatpush1.msra.mxu0 0.0
  %7667 = vmatprep.subr.mxu0 0.0
  %7668 = vmatpush1.msra.mxu0 0.0
  %7669 = vmatprep.subr.mxu0 0.0
  %7670 = vmatpush1.msra.mxu0 0.0
  %7671 = vmatprep.subr.mxu0 0.0
  %7672 = vmatpush1.msra.mxu0 0.0
  %7673 = vmatprep.mubr.f32.mxu0 0.0
  %7674 = vmatmul.mubr.f32.gmra.mrb[0].mxu0 %v6721
  %v7675 = vpop.f32.mrb[0].mxu0
  %v7676 = vadd.f32 0.0, %v7675
  %v7677 = vpop.f32.mrb[0].mxu0
  %7678 = vdwg.mxu0
  %7679 = vmatprep.subr.mxu0 0.0
  %7680 = vmatpush1.msra.mxu0 %v5852
  %7681 = vmatprep.subr.mxu0 0.0
  %7682 = vmatpush1.msra.mxu0 %v5853
  %7683 = vmatprep.subr.mxu0 0.0
  %7684 = vmatpush1.msra.mxu0 %v5854
  %7685 = vmatprep.subr.mxu0 0.0
  %7686 = vmatpush1.msra.mxu0 %v5855
  %7687 = vmatprep.subr.mxu0 0.0
  %7688 = vmatpush1.msra.mxu0 %v5856
  %7689 = vmatprep.subr.mxu0 0.0
  %7690 = vmatpush1.msra.mxu0 %v5857
  %7691 = vmatprep.subr.mxu0 0.0
  %7692 = vmatpush1.msra.mxu0 %v5858
  %7693 = vmatprep.subr.mxu0 0.0
  %7694 = vmatpush1.msra.mxu0 %v5859
  %7695 = vmatprep.subr.mxu0 0.0
  %7696 = vmatpush1.msra.mxu0 0.0
  %7697 = vmatprep.subr.mxu0 0.0
  %7698 = vmatpush1.msra.mxu0 0.0
  %7699 = vmatprep.subr.mxu0 0.0
  %7700 = vmatpush1.msra.mxu0 0.0
  %7701 = vmatprep.subr.mxu0 0.0
  %7702 = vmatpush1.msra.mxu0 0.0
  %7703 = vmatprep.subr.mxu0 0.0
  %7704 = vmatpush1.msra.mxu0 0.0
  %7705 = vmatprep.subr.mxu0 0.0
  %7706 = vmatpush1.msra.mxu0 0.0
  %7707 = vmatprep.subr.mxu0 0.0
  %7708 = vmatpush1.msra.mxu0 0.0
  %7709 = vmatprep.subr.mxu0 0.0
  %7710 = vmatpush1.msra.mxu0 0.0
  %7711 = vmatprep.subr.mxu0 0.0
  %7712 = vmatpush1.msra.mxu0 0.0
  %7713 = vmatprep.subr.mxu0 0.0
  %7714 = vmatpush1.msra.mxu0 0.0
  %7715 = vmatprep.subr.mxu0 0.0
  %7716 = vmatpush1.msra.mxu0 0.0
  %7717 = vmatprep.subr.mxu0 0.0
  %7718 = vmatpush1.msra.mxu0 0.0
  %7719 = vmatprep.subr.mxu0 0.0
  %7720 = vmatpush1.msra.mxu0 0.0
  %7721 = vmatprep.subr.mxu0 0.0
  %7722 = vmatpush1.msra.mxu0 0.0
  %7723 = vmatprep.subr.mxu0 0.0
  %7724 = vmatpush1.msra.mxu0 0.0
  %7725 = vmatprep.subr.mxu0 0.0
  %7726 = vmatpush1.msra.mxu0 0.0
  %7727 = vmatprep.subr.mxu0 0.0
  %7728 = vmatpush1.msra.mxu0 0.0
  %7729 = vmatprep.subr.mxu0 0.0
  %7730 = vmatpush1.msra.mxu0 0.0
  %7731 = vmatprep.subr.mxu0 0.0
  %7732 = vmatpush1.msra.mxu0 0.0
  %7733 = vmatprep.subr.mxu0 0.0
  %7734 = vmatpush1.msra.mxu0 0.0
  %7735 = vmatprep.subr.mxu0 0.0
  %7736 = vmatpush1.msra.mxu0 0.0
  %7737 = vmatprep.subr.mxu0 0.0
  %7738 = vmatpush1.msra.mxu0 0.0
  %7739 = vmatprep.subr.mxu0 0.0
  %7740 = vmatpush1.msra.mxu0 0.0
  %7741 = vmatprep.subr.mxu0 0.0
  %7742 = vmatpush1.msra.mxu0 0.0
  %7743 = vmatprep.mubr.f32.mxu0 0.0
  %7744 = vmatmul.mubr.f32.gmra.mrb[0].mxu0 %v6721
  %v7745 = vpop.f32.mrb[0].mxu0
  %v7746 = vadd.f32 0.0, %v7745
  %v7747 = vpop.f32.mrb[0].mxu0
  %7748 = vdwg.mxu0
  %7749 = vmatprep.subr.mxu0 0.0
  %7750 = vmatpush1.msra.mxu0 %v5931
  %7751 = vmatprep.subr.mxu0 0.0
  %7752 = vmatpush1.msra.mxu0 %v5932
  %7753 = vmatprep.subr.mxu0 0.0
  %7754 = vmatpush1.msra.mxu0 %v5933
  %7755 = vmatprep.subr.mxu0 0.0
  %7756 = vmatpush1.msra.mxu0 %v5934
  %7757 = vmatprep.subr.mxu0 0.0
  %7758 = vmatpush1.msra.mxu0 %v5935
  %7759 = vmatprep.subr.mxu0 0.0
  %7760 = vmatpush1.msra.mxu0 %v5936
  %7761 = vmatprep.subr.mxu0 0.0
  %7762 = vmatpush1.msra.mxu0 %v5937
  %7763 = vmatprep.subr.mxu0 0.0
  %7764 = vmatpush1.msra.mxu0 %v5938
  %7765 = vmatprep.subr.mxu0 0.0
  %7766 = vmatpush1.msra.mxu0 0.0
  %7767 = vmatprep.subr.mxu0 0.0
  %7768 = vmatpush1.msra.mxu0 0.0
  %7769 = vmatprep.subr.mxu0 0.0
  %7770 = vmatpush1.msra.mxu0 0.0
  %7771 = vmatprep.subr.mxu0 0.0
  %7772 = vmatpush1.msra.mxu0 0.0
  %7773 = vmatprep.subr.mxu0 0.0
  %7774 = vmatpush1.msra.mxu0 0.0
  %7775 = vmatprep.subr.mxu0 0.0
  %7776 = vmatpush1.msra.mxu0 0.0
  %7777 = vmatprep.subr.mxu0 0.0
  %7778 = vmatpush1.msra.mxu0 0.0
  %7779 = vmatprep.subr.mxu0 0.0
  %7780 = vmatpush1.msra.mxu0 0.0
  %7781 = vmatprep.subr.mxu0 0.0
  %7782 = vmatpush1.msra.mxu0 0.0
  %7783 = vmatprep.subr.mxu0 0.0
  %7784 = vmatpush1.msra.mxu0 0.0
  %7785 = vmatprep.subr.mxu0 0.0
  %7786 = vmatpush1.msra.mxu0 0.0
  %7787 = vmatprep.subr.mxu0 0.0
  %7788 = vmatpush1.msra.mxu0 0.0
  %7789 = vmatprep.subr.mxu0 0.0
  %7790 = vmatpush1.msra.mxu0 0.0
  %7791 = vmatprep.subr.mxu0 0.0
  %7792 = vmatpush1.msra.mxu0 0.0
  %7793 = vmatprep.subr.mxu0 0.0
  %7794 = vmatpush1.msra.mxu0 0.0
  %7795 = vmatprep.subr.mxu0 0.0
  %7796 = vmatpush1.msra.mxu0 0.0
  %7797 = vmatprep.subr.mxu0 0.0
  %7798 = vmatpush1.msra.mxu0 0.0
  %7799 = vmatprep.subr.mxu0 0.0
  %7800 = vmatpush1.msra.mxu0 0.0
  %7801 = vmatprep.subr.mxu0 0.0
  %7802 = vmatpush1.msra.mxu0 0.0
  %7803 = vmatprep.subr.mxu0 0.0
  %7804 = vmatpush1.msra.mxu0 0.0
  %7805 = vmatprep.subr.mxu0 0.0
  %7806 = vmatpush1.msra.mxu0 0.0
  %7807 = vmatprep.subr.mxu0 0.0
  %7808 = vmatpush1.msra.mxu0 0.0
  %7809 = vmatprep.subr.mxu0 0.0
  %7810 = vmatpush1.msra.mxu0 0.0
  %7811 = vmatprep.subr.mxu0 0.0
  %7812 = vmatpush1.msra.mxu0 0.0
  %7813 = vmatprep.mubr.f32.mxu0 0.0
  %7814 = vmatmul.mubr.f32.gmra.mrb[0].mxu0 %v6721
  %v7815 = vpop.f32.mrb[0].mxu0
  %v7816 = vadd.f32 0.0, %v7815
  %v7817 = vpop.f32.mrb[0].mxu0
  %7818 = vdwg.mxu0
  %v7820 = vsel %vm1081, %v7676, 0
  %v7823 = vsel %vm1081, %v7746, 0
  %7825 = vmatprep.subr.mxu0 0.0
  %7826 = vmatpush1.xpose.msra.mxu0 %v7823
  %7827 = vmatprep.subr.mxu0 0.0
  %7828 = vmatpush1.xpose.msra.mxu0 0.0
  %7829 = vmatprep.subr.mxu0 0.0
  %7830 = vmatpush1.xpose.msra.mxu0 0.0
  %7831 = vmatprep.subr.mxu0 0.0
  %7832 = vmatpush1.xpose.msra.mxu0 0.0
  %7833 = vmatprep.subr.mxu0 0.0
  %7834 = vmatpush1.xpose.msra.mxu0 0.0
  %7835 = vmatprep.subr.mxu0 0.0
  %7836 = vmatpush1.xpose.msra.mxu0 0.0
  %7837 = vmatprep.subr.mxu0 0.0
  %7838 = vmatpush1.xpose.msra.mxu0 0.0
  %7839 = vmatprep.subr.mxu0 0.0
  %7840 = vmatpush1.xpose.msra.mxu0 0.0
  %7841 = vmatprep.subr.mxu0 0.0
  %7842 = vmatpush1.xpose.msra.mxu0 0.0
  %7843 = vmatprep.subr.mxu0 0.0
  %7844 = vmatpush1.xpose.msra.mxu0 0.0
  %7845 = vmatprep.subr.mxu0 0.0
  %7846 = vmatpush1.xpose.msra.mxu0 0.0
  %7847 = vmatprep.subr.mxu0 0.0
  %7848 = vmatpush1.xpose.msra.mxu0 0.0
  %7849 = vmatprep.subr.mxu0 0.0
  %7850 = vmatpush1.xpose.msra.mxu0 0.0
  %7851 = vmatprep.subr.mxu0 0.0
  %7852 = vmatpush1.xpose.msra.mxu0 0.0
  %7853 = vmatprep.subr.mxu0 0.0
  %7854 = vmatpush1.xpose.msra.mxu0 0.0
  %7855 = vmatprep.subr.mxu0 0.0
  %7856 = vmatpush1.xpose.msra.mxu0 0.0
  %7857 = vmatprep.subr.mxu0 0.0
  %7858 = vmatpush1.xpose.msra.mxu0 0.0
  %7859 = vmatprep.subr.mxu0 0.0
  %7860 = vmatpush1.xpose.msra.mxu0 0.0
  %7861 = vmatprep.subr.mxu0 0.0
  %7862 = vmatpush1.xpose.msra.mxu0 0.0
  %7863 = vmatprep.subr.mxu0 0.0
  %7864 = vmatpush1.xpose.msra.mxu0 0.0
  %7865 = vmatprep.subr.mxu0 0.0
  %7866 = vmatpush1.xpose.msra.mxu0 0.0
  %7867 = vmatprep.subr.mxu0 0.0
  %7868 = vmatpush1.xpose.msra.mxu0 0.0
  %7869 = vmatprep.subr.mxu0 0.0
  %7870 = vmatpush1.xpose.msra.mxu0 0.0
  %7871 = vmatprep.subr.mxu0 0.0
  %7872 = vmatpush1.xpose.msra.mxu0 0.0
  %7873 = vmatprep.subr.mxu0 0.0
  %7874 = vmatpush1.xpose.msra.mxu0 0.0
  %7875 = vmatprep.subr.mxu0 0.0
  %7876 = vmatpush1.xpose.msra.mxu0 0.0
  %7877 = vmatprep.subr.mxu0 0.0
  %7878 = vmatpush1.xpose.msra.mxu0 0.0
  %7879 = vmatprep.subr.mxu0 0.0
  %7880 = vmatpush1.xpose.msra.mxu0 0.0
  %7881 = vmatprep.subr.mxu0 0.0
  %7882 = vmatpush1.xpose.msra.mxu0 0.0
  %7883 = vmatprep.subr.mxu0 0.0
  %7884 = vmatpush1.xpose.msra.mxu0 0.0
  %7885 = vmatprep.subr.mxu0 0.0
  %7886 = vmatpush1.xpose.msra.mxu0 0.0
  %7887 = vmatprep.subr.mxu0 0.0
  %7888 = vmatpush1.xpose.msra.mxu0 0.0
  %7889 = vmatprep.mubr.f32.mxu0 0.0
  %7890 = vmatmul.mubr.f32.gmra.mrb[0].mxu0 %v7820
  %v7891 = vpop.f32.mrb[0].mxu0
  %v7892 = vadd.f32 0.0, %v7891
  %v7893 = vpop.f32.mrb[0].mxu0
  %7894 = vdwg.mxu0
  %v7895 = vsel %vm1158, %v7892, -inf
  %7896 = vmax.xlane.f32.xlu0 %v7895
  %v7897 = vpop.xlane.xlu0 %7896
  %v7898 = vsub.f32 %v7892, %v7897
  %v7899 = vmul.f32 %v7898, 1.442695
  %v7900 = vpow.pop %v7899
  %v7901 = vsel %vm1158, %v7900, 0.0
  %7902 = vadd.xlane.f32.xlu0 %v7901
  %v7903 = vpop.xlane.xlu0 %7902
  %v7904 = vrcp.pop %v7903
  %v7905 = vmul.f32 %v7900, %v7904
  %v7907 = vsel %vm1158, %v7905, 0
  %7909 = vmatprep.subr.mxu0 0.0
  %7910 = vmatpush1.msra.mxu0 %v7816
  %7911 = vmatprep.subr.mxu0 0.0
  %7912 = vmatpush1.msra.mxu0 0.0
  %7913 = vmatprep.subr.mxu0 0.0
  %7914 = vmatpush1.msra.mxu0 0.0
  %7915 = vmatprep.subr.mxu0 0.0
  %7916 = vmatpush1.msra.mxu0 0.0
  %7917 = vmatprep.subr.mxu0 0.0
  %7918 = vmatpush1.msra.mxu0 0.0
  %7919 = vmatprep.subr.mxu0 0.0
  %7920 = vmatpush1.msra.mxu0 0.0
  %7921 = vmatprep.subr.mxu0 0.0
  %7922 = vmatpush1.msra.mxu0 0.0
  %7923 = vmatprep.subr.mxu0 0.0
  %7924 = vmatpush1.msra.mxu0 0.0
  %7925 = vmatprep.subr.mxu0 0.0
  %7926 = vmatpush1.msra.mxu0 0.0
  %7927 = vmatprep.subr.mxu0 0.0
  %7928 = vmatpush1.msra.mxu0 0.0
  %7929 = vmatprep.subr.mxu0 0.0
  %7930 = vmatpush1.msra.mxu0 0.0
  %7931 = vmatprep.subr.mxu0 0.0
  %7932 = vmatpush1.msra.mxu0 0.0
  %7933 = vmatprep.subr.mxu0 0.0
  %7934 = vmatpush1.msra.mxu0 0.0
  %7935 = vmatprep.subr.mxu0 0.0
  %7936 = vmatpush1.msra.mxu0 0.0
  %7937 = vmatprep.subr.mxu0 0.0
  %7938 = vmatpush1.msra.mxu0 0.0
  %7939 = vmatprep.subr.mxu0 0.0
  %7940 = vmatpush1.msra.mxu0 0.0
  %7941 = vmatprep.subr.mxu0 0.0
  %7942 = vmatpush1.msra.mxu0 0.0
  %7943 = vmatprep.subr.mxu0 0.0
  %7944 = vmatpush1.msra.mxu0 0.0
  %7945 = vmatprep.subr.mxu0 0.0
  %7946 = vmatpush1.msra.mxu0 0.0
  %7947 = vmatprep.subr.mxu0 0.0
  %7948 = vmatpush1.msra.mxu0 0.0
  %7949 = vmatprep.subr.mxu0 0.0
  %7950 = vmatpush1.msra.mxu0 0.0
  %7951 = vmatprep.subr.mxu0 0.0
  %7952 = vmatpush1.msra.mxu0 0.0
  %7953 = vmatprep.subr.mxu0 0.0
  %7954 = vmatpush1.msra.mxu0 0.0
  %7955 = vmatprep.subr.mxu0 0.0
  %7956 = vmatpush1.msra.mxu0 0.0
  %7957 = vmatprep.subr.mxu0 0.0
  %7958 = vmatpush1.msra.mxu0 0.0
  %7959 = vmatprep.subr.mxu0 0.0
  %7960 = vmatpush1.msra.mxu0 0.0
  %7961 = vmatprep.subr.mxu0 0.0
  %7962 = vmatpush1.msra.mxu0 0.0
  %7963 = vmatprep.subr.mxu0 0.0
  %7964 = vmatpush1.msra.mxu0 0.0
  %7965 = vmatprep.subr.mxu0 0.0
  %7966 = vmatpush1.msra.mxu0 0.0
  %7967 = vmatprep.subr.mxu0 0.0
  %7968 = vmatpush1.msra.mxu0 0.0
  %7969 = vmatprep.subr.mxu0 0.0
  %7970 = vmatpush1.msra.mxu0 0.0
  %7971 = vmatprep.subr.mxu0 0.0
  %7972 = vmatpush1.msra.mxu0 0.0
  %7973 = vmatprep.mubr.f32.mxu0 0.0
  %7974 = vmatmul.mubr.f32.gmra.mrb[0].mxu0 %v7907
  %v7975 = vpop.f32.mrb[0].mxu0
  %v7976 = vadd.f32 0.0, %v7975
  %v7977 = vpop.f32.mrb[0].mxu0
  %7978 = vdwg.mxu0
  %v7980 = vsel %vm1081, %v7976, 0
  %7982 = vmatprep.subr.mxu0 0.0
  %7983 = vmatpush1.msra.mxu0 %v6170
  %7984 = vmatprep.subr.mxu0 0.0
  %7985 = vmatpush1.msra.mxu0 %v6171
  %7986 = vmatprep.subr.mxu0 0.0
  %7987 = vmatpush1.msra.mxu0 0.0
  %7988 = vmatprep.subr.mxu0 0.0
  %7989 = vmatpush1.msra.mxu0 0.0
  %7990 = vmatprep.subr.mxu0 0.0
  %7991 = vmatpush1.msra.mxu0 0.0
  %7992 = vmatprep.subr.mxu0 0.0
  %7993 = vmatpush1.msra.mxu0 0.0
  %7994 = vmatprep.subr.mxu0 0.0
  %7995 = vmatpush1.msra.mxu0 0.0
  %7996 = vmatprep.subr.mxu0 0.0
  %7997 = vmatpush1.msra.mxu0 0.0
  %7998 = vmatprep.subr.mxu0 0.0
  %7999 = vmatpush1.msra.mxu0 0.0
  %8000 = vmatprep.subr.mxu0 0.0
  %8001 = vmatpush1.msra.mxu0 0.0
  %8002 = vmatprep.subr.mxu0 0.0
  %8003 = vmatpush1.msra.mxu0 0.0
  %8004 = vmatprep.subr.mxu0 0.0
  %8005 = vmatpush1.msra.mxu0 0.0
  %8006 = vmatprep.subr.mxu0 0.0
  %8007 = vmatpush1.msra.mxu0 0.0
  %8008 = vmatprep.subr.mxu0 0.0
  %8009 = vmatpush1.msra.mxu0 0.0
  %8010 = vmatprep.subr.mxu0 0.0
  %8011 = vmatpush1.msra.mxu0 0.0
  %8012 = vmatprep.subr.mxu0 0.0
  %8013 = vmatpush1.msra.mxu0 0.0
  %8014 = vmatprep.subr.mxu0 0.0
  %8015 = vmatpush1.msra.mxu0 0.0
  %8016 = vmatprep.subr.mxu0 0.0
  %8017 = vmatpush1.msra.mxu0 0.0
  %8018 = vmatprep.subr.mxu0 0.0
  %8019 = vmatpush1.msra.mxu0 0.0
  %8020 = vmatprep.subr.mxu0 0.0
  %8021 = vmatpush1.msra.mxu0 0.0
  %8022 = vmatprep.subr.mxu0 0.0
  %8023 = vmatpush1.msra.mxu0 0.0
  %8024 = vmatprep.subr.mxu0 0.0
  %8025 = vmatpush1.msra.mxu0 0.0
  %8026 = vmatprep.subr.mxu0 0.0
  %8027 = vmatpush1.msra.mxu0 0.0
  %8028 = vmatprep.subr.mxu0 0.0
  %8029 = vmatpush1.msra.mxu0 0.0
  %8030 = vmatprep.subr.mxu0 0.0
  %8031 = vmatpush1.msra.mxu0 0.0
  %8032 = vmatprep.subr.mxu0 0.0
  %8033 = vmatpush1.msra.mxu0 0.0
  %8034 = vmatprep.subr.mxu0 0.0
  %8035 = vmatpush1.msra.mxu0 0.0
  %8036 = vmatprep.subr.mxu0 0.0
  %8037 = vmatpush1.msra.mxu0 0.0
  %8038 = vmatprep.subr.mxu0 0.0
  %8039 = vmatpush1.msra.mxu0 0.0
  %8040 = vmatprep.subr.mxu0 0.0
  %8041 = vmatpush1.msra.mxu0 0.0
  %8042 = vmatprep.subr.mxu0 0.0
  %8043 = vmatpush1.msra.mxu0 0.0
  %8044 = vmatprep.subr.mxu0 0.0
  %8045 = vmatpush1.msra.mxu0 0.0
  %8046 = vmatprep.mubr.f32.mxu0 0.0
  %8047 = vmatmul.mubr.f32.gmra.mrb[0].mxu0 %v7980
  %v8048 = vpop.f32.mrb[0].mxu0
  %v8049 = vadd.f32 0.0, %v8048
  %v8050 = vpop.f32.mrb[0].mxu0
  %8051 = vdwg.mxu0
  %v8052 = vadd.f32 %v7606, %v8049
  %8053 = vmatprep.subr.mxu0 0.0
  %8054 = vmatpush1.msra.mxu0 %v6247
  %8055 = vmatprep.subr.mxu0 0.0
  %8056 = vmatpush1.msra.mxu0 %v6248
  %8057 = vmatprep.subr.mxu0 0.0
  %8058 = vmatpush1.msra.mxu0 %v6249
  %8059 = vmatprep.subr.mxu0 0.0
  %8060 = vmatpush1.msra.mxu0 %v6250
  %8061 = vmatprep.subr.mxu0 0.0
  %8062 = vmatpush1.msra.mxu0 %v6251
  %8063 = vmatprep.subr.mxu0 0.0
  %8064 = vmatpush1.msra.mxu0 %v6252
  %8065 = vmatprep.subr.mxu0 0.0
  %8066 = vmatpush1.msra.mxu0 %v6253
  %8067 = vmatprep.subr.mxu0 0.0
  %8068 = vmatpush1.msra.mxu0 %v6254
  %8069 = vmatprep.subr.mxu0 0.0
  %8070 = vmatpush1.msra.mxu0 0.0
  %8071 = vmatprep.subr.mxu0 0.0
  %8072 = vmatpush1.msra.mxu0 0.0
  %8073 = vmatprep.subr.mxu0 0.0
  %8074 = vmatpush1.msra.mxu0 0.0
  %8075 = vmatprep.subr.mxu0 0.0
  %8076 = vmatpush1.msra.mxu0 0.0
  %8077 = vmatprep.subr.mxu0 0.0
  %8078 = vmatpush1.msra.mxu0 0.0
  %8079 = vmatprep.subr.mxu0 0.0
  %8080 = vmatpush1.msra.mxu0 0.0
  %8081 = vmatprep.subr.mxu0 0.0
  %8082 = vmatpush1.msra.mxu0 0.0
  %8083 = vmatprep.subr.mxu0 0.0
  %8084 = vmatpush1.msra.mxu0 0.0
  %8085 = vmatprep.subr.mxu0 0.0
  %8086 = vmatpush1.msra.mxu0 0.0
  %8087 = vmatprep.subr.mxu0 0.0
  %8088 = vmatpush1.msra.mxu0 0.0
  %8089 = vmatprep.subr.mxu0 0.0
  %8090 = vmatpush1.msra.mxu0 0.0
  %8091 = vmatprep.subr.mxu0 0.0
  %8092 = vmatpush1.msra.mxu0 0.0
  %8093 = vmatprep.subr.mxu0 0.0
  %8094 = vmatpush1.msra.mxu0 0.0
  %8095 = vmatprep.subr.mxu0 0.0
  %8096 = vmatpush1.msra.mxu0 0.0
  %8097 = vmatprep.subr.mxu0 0.0
  %8098 = vmatpush1.msra.mxu0 0.0
  %8099 = vmatprep.subr.mxu0 0.0
  %8100 = vmatpush1.msra.mxu0 0.0
  %8101 = vmatprep.subr.mxu0 0.0
  %8102 = vmatpush1.msra.mxu0 0.0
  %8103 = vmatprep.subr.mxu0 0.0
  %8104 = vmatpush1.msra.mxu0 0.0
  %8105 = vmatprep.subr.mxu0 0.0
  %8106 = vmatpush1.msra.mxu0 0.0
  %8107 = vmatprep.subr.mxu0 0.0
  %8108 = vmatpush1.msra.mxu0 0.0
  %8109 = vmatprep.subr.mxu0 0.0
  %8110 = vmatpush1.msra.mxu0 0.0
  %8111 = vmatprep.subr.mxu0 0.0
  %8112 = vmatpush1.msra.mxu0 0.0
  %8113 = vmatprep.subr.mxu0 0.0
  %8114 = vmatpush1.msra.mxu0 0.0
  %8115 = vmatprep.subr.mxu0 0.0
  %8116 = vmatpush1.msra.mxu0 0.0
  %8117 = vmatprep.mubr.f32.mxu0 0.0
  %8118 = vmatmul.mubr.f32.gmra.mrb[0].mxu0 %v6721
  %v8119 = vpop.f32.mrb[0].mxu0
  %v8120 = vadd.f32 0.0, %v8119
  %v8121 = vpop.f32.mrb[0].mxu0
  %8122 = vdwg.mxu0
  %8123 = vmatprep.subr.mxu0 0.0
  %8124 = vmatpush1.msra.mxu0 %v6326
  %8125 = vmatprep.subr.mxu0 0.0
  %8126 = vmatpush1.msra.mxu0 %v6327
  %8127 = vmatprep.subr.mxu0 0.0
  %8128 = vmatpush1.msra.mxu0 %v6328
  %8129 = vmatprep.subr.mxu0 0.0
  %8130 = vmatpush1.msra.mxu0 %v6329
  %8131 = vmatprep.subr.mxu0 0.0
  %8132 = vmatpush1.msra.mxu0 %v6330
  %8133 = vmatprep.subr.mxu0 0.0
  %8134 = vmatpush1.msra.mxu0 %v6331
  %8135 = vmatprep.subr.mxu0 0.0
  %8136 = vmatpush1.msra.mxu0 %v6332
  %8137 = vmatprep.subr.mxu0 0.0
  %8138 = vmatpush1.msra.mxu0 %v6333
  %8139 = vmatprep.subr.mxu0 0.0
  %8140 = vmatpush1.msra.mxu0 0.0
  %8141 = vmatprep.subr.mxu0 0.0
  %8142 = vmatpush1.msra.mxu0 0.0
  %8143 = vmatprep.subr.mxu0 0.0
  %8144 = vmatpush1.msra.mxu0 0.0
  %8145 = vmatprep.subr.mxu0 0.0
  %8146 = vmatpush1.msra.mxu0 0.0
  %8147 = vmatprep.subr.mxu0 0.0
  %8148 = vmatpush1.msra.mxu0 0.0
  %8149 = vmatprep.subr.mxu0 0.0
  %8150 = vmatpush1.msra.mxu0 0.0
  %8151 = vmatprep.subr.mxu0 0.0
  %8152 = vmatpush1.msra.mxu0 0.0
  %8153 = vmatprep.subr.mxu0 0.0
  %8154 = vmatpush1.msra.mxu0 0.0
  %8155 = vmatprep.subr.mxu0 0.0
  %8156 = vmatpush1.msra.mxu0 0.0
  %8157 = vmatprep.subr.mxu0 0.0
  %8158 = vmatpush1.msra.mxu0 0.0
  %8159 = vmatprep.subr.mxu0 0.0
  %8160 = vmatpush1.msra.mxu0 0.0
  %8161 = vmatprep.subr.mxu0 0.0
  %8162 = vmatpush1.msra.mxu0 0.0
  %8163 = vmatprep.subr.mxu0 0.0
  %8164 = vmatpush1.msra.mxu0 0.0
  %8165 = vmatprep.subr.mxu0 0.0
  %8166 = vmatpush1.msra.mxu0 0.0
  %8167 = vmatprep.subr.mxu0 0.0
  %8168 = vmatpush1.msra.mxu0 0.0
  %8169 = vmatprep.subr.mxu0 0.0
  %8170 = vmatpush1.msra.mxu0 0.0
  %8171 = vmatprep.subr.mxu0 0.0
  %8172 = vmatpush1.msra.mxu0 0.0
  %8173 = vmatprep.subr.mxu0 0.0
  %8174 = vmatpush1.msra.mxu0 0.0
  %8175 = vmatprep.subr.mxu0 0.0
  %8176 = vmatpush1.msra.mxu0 0.0
  %8177 = vmatprep.subr.mxu0 0.0
  %8178 = vmatpush1.msra.mxu0 0.0
  %8179 = vmatprep.subr.mxu0 0.0
  %8180 = vmatpush1.msra.mxu0 0.0
  %8181 = vmatprep.subr.mxu0 0.0
  %8182 = vmatpush1.msra.mxu0 0.0
  %8183 = vmatprep.subr.mxu0 0.0
  %8184 = vmatpush1.msra.mxu0 0.0
  %8185 = vmatprep.subr.mxu0 0.0
  %8186 = vmatpush1.msra.mxu0 0.0
  %8187 = vmatprep.mubr.f32.mxu0 0.0
  %8188 = vmatmul.mubr.f32.gmra.mrb[0].mxu0 %v6721
  %v8189 = vpop.f32.mrb[0].mxu0
  %v8190 = vadd.f32 0.0, %v8189
  %v8191 = vpop.f32.mrb[0].mxu0
  %8192 = vdwg.mxu0
  %8193 = vmatprep.subr.mxu0 0.0
  %8194 = vmatpush1.msra.mxu0 %v6405
  %8195 = vmatprep.subr.mxu0 0.0
  %8196 = vmatpush1.msra.mxu0 %v6406
  %8197 = vmatprep.subr.mxu0 0.0
  %8198 = vmatpush1.msra.mxu0 %v6407
  %8199 = vmatprep.subr.mxu0 0.0
  %8200 = vmatpush1.msra.mxu0 %v6408
  %8201 = vmatprep.subr.mxu0 0.0
  %8202 = vmatpush1.msra.mxu0 %v6409
  %8203 = vmatprep.subr.mxu0 0.0
  %8204 = vmatpush1.msra.mxu0 %v6410
  %8205 = vmatprep.subr.mxu0 0.0
  %8206 = vmatpush1.msra.mxu0 %v6411
  %8207 = vmatprep.subr.mxu0 0.0
  %8208 = vmatpush1.msra.mxu0 %v6412
  %8209 = vmatprep.subr.mxu0 0.0
  %8210 = vmatpush1.msra.mxu0 0.0
  %8211 = vmatprep.subr.mxu0 0.0
  %8212 = vmatpush1.msra.mxu0 0.0
  %8213 = vmatprep.subr.mxu0 0.0
  %8214 = vmatpush1.msra.mxu0 0.0
  %8215 = vmatprep.subr.mxu0 0.0
  %8216 = vmatpush1.msra.mxu0 0.0
  %8217 = vmatprep.subr.mxu0 0.0
  %8218 = vmatpush1.msra.mxu0 0.0
  %8219 = vmatprep.subr.mxu0 0.0
  %8220 = vmatpush1.msra.mxu0 0.0
  %8221 = vmatprep.subr.mxu0 0.0
  %8222 = vmatpush1.msra.mxu0 0.0
  %8223 = vmatprep.subr.mxu0 0.0
  %8224 = vmatpush1.msra.mxu0 0.0
  %8225 = vmatprep.subr.mxu0 0.0
  %8226 = vmatpush1.msra.mxu0 0.0
  %8227 = vmatprep.subr.mxu0 0.0
  %8228 = vmatpush1.msra.mxu0 0.0
  %8229 = vmatprep.subr.mxu0 0.0
  %8230 = vmatpush1.msra.mxu0 0.0
  %8231 = vmatprep.subr.mxu0 0.0
  %8232 = vmatpush1.msra.mxu0 0.0
  %8233 = vmatprep.subr.mxu0 0.0
  %8234 = vmatpush1.msra.mxu0 0.0
  %8235 = vmatprep.subr.mxu0 0.0
  %8236 = vmatpush1.msra.mxu0 0.0
  %8237 = vmatprep.subr.mxu0 0.0
  %8238 = vmatpush1.msra.mxu0 0.0
  %8239 = vmatprep.subr.mxu0 0.0
  %8240 = vmatpush1.msra.mxu0 0.0
  %8241 = vmatprep.subr.mxu0 0.0
  %8242 = vmatpush1.msra.mxu0 0.0
  %8243 = vmatprep.subr.mxu0 0.0
  %8244 = vmatpush1.msra.mxu0 0.0
  %8245 = vmatprep.subr.mxu0 0.0
  %8246 = vmatpush1.msra.mxu0 0.0
  %8247 = vmatprep.subr.mxu0 0.0
  %8248 = vmatpush1.msra.mxu0 0.0
  %8249 = vmatprep.subr.mxu0 0.0
  %8250 = vmatpush1.msra.mxu0 0.0
  %8251 = vmatprep.subr.mxu0 0.0
  %8252 = vmatpush1.msra.mxu0 0.0
  %8253 = vmatprep.subr.mxu0 0.0
  %8254 = vmatpush1.msra.mxu0 0.0
  %8255 = vmatprep.subr.mxu0 0.0
  %8256 = vmatpush1.msra.mxu0 0.0
  %8257 = vmatprep.mubr.f32.mxu0 0.0
  %8258 = vmatmul.mubr.f32.gmra.mrb[0].mxu0 %v6721
  %v8259 = vpop.f32.mrb[0].mxu0
  %v8260 = vadd.f32 0.0, %v8259
  %v8261 = vpop.f32.mrb[0].mxu0
  %8262 = vdwg.mxu0
  %v8264 = vsel %vm1081, %v8120, 0
  %v8267 = vsel %vm1081, %v8190, 0
  %8269 = vmatprep.subr.mxu0 0.0
  %8270 = vmatpush1.xpose.msra.mxu0 %v8267
  %8271 = vmatprep.subr.mxu0 0.0
  %8272 = vmatpush1.xpose.msra.mxu0 0.0
  %8273 = vmatprep.subr.mxu0 0.0
  %8274 = vmatpush1.xpose.msra.mxu0 0.0
  %8275 = vmatprep.subr.mxu0 0.0
  %8276 = vmatpush1.xpose.msra.mxu0 0.0
  %8277 = vmatprep.subr.mxu0 0.0
  %8278 = vmatpush1.xpose.msra.mxu0 0.0
  %8279 = vmatprep.subr.mxu0 0.0
  %8280 = vmatpush1.xpose.msra.mxu0 0.0
  %8281 = vmatprep.subr.mxu0 0.0
  %8282 = vmatpush1.xpose.msra.mxu0 0.0
  %8283 = vmatprep.subr.mxu0 0.0
  %8284 = vmatpush1.xpose.msra.mxu0 0.0
  %8285 = vmatprep.subr.mxu0 0.0
  %8286 = vmatpush1.xpose.msra.mxu0 0.0
  %8287 = vmatprep.subr.mxu0 0.0
  %8288 = vmatpush1.xpose.msra.mxu0 0.0
  %8289 = vmatprep.subr.mxu0 0.0
  %8290 = vmatpush1.xpose.msra.mxu0 0.0
  %8291 = vmatprep.subr.mxu0 0.0
  %8292 = vmatpush1.xpose.msra.mxu0 0.0
  %8293 = vmatprep.subr.mxu0 0.0
  %8294 = vmatpush1.xpose.msra.mxu0 0.0
  %8295 = vmatprep.subr.mxu0 0.0
  %8296 = vmatpush1.xpose.msra.mxu0 0.0
  %8297 = vmatprep.subr.mxu0 0.0
  %8298 = vmatpush1.xpose.msra.mxu0 0.0
  %8299 = vmatprep.subr.mxu0 0.0
  %8300 = vmatpush1.xpose.msra.mxu0 0.0
  %8301 = vmatprep.subr.mxu0 0.0
  %8302 = vmatpush1.xpose.msra.mxu0 0.0
  %8303 = vmatprep.subr.mxu0 0.0
  %8304 = vmatpush1.xpose.msra.mxu0 0.0
  %8305 = vmatprep.subr.mxu0 0.0
  %8306 = vmatpush1.xpose.msra.mxu0 0.0
  %8307 = vmatprep.subr.mxu0 0.0
  %8308 = vmatpush1.xpose.msra.mxu0 0.0
  %8309 = vmatprep.subr.mxu0 0.0
  %8310 = vmatpush1.xpose.msra.mxu0 0.0
  %8311 = vmatprep.subr.mxu0 0.0
  %8312 = vmatpush1.xpose.msra.mxu0 0.0
  %8313 = vmatprep.subr.mxu0 0.0
  %8314 = vmatpush1.xpose.msra.mxu0 0.0
  %8315 = vmatprep.subr.mxu0 0.0
  %8316 = vmatpush1.xpose.msra.mxu0 0.0
  %8317 = vmatprep.subr.mxu0 0.0
  %8318 = vmatpush1.xpose.msra.mxu0 0.0
  %8319 = vmatprep.subr.mxu0 0.0
  %8320 = vmatpush1.xpose.msra.mxu0 0.0
  %8321 = vmatprep.subr.mxu0 0.0
  %8322 = vmatpush1.xpose.msra.mxu0 0.0
  %8323 = vmatprep.subr.mxu0 0.0
  %8324 = vmatpush1.xpose.msra.mxu0 0.0
  %8325 = vmatprep.subr.mxu0 0.0
  %8326 = vmatpush1.xpose.msra.mxu0 0.0
  %8327 = vmatprep.subr.mxu0 0.0
  %8328 = vmatpush1.xpose.msra.mxu0 0.0
  %8329 = vmatprep.subr.mxu0 0.0
  %8330 = vmatpush1.xpose.msra.mxu0 0.0
  %8331 = vmatprep.subr.mxu0 0.0
  %8332 = vmatpush1.xpose.msra.mxu0 0.0
  %8333 = vmatprep.mubr.f32.mxu0 0.0
  %8334 = vmatmul.mubr.f32.gmra.mrb[0].mxu0 %v8264
  %v8335 = vpop.f32.mrb[0].mxu0
  %v8336 = vadd.f32 0.0, %v8335
  %v8337 = vpop.f32.mrb[0].mxu0
  %8338 = vdwg.mxu0
  %v8339 = vsel %vm1158, %v8336, -inf
  %8340 = vmax.xlane.f32.xlu0 %v8339
  %v8341 = vpop.xlane.xlu0 %8340
  %v8342 = vsub.f32 %v8336, %v8341
  %v8343 = vmul.f32 %v8342, 1.442695
  %v8344 = vpow.pop %v8343
  %v8345 = vsel %vm1158, %v8344, 0.0
  %8346 = vadd.xlane.f32.xlu0 %v8345
  %v8347 = vpop.xlane.xlu0 %8346
  %v8348 = vrcp.pop %v8347
  %v8349 = vmul.f32 %v8344, %v8348
  %v8351 = vsel %vm1158, %v8349, 0
  %8353 = vmatprep.subr.mxu0 0.0
  %8354 = vmatpush1.msra.mxu0 %v8260
  %8355 = vmatprep.subr.mxu0 0.0
  %8356 = vmatpush1.msra.mxu0 0.0
  %8357 = vmatprep.subr.mxu0 0.0
  %8358 = vmatpush1.msra.mxu0 0.0
  %8359 = vmatprep.subr.mxu0 0.0
  %8360 = vmatpush1.msra.mxu0 0.0
  %8361 = vmatprep.subr.mxu0 0.0
  %8362 = vmatpush1.msra.mxu0 0.0
  %8363 = vmatprep.subr.mxu0 0.0
  %8364 = vmatpush1.msra.mxu0 0.0
  %8365 = vmatprep.subr.mxu0 0.0
  %8366 = vmatpush1.msra.mxu0 0.0
  %8367 = vmatprep.subr.mxu0 0.0
  %8368 = vmatpush1.msra.mxu0 0.0
  %8369 = vmatprep.subr.mxu0 0.0
  %8370 = vmatpush1.msra.mxu0 0.0
  %8371 = vmatprep.subr.mxu0 0.0
  %8372 = vmatpush1.msra.mxu0 0.0
  %8373 = vmatprep.subr.mxu0 0.0
  %8374 = vmatpush1.msra.mxu0 0.0
  %8375 = vmatprep.subr.mxu0 0.0
  %8376 = vmatpush1.msra.mxu0 0.0
  %8377 = vmatprep.subr.mxu0 0.0
  %8378 = vmatpush1.msra.mxu0 0.0
  %8379 = vmatprep.subr.mxu0 0.0
  %8380 = vmatpush1.msra.mxu0 0.0
  %8381 = vmatprep.subr.mxu0 0.0
  %8382 = vmatpush1.msra.mxu0 0.0
  %8383 = vmatprep.subr.mxu0 0.0
  %8384 = vmatpush1.msra.mxu0 0.0
  %8385 = vmatprep.subr.mxu0 0.0
  %8386 = vmatpush1.msra.mxu0 0.0
  %8387 = vmatprep.subr.mxu0 0.0
  %8388 = vmatpush1.msra.mxu0 0.0
  %8389 = vmatprep.subr.mxu0 0.0
  %8390 = vmatpush1.msra.mxu0 0.0
  %8391 = vmatprep.subr.mxu0 0.0
  %8392 = vmatpush1.msra.mxu0 0.0
  %8393 = vmatprep.subr.mxu0 0.0
  %8394 = vmatpush1.msra.mxu0 0.0
  %8395 = vmatprep.subr.mxu0 0.0
  %8396 = vmatpush1.msra.mxu0 0.0
  %8397 = vmatprep.subr.mxu0 0.0
  %8398 = vmatpush1.msra.mxu0 0.0
  %8399 = vmatprep.subr.mxu0 0.0
  %8400 = vmatpush1.msra.mxu0 0.0
  %8401 = vmatprep.subr.mxu0 0.0
  %8402 = vmatpush1.msra.mxu0 0.0
  %8403 = vmatprep.subr.mxu0 0.0
  %8404 = vmatpush1.msra.mxu0 0.0
  %8405 = vmatprep.subr.mxu0 0.0
  %8406 = vmatpush1.msra.mxu0 0.0
  %8407 = vmatprep.subr.mxu0 0.0
  %8408 = vmatpush1.msra.mxu0 0.0
  %8409 = vmatprep.subr.mxu0 0.0
  %8410 = vmatpush1.msra.mxu0 0.0
  %8411 = vmatprep.subr.mxu0 0.0
  %8412 = vmatpush1.msra.mxu0 0.0
  %8413 = vmatprep.subr.mxu0 0.0
  %8414 = vmatpush1.msra.mxu0 0.0
  %8415 = vmatprep.subr.mxu0 0.0
  %8416 = vmatpush1.msra.mxu0 0.0
  %8417 = vmatprep.mubr.f32.mxu0 0.0
  %8418 = vmatmul.mubr.f32.gmra.mrb[0].mxu0 %v8351
  %v8419 = vpop.f32.mrb[0].mxu0
  %v8420 = vadd.f32 0.0, %v8419
  %v8421 = vpop.f32.mrb[0].mxu0
  %8422 = vdwg.mxu0
  %v8424 = vsel %vm1081, %v8420, 0
  %8426 = vmatprep.subr.mxu0 0.0
  %8427 = vmatpush1.msra.mxu0 %v6644
  %8428 = vmatprep.subr.mxu0 0.0
  %8429 = vmatpush1.msra.mxu0 %v6645
  %8430 = vmatprep.subr.mxu0 0.0
  %8431 = vmatpush1.msra.mxu0 0.0
  %8432 = vmatprep.subr.mxu0 0.0
  %8433 = vmatpush1.msra.mxu0 0.0
  %8434 = vmatprep.subr.mxu0 0.0
  %8435 = vmatpush1.msra.mxu0 0.0
  %8436 = vmatprep.subr.mxu0 0.0
  %8437 = vmatpush1.msra.mxu0 0.0
  %8438 = vmatprep.subr.mxu0 0.0
  %8439 = vmatpush1.msra.mxu0 0.0
  %8440 = vmatprep.subr.mxu0 0.0
  %8441 = vmatpush1.msra.mxu0 0.0
  %8442 = vmatprep.subr.mxu0 0.0
  %8443 = vmatpush1.msra.mxu0 0.0
  %8444 = vmatprep.subr.mxu0 0.0
  %8445 = vmatpush1.msra.mxu0 0.0
  %8446 = vmatprep.subr.mxu0 0.0
  %8447 = vmatpush1.msra.mxu0 0.0
  %8448 = vmatprep.subr.mxu0 0.0
  %8449 = vmatpush1.msra.mxu0 0.0
  %8450 = vmatprep.subr.mxu0 0.0
  %8451 = vmatpush1.msra.mxu0 0.0
  %8452 = vmatprep.subr.mxu0 0.0
  %8453 = vmatpush1.msra.mxu0 0.0
  %8454 = vmatprep.subr.mxu0 0.0
  %8455 = vmatpush1.msra.mxu0 0.0
  %8456 = vmatprep.subr.mxu0 0.0
  %8457 = vmatpush1.msra.mxu0 0.0
  %8458 = vmatprep.subr.mxu0 0.0
  %8459 = vmatpush1.msra.mxu0 0.0
  %8460 = vmatprep.subr.mxu0 0.0
  %8461 = vmatpush1.msra.mxu0 0.0
  %8462 = vmatprep.subr.mxu0 0.0
  %8463 = vmatpush1.msra.mxu0 0.0
  %8464 = vmatprep.subr.mxu0 0.0
  %8465 = vmatpush1.msra.mxu0 0.0
  %8466 = vmatprep.subr.mxu0 0.0
  %8467 = vmatpush1.msra.mxu0 0.0
  %8468 = vmatprep.subr.mxu0 0.0
  %8469 = vmatpush1.msra.mxu0 0.0
  %8470 = vmatprep.subr.mxu0 0.0
  %8471 = vmatpush1.msra.mxu0 0.0
  %8472 = vmatprep.subr.mxu0 0.0
  %8473 = vmatpush1.msra.mxu0 0.0
  %8474 = vmatprep.subr.mxu0 0.0
  %8475 = vmatpush1.msra.mxu0 0.0
  %8476 = vmatprep.subr.mxu0 0.0
  %8477 = vmatpush1.msra.mxu0 0.0
  %8478 = vmatprep.subr.mxu0 0.0
  %8479 = vmatpush1.msra.mxu0 0.0
  %8480 = vmatprep.subr.mxu0 0.0
  %8481 = vmatpush1.msra.mxu0 0.0
  %8482 = vmatprep.subr.mxu0 0.0
  %8483 = vmatpush1.msra.mxu0 0.0
  %8484 = vmatprep.subr.mxu0 0.0
  %8485 = vmatpush1.msra.mxu0 0.0
  %8486 = vmatprep.subr.mxu0 0.0
  %8487 = vmatpush1.msra.mxu0 0.0
  %8488 = vmatprep.subr.mxu0 0.0
  %8489 = vmatpush1.msra.mxu0 0.0
  %8490 = vmatprep.mubr.f32.mxu0 0.0
  %8491 = vmatmul.mubr.f32.gmra.mrb[0].mxu0 %v8424
  %v8492 = vpop.f32.mrb[0].mxu0
  %v8493 = vadd.f32 0.0, %v8492
  %v8494 = vpop.f32.mrb[0].mxu0
  %8495 = vdwg.mxu0
  %v8496 = vadd.f32 %v8052, %v8493
  %v8497 = vadd.f32 %v4775, %v6719
  %v8498 = vadd.f32 %v4776, %v8496
  %s8499 = scalar_lea.vmem %s10, 1
  %v8500 = vld [vmem:[%s8499] sm:$0x1]
  %v8502 = vlaneseq
  %v8503 = vshrl.u32 %v8502, 7
  %v8504 = vsub.s32 0, %v8503
  %v8505 = vrot.slane %v8500, %v8504
  %v8507 = vadd.f32 %v8497, %v8505
  %v8508 = vadd.f32 %v8498, %v8505
  %s8509 = scalar_lea.vmem %s11, 1
  %v8510 = vld [vmem:[%s8509] sm:$0x1]
  %s8511 = scalar_lea.vmem %s12, 1
  %v8512 = vld [vmem:[%s8511] sm:$0x1]
  %v8513 = vsel %vm800, %v8507, 0.0
  %8514 = vadd.xlane.f32.xlu0 %v8513
  %v8515 = vpop.xlane.xlu0 %8514
  %v8516 = vsel %vm800, %v8508, 0.0
  %8517 = vadd.xlane.f32.xlu0 %v8516
  %v8518 = vpop.xlane.xlu0 %8517
  %v8519 = vmul.f32 %v8515, %v807
  %v8520 = vmul.f32 %v8518, %v807
  %v8521 = vsub.f32 %v8507, %v8519
  %v8522 = vsub.f32 %v8508, %v8520
  %v8523 = vmul.f32 %v8521, %v8521
  %v8524 = vmul.f32 %v8522, %v8522
  %v8525 = vsel %vm800, %v8523, 0.0
  %8526 = vadd.xlane.f32.xlu0 %v8525
  %v8527 = vpop.xlane.xlu0 %8526
  %v8528 = vsel %vm800, %v8524, 0.0
  %8529 = vadd.xlane.f32.xlu0 %v8528
  %v8530 = vpop.xlane.xlu0 %8529
  %v8531 = vmul.f32 %v8527, %v807
  %v8532 = vmul.f32 %v8530, %v807
  %v8533 = vadd.f32 %v8531, 1e-05
  %v8534 = vadd.f32 %v8532, 1e-05
  %v8535 = vrsqrt.pop %v8533
  %v8536 = vrsqrt.pop %v8534
  %v8537 = vmul.f32 %v8521, %v8535
  %v8538 = vmul.f32 %v8522, %v8536
  %v8540 = vlaneseq
  %v8541 = vshrl.u32 %v8540, 7
  %v8542 = vsub.s32 0, %v8541
  %v8543 = vrot.slane %v8510, %v8542
  %v8545 = vmul.f32 %v8537, %v8543
  %v8546 = vmul.f32 %v8538, %v8543
  %v8548 = vlaneseq
  %v8549 = vshrl.u32 %v8548, 7
  %v8550 = vsub.s32 0, %v8549
  %v8551 = vrot.slane %v8512, %v8550
  %v8553 = vadd.f32 %v8545, %v8551
  %v8554 = vadd.f32 %v8546, %v8551
  %s8555 = scalar_lea.vmem %s13, 64
  %v8556 = vld [vmem:[%s8555] sm:$0xff]
  %v8557 = vld [vmem:[%s8555 + $0x8] sm:$0xff]
  %v8558 = vld [vmem:[%s8555 + $0x10] sm:$0xff]
  %v8559 = vld [vmem:[%s8555 + $0x18] sm:$0xff]
  %v8560 = vld [vmem:[%s8555 + $0x20] sm:$0xff]
  %v8561 = vld [vmem:[%s8555 + $0x28] sm:$0xff]
  %v8562 = vld [vmem:[%s8555 + $0x30] sm:$0xff]
  %v8563 = vld [vmem:[%s8555 + $0x38] sm:$0xff]
  %s8564 = scalar_lea.vmem %s14, 1
  %v8565 = vld [vmem:[%s8564] sm:$0x1]
  %v8567 = vlaneseq
  %v8568 = vshrl.u32 %v8567, 7
  %v8569 = vsub.s32 0, %v8568
  %v8570 = vrot.slane %v8565, %v8569
  %v8573 = vsel %vm800, %v8553, 0
  %v8576 = vsel %vm800, %v8554, 0
  %8578 = vmatprep.subr.mxu0 0.0
  %8579 = vmatpush1.msra.mxu0 %v8556
  %8580 = vmatprep.subr.mxu0 0.0
  %8581 = vmatpush1.msra.mxu0 %v8557
  %8582 = vmatprep.subr.mxu0 0.0
  %8583 = vmatpush1.msra.mxu0 %v8558
  %8584 = vmatprep.subr.mxu0 0.0
  %8585 = vmatpush1.msra.mxu0 %v8559
  %8586 = vmatprep.subr.mxu0 0.0
  %8587 = vmatpush1.msra.mxu0 %v8560
  %8588 = vmatprep.subr.mxu0 0.0
  %8589 = vmatpush1.msra.mxu0 %v8561
  %8590 = vmatprep.subr.mxu0 0.0
  %8591 = vmatpush1.msra.mxu0 %v8562
  %8592 = vmatprep.subr.mxu0 0.0
  %8593 = vmatpush1.msra.mxu0 %v8563
  %8594 = vmatprep.subr.mxu0 0.0
  %8595 = vmatpush1.msra.mxu0 0.0
  %8596 = vmatprep.subr.mxu0 0.0
  %8597 = vmatpush1.msra.mxu0 0.0
  %8598 = vmatprep.subr.mxu0 0.0
  %8599 = vmatpush1.msra.mxu0 0.0
  %8600 = vmatprep.subr.mxu0 0.0
  %8601 = vmatpush1.msra.mxu0 0.0
  %8602 = vmatprep.subr.mxu0 0.0
  %8603 = vmatpush1.msra.mxu0 0.0
  %8604 = vmatprep.subr.mxu0 0.0
  %8605 = vmatpush1.msra.mxu0 0.0
  %8606 = vmatprep.subr.mxu0 0.0
  %8607 = vmatpush1.msra.mxu0 0.0
  %8608 = vmatprep.subr.mxu0 0.0
  %8609 = vmatpush1.msra.mxu0 0.0
  %8610 = vmatprep.subr.mxu0 0.0
  %8611 = vmatpush1.msra.mxu0 0.0
  %8612 = vmatprep.subr.mxu0 0.0
  %8613 = vmatpush1.msra.mxu0 0.0
  %8614 = vmatprep.subr.mxu0 0.0
  %8615 = vmatpush1.msra.mxu0 0.0
  %8616 = vmatprep.subr.mxu0 0.0
  %8617 = vmatpush1.msra.mxu0 0.0
  %8618 = vmatprep.subr.mxu0 0.0
  %8619 = vmatpush1.msra.mxu0 0.0
  %8620 = vmatprep.subr.mxu0 0.0
  %8621 = vmatpush1.msra.mxu0 0.0
  %8622 = vmatprep.subr.mxu0 0.0
  %8623 = vmatpush1.msra.mxu0 0.0
  %8624 = vmatprep.subr.mxu0 0.0
  %8625 = vmatpush1.msra.mxu0 0.0
  %8626 = vmatprep.subr.mxu0 0.0
  %8627 = vmatpush1.msra.mxu0 0.0
  %8628 = vmatprep.subr.mxu0 0.0
  %8629 = vmatpush1.msra.mxu0 0.0
  %8630 = vmatprep.subr.mxu0 0.0
  %8631 = vmatpush1.msra.mxu0 0.0
  %8632 = vmatprep.subr.mxu0 0.0
  %8633 = vmatpush1.msra.mxu0 0.0
  %8634 = vmatprep.subr.mxu0 0.0
  %8635 = vmatpush1.msra.mxu0 0.0
  %8636 = vmatprep.subr.mxu0 0.0
  %8637 = vmatpush1.msra.mxu0 0.0
  %8638 = vmatprep.subr.mxu0 0.0
  %8639 = vmatpush1.msra.mxu0 0.0
  %8640 = vmatprep.subr.mxu0 0.0
  %8641 = vmatpush1.msra.mxu0 0.0
  %8642 = vmatprep.mubr.f32.mxu0 0.0
  %8643 = vmatmul.mubr.f32.gmra.mrb[0].mxu0 %v8573
  %v8644 = vpop.f32.mrb[0].mxu0
  %v8645 = vadd.f32 %v8570, %v8644
  %v8646 = vpop.f32.mrb[0].mxu0
  %8647 = vmatprep.mubr.f32.mxu0 0.0
  %8648 = vmatmul.mubr.f32.gmra.mrb[0].mxu0 %v8576
  %v8649 = vpop.f32.mrb[0].mxu0
  %v8650 = vadd.f32 %v8570, %v8649
  %v8651 = vpop.f32.mrb[0].mxu0
  %8652 = vdwg.mxu0
  %v8653 = vmul.f32 %v8645, 0.5
  %v8654 = vmul.f32 %v8650, 0.5
  %v8655 = vmul.f32 %v8645, 0.70710677
  %v8656 = vmul.f32 %v8650, 0.70710677
  %v8657 = verf.f32.pop %v8655
  %v8658 = verf.f32.pop %v8656
  %v8659 = vadd.f32 %v8657, 1.0
  %v8660 = vadd.f32 %v8658, 1.0
  %v8661 = vmul.f32 %v8653, %v8659
  %v8662 = vmul.f32 %v8654, %v8660
  %s8663 = scalar_lea.vmem %s15, 128
  %v8664 = vld [vmem:[%s8663] sm:$0xff]
  %v8665 = vld [vmem:[%s8663 + $0x8] sm:$0xff]
  %v8666 = vld [vmem:[%s8663 + $0x10] sm:$0xff]
  %v8667 = vld [vmem:[%s8663 + $0x18] sm:$0xff]
  %v8668 = vld [vmem:[%s8663 + $0x20] sm:$0xff]
  %v8669 = vld [vmem:[%s8663 + $0x28] sm:$0xff]
  %v8670 = vld [vmem:[%s8663 + $0x30] sm:$0xff]
  %v8671 = vld [vmem:[%s8663 + $0x38] sm:$0xff]
  %v8672 = vld [vmem:[%s8663 + $0x40] sm:$0xff]
  %v8673 = vld [vmem:[%s8663 + $0x48] sm:$0xff]
  %v8674 = vld [vmem:[%s8663 + $0x50] sm:$0xff]
  %v8675 = vld [vmem:[%s8663 + $0x58] sm:$0xff]
  %v8676 = vld [vmem:[%s8663 + $0x60] sm:$0xff]
  %v8677 = vld [vmem:[%s8663 + $0x68] sm:$0xff]
  %v8678 = vld [vmem:[%s8663 + $0x70] sm:$0xff]
  %v8679 = vld [vmem:[%s8663 + $0x78] sm:$0xff]
  %s8680 = scalar_lea.vmem %s16, 1
  %v8681 = vld [vmem:[%s8680] sm:$0x1]
  %v8683 = vlaneseq
  %v8684 = vshrl.u32 %v8683, 7
  %v8685 = vsub.s32 0, %v8684
  %v8686 = vrot.slane %v8681, %v8685
  %8688 = vmatprep.subr.mxu0 0.0
  %8689 = vmatpush1.msra.mxu0 %v8664
  %8690 = vmatprep.subr.mxu0 0.0
  %8691 = vmatpush1.msra.mxu0 %v8665
  %8692 = vmatprep.subr.mxu0 0.0
  %8693 = vmatpush1.msra.mxu0 %v8666
  %8694 = vmatprep.subr.mxu0 0.0
  %8695 = vmatpush1.msra.mxu0 %v8667
  %8696 = vmatprep.subr.mxu0 0.0
  %8697 = vmatpush1.msra.mxu0 %v8668
  %8698 = vmatprep.subr.mxu0 0.0
  %8699 = vmatpush1.msra.mxu0 %v8669
  %8700 = vmatprep.subr.mxu0 0.0
  %8701 = vmatpush1.msra.mxu0 %v8670
  %8702 = vmatprep.subr.mxu0 0.0
  %8703 = vmatpush1.msra.mxu0 %v8671
  %8704 = vmatprep.subr.mxu0 0.0
  %8705 = vmatpush1.msra.mxu0 %v8672
  %8706 = vmatprep.subr.mxu0 0.0
  %8707 = vmatpush1.msra.mxu0 %v8673
  %8708 = vmatprep.subr.mxu0 0.0
  %8709 = vmatpush1.msra.mxu0 %v8674
  %8710 = vmatprep.subr.mxu0 0.0
  %8711 = vmatpush1.msra.mxu0 %v8675
  %8712 = vmatprep.subr.mxu0 0.0
  %8713 = vmatpush1.msra.mxu0 %v8676
  %8714 = vmatprep.subr.mxu0 0.0
  %8715 = vmatpush1.msra.mxu0 %v8677
  %8716 = vmatprep.subr.mxu0 0.0
  %8717 = vmatpush1.msra.mxu0 %v8678
  %8718 = vmatprep.subr.mxu0 0.0
  %8719 = vmatpush1.msra.mxu0 %v8679
  %8720 = vmatprep.subr.mxu0 0.0
  %8721 = vmatpush1.msra.mxu0 0.0
  %8722 = vmatprep.subr.mxu0 0.0
  %8723 = vmatpush1.msra.mxu0 0.0
  %8724 = vmatprep.subr.mxu0 0.0
  %8725 = vmatpush1.msra.mxu0 0.0
  %8726 = vmatprep.subr.mxu0 0.0
  %8727 = vmatpush1.msra.mxu0 0.0
  %8728 = vmatprep.subr.mxu0 0.0
  %8729 = vmatpush1.msra.mxu0 0.0
  %8730 = vmatprep.subr.mxu0 0.0
  %8731 = vmatpush1.msra.mxu0 0.0
  %8732 = vmatprep.subr.mxu0 0.0
  %8733 = vmatpush1.msra.mxu0 0.0
  %8734 = vmatprep.subr.mxu0 0.0
  %8735 = vmatpush1.msra.mxu0 0.0
  %8736 = vmatprep.subr.mxu0 0.0
  %8737 = vmatpush1.msra.mxu0 0.0
  %8738 = vmatprep.subr.mxu0 0.0
  %8739 = vmatpush1.msra.mxu0 0.0
  %8740 = vmatprep.subr.mxu0 0.0
  %8741 = vmatpush1.msra.mxu0 0.0
  %8742 = vmatprep.subr.mxu0 0.0
  %8743 = vmatpush1.msra.mxu0 0.0
  %8744 = vmatprep.subr.mxu0 0.0
  %8745 = vmatpush1.msra.mxu0 0.0
  %8746 = vmatprep.subr.mxu0 0.0
  %8747 = vmatpush1.msra.mxu0 0.0
  %8748 = vmatprep.subr.mxu0 0.0
  %8749 = vmatpush1.msra.mxu0 0.0
  %8750 = vmatprep.subr.mxu0 0.0
  %8751 = vmatpush1.msra.mxu0 0.0
  %8752 = vmatprep.mubr.f32.mxu0 0.0
  %8753 = vmatmul.mubr.f32.gmra.mrb[0].mxu0 %v8661
  %v8754 = vpop.f32.mrb[0].mxu0
  %v8755 = vadd.f32 %v8686, %v8754
  %v8756 = vpop.f32.mrb[0].mxu0
  %8757 = vmatprep.mubr.f32.mxu0 0.0
  %8758 = vmatmul.mubr.f32.gmra.mrb[0].mxu0 %v8662
  %v8759 = vpop.f32.mrb[0].mxu0
  %v8760 = vadd.f32 %v8686, %v8759
  %v8761 = vpop.f32.mrb[0].mxu0
  %8762 = vdwg.mxu0
  %v8763 = vadd.f32 %v8507, %v8755
  %v8764 = vadd.f32 %v8508, %v8760
  %v8765 = vld [vmem:[%s17] sm:$0x1]
  %v8766 = vld [vmem:[%s18] sm:$0x1]
  %v8767 = vsel %vm800, %v8763, 0.0
  %8768 = vadd.xlane.f32.xlu0 %v8767
  %v8769 = vpop.xlane.xlu0 %8768
  %v8770 = vsel %vm800, %v8764, 0.0
  %8771 = vadd.xlane.f32.xlu0 %v8770
  %v8772 = vpop.xlane.xlu0 %8771
  %v8773 = vmul.f32 %v8769, %v807
  %v8774 = vmul.f32 %v8772, %v807
  %v8775 = vsub.f32 %v8763, %v8773
  %v8776 = vsub.f32 %v8764, %v8774
  %v8777 = vmul.f32 %v8775, %v8775
  %v8778 = vmul.f32 %v8776, %v8776
  %v8779 = vsel %vm800, %v8777, 0.0
  %8780 = vadd.xlane.f32.xlu0 %v8779
  %v8781 = vpop.xlane.xlu0 %8780
  %v8782 = vsel %vm800, %v8778, 0.0
  %8783 = vadd.xlane.f32.xlu0 %v8782
  %v8784 = vpop.xlane.xlu0 %8783
  %v8785 = vmul.f32 %v8781, %v807
  %v8786 = vmul.f32 %v8784, %v807
  %v8787 = vadd.f32 %v8785, 1e-05
  %v8788 = vadd.f32 %v8786, 1e-05
  %v8789 = vrsqrt.pop %v8787
  %v8790 = vrsqrt.pop %v8788
  %v8791 = vmul.f32 %v8775, %v8789
  %v8792 = vmul.f32 %v8776, %v8790
  %v8794 = vlaneseq
  %v8795 = vshrl.u32 %v8794, 7
  %v8796 = vsub.s32 0, %v8795
  %v8797 = vrot.slane %v8765, %v8796
  %v8799 = vmul.f32 %v8791, %v8797
  %v8800 = vmul.f32 %v8792, %v8797
  %v8802 = vlaneseq
  %v8803 = vshrl.u32 %v8802, 7
  %v8804 = vsub.s32 0, %v8803
  %v8805 = vrot.slane %v8766, %v8804
  %v8807 = vadd.f32 %v8799, %v8805
  %v8808 = vadd.f32 %v8800, %v8805
  %8811 = vrot.lane.b32.xlu0 %v8763, 64
  %v8812 = vpop.permute.xlu0 %8811
  %8813 = vrot.lane.b32.xlu0 %v8764, 64
  %v8814 = vpop.permute.xlu0 %8813
  %v8817 = vsel %vm800, %v4775, %v8812
  %v8818 = vsel %vm800, %v4776, %v8814
  %8819 = vst [vmem:[%s19] sm:$0xff] %v8817
  %8820 = vst.msk [vmem:[%s19 + $0x8] sm:$0xff] %vm800, %v8807
  %8821 = vst [vmem:[%s19 + $0x10] sm:$0xff] %v8818
  %8822 = vst.msk [vmem:[%s19 + $0x18] sm:$0xff] %vm800, %v8808
  // Predicated region
  $region78: #{vit_forward.1} parent=0 // pred_check
    _
  $region79: #{vit_forward.1} parent=0 // pred_check_branch
    %8824 = sbr.rel (0) target = $region81
  $region80: #{vit_forward.1} parent=0 // pred_region
    _
  $region81: #{vit_forward.1} parent=0 // pred_fallthru
    _
  // Predicated region
  $region82: #{vit_forward.1} parent=0 // pred_check
    _
  $region83: #{vit_forward.1} parent=0 // pred_check_branch
    %8826 = sbr.rel (0) target = $region85
  $region84: #{vit_forward.1} parent=0 // pred_region
    _
  $region85: #{vit_forward.1} parent=0 // pred_fallthru
    _

</llo_original>
